<compile_context>
chip_gen: v6e
topology: v6e:2x2x1
jax: 0.10.0
libtpu: 0.0.40
codegen_flags: <defaults>
</compile_context>

<pallas_src>
import jax
import jax.numpy as jnp
from jax import lax
from jax.experimental import pallas as pl
from jax.experimental.pallas import tpu as pltpu

# Review item: bf16 MXU operands (f32 accumulation) on v5e/v6e/v7x.  Set to
# False for bit-closer f32 semantics (still not bit-exact vs HIGHEST).
USE_BF16_MATMUL = True


def _mxu_dot(a, b):
    if USE_BF16_MATMUL:
        a = a.astype(jnp.bfloat16)
        b = b.astype(jnp.bfloat16)
    return jnp.dot(a, b, preferred_element_type=jnp.float32)


# ---------------------------------------------------------------------------
# Fused kernel: one batch tile (Bt images) per grid step.
#   conv1+pool -> conv2+pool -> flatten -> fc1 -> fc2, all resident in VMEM.
# Activation layouts (all lane-dense):
#   xp1  : (Bt, 34, 96)   rows=(b, padded y), lane = x*3  + c   (c = RGB)
#   conv1: (Bt*32, 1024)  rows=(b, y),        lane = interleaved (x, co)
#   xp2  : (Bt, 18, 512)  rows=(b, padded y), lane = x*32 + c
#   conv2: (Bt*16, 1024)  rows=(b, y),        lane = interleaved (x, co)
#   flat : (Bt, 4096)     lane = y*512 + x*64 + c (fc1 weights pre-permuted)
# "interleaved (x, co)" = even-x blocks in lanes [0,512), odd-x in [512,1024),
# chosen on the host (weight column permutation) so the 2x2 W-pool is a single
# aligned half-lane maximum.
# ---------------------------------------------------------------------------
def _fused_cnn_kernel(x_ref, w1_ref, b1_ref, w2_ref, b2_ref,
                      fw1_ref, fb1_ref, fw2_ref, fb2_ref,
                      o_ref, xp1, xp2, flat):
    Bt = x_ref.shape[0]
    f32 = jnp.float32

    # ---------------- stage 1: conv1 (3->32) + ReLU + 2x2 maxpool ----------
    # Only the two 1-row y-halo borders are zeroed (review item 3); the
    # interior is fully overwritten every step.
    zrow1 = jnp.zeros((Bt, 1, 96), f32)
    xp1[:, 0:1, :] = zrow1
    xp1[:, 33:34, :] = zrow1
    xp1[:, 1:33, :] = x_ref[...]

    acc1 = jnp.zeros((Bt * 32, 1024), f32)
    for dy in range(3):                                   # 3 banded MXU matmuls
        a = xp1[:, dy:dy + 32, :].reshape(Bt * 32, 96)
        acc1 = acc1 + _mxu_dot(a, w1_ref[dy])
    a1 = jnp.maximum(acc1 + b1_ref[...], 0.0)             # (Bt*32, 1024)

    v1 = a1.reshape(Bt, 16, 2, 1024)                      # H-pool: sublane pairs
    h1 = jnp.maximum(v1[:, :, 0, :], v1[:, :, 1, :])      # (Bt, 16, 1024)
    p1 = jnp.maximum(h1[:, :, :512], h1[:, :, 512:])      # W-pool: aligned halves
    #                                                     # (Bt, 16, 512), lane=x*32+c

    # ---------------- stage 2: conv2 (32->64) + ReLU + 2x2 maxpool ---------
    zrow2 = jnp.zeros((Bt, 1, 512), f32)
    xp2[:, 0:1, :] = zrow2
    xp2[:, 17:18, :] = zrow2
    xp2[:, 1:17, :] = p1

    acc2 = jnp.zeros((Bt * 16, 1024), f32)
    for dy in range(3):
        a = xp2[:, dy:dy + 16, :].reshape(Bt * 16, 512)
        acc2 = acc2 + _mxu_dot(a, w2_ref[dy])
    a2 = jnp.maximum(acc2 + b2_ref[...], 0.0)             # (Bt*16, 1024)

    v2 = a2.reshape(Bt, 8, 2, 1024)
    h2 = jnp.maximum(v2[:, :, 0, :], v2[:, :, 1, :])      # (Bt, 8, 1024)
    p2 = jnp.maximum(h2[:, :, :512], h2[:, :, 512:])      # (Bt, 8, 512), lane=x*64+c

    # ---------------- flatten (8 aligned full-width 512-lane stores) -------
    for y in range(8):
        flat[:, y * 512:(y + 1) * 512] = p2[:, y, :]

    # ---------------- fc1 (single K=4096 matmul) + ReLU + fc2 --------------
    h = jnp.maximum(_mxu_dot(flat[...], fw1_ref[...]) + fb1_ref[...], 0.0)
    # TODO(synk): training-mode Dropout(0.5) (pltpu.prng_seed/prng_random_bits)
    # is not implemented; eval-mode dropout is the identity.
    logits = _mxu_dot(h, fw2_ref[...]) + fb2_ref[...]     # (Bt, 128), lane-dense
    o_ref[...] = logits.astype(o_ref.dtype)


# ---------------------------------------------------------------------------
# Host-side packing of the PyTorch-shaped parameters.
# ---------------------------------------------------------------------------
def _banded_conv_weight(w_oihw, width):
    """Lowered 3x3 conv weight: (3, width*Cin, width*Cout), one slab per dy.

    Input rows:   xin*Cin + c                      (natural x order)
    Output cols:  interleaved even/odd x blocks -- even x in the first
                  width/2 * Cout columns, odd x in the second half -- so the
                  2x2 W-pool in the kernel is an aligned half-lane maximum.
    Zero padding (padding=1) is realised by clipping the band at the x edges
    and by the zeroed y-halo rows in the kernel.
    """
    cout, cin, kh, kw = w_oihw.shape
    xin = jnp.arange(width)[None, :, None]
    xo = jnp.arange(width)[None, None, :]
    d = jnp.arange(kw)[:, None, None]
    sel = (xin == xo + d - 1).astype(jnp.float32)          # (kw, width, width)
    order = jnp.concatenate([jnp.arange(0, width, 2), jnp.arange(1, width, 2)])
    mats = []
    for dy in range(kh):
        tap = jnp.transpose(w_oihw[:, :, dy, :], (2, 1, 0)).astype(jnp.float32)
        # w4[xin, c, xo, co] = sum_dx [xin == xo+dx-1] * w[co, c, dy, dx]
        w4 = jnp.einsum('dpq,dco->pcqo', sel, tap)         # (width,cin,width,cout)
        w4 = jnp.take(w4, order, axis=2)                   # even/odd-x halves
        mats.append(w4.reshape(width * cin, width * cout))
    return jnp.stack(mats)                                 # (3, width*cin, width*cout)


def _pack_params(p):
    wdt = jnp.bfloat16 if USE_BF16_MATMUL else jnp.float32
    w1b = _banded_conv_weight(p["conv1_w"], 32).astype(wdt)       # (3, 96, 1024)
    w2b = _banded_conv_weight(p["conv2_w"], 16).astype(wdt)       # (3, 512, 1024)
    # Bias per output lane (independent of the x-block permutation).
    b1r = jnp.tile(p["conv1_b"].astype(jnp.float32), (32,)).reshape(1, 1024)
    b2r = jnp.tile(p["conv2_b"].astype(jnp.float32), (16,)).reshape(1, 1024)
    # fc1: torch flatten order is (c, y, x); the kernel produces (y, x, c).
    # Permute the static weight rows once on the host.
    fw1 = (p["fc1_w"].T                     # (4096, 128), row = c*64 + y*8 + x
           .reshape(64, 8, 8, 128)          # (c, y, x, n)
           .transpose(1, 2, 0, 3)           # (y, x, c, n)
           .reshape(4096, 128)).astype(wdt)
    fb1 = p["fc1_b"].reshape(1, 128).astype(jnp.float32)
    # Pad fc2 to 128 output lanes so the final store is lane-dense.
    fw2 = jnp.zeros((128, 128), jnp.float32).at[:, :10].set(p["fc2_w"].T).astype(wdt)
    fb2 = jnp.zeros((1, 128), jnp.float32).at[:, :10].set(p["fc2_b"].reshape(1, 10))
    return w1b, b1r, w2b, b2r, fw1, fb1, fw2, fb2


# ---------------------------------------------------------------------------
# Per-generation tuning (review items 10-12).
# ---------------------------------------------------------------------------
def _tpu_vmem_bytes():
    try:
        info = pltpu.get_tpu_info()
        return int(getattr(info, "vmem_capacity_bytes", 128 * 1024 * 1024))
    except Exception:
        return 128 * 1024 * 1024


def _pick_batch_tile(batch, vmem_bytes):
    """Images per grid step + padded batch.  Bt%8==0 (or Bt==B) keeps the
    (Bt,128) output block tile-aligned; Bt is clamped and the batch is padded
    so arbitrary batch sizes never blow up scratch; for B>=16 there are always
    >=2 grid steps so both v7x TensorCores get work."""
    cap = 32 if vmem_bytes >= 96 * 1024 * 1024 else 16     # v5e/v6e vs v7x
    if batch <= 8:
        return batch, batch                                # single step, block == batch
    bt = max(8, min(cap, (batch // 2) // 8 * 8))
    b_pad = -(-batch // bt) * bt
    return bt, b_pad


# ---------------------------------------------------------------------------
# Forward pass.
# ---------------------------------------------------------------------------
def simple_cnn_forward(x_nchw, p):
    B = x_nchw.shape[0]
    # NCHW -> NHWC -> lane-dense (B, 32, 96): lane = x*3 + c (review item 1).
    x = jnp.transpose(x_nchw, (0, 2, 3, 1)).astype(jnp.float32).reshape(B, 32, 96)

    vmem_bytes = _tpu_vmem_bytes()
    Bt, B_pad = _pick_batch_tile(B, vmem_bytes)
    if B_pad != B:
        x = jnp.pad(x, ((0, B_pad - B), (0, 0), (0, 0)))

    w1b, b1r, w2b, b2r, fw1, fb1, fw2, fb2 = _pack_params(p)

    out = pl.pallas_call(
        _fused_cnn_kernel,
        out_shape=jax.ShapeDtypeStruct((B_pad, 128), jnp.float32),
        grid=(B_pad // Bt,),
        in_specs=[
            pl.BlockSpec((Bt, 32, 96), lambda i: (i, 0, 0)),      # images (lane-dense)
            pl.BlockSpec((3, 96, 1024), lambda i: (0, 0, 0)),     # conv1 banded weights
            pl.BlockSpec((1, 1024), lambda i: (0, 0)),            # conv1 bias row
            pl.BlockSpec((3, 512, 1024), lambda i: (0, 0, 0)),    # conv2 banded weights
            pl.BlockSpec((1, 1024), lambda i: (0, 0)),            # conv2 bias row
            pl.BlockSpec((4096, 128), lambda i: (0, 0)),          # fc1 weight (permuted)
            pl.BlockSpec((1, 128), lambda i: (0, 0)),             # fc1 bias
            pl.BlockSpec((128, 128), lambda i: (0, 0)),           # fc2 weight (padded)
            pl.BlockSpec((1, 128), lambda i: (0, 0)),             # fc2 bias (padded)
        ],
        out_specs=pl.BlockSpec((Bt, 128), lambda i: (i, 0)),
        scratch_shapes=[
            pltpu.VMEM((Bt, 34, 96), jnp.float32),    # conv1 y-halo input
            pltpu.VMEM((Bt, 18, 512), jnp.float32),   # conv2 y-halo input
            pltpu.VMEM((Bt, 4096), jnp.float32),      # flattened fc1 input
        ],
        compiler_params=pltpu.CompilerParams(
            dimension_semantics=("parallel",),
            vmem_limit_bytes=int(min(vmem_bytes * 3 // 4, 100 * 1024 * 1024)),
        ),
    )(x, w1b, b1r, w2b, b2r, fw1, fb1, fw2, fb2)
    return out[:B, :10]


# ---------------------------------------------------------------------------
# Parameters (deterministic, PyTorch-shaped) and a pure-JAX reference.
# ---------------------------------------------------------------------------
def init_params(key):
    ks = jax.random.split(key, 8)
    return {
        "conv1_w": jax.random.normal(ks[0], (32, 3, 3, 3), jnp.float32) * 0.10,
        "conv1_b": jax.random.normal(ks[1], (32,), jnp.float32) * 0.10,
        "conv2_w": jax.random.normal(ks[2], (64, 32, 3, 3), jnp.float32) * 0.05,
        "conv2_b": jax.random.normal(ks[3], (64,), jnp.float32) * 0.05,
        "fc1_w": jax.random.normal(ks[4], (128, 64 * 8 * 8), jnp.float32) * 0.02,
        "fc1_b": jax.random.normal(ks[5], (128,), jnp.float32) * 0.02,
        "fc2_w": jax.random.normal(ks[6], (10, 128), jnp.float32) * 0.05,
        "fc2_b": jax.random.normal(ks[7], (10,), jnp.float32) * 0.05,
    }


def _reference_forward(x_nchw, p):
    dn = ("NCHW", "OIHW", "NCHW")
    hi = lax.Precision.HIGHEST
    y = lax.conv_general_dilated(x_nchw, p["conv1_w"], (1, 1), ((1, 1), (1, 1)),
                                 dimension_numbers=dn, precision=hi)
    y = jnp.maximum(y + p["conv1_b"][None, :, None, None], 0.0)
    y = lax.reduce_window(y, -jnp.inf, lax.max, (1, 1, 2, 2), (1, 1, 2, 2), "VALID")
    y = lax.conv_general_dilated(y, p["conv2_w"], (1, 1), ((1, 1), (1, 1)),
                                 dimension_numbers=dn, precision=hi)
    y = jnp.maximum(y + p["conv2_b"][None, :, None, None], 0.0)
    y = lax.reduce_window(y, -jnp.inf, lax.max, (1, 1, 2, 2), (1, 1, 2, 2), "VALID")
    v = y.reshape(y.shape[0], -1)                          # torch NCHW flatten
    h = jnp.maximum(jnp.dot(v, p["fc1_w"].T, precision=hi) + p["fc1_b"], 0.0)
    return jnp.dot(h, p["fc2_w"].T, precision=hi) + p["fc2_b"]


if __name__ == "__main__":
    key = jax.random.PRNGKey(0)
    k_x, k_p = jax.random.split(key)

    B = 2
    # CIFAR-10-shaped input (NCHW); 32x32x3 is required by fc1's 64*8*8 flatten.
    x = jax.random.normal(k_x, (B, 3, 32, 32), jnp.float32)
    params = init_params(k_p)

    logits = jax.jit(simple_cnn_forward)(x, params)
    jax.block_until_ready(logits)

    assert logits.shape == (B, 10), logits.shape
    assert logits.dtype == jnp.float32
    assert bool(jnp.all(jnp.isfinite(logits)))

    ref = _reference_forward(x, params)
    max_err = float(jnp.max(jnp.abs(logits - ref)))
    assert bool(jnp.allclose(logits, ref, rtol=5e-2, atol=5e-2)), max_err

    print("KERNEL_OK")
</pallas_src>

<mosaic_0001>
module attributes {stable_mosaic.version = 11 : i64} {
  func.func @_fused_cnn_kernel(%arg0: i32, %arg1: memref<2x32x96xf32, #tpu.memory_space<vmem>>, %arg2: memref<3x96x1024xbf16, #tpu.memory_space<vmem>>, %arg3: memref<1x1024xf32, #tpu.memory_space<vmem>>, %arg4: memref<3x512x1024xbf16, #tpu.memory_space<vmem>>, %arg5: memref<1x1024xf32, #tpu.memory_space<vmem>>, %arg6: memref<4096x128xbf16, #tpu.memory_space<vmem>>, %arg7: memref<1x128xf32, #tpu.memory_space<vmem>>, %arg8: memref<128x128xbf16, #tpu.memory_space<vmem>>, %arg9: memref<1x128xf32, #tpu.memory_space<vmem>>, %arg10: memref<2x128xf32, #tpu.memory_space<vmem>>, %arg11: memref<2x34x96xf32, #tpu.memory_space<vmem>>, %arg12: memref<2x18x512xf32, #tpu.memory_space<vmem>>, %arg13: memref<2x4096xf32, #tpu.memory_space<vmem>>) attributes {dimension_semantics = [#tpu.dimension_semantics<parallel>], iteration_bounds = array<i64: 1>, scalar_prefetch = 0 : i64, scratch_operands = 3 : i64, tpu.core_type = #tpu.core_type<tc>, window_params = [{transform_indices = @transform_0, window_bounds = array<i64: 2, 32, 96>}, {pipeline_mode = #tpu.pipeline_mode<synchronous>, transform_indices = @transform_1, window_bounds = array<i64: 3, 96, 1024>}, {pipeline_mode = #tpu.pipeline_mode<synchronous>, transform_indices = @transform_2, window_bounds = array<i64: 1, 1024>}, {pipeline_mode = #tpu.pipeline_mode<synchronous>, transform_indices = @transform_3, window_bounds = array<i64: 3, 512, 1024>}, {pipeline_mode = #tpu.pipeline_mode<synchronous>, transform_indices = @transform_4, window_bounds = array<i64: 1, 1024>}, {pipeline_mode = #tpu.pipeline_mode<synchronous>, transform_indices = @transform_5, window_bounds = array<i64: 4096, 128>}, {pipeline_mode = #tpu.pipeline_mode<synchronous>, transform_indices = @transform_6, window_bounds = array<i64: 1, 128>}, {pipeline_mode = #tpu.pipeline_mode<synchronous>, transform_indices = @transform_7, window_bounds = array<i64: 128, 128>}, {pipeline_mode = #tpu.pipeline_mode<synchronous>, transform_indices = @transform_8, window_bounds = array<i64: 1, 128>}, {transform_indices = @transform_9, window_bounds = array<i64: 2, 128>}]} {
    %cst = arith.constant 0.000000e+00 : f32
    %0 = vector.broadcast %cst : f32 to vector<2x1x96xf32>
    %c0 = arith.constant 0 : index
    %c0_0 = arith.constant 0 : index
    %c0_1 = arith.constant 0 : index
    %1 = vector.load %arg11[%c0, %c0_0, %c0_1] : memref<2x34x96xf32, #tpu.memory_space<vmem>>, vector<2x1x96xf32>
    tpu.vector_store %arg11[%c0, %c0_0, %c0_1], %0 {strides = array<i32>} : memref<2x34x96xf32, #tpu.memory_space<vmem>>, vector<2x1x96xf32>,
    %c0_2 = arith.constant 0 : index
    %c33 = arith.constant 33 : index
    %c0_3 = arith.constant 0 : index
    %2 = vector.load %arg11[%c0_2, %c33, %c0_3] : memref<2x34x96xf32, #tpu.memory_space<vmem>>, vector<2x1x96xf32>
    tpu.vector_store %arg11[%c0_2, %c33, %c0_3], %0 {strides = array<i32>} : memref<2x34x96xf32, #tpu.memory_space<vmem>>, vector<2x1x96xf32>,
    %c0_4 = arith.constant 0 : index
    %c0_5 = arith.constant 0 : index
    %c0_6 = arith.constant 0 : index
    %3 = vector.load %arg1[%c0_4, %c0_5, %c0_6] : memref<2x32x96xf32, #tpu.memory_space<vmem>>, vector<2x32x96xf32>
    %c0_7 = arith.constant 0 : index
    %c1 = arith.constant 1 : index
    %c0_8 = arith.constant 0 : index
    %4 = vector.load %arg11[%c0_7, %c1, %c0_8] : memref<2x34x96xf32, #tpu.memory_space<vmem>>, vector<2x32x96xf32>
    tpu.vector_store %arg11[%c0_7, %c1, %c0_8], %3 {strides = array<i32>} : memref<2x34x96xf32, #tpu.memory_space<vmem>>, vector<2x32x96xf32>,
    %cst_9 = arith.constant 0.000000e+00 : f32
    %5 = vector.broadcast %cst_9 : f32 to vector<64x1024xf32>
    %c0_10 = arith.constant 0 : index
    %c0_11 = arith.constant 0 : index
    %c0_12 = arith.constant 0 : index
    %6 = vector.load %arg11[%c0_10, %c0_11, %c0_12] : memref<2x34x96xf32, #tpu.memory_space<vmem>>, vector<2x32x96xf32>
    %7 = vector.shape_cast %6 : vector<2x32x96xf32> to vector<64x96xf32>
    %c0_13 = arith.constant 0 : index
    %c0_14 = arith.constant 0 : index
    %c0_15 = arith.constant 0 : index
    %8 = vector.load %arg2[%c0_13, %c0_14, %c0_15] : memref<3x96x1024xbf16, #tpu.memory_space<vmem>>, vector<1x96x1024xbf16>
    %9 = vector.shape_cast %8 : vector<1x96x1024xbf16> to vector<96x1024xbf16>
    %10 = arith.truncf %7 : vector<64x96xf32> to vector<64x96xbf16>
    %cst_16 = arith.constant dense<0.000000e+00> : vector<64x1024xf32>
    %11 = tpu.matmul %10, %9, %cst_16 {dimension_numbers = #tpu.dot_dimension_numbers<[1], [0], [0], [1], [0, 0, 1, 1], [], []>} : vector<64x96xbf16>, vector<96x1024xbf16>, vector<64x1024xf32> -> vector<64x1024xf32>
    %12 = arith.addf %5, %11 : vector<64x1024xf32>
    %c0_17 = arith.constant 0 : index
    %c1_18 = arith.constant 1 : index
    %c0_19 = arith.constant 0 : index
    %13 = vector.load %arg11[%c0_17, %c1_18, %c0_19] : memref<2x34x96xf32, #tpu.memory_space<vmem>>, vector<2x32x96xf32>
    %14 = vector.shape_cast %13 : vector<2x32x96xf32> to vector<64x96xf32>
    %c1_20 = arith.constant 1 : index
    %c0_21 = arith.constant 0 : index
    %c0_22 = arith.constant 0 : index
    %15 = vector.load %arg2[%c1_20, %c0_21, %c0_22] : memref<3x96x1024xbf16, #tpu.memory_space<vmem>>, vector<1x96x1024xbf16>
    %16 = vector.shape_cast %15 : vector<1x96x1024xbf16> to vector<96x1024xbf16>
    %17 = arith.truncf %14 : vector<64x96xf32> to vector<64x96xbf16>
    %cst_23 = arith.constant dense<0.000000e+00> : vector<64x1024xf32>
    %18 = tpu.matmul %17, %16, %cst_23 {dimension_numbers = #tpu.dot_dimension_numbers<[1], [0], [0], [1], [0, 0, 1, 1], [], []>} : vector<64x96xbf16>, vector<96x1024xbf16>, vector<64x1024xf32> -> vector<64x1024xf32>
    %19 = arith.addf %12, %18 : vector<64x1024xf32>
    %c0_24 = arith.constant 0 : index
    %c2 = arith.constant 2 : index
    %c0_25 = arith.constant 0 : index
    %20 = vector.load %arg11[%c0_24, %c2, %c0_25] : memref<2x34x96xf32, #tpu.memory_space<vmem>>, vector<2x32x96xf32>
    %21 = vector.shape_cast %20 : vector<2x32x96xf32> to vector<64x96xf32>
    %c2_26 = arith.constant 2 : index
    %c0_27 = arith.constant 0 : index
    %c0_28 = arith.constant 0 : index
    %22 = vector.load %arg2[%c2_26, %c0_27, %c0_28] : memref<3x96x1024xbf16, #tpu.memory_space<vmem>>, vector<1x96x1024xbf16>
    %23 = vector.shape_cast %22 : vector<1x96x1024xbf16> to vector<96x1024xbf16>
    %24 = arith.truncf %21 : vector<64x96xf32> to vector<64x96xbf16>
    %cst_29 = arith.constant dense<0.000000e+00> : vector<64x1024xf32>
    %25 = tpu.matmul %24, %23, %cst_29 {dimension_numbers = #tpu.dot_dimension_numbers<[1], [0], [0], [1], [0, 0, 1, 1], [], []>} : vector<64x96xbf16>, vector<96x1024xbf16>, vector<64x1024xf32> -> vector<64x1024xf32>
    %26 = arith.addf %19, %25 : vector<64x1024xf32>
    %c0_30 = arith.constant 0 : index
    %c0_31 = arith.constant 0 : index
    %27 = vector.load %arg3[%c0_30, %c0_31] : memref<1x1024xf32, #tpu.memory_space<vmem>>, vector<1x1024xf32>
    %28 = vector.broadcast %27 : vector<1x1024xf32> to vector<64x1024xf32>
    %29 = arith.addf %26, %28 : vector<64x1024xf32>
    %cst_32 = arith.constant 0.000000e+00 : f32
    %30 = vector.broadcast %cst_32 : f32 to vector<64x1024xf32>
    %31 = arith.maximumf %29, %30 : vector<64x1024xf32>
    %32 = vector.shape_cast %31 : vector<64x1024xf32> to vector<2x16x2x1024xf32>
    %33 = vector.extract_strided_slice %32 {offsets = [0, 0, 0, 0], sizes = [2, 16, 1, 1024], strides = [1, 1, 1, 1]} : vector<2x16x2x1024xf32> to vector<2x16x1x1024xf32>
    %34 = vector.shape_cast %33 : vector<2x16x1x1024xf32> to vector<2x16x1024xf32>
    %35 = vector.extract_strided_slice %32 {offsets = [0, 0, 1, 0], sizes = [2, 16, 1, 1024], strides = [1, 1, 1, 1]} : vector<2x16x2x1024xf32> to vector<2x16x1x1024xf32>
    %36 = vector.shape_cast %35 : vector<2x16x1x1024xf32> to vector<2x16x1024xf32>
    %37 = arith.maximumf %34, %36 : vector<2x16x1024xf32>
    %38 = vector.extract_strided_slice %37 {offsets = [0, 0, 0], sizes = [2, 16, 512], strides = [1, 1, 1]} : vector<2x16x1024xf32> to vector<2x16x512xf32>
    %39 = vector.extract_strided_slice %37 {offsets = [0, 0, 512], sizes = [2, 16, 512], strides = [1, 1, 1]} : vector<2x16x1024xf32> to vector<2x16x512xf32>
    %40 = arith.maximumf %38, %39 : vector<2x16x512xf32>
    %cst_33 = arith.constant 0.000000e+00 : f32
    %41 = vector.broadcast %cst_33 : f32 to vector<2x1x512xf32>
    %c0_34 = arith.constant 0 : index
    %c0_35 = arith.constant 0 : index
    %c0_36 = arith.constant 0 : index
    %42 = vector.load %arg12[%c0_34, %c0_35, %c0_36] : memref<2x18x512xf32, #tpu.memory_space<vmem>>, vector<2x1x512xf32>
    tpu.vector_store %arg12[%c0_34, %c0_35, %c0_36], %41 {strides = array<i32>} : memref<2x18x512xf32, #tpu.memory_space<vmem>>, vector<2x1x512xf32>,
    %c0_37 = arith.constant 0 : index
    %c17 = arith.constant 17 : index
    %c0_38 = arith.constant 0 : index
    %43 = vector.load %arg12[%c0_37, %c17, %c0_38] : memref<2x18x512xf32, #tpu.memory_space<vmem>>, vector<2x1x512xf32>
    tpu.vector_store %arg12[%c0_37, %c17, %c0_38], %41 {strides = array<i32>} : memref<2x18x512xf32, #tpu.memory_space<vmem>>, vector<2x1x512xf32>,
    %c0_39 = arith.constant 0 : index
    %c1_40 = arith.constant 1 : index
    %c0_41 = arith.constant 0 : index
    %44 = vector.load %arg12[%c0_39, %c1_40, %c0_41] : memref<2x18x512xf32, #tpu.memory_space<vmem>>, vector<2x16x512xf32>
    tpu.vector_store %arg12[%c0_39, %c1_40, %c0_41], %40 {strides = array<i32>} : memref<2x18x512xf32, #tpu.memory_space<vmem>>, vector<2x16x512xf32>,
    %cst_42 = arith.constant 0.000000e+00 : f32
    %45 = vector.broadcast %cst_42 : f32 to vector<32x1024xf32>
    %c0_43 = arith.constant 0 : index
    %c0_44 = arith.constant 0 : index
    %c0_45 = arith.constant 0 : index
    %46 = vector.load %arg12[%c0_43, %c0_44, %c0_45] : memref<2x18x512xf32, #tpu.memory_space<vmem>>, vector<2x16x512xf32>
    %47 = vector.shape_cast %46 : vector<2x16x512xf32> to vector<32x512xf32>
    %c0_46 = arith.constant 0 : index
    %c0_47 = arith.constant 0 : index
    %c0_48 = arith.constant 0 : index
    %48 = vector.load %arg4[%c0_46, %c0_47, %c0_48] : memref<3x512x1024xbf16, #tpu.memory_space<vmem>>, vector<1x512x1024xbf16>
    %49 = vector.shape_cast %48 : vector<1x512x1024xbf16> to vector<512x1024xbf16>
    %50 = arith.truncf %47 : vector<32x512xf32> to vector<32x512xbf16>
    %cst_49 = arith.constant dense<0.000000e+00> : vector<32x1024xf32>
    %51 = tpu.matmul %50, %49, %cst_49 {dimension_numbers = #tpu.dot_dimension_numbers<[1], [0], [0], [1], [0, 0, 1, 1], [], []>} : vector<32x512xbf16>, vector<512x1024xbf16>, vector<32x1024xf32> -> vector<32x1024xf32>
    %52 = arith.addf %45, %51 : vector<32x1024xf32>
    %c0_50 = arith.constant 0 : index
    %c1_51 = arith.constant 1 : index
    %c0_52 = arith.constant 0 : index
    %53 = vector.load %arg12[%c0_50, %c1_51, %c0_52] : memref<2x18x512xf32, #tpu.memory_space<vmem>>, vector<2x16x512xf32>
    %54 = vector.shape_cast %53 : vector<2x16x512xf32> to vector<32x512xf32>
    %c1_53 = arith.constant 1 : index
    %c0_54 = arith.constant 0 : index
    %c0_55 = arith.constant 0 : index
    %55 = vector.load %arg4[%c1_53, %c0_54, %c0_55] : memref<3x512x1024xbf16, #tpu.memory_space<vmem>>, vector<1x512x1024xbf16>
    %56 = vector.shape_cast %55 : vector<1x512x1024xbf16> to vector<512x1024xbf16>
    %57 = arith.truncf %54 : vector<32x512xf32> to vector<32x512xbf16>
    %cst_56 = arith.constant dense<0.000000e+00> : vector<32x1024xf32>
    %58 = tpu.matmul %57, %56, %cst_56 {dimension_numbers = #tpu.dot_dimension_numbers<[1], [0], [0], [1], [0, 0, 1, 1], [], []>} : vector<32x512xbf16>, vector<512x1024xbf16>, vector<32x1024xf32> -> vector<32x1024xf32>
    %59 = arith.addf %52, %58 : vector<32x1024xf32>
    %c0_57 = arith.constant 0 : index
    %c2_58 = arith.constant 2 : index
    %c0_59 = arith.constant 0 : index
    %60 = vector.load %arg12[%c0_57, %c2_58, %c0_59] : memref<2x18x512xf32, #tpu.memory_space<vmem>>, vector<2x16x512xf32>
    %61 = vector.shape_cast %60 : vector<2x16x512xf32> to vector<32x512xf32>
    %c2_60 = arith.constant 2 : index
    %c0_61 = arith.constant 0 : index
    %c0_62 = arith.constant 0 : index
    %62 = vector.load %arg4[%c2_60, %c0_61, %c0_62] : memref<3x512x1024xbf16, #tpu.memory_space<vmem>>, vector<1x512x1024xbf16>
    %63 = vector.shape_cast %62 : vector<1x512x1024xbf16> to vector<512x1024xbf16>
    %64 = arith.truncf %61 : vector<32x512xf32> to vector<32x512xbf16>
    %cst_63 = arith.constant dense<0.000000e+00> : vector<32x1024xf32>
    %65 = tpu.matmul %64, %63, %cst_63 {dimension_numbers = #tpu.dot_dimension_numbers<[1], [0], [0], [1], [0, 0, 1, 1], [], []>} : vector<32x512xbf16>, vector<512x1024xbf16>, vector<32x1024xf32> -> vector<32x1024xf32>
    %66 = arith.addf %59, %65 : vector<32x1024xf32>
    %c0_64 = arith.constant 0 : index
    %c0_65 = arith.constant 0 : index
    %67 = vector.load %arg5[%c0_64, %c0_65] : memref<1x1024xf32, #tpu.memory_space<vmem>>, vector<1x1024xf32>
    %68 = vector.broadcast %67 : vector<1x1024xf32> to vector<32x1024xf32>
    %69 = arith.addf %66, %68 : vector<32x1024xf32>
    %cst_66 = arith.constant 0.000000e+00 : f32
    %70 = vector.broadcast %cst_66 : f32 to vector<32x1024xf32>
    %71 = arith.maximumf %69, %70 : vector<32x1024xf32>
    %72 = vector.shape_cast %71 : vector<32x1024xf32> to vector<2x8x2x1024xf32>
    %73 = vector.extract_strided_slice %72 {offsets = [0, 0, 0, 0], sizes = [2, 8, 1, 1024], strides = [1, 1, 1, 1]} : vector<2x8x2x1024xf32> to vector<2x8x1x1024xf32>
    %74 = vector.shape_cast %73 : vector<2x8x1x1024xf32> to vector<2x8x1024xf32>
    %75 = vector.extract_strided_slice %72 {offsets = [0, 0, 1, 0], sizes = [2, 8, 1, 1024], strides = [1, 1, 1, 1]} : vector<2x8x2x1024xf32> to vector<2x8x1x1024xf32>
    %76 = vector.shape_cast %75 : vector<2x8x1x1024xf32> to vector<2x8x1024xf32>
    %77 = arith.maximumf %74, %76 : vector<2x8x1024xf32>
    %78 = vector.extract_strided_slice %77 {offsets = [0, 0, 0], sizes = [2, 8, 512], strides = [1, 1, 1]} : vector<2x8x1024xf32> to vector<2x8x512xf32>
    %79 = vector.extract_strided_slice %77 {offsets = [0, 0, 512], sizes = [2, 8, 512], strides = [1, 1, 1]} : vector<2x8x1024xf32> to vector<2x8x512xf32>
    %80 = arith.maximumf %78, %79 : vector<2x8x512xf32>
    %81 = vector.extract_strided_slice %80 {offsets = [0, 0, 0], sizes = [2, 1, 512], strides = [1, 1, 1]} : vector<2x8x512xf32> to vector<2x1x512xf32>
    %82 = vector.shape_cast %81 : vector<2x1x512xf32> to vector<2x512xf32>
    %c0_67 = arith.constant 0 : index
    %c0_68 = arith.constant 0 : index
    %83 = vector.load %arg13[%c0_67, %c0_68] : memref<2x4096xf32, #tpu.memory_space<vmem>>, vector<2x512xf32>
    tpu.vector_store %arg13[%c0_67, %c0_68], %82 {strides = array<i32>} : memref<2x4096xf32, #tpu.memory_space<vmem>>, vector<2x512xf32>,
    %84 = vector.extract_strided_slice %80 {offsets = [0, 1, 0], sizes = [2, 1, 512], strides = [1, 1, 1]} : vector<2x8x512xf32> to vector<2x1x512xf32>
    %85 = vector.shape_cast %84 : vector<2x1x512xf32> to vector<2x512xf32>
    %c0_69 = arith.constant 0 : index
    %c512 = arith.constant 512 : index
    %86 = vector.load %arg13[%c0_69, %c512] : memref<2x4096xf32, #tpu.memory_space<vmem>>, vector<2x512xf32>
    tpu.vector_store %arg13[%c0_69, %c512], %85 {strides = array<i32>} : memref<2x4096xf32, #tpu.memory_space<vmem>>, vector<2x512xf32>,
    %87 = vector.extract_strided_slice %80 {offsets = [0, 2, 0], sizes = [2, 1, 512], strides = [1, 1, 1]} : vector<2x8x512xf32> to vector<2x1x512xf32>
    %88 = vector.shape_cast %87 : vector<2x1x512xf32> to vector<2x512xf32>
    %c0_70 = arith.constant 0 : index
    %c1024 = arith.constant 1024 : index
    %89 = vector.load %arg13[%c0_70, %c1024] : memref<2x4096xf32, #tpu.memory_space<vmem>>, vector<2x512xf32>
    tpu.vector_store %arg13[%c0_70, %c1024], %88 {strides = array<i32>} : memref<2x4096xf32, #tpu.memory_space<vmem>>, vector<2x512xf32>,
    %90 = vector.extract_strided_slice %80 {offsets = [0, 3, 0], sizes = [2, 1, 512], strides = [1, 1, 1]} : vector<2x8x512xf32> to vector<2x1x512xf32>
    %91 = vector.shape_cast %90 : vector<2x1x512xf32> to vector<2x512xf32>
    %c0_71 = arith.constant 0 : index
    %c1536 = arith.constant 1536 : index
    %92 = vector.load %arg13[%c0_71, %c1536] : memref<2x4096xf32, #tpu.memory_space<vmem>>, vector<2x512xf32>
    tpu.vector_store %arg13[%c0_71, %c1536], %91 {strides = array<i32>} : memref<2x4096xf32, #tpu.memory_space<vmem>>, vector<2x512xf32>,
    %93 = vector.extract_strided_slice %80 {offsets = [0, 4, 0], sizes = [2, 1, 512], strides = [1, 1, 1]} : vector<2x8x512xf32> to vector<2x1x512xf32>
    %94 = vector.shape_cast %93 : vector<2x1x512xf32> to vector<2x512xf32>
    %c0_72 = arith.constant 0 : index
    %c2048 = arith.constant 2048 : index
    %95 = vector.load %arg13[%c0_72, %c2048] : memref<2x4096xf32, #tpu.memory_space<vmem>>, vector<2x512xf32>
    tpu.vector_store %arg13[%c0_72, %c2048], %94 {strides = array<i32>} : memref<2x4096xf32, #tpu.memory_space<vmem>>, vector<2x512xf32>,
    %96 = vector.extract_strided_slice %80 {offsets = [0, 5, 0], sizes = [2, 1, 512], strides = [1, 1, 1]} : vector<2x8x512xf32> to vector<2x1x512xf32>
    %97 = vector.shape_cast %96 : vector<2x1x512xf32> to vector<2x512xf32>
    %c0_73 = arith.constant 0 : index
    %c2560 = arith.constant 2560 : index
    %98 = vector.load %arg13[%c0_73, %c2560] : memref<2x4096xf32, #tpu.memory_space<vmem>>, vector<2x512xf32>
    tpu.vector_store %arg13[%c0_73, %c2560], %97 {strides = array<i32>} : memref<2x4096xf32, #tpu.memory_space<vmem>>, vector<2x512xf32>,
    %99 = vector.extract_strided_slice %80 {offsets = [0, 6, 0], sizes = [2, 1, 512], strides = [1, 1, 1]} : vector<2x8x512xf32> to vector<2x1x512xf32>
    %100 = vector.shape_cast %99 : vector<2x1x512xf32> to vector<2x512xf32>
    %c0_74 = arith.constant 0 : index
    %c3072 = arith.constant 3072 : index
    %101 = vector.load %arg13[%c0_74, %c3072] : memref<2x4096xf32, #tpu.memory_space<vmem>>, vector<2x512xf32>
    tpu.vector_store %arg13[%c0_74, %c3072], %100 {strides = array<i32>} : memref<2x4096xf32, #tpu.memory_space<vmem>>, vector<2x512xf32>,
    %102 = vector.extract_strided_slice %80 {offsets = [0, 7, 0], sizes = [2, 1, 512], strides = [1, 1, 1]} : vector<2x8x512xf32> to vector<2x1x512xf32>
    %103 = vector.shape_cast %102 : vector<2x1x512xf32> to vector<2x512xf32>
    %c0_75 = arith.constant 0 : index
    %c3584 = arith.constant 3584 : index
    %104 = vector.load %arg13[%c0_75, %c3584] : memref<2x4096xf32, #tpu.memory_space<vmem>>, vector<2x512xf32>
    tpu.vector_store %arg13[%c0_75, %c3584], %103 {strides = array<i32>} : memref<2x4096xf32, #tpu.memory_space<vmem>>, vector<2x512xf32>,
    %c0_76 = arith.constant 0 : index
    %c0_77 = arith.constant 0 : index
    %105 = vector.load %arg13[%c0_76, %c0_77] : memref<2x4096xf32, #tpu.memory_space<vmem>>, vector<2x4096xf32>
    %c0_78 = arith.constant 0 : index
    %c0_79 = arith.constant 0 : index
    %106 = vector.load %arg6[%c0_78, %c0_79] : memref<4096x128xbf16, #tpu.memory_space<vmem>>, vector<4096x128xbf16>
    %107 = arith.truncf %105 : vector<2x4096xf32> to vector<2x4096xbf16>
    %cst_80 = arith.constant dense<0.000000e+00> : vector<2x128xf32>
    %108 = tpu.matmul %107, %106, %cst_80 {dimension_numbers = #tpu.dot_dimension_numbers<[1], [0], [0], [1], [0, 0, 1, 1], [], []>} : vector<2x4096xbf16>, vector<4096x128xbf16>, vector<2x128xf32> -> vector<2x128xf32>
    %c0_81 = arith.constant 0 : index
    %c0_82 = arith.constant 0 : index
    %109 = vector.load %arg7[%c0_81, %c0_82] : memref<1x128xf32, #tpu.memory_space<vmem>>, vector<1x128xf32>
    %110 = vector.broadcast %109 : vector<1x128xf32> to vector<2x128xf32>
    %111 = arith.addf %108, %110 : vector<2x128xf32>
    %cst_83 = arith.constant 0.000000e+00 : f32
    %112 = vector.broadcast %cst_83 : f32 to vector<2x128xf32>
    %113 = arith.maximumf %111, %112 : vector<2x128xf32>
    %c0_84 = arith.constant 0 : index
    %c0_85 = arith.constant 0 : index
    %114 = vector.load %arg8[%c0_84, %c0_85] : memref<128x128xbf16, #tpu.memory_space<vmem>>, vector<128x128xbf16>
    %115 = arith.truncf %113 : vector<2x128xf32> to vector<2x128xbf16>
    %cst_86 = arith.constant dense<0.000000e+00> : vector<2x128xf32>
    %116 = tpu.matmul %115, %114, %cst_86 {dimension_numbers = #tpu.dot_dimension_numbers<[1], [0], [0], [1], [0, 0, 1, 1], [], []>} : vector<2x128xbf16>, vector<128x128xbf16>, vector<2x128xf32> -> vector<2x128xf32>
    %c0_87 = arith.constant 0 : index
    %c0_88 = arith.constant 0 : index
    %117 = vector.load %arg9[%c0_87, %c0_88] : memref<1x128xf32, #tpu.memory_space<vmem>>, vector<1x128xf32>
    %118 = vector.broadcast %117 : vector<1x128xf32> to vector<2x128xf32>
    %119 = arith.addf %116, %118 : vector<2x128xf32>
    %c0_89 = arith.constant 0 : index
    %c0_90 = arith.constant 0 : index
    %120 = vector.load %arg10[%c0_89, %c0_90] : memref<2x128xf32, #tpu.memory_space<vmem>>, vector<2x128xf32>
    tpu.vector_store %arg10[%c0_89, %c0_90], %119 {strides = array<i32>} : memref<2x128xf32, #tpu.memory_space<vmem>>, vector<2x128xf32>,
    return
  }
  func.func @transform_0(%arg0: i32) -> (i32, i32, i32) {
    %c0_i32 = arith.constant 0 : i32
    %c0_i32_0 = arith.constant 0 : i32
    %c0_i32_1 = arith.constant 0 : i32
    return %arg0, %c0_i32, %c0_i32_0 : i32, i32, i32
  }
  func.func @transform_1(%arg0: i32) -> (i32, i32, i32) {
    %c0_i32 = arith.constant 0 : i32
    %c0_i32_0 = arith.constant 0 : i32
    %c0_i32_1 = arith.constant 0 : i32
    %c0_i32_2 = arith.constant 0 : i32
    return %c0_i32, %c0_i32_0, %c0_i32_1 : i32, i32, i32
  }
  func.func @transform_2(%arg0: i32) -> (i32, i32) {
    %c0_i32 = arith.constant 0 : i32
    %c0_i32_0 = arith.constant 0 : i32
    %c0_i32_1 = arith.constant 0 : i32
    return %c0_i32, %c0_i32_0 : i32, i32
  }
  func.func @transform_3(%arg0: i32) -> (i32, i32, i32) {
    %c0_i32 = arith.constant 0 : i32
    %c0_i32_0 = arith.constant 0 : i32
    %c0_i32_1 = arith.constant 0 : i32
    %c0_i32_2 = arith.constant 0 : i32
    return %c0_i32, %c0_i32_0, %c0_i32_1 : i32, i32, i32
  }
  func.func @transform_4(%arg0: i32) -> (i32, i32) {
    %c0_i32 = arith.constant 0 : i32
    %c0_i32_0 = arith.constant 0 : i32
    %c0_i32_1 = arith.constant 0 : i32
    return %c0_i32, %c0_i32_0 : i32, i32
  }
  func.func @transform_5(%arg0: i32) -> (i32, i32) {
    %c0_i32 = arith.constant 0 : i32
    %c0_i32_0 = arith.constant 0 : i32
    %c0_i32_1 = arith.constant 0 : i32
    return %c0_i32, %c0_i32_0 : i32, i32
  }
  func.func @transform_6(%arg0: i32) -> (i32, i32) {
    %c0_i32 = arith.constant 0 : i32
    %c0_i32_0 = arith.constant 0 : i32
    %c0_i32_1 = arith.constant 0 : i32
    return %c0_i32, %c0_i32_0 : i32, i32
  }
  func.func @transform_7(%arg0: i32) -> (i32, i32) {
    %c0_i32 = arith.constant 0 : i32
    %c0_i32_0 = arith.constant 0 : i32
    %c0_i32_1 = arith.constant 0 : i32
    return %c0_i32, %c0_i32_0 : i32, i32
  }
  func.func @transform_8(%arg0: i32) -> (i32, i32) {
    %c0_i32 = arith.constant 0 : i32
    %c0_i32_0 = arith.constant 0 : i32
    %c0_i32_1 = arith.constant 0 : i32
    return %c0_i32, %c0_i32_0 : i32, i32
  }
  func.func @transform_9(%arg0: i32) -> (i32, i32) {
    %c0_i32 = arith.constant 0 : i32
    %c0_i32_0 = arith.constant 0 : i32
    return %arg0, %c0_i32 : i32, i32
  }
}

</mosaic_0001>

<llo_original>
// kernel: tile.13
$region0: #{tile.13}
  #allocation0 [shape = 's32[1]{0}', space=sflag, size = 0x4, scoped, tag = 'scoped memory for tile.13']
  %s0 = inlined_call_operand.vmem [shape: f32[32], index: 0, kind: input, shape index: {}]
  %s1 = inlined_call_operand.vmem [shape: f32[32,32], index: 1, kind: output, shape index: {}]
  // Predicated region
  $region2: #{tile.13} parent=0 // pred_check
    _
  $region3: #{tile.13} parent=0 // pred_check_branch
    %3 = sbr.rel (0) target = $region5
  $region4: #{tile.13} parent=0 // pred_region
    _
  $region5: #{tile.13} parent=0 // pred_fallthru
    _
  %v4 = vld [vmem:[%s0] ss:$0 sm:$0xff]
  %5 = vst [vmem:[%s1] sm:$0xff] %v4
  %s6 = scalar_lea.vmem %s1, 8
  %7 = vst [vmem:[%s6] sm:$0xff] %v4
  %s8 = scalar_lea.vmem %s1, 16
  %9 = vst [vmem:[%s8] sm:$0xff] %v4
  %s10 = scalar_lea.vmem %s1, 24
  %11 = vst [vmem:[%s10] sm:$0xff] %v4

// kernel: tile.14
$region0: #{tile.14}
  %s0 = inlined_call_operand.vmem [shape: f32[32,32], index: 0, kind: input, shape index: {}]
  %s1 = inlined_call_operand.vmem [shape: f32[1,1024], index: 1, kind: output, shape index: {}]
  $region1: #{tile.14} parent=0
    #allocation0 [shape = 'u8[32768]{0}', space=vmem, size = 0x8000, scoped, tag = 'scoped mem for output reshape']
    %v2 = vld [vmem:[%s0] ss:$4 sm:$0xff]
    %vm3 = vcmask 261120
    %4 = vst.msk [vmem:[#allocation0] ss:$8 sm:$0xf] %vm3, %v2
    %5 = vst.msk [vmem:[#allocation0] ss:$8 sm:$0xf0] %vm3, %v2
    %s6 = scalar_lea.vmem %s0, 3
    %v7 = vld [vmem:[%s6] ss:$4 sm:$0xff]
    %8 = vrot.lane.b32.xlu0 %v7, 96
    %v9 = vpop.permute.xlu0 %8
    %vm10 = vcmask 1048320
    %11 = vst.msk [vmem:[#allocation0] ss:$8 sm:$0xf] %vm10, %v9
    %12 = vst.msk [vmem:[#allocation0] ss:$8 sm:$0xf0] %vm10, %v9
    %s13 = scalar_lea.vmem %s0, 2
    %v14 = vld [vmem:[%s13] ss:$4 sm:$0xff]
    %15 = vrot.lane.b32.xlu0 %v14, 64
    %v16 = vpop.permute.xlu0 %15
    %vm17 = vcmask 785920
    %18 = vst.msk [vmem:[#allocation0] ss:$8 sm:$0xf] %vm17, %v16
    %19 = vst.msk [vmem:[#allocation0] ss:$8 sm:$0xf0] %vm17, %v16
    %s20 = scalar_lea.vmem %s0, 1
    %v21 = vld [vmem:[%s20] ss:$4 sm:$0xff]
    %22 = vrot.lane.b32.xlu0 %v21, 32
    %v23 = vpop.permute.xlu0 %22
    %vm24 = vcmask 523520
    %25 = vst.msk [vmem:[#allocation0] ss:$8 sm:$0xf] %vm24, %v23
    %26 = vst.msk [vmem:[#allocation0] ss:$8 sm:$0xf0] %vm24, %v23
    %s28 = sshll.u32 1, 1
    %s29 = ssub.s32 %s28, 1
    %v31 = vld [vmem:[#allocation0] sm:%s29]
    %s32 = sshll.u32 1, 1
    %s33 = ssub.s32 %s32, 1
    %34 = vst [vmem:[%s1] sm:%s33] %v31
    %s35 = scalar_lea.vmem [#allocation0], 8
    %v36 = vld [vmem:[%s35] sm:%s29]
    %s37 = sshll.u32 1, 1
    %s38 = ssub.s32 %s37, 1
    %s39 = scalar_lea.vmem %s1, 1
    %40 = vst [vmem:[%s39] sm:%s38] %v36
    %s41 = scalar_lea.vmem [#allocation0], 16
    %v42 = vld [vmem:[%s41] sm:%s29]
    %s43 = sshll.u32 1, 1
    %s44 = ssub.s32 %s43, 1
    %s45 = smul.addr 1, 2
    %s46 = scalar_lea.vmem %s1, %s45
    %47 = vst [vmem:[%s46] sm:%s44] %v42
    %s48 = scalar_lea.vmem [#allocation0], 24
    %v49 = vld [vmem:[%s48] sm:%s29]
    %s50 = sshll.u32 1, 1
    %s51 = ssub.s32 %s50, 1
    %s52 = smul.addr 1, 3
    %s53 = scalar_lea.vmem %s1, %s52
    %54 = vst [vmem:[%s53] sm:%s51] %v49
    %s55 = scalar_lea.vmem [#allocation0], 32
    %v56 = vld [vmem:[%s55] sm:%s29]
    %s57 = sshll.u32 1, 1
    %s58 = ssub.s32 %s57, 1
    %s59 = smul.addr 1, 4
    %s60 = scalar_lea.vmem %s1, %s59
    %61 = vst [vmem:[%s60] sm:%s58] %v56
    %s62 = scalar_lea.vmem [#allocation0], 40
    %v63 = vld [vmem:[%s62] sm:%s29]
    %s64 = sshll.u32 1, 1
    %s65 = ssub.s32 %s64, 1
    %s66 = smul.addr 1, 5
    %s67 = scalar_lea.vmem %s1, %s66
    %68 = vst [vmem:[%s67] sm:%s65] %v63
    %s69 = scalar_lea.vmem [#allocation0], 48
    %v70 = vld [vmem:[%s69] sm:%s29]
    %s71 = sshll.u32 1, 1
    %s72 = ssub.s32 %s71, 1
    %s73 = smul.addr 1, 6
    %s74 = scalar_lea.vmem %s1, %s73
    %75 = vst [vmem:[%s74] sm:%s72] %v70
    %s76 = scalar_lea.vmem [#allocation0], 56
    %v77 = vld [vmem:[%s76] sm:%s29]
    %s78 = sshll.u32 1, 1
    %s79 = ssub.s32 %s78, 1
    %s80 = smul.addr 1, 7
    %s81 = scalar_lea.vmem %s1, %s80
    %82 = vst [vmem:[%s81] sm:%s79] %v77

// kernel: tile.18
$region0: #{tile.18}
  #allocation0 [shape = 's32[1]{0}', space=sflag, size = 0x4, scoped, tag = 'scoped memory for tile.18']
  %s0 = inlined_call_operand.vmem [shape: f32[64], index: 0, kind: input, shape index: {}]
  %s1 = inlined_call_operand.vmem [shape: f32[16,64], index: 1, kind: output, shape index: {}]
  // Predicated region
  $region2: #{tile.18} parent=0 // pred_check
    _
  $region3: #{tile.18} parent=0 // pred_check_branch
    %3 = sbr.rel (0) target = $region5
  $region4: #{tile.18} parent=0 // pred_region
    _
  $region5: #{tile.18} parent=0 // pred_fallthru
    _
  %v4 = vld [vmem:[%s0] ss:$0 sm:$0xff]
  %5 = vst [vmem:[%s1] sm:$0xff] %v4
  %s6 = scalar_lea.vmem %s1, 8
  %7 = vst [vmem:[%s6] sm:$0xff] %v4

// kernel: tile.19
$region0: #{tile.19}
  %s0 = inlined_call_operand.vmem [shape: f32[16,64], index: 0, kind: input, shape index: {}]
  %s1 = inlined_call_operand.vmem [shape: f32[1,1024], index: 1, kind: output, shape index: {}]
  $region1: #{tile.19} parent=0
    #allocation0 [shape = 'u8[32768]{0}', space=vmem, size = 0x8000, scoped, tag = 'scoped mem for output reshape']
    %v2 = vld [vmem:[%s0] ss:$2 sm:$0xff]
    %vm3 = vcmask 523264
    %4 = vst.msk [vmem:[#allocation0] ss:$8 sm:$0xf] %vm3, %v2
    %5 = vst.msk [vmem:[#allocation0] ss:$8 sm:$0xf0] %vm3, %v2
    %s6 = scalar_lea.vmem %s0, 1
    %v7 = vld [vmem:[%s6] ss:$2 sm:$0xff]
    %8 = vrot.lane.b32.xlu0 %v7, 64
    %v9 = vpop.permute.xlu0 %8
    %vm10 = vcmask 1048064
    %11 = vst.msk [vmem:[#allocation0] ss:$8 sm:$0xf] %vm10, %v9
    %12 = vst.msk [vmem:[#allocation0] ss:$8 sm:$0xf0] %vm10, %v9
    %s14 = sshll.u32 1, 1
    %s15 = ssub.s32 %s14, 1
    %v17 = vld [vmem:[#allocation0] sm:%s15]
    %s18 = sshll.u32 1, 1
    %s19 = ssub.s32 %s18, 1
    %20 = vst [vmem:[%s1] sm:%s19] %v17
    %s21 = scalar_lea.vmem [#allocation0], 8
    %v22 = vld [vmem:[%s21] sm:%s15]
    %s23 = sshll.u32 1, 1
    %s24 = ssub.s32 %s23, 1
    %s25 = scalar_lea.vmem %s1, 1
    %26 = vst [vmem:[%s25] sm:%s24] %v22
    %s27 = scalar_lea.vmem [#allocation0], 16
    %v28 = vld [vmem:[%s27] sm:%s15]
    %s29 = sshll.u32 1, 1
    %s30 = ssub.s32 %s29, 1
    %s31 = smul.addr 1, 2
    %s32 = scalar_lea.vmem %s1, %s31
    %33 = vst [vmem:[%s32] sm:%s30] %v28
    %s34 = scalar_lea.vmem [#allocation0], 24
    %v35 = vld [vmem:[%s34] sm:%s15]
    %s36 = sshll.u32 1, 1
    %s37 = ssub.s32 %s36, 1
    %s38 = smul.addr 1, 3
    %s39 = scalar_lea.vmem %s1, %s38
    %40 = vst [vmem:[%s39] sm:%s37] %v35
    %s41 = scalar_lea.vmem [#allocation0], 32
    %v42 = vld [vmem:[%s41] sm:%s15]
    %s43 = sshll.u32 1, 1
    %s44 = ssub.s32 %s43, 1
    %s45 = smul.addr 1, 4
    %s46 = scalar_lea.vmem %s1, %s45
    %47 = vst [vmem:[%s46] sm:%s44] %v42
    %s48 = scalar_lea.vmem [#allocation0], 40
    %v49 = vld [vmem:[%s48] sm:%s15]
    %s50 = sshll.u32 1, 1
    %s51 = ssub.s32 %s50, 1
    %s52 = smul.addr 1, 5
    %s53 = scalar_lea.vmem %s1, %s52
    %54 = vst [vmem:[%s53] sm:%s51] %v49
    %s55 = scalar_lea.vmem [#allocation0], 48
    %v56 = vld [vmem:[%s55] sm:%s15]
    %s57 = sshll.u32 1, 1
    %s58 = ssub.s32 %s57, 1
    %s59 = smul.addr 1, 6
    %s60 = scalar_lea.vmem %s1, %s59
    %61 = vst [vmem:[%s60] sm:%s58] %v56
    %s62 = scalar_lea.vmem [#allocation0], 56
    %v63 = vld [vmem:[%s62] sm:%s15]
    %s64 = sshll.u32 1, 1
    %s65 = ssub.s32 %s64, 1
    %s66 = smul.addr 1, 7
    %s67 = scalar_lea.vmem %s1, %s66
    %68 = vst [vmem:[%s67] sm:%s65] %v63

// kernel: simple_cnn_forward.1
$region0: #{simple_cnn_forward.1}
  #allocation0 [shape = 'u32[]', space=smem, size = 0x4, offset = 0x4, fixed_abs, tag = 'smem constant byte address 0x4 - core index']
  #allocation1 [shape = 'u32[144,128]{1,0:T(1,128)}', space=vmem, size = 0x12000, scoped, tag = 'internal scratch']
  #allocation2 [shape = 'f32[2,34,96]{2,1,0:T(8,128)}', space=vmem, size = 0xa000, scoped, tag = 'scratch operand']
  #allocation3 [shape = 'f32[2,18,512]{2,1,0:T(8,128)}', space=vmem, size = 0x18000, scoped, tag = 'scratch operand']
  #allocation4 [shape = 'f32[2,4096]{1,0:T(2,128)}', space=vmem, size = 0x8000, scoped, tag = 'scratch operand']
  %s0 = inlined_call_operand.vmem [shape: f32[2,32,96], index: 0, kind: input, shape index: {}]
  %s1 = inlined_call_operand.vmem [shape: bf16[3,96,1024], index: 1, kind: input, shape index: {}]
  %s2 = inlined_call_operand.vmem [shape: f32[1,1024], index: 2, kind: input, shape index: {}]
  %s3 = inlined_call_operand.vmem [shape: bf16[3,512,1024], index: 3, kind: input, shape index: {}]
  %s4 = inlined_call_operand.vmem [shape: f32[1,1024], index: 4, kind: input, shape index: {}]
  %s5 = inlined_call_operand.vmem [shape: bf16[4096,128], index: 5, kind: input, shape index: {}]
  %s6 = inlined_call_operand.vmem [shape: f32[1,128], index: 6, kind: input, shape index: {}]
  %s7 = inlined_call_operand.vmem [shape: bf16[128,128], index: 7, kind: input, shape index: {}]
  %s8 = inlined_call_operand.vmem [shape: f32[1,128], index: 8, kind: input, shape index: {}]
  %s9 = inlined_call_operand.hbm [shape: f32[2,128], index: 9, kind: output, shape index: {}]
  %s10 = sld [smem:[#allocation0]]
  $region46: #{simple_cnn_forward.1} parent=0
    _
  %s12 = ssub.s32 1, %s10
  %s13 = scalar_select 0, %s12, %s10
  $region1: #{simple_cnn_forward.1} parent=0
    #allocation5 [shape = 'u8[1024]{0}', space=vmem, size = 0x400, scoped, tag = 'output window, operand 0, single buffered']
    #allocation6 [shape = 's32[1]{0}', space=sflag, size = 0x4, scoped, tag = 'scoped memory for simple_cnn_forward.1']
    %14 = vsyncpa [#allocation6], 0
    // Predicated region
    $region2: #{simple_cnn_forward.1} parent=1 // pred_check
      _
    $region3: #{simple_cnn_forward.1} parent=1 // pred_check_branch
      %16 = sbr.rel (0) target = $region5
    $region4: #{simple_cnn_forward.1} parent=1 // pred_region
      _
    $region5: #{simple_cnn_forward.1} parent=1 // pred_fallthru
      _
    // Predicated region
    $region6: #{simple_cnn_forward.1} parent=1 // pred_check
      _
    $region7: #{simple_cnn_forward.1} parent=1 // pred_check_branch
      %18 = sbr.rel (0) target = $region9
    $region8: #{simple_cnn_forward.1} parent=1 // pred_region
      _
    $region9: #{simple_cnn_forward.1} parent=1 // pred_fallthru
      _
    // Predicated region
    $region10: #{simple_cnn_forward.1} parent=1 // pred_check
      _
    $region11: #{simple_cnn_forward.1} parent=1 // pred_check_branch
      %20 = sbr.rel (0) target = $region13
    $region12: #{simple_cnn_forward.1} parent=1 // pred_region
      _
    $region13: #{simple_cnn_forward.1} parent=1 // pred_fallthru
      _
    // Predicated region
    $region14: #{simple_cnn_forward.1} parent=1 // pred_check
      _
    $region15: #{simple_cnn_forward.1} parent=1 // pred_check_branch
      %22 = sbr.rel (0) target = $region17
    $region16: #{simple_cnn_forward.1} parent=1 // pred_region
      _
    $region17: #{simple_cnn_forward.1} parent=1 // pred_fallthru
      _
    // Predicated region
    $region18: #{simple_cnn_forward.1} parent=1 // pred_check
      _
    $region19: #{simple_cnn_forward.1} parent=1 // pred_check_branch
      %24 = sbr.rel (0) target = $region21
    $region20: #{simple_cnn_forward.1} parent=1 // pred_region
      _
    $region21: #{simple_cnn_forward.1} parent=1 // pred_fallthru
      _
    // Predicated region
    $region22: #{simple_cnn_forward.1} parent=1 // pred_check
      _
    $region23: #{simple_cnn_forward.1} parent=1 // pred_check_branch
      %26 = sbr.rel (0) target = $region25
    $region24: #{simple_cnn_forward.1} parent=1 // pred_region
      _
    $region25: #{simple_cnn_forward.1} parent=1 // pred_fallthru
      _
    // Predicated region
    $region26: #{simple_cnn_forward.1} parent=1 // pred_check
      _
    $region27: #{simple_cnn_forward.1} parent=1 // pred_check_branch
      %28 = sbr.rel (0) target = $region29
    $region28: #{simple_cnn_forward.1} parent=1 // pred_region
      _
    $region29: #{simple_cnn_forward.1} parent=1 // pred_fallthru
      _
    // Predicated region
    $region30: #{simple_cnn_forward.1} parent=1 // pred_check
      _
    $region31: #{simple_cnn_forward.1} parent=1 // pred_check_branch
      %30 = sbr.rel (0) target = $region33
    $region32: #{simple_cnn_forward.1} parent=1 // pred_region
      _
    $region33: #{simple_cnn_forward.1} parent=1 // pred_fallthru
      _
    // Predicated region
    $region34: #{simple_cnn_forward.1} parent=1 // pred_check
      _
    $region35: #{simple_cnn_forward.1} parent=1 // pred_check_branch
      %32 = sbr.rel (0) target = $region37
    $region36: #{simple_cnn_forward.1} parent=1 // pred_region
      _
    $region37: #{simple_cnn_forward.1} parent=1 // pred_fallthru
      _
    %vm34 = vcmask 778240
    %35 = vst.msk [vmem:[#allocation2] sm:$0x1] %vm34, 0.0
    %36 = vst.msk [vmem:[#allocation2 + $0x28] sm:$0x1] %vm34, 0.0
    %37 = vst.msk [vmem:[#allocation2 + $0x21] sm:$0x1] %vm34, 0.0
    %38 = vst.msk [vmem:[#allocation2 + $0x49] sm:$0x1] %vm34, 0.0
    %v39 = vld [vmem:[%s0] sm:$0xff]
    %v40 = vld [vmem:[%s0 + $0x8] sm:$0xff]
    %v41 = vld [vmem:[%s0 + $0x10] sm:$0xff]
    %v42 = vld [vmem:[%s0 + $0x18] sm:$0xff]
    %v43 = vld [vmem:[%s0 + $0x20] sm:$0xff]
    %v44 = vld [vmem:[%s0 + $0x28] sm:$0xff]
    %v45 = vld [vmem:[%s0 + $0x30] sm:$0xff]
    %v46 = vld [vmem:[%s0 + $0x38] sm:$0xff]
    %vm47 = vcmask 785408
    %48 = vst.msk [vmem:[#allocation2 + $0x1] sm:$0xff] %vm47, %v39
    %49 = vst.msk [vmem:[#allocation2 + $0x9] sm:$0xff] %vm47, %v40
    %50 = vst.msk [vmem:[#allocation2 + $0x11] sm:$0xff] %vm47, %v41
    %51 = vst.msk [vmem:[#allocation2 + $0x19] sm:$0xff] %vm47, %v42
    %52 = vst.msk [vmem:[#allocation2 + $0x29] sm:$0xff] %vm47, %v43
    %53 = vst.msk [vmem:[#allocation2 + $0x31] sm:$0xff] %vm47, %v44
    %54 = vst.msk [vmem:[#allocation2 + $0x39] sm:$0xff] %vm47, %v45
    %55 = vst.msk [vmem:[#allocation2 + $0x41] sm:$0xff] %vm47, %v46
    %v56 = vld [vmem:[#allocation2] sm:$0xff]
    %v57 = vld [vmem:[#allocation2 + $0x8] sm:$0xff]
    %v58 = vld [vmem:[#allocation2 + $0x10] sm:$0xff]
    %v59 = vld [vmem:[#allocation2 + $0x18] sm:$0xff]
    %v60 = vld [vmem:[#allocation2 + $0x28] sm:$0xff]
    %v61 = vld [vmem:[#allocation2 + $0x30] sm:$0xff]
    %v62 = vld [vmem:[#allocation2 + $0x38] sm:$0xff]
    %v63 = vld [vmem:[#allocation2 + $0x40] sm:$0xff]
    %v64 = vld [vmem:[%s1] sm:$0xff]
    %v65 = vld [vmem:[%s1 + $0x8] sm:$0xff]
    %v66 = vld [vmem:[%s1 + $0x10] sm:$0xff]
    %v67 = vld [vmem:[%s1 + $0x18] sm:$0xff]
    %v68 = vld [vmem:[%s1 + $0x20] sm:$0xff]
    %v69 = vld [vmem:[%s1 + $0x28] sm:$0xff]
    %v70 = vld [vmem:[%s1 + $0x30] sm:$0xff]
    %v71 = vld [vmem:[%s1 + $0x38] sm:$0xff]
    %v72 = vld [vmem:[%s1 + $0x40] sm:$0xff]
    %v73 = vld [vmem:[%s1 + $0x48] sm:$0xff]
    %v74 = vld [vmem:[%s1 + $0x50] sm:$0xff]
    %v75 = vld [vmem:[%s1 + $0x58] sm:$0xff]
    %v76 = vld [vmem:[%s1 + $0x60] sm:$0xff]
    %v77 = vld [vmem:[%s1 + $0x68] sm:$0xff]
    %v78 = vld [vmem:[%s1 + $0x70] sm:$0xff]
    %v79 = vld [vmem:[%s1 + $0x78] sm:$0xff]
    %v80 = vld [vmem:[%s1 + $0x80] sm:$0xff]
    %v81 = vld [vmem:[%s1 + $0x88] sm:$0xff]
    %v82 = vld [vmem:[%s1 + $0x90] sm:$0xff]
    %v83 = vld [vmem:[%s1 + $0x98] sm:$0xff]
    %v84 = vld [vmem:[%s1 + $0xa0] sm:$0xff]
    %v85 = vld [vmem:[%s1 + $0xa8] sm:$0xff]
    %v86 = vld [vmem:[%s1 + $0xb0] sm:$0xff]
    %v87 = vld [vmem:[%s1 + $0xb8] sm:$0xff]
    %v88 = vld [vmem:[%s1 + $0xc0] sm:$0xff]
    %v89 = vld [vmem:[%s1 + $0xc8] sm:$0xff]
    %v90 = vld [vmem:[%s1 + $0xd0] sm:$0xff]
    %v91 = vld [vmem:[%s1 + $0xd8] sm:$0xff]
    %v92 = vld [vmem:[%s1 + $0xe0] sm:$0xff]
    %v93 = vld [vmem:[%s1 + $0xe8] sm:$0xff]
    %v94 = vld [vmem:[%s1 + $0xf0] sm:$0xff]
    %v95 = vld [vmem:[%s1 + $0xf8] sm:$0xff]
    %v96 = vld [vmem:[%s1 + $0x100] sm:$0xff]
    %v97 = vld [vmem:[%s1 + $0x108] sm:$0xff]
    %v98 = vld [vmem:[%s1 + $0x110] sm:$0xff]
    %v99 = vld [vmem:[%s1 + $0x118] sm:$0xff]
    %v100 = vld [vmem:[%s1 + $0x120] sm:$0xff]
    %v101 = vld [vmem:[%s1 + $0x128] sm:$0xff]
    %v102 = vld [vmem:[%s1 + $0x130] sm:$0xff]
    %v103 = vld [vmem:[%s1 + $0x138] sm:$0xff]
    %v104 = vld [vmem:[%s1 + $0x140] sm:$0xff]
    %v105 = vld [vmem:[%s1 + $0x148] sm:$0xff]
    %v106 = vld [vmem:[%s1 + $0x150] sm:$0xff]
    %v107 = vld [vmem:[%s1 + $0x158] sm:$0xff]
    %v108 = vld [vmem:[%s1 + $0x160] sm:$0xff]
    %v109 = vld [vmem:[%s1 + $0x168] sm:$0xff]
    %v110 = vld [vmem:[%s1 + $0x170] sm:$0xff]
    %v111 = vld [vmem:[%s1 + $0x178] sm:$0xff]
    %v112 = vpack.c.bf16 %v57, %v56
    %v113 = vpack.c.bf16 %v59, %v58
    %v114 = vpack.c.bf16 %v61, %v60
    %v115 = vpack.c.bf16 %v63, %v62
    %v116 = vld [vmem:[#allocation2 + $0x1] sm:$0xff]
    %v117 = vld [vmem:[#allocation2 + $0x9] sm:$0xff]
    %v118 = vld [vmem:[#allocation2 + $0x11] sm:$0xff]
    %v119 = vld [vmem:[#allocation2 + $0x19] sm:$0xff]
    %v120 = vld [vmem:[#allocation2 + $0x29] sm:$0xff]
    %v121 = vld [vmem:[#allocation2 + $0x31] sm:$0xff]
    %v122 = vld [vmem:[#allocation2 + $0x39] sm:$0xff]
    %v123 = vld [vmem:[#allocation2 + $0x41] sm:$0xff]
    %s124 = scalar_lea.vmem %s1, 384
    %v125 = vld [vmem:[%s124] sm:$0xff]
    %v126 = vld [vmem:[%s124 + $0x8] sm:$0xff]
    %v127 = vld [vmem:[%s124 + $0x10] sm:$0xff]
    %v128 = vld [vmem:[%s124 + $0x18] sm:$0xff]
    %v129 = vld [vmem:[%s124 + $0x20] sm:$0xff]
    %v130 = vld [vmem:[%s124 + $0x28] sm:$0xff]
    %v131 = vld [vmem:[%s124 + $0x30] sm:$0xff]
    %v132 = vld [vmem:[%s124 + $0x38] sm:$0xff]
    %v133 = vld [vmem:[%s124 + $0x40] sm:$0xff]
    %v134 = vld [vmem:[%s124 + $0x48] sm:$0xff]
    %v135 = vld [vmem:[%s124 + $0x50] sm:$0xff]
    %v136 = vld [vmem:[%s124 + $0x58] sm:$0xff]
    %v137 = vld [vmem:[%s124 + $0x60] sm:$0xff]
    %v138 = vld [vmem:[%s124 + $0x68] sm:$0xff]
    %v139 = vld [vmem:[%s124 + $0x70] sm:$0xff]
    %v140 = vld [vmem:[%s124 + $0x78] sm:$0xff]
    %v141 = vld [vmem:[%s124 + $0x80] sm:$0xff]
    %v142 = vld [vmem:[%s124 + $0x88] sm:$0xff]
    %v143 = vld [vmem:[%s124 + $0x90] sm:$0xff]
    %v144 = vld [vmem:[%s124 + $0x98] sm:$0xff]
    %v145 = vld [vmem:[%s124 + $0xa0] sm:$0xff]
    %v146 = vld [vmem:[%s124 + $0xa8] sm:$0xff]
    %v147 = vld [vmem:[%s124 + $0xb0] sm:$0xff]
    %v148 = vld [vmem:[%s124 + $0xb8] sm:$0xff]
    %v149 = vld [vmem:[%s124 + $0xc0] sm:$0xff]
    %v150 = vld [vmem:[%s124 + $0xc8] sm:$0xff]
    %v151 = vld [vmem:[%s124 + $0xd0] sm:$0xff]
    %v152 = vld [vmem:[%s124 + $0xd8] sm:$0xff]
    %v153 = vld [vmem:[%s124 + $0xe0] sm:$0xff]
    %v154 = vld [vmem:[%s124 + $0xe8] sm:$0xff]
    %v155 = vld [vmem:[%s124 + $0xf0] sm:$0xff]
    %v156 = vld [vmem:[%s124 + $0xf8] sm:$0xff]
    %v157 = vld [vmem:[%s124 + $0x100] sm:$0xff]
    %v158 = vld [vmem:[%s124 + $0x108] sm:$0xff]
    %v159 = vld [vmem:[%s124 + $0x110] sm:$0xff]
    %v160 = vld [vmem:[%s124 + $0x118] sm:$0xff]
    %v161 = vld [vmem:[%s124 + $0x120] sm:$0xff]
    %v162 = vld [vmem:[%s124 + $0x128] sm:$0xff]
    %v163 = vld [vmem:[%s124 + $0x130] sm:$0xff]
    %v164 = vld [vmem:[%s124 + $0x138] sm:$0xff]
    %v165 = vld [vmem:[%s124 + $0x140] sm:$0xff]
    %v166 = vld [vmem:[%s124 + $0x148] sm:$0xff]
    %v167 = vld [vmem:[%s124 + $0x150] sm:$0xff]
    %v168 = vld [vmem:[%s124 + $0x158] sm:$0xff]
    %v169 = vld [vmem:[%s124 + $0x160] sm:$0xff]
    %v170 = vld [vmem:[%s124 + $0x168] sm:$0xff]
    %v171 = vld [vmem:[%s124 + $0x170] sm:$0xff]
    %v172 = vld [vmem:[%s124 + $0x178] sm:$0xff]
    %v173 = vpack.c.bf16 %v117, %v116
    %v174 = vpack.c.bf16 %v119, %v118
    %v175 = vpack.c.bf16 %v121, %v120
    %v176 = vpack.c.bf16 %v123, %v122
    %v225 = vunpack.c.l.b16 %v125
    %v226 = vunpack.c.h.b16 %v125
    %v227 = vunpack.c.l.b16 %v126
    %v228 = vunpack.c.h.b16 %v126
    %v229 = vunpack.c.l.b16 %v127
    %v230 = vunpack.c.h.b16 %v127
    %v231 = vunpack.c.l.b16 %v128
    %v232 = vunpack.c.h.b16 %v128
    %v233 = vunpack.c.l.b16 %v129
    %v234 = vunpack.c.h.b16 %v129
    %v235 = vunpack.c.l.b16 %v130
    %v236 = vunpack.c.h.b16 %v130
    %v237 = vunpack.c.l.b16 %v131
    %v238 = vunpack.c.h.b16 %v131
    %v239 = vunpack.c.l.b16 %v132
    %v240 = vunpack.c.h.b16 %v132
    %v241 = vunpack.c.l.b16 %v133
    %v242 = vunpack.c.h.b16 %v133
    %v243 = vunpack.c.l.b16 %v134
    %v244 = vunpack.c.h.b16 %v134
    %v245 = vunpack.c.l.b16 %v135
    %v246 = vunpack.c.h.b16 %v135
    %v247 = vunpack.c.l.b16 %v136
    %v248 = vunpack.c.h.b16 %v136
    %v249 = vunpack.c.l.b16 %v137
    %v250 = vunpack.c.h.b16 %v137
    %v251 = vunpack.c.l.b16 %v138
    %v252 = vunpack.c.h.b16 %v138
    %v253 = vunpack.c.l.b16 %v139
    %v254 = vunpack.c.h.b16 %v139
    %v255 = vunpack.c.l.b16 %v140
    %v256 = vunpack.c.h.b16 %v140
    %v257 = vunpack.c.l.b16 %v141
    %v258 = vunpack.c.h.b16 %v141
    %v259 = vunpack.c.l.b16 %v142
    %v260 = vunpack.c.h.b16 %v142
    %v261 = vunpack.c.l.b16 %v143
    %v262 = vunpack.c.h.b16 %v143
    %v263 = vunpack.c.l.b16 %v144
    %v264 = vunpack.c.h.b16 %v144
    %v265 = vunpack.c.l.b16 %v145
    %v266 = vunpack.c.h.b16 %v145
    %v267 = vunpack.c.l.b16 %v146
    %v268 = vunpack.c.h.b16 %v146
    %v269 = vunpack.c.l.b16 %v147
    %v270 = vunpack.c.h.b16 %v147
    %v271 = vunpack.c.l.b16 %v148
    %v272 = vunpack.c.h.b16 %v148
    %v273 = vunpack.c.l.b16 %v149
    %v274 = vunpack.c.h.b16 %v149
    %v275 = vunpack.c.l.b16 %v150
    %v276 = vunpack.c.h.b16 %v150
    %v277 = vunpack.c.l.b16 %v151
    %v278 = vunpack.c.h.b16 %v151
    %v279 = vunpack.c.l.b16 %v152
    %v280 = vunpack.c.h.b16 %v152
    %v281 = vunpack.c.l.b16 %v153
    %v282 = vunpack.c.h.b16 %v153
    %v283 = vunpack.c.l.b16 %v154
    %v284 = vunpack.c.h.b16 %v154
    %v285 = vunpack.c.l.b16 %v155
    %v286 = vunpack.c.h.b16 %v155
    %v287 = vunpack.c.l.b16 %v156
    %v288 = vunpack.c.h.b16 %v156
    %v289 = vunpack.c.l.b16 %v157
    %v290 = vunpack.c.h.b16 %v157
    %v291 = vunpack.c.l.b16 %v158
    %v292 = vunpack.c.h.b16 %v158
    %v293 = vunpack.c.l.b16 %v159
    %v294 = vunpack.c.h.b16 %v159
    %v295 = vunpack.c.l.b16 %v160
    %v296 = vunpack.c.h.b16 %v160
    %v297 = vunpack.c.l.b16 %v161
    %v298 = vunpack.c.h.b16 %v161
    %v299 = vunpack.c.l.b16 %v162
    %v300 = vunpack.c.h.b16 %v162
    %v301 = vunpack.c.l.b16 %v163
    %v302 = vunpack.c.h.b16 %v163
    %v303 = vunpack.c.l.b16 %v164
    %v304 = vunpack.c.h.b16 %v164
    %v305 = vunpack.c.l.b16 %v165
    %v306 = vunpack.c.h.b16 %v165
    %v307 = vunpack.c.l.b16 %v166
    %v308 = vunpack.c.h.b16 %v166
    %v309 = vunpack.c.l.b16 %v167
    %v310 = vunpack.c.h.b16 %v167
    %v311 = vunpack.c.l.b16 %v168
    %v312 = vunpack.c.h.b16 %v168
    %v313 = vunpack.c.l.b16 %v169
    %v314 = vunpack.c.h.b16 %v169
    %v315 = vunpack.c.l.b16 %v170
    %v316 = vunpack.c.h.b16 %v170
    %v317 = vunpack.c.l.b16 %v171
    %v318 = vunpack.c.h.b16 %v171
    %v319 = vunpack.c.l.b16 %v172
    %v320 = vunpack.c.h.b16 %v172
    %v321 = vpack.c.b16 %v233, %v225
    %v322 = vpack.c.b16 %v234, %v226
    %v323 = vpack.c.b16 %v235, %v227
    %v324 = vpack.c.b16 %v236, %v228
    %v325 = vpack.c.b16 %v237, %v229
    %v326 = vpack.c.b16 %v238, %v230
    %v327 = vpack.c.b16 %v239, %v231
    %v328 = vpack.c.b16 %v240, %v232
    %v329 = vpack.c.b16 %v249, %v241
    %v330 = vpack.c.b16 %v250, %v242
    %v331 = vpack.c.b16 %v251, %v243
    %v332 = vpack.c.b16 %v252, %v244
    %v333 = vpack.c.b16 %v253, %v245
    %v334 = vpack.c.b16 %v254, %v246
    %v335 = vpack.c.b16 %v255, %v247
    %v336 = vpack.c.b16 %v256, %v248
    %v337 = vpack.c.b16 %v265, %v257
    %v338 = vpack.c.b16 %v266, %v258
    %v339 = vpack.c.b16 %v267, %v259
    %v340 = vpack.c.b16 %v268, %v260
    %v341 = vpack.c.b16 %v269, %v261
    %v342 = vpack.c.b16 %v270, %v262
    %v343 = vpack.c.b16 %v271, %v263
    %v344 = vpack.c.b16 %v272, %v264
    %v345 = vpack.c.b16 %v281, %v273
    %v346 = vpack.c.b16 %v282, %v274
    %v347 = vpack.c.b16 %v283, %v275
    %v348 = vpack.c.b16 %v284, %v276
    %v349 = vpack.c.b16 %v285, %v277
    %v350 = vpack.c.b16 %v286, %v278
    %v351 = vpack.c.b16 %v287, %v279
    %v352 = vpack.c.b16 %v288, %v280
    %v353 = vpack.c.b16 %v297, %v289
    %v354 = vpack.c.b16 %v298, %v290
    %v355 = vpack.c.b16 %v299, %v291
    %v356 = vpack.c.b16 %v300, %v292
    %v357 = vpack.c.b16 %v301, %v293
    %v358 = vpack.c.b16 %v302, %v294
    %v359 = vpack.c.b16 %v303, %v295
    %v360 = vpack.c.b16 %v304, %v296
    %v361 = vpack.c.b16 %v313, %v305
    %v362 = vpack.c.b16 %v314, %v306
    %v363 = vpack.c.b16 %v315, %v307
    %v364 = vpack.c.b16 %v316, %v308
    %v365 = vpack.c.b16 %v317, %v309
    %v366 = vpack.c.b16 %v318, %v310
    %v367 = vpack.c.b16 %v319, %v311
    %v368 = vpack.c.b16 %v320, %v312
    %v418 = vsel %vm47, %v173, 0
    %v421 = vsel %vm47, %v174, 0
    %v424 = vsel %vm47, %v175, 0
    %v427 = vsel %vm47, %v176, 0
    %429 = vmatprep.subr.bf16.mxu0 0
    %430 = vmatpush1.bf16.msra.mxu0 0
    %431 = vmatprep.subr.bf16.mxu0 0
    %432 = vmatpush1.bf16.msra.mxu0 0
    %433 = vmatprep.subr.bf16.mxu0 %v362
    %434 = vmatpush1.bf16.msra.mxu0 %v361
    %435 = vmatprep.subr.bf16.mxu0 %v354
    %436 = vmatpush1.bf16.msra.mxu0 %v353
    %437 = vmatprep.subr.bf16.mxu0 %v346
    %438 = vmatpush1.bf16.msra.mxu0 %v345
    %439 = vmatprep.subr.bf16.mxu0 %v338
    %440 = vmatpush1.bf16.msra.mxu0 %v337
    %441 = vmatprep.subr.bf16.mxu0 %v330
    %442 = vmatpush1.bf16.msra.mxu0 %v329
    %443 = vmatprep.subr.bf16.mxu0 %v322
    %444 = vmatpush1.bf16.msra.mxu0 %v321
    %445 = vmatprep.subr.bf16.mxu0 0
    %446 = vmatpush2.bf16.msra.mxu0 0
    %447 = vmatprep.subr.bf16.mxu0 0
    %448 = vmatpush2.bf16.msra.mxu0 0
    %449 = vmatprep.subr.bf16.mxu0 0
    %450 = vmatpush2.bf16.msra.mxu0 0
    %451 = vmatprep.subr.bf16.mxu0 0
    %452 = vmatpush2.bf16.msra.mxu0 0
    %453 = vmatprep.subr.bf16.mxu0 0
    %454 = vmatpush2.bf16.msra.mxu0 0
    %455 = vmatprep.subr.bf16.mxu0 0
    %456 = vmatpush2.bf16.msra.mxu0 0
    %457 = vmatprep.subr.bf16.mxu0 0
    %458 = vmatpush2.bf16.msra.mxu0 0
    %459 = vmatprep.subr.bf16.mxu0 0
    %460 = vmatpush2.bf16.msra.mxu0 0
    %461 = vmatprep.mubr.bf16.mxu0 0
    %462 = vmatmul.mubr.bf16.gmra.mxu0 %v418
    %v463 = vpop.f32.mrf.mxu0
    %v464 = vadd.f32 0.0, %v463
    %v465 = vpop.f32.mrf.mxu0
    %v466 = vadd.f32 0.0, %v465
    %v467 = vpop.f32.mrf.mxu0
    %v468 = vadd.f32 0.0, %v467
    %v469 = vpop.f32.mrf.mxu0
    %v470 = vadd.f32 0.0, %v469
    %471 = vmatprep.mubr.bf16.mxu0 0
    %472 = vmatmul.mubr.bf16.gmra.mxu0 %v421
    %v473 = vpop.f32.mrf.mxu0
    %v474 = vadd.f32 0.0, %v473
    %v475 = vpop.f32.mrf.mxu0
    %v476 = vadd.f32 0.0, %v475
    %v477 = vpop.f32.mrf.mxu0
    %v478 = vadd.f32 0.0, %v477
    %v479 = vpop.f32.mrf.mxu0
    %v480 = vadd.f32 0.0, %v479
    %481 = vmatprep.mubr.bf16.mxu0 0
    %482 = vmatmul.mubr.bf16.gmra.mxu0 %v424
    %v483 = vpop.f32.mrf.mxu0
    %v484 = vadd.f32 0.0, %v483
    %v485 = vpop.f32.mrf.mxu0
    %v486 = vadd.f32 0.0, %v485
    %v487 = vpop.f32.mrf.mxu0
    %v488 = vadd.f32 0.0, %v487
    %v489 = vpop.f32.mrf.mxu0
    %v490 = vadd.f32 0.0, %v489
    %491 = vmatprep.mubr.bf16.mxu0 0
    %492 = vmatmul.mubr.bf16.gmra.mxu0 %v427
    %v493 = vpop.f32.mrf.mxu0
    %v494 = vadd.f32 0.0, %v493
    %v495 = vpop.f32.mrf.mxu0
    %v496 = vadd.f32 0.0, %v495
    %v497 = vpop.f32.mrf.mxu0
    %v498 = vadd.f32 0.0, %v497
    %v499 = vpop.f32.mrf.mxu0
    %v500 = vadd.f32 0.0, %v499
    %501 = vdwg.mxu0
    %502 = vmatprep.subr.bf16.mxu0 0
    %503 = vmatpush1.bf16.msra.mxu0 0
    %504 = vmatprep.subr.bf16.mxu0 0
    %505 = vmatpush1.bf16.msra.mxu0 0
    %506 = vmatprep.subr.bf16.mxu0 %v364
    %507 = vmatpush1.bf16.msra.mxu0 %v363
    %508 = vmatprep.subr.bf16.mxu0 %v356
    %509 = vmatpush1.bf16.msra.mxu0 %v355
    %510 = vmatprep.subr.bf16.mxu0 %v348
    %511 = vmatpush1.bf16.msra.mxu0 %v347
    %512 = vmatprep.subr.bf16.mxu0 %v340
    %513 = vmatpush1.bf16.msra.mxu0 %v339
    %514 = vmatprep.subr.bf16.mxu0 %v332
    %515 = vmatpush1.bf16.msra.mxu0 %v331
    %516 = vmatprep.subr.bf16.mxu0 %v324
    %517 = vmatpush1.bf16.msra.mxu0 %v323
    %518 = vmatprep.subr.bf16.mxu0 0
    %519 = vmatpush2.bf16.msra.mxu0 0
    %520 = vmatprep.subr.bf16.mxu0 0
    %521 = vmatpush2.bf16.msra.mxu0 0
    %522 = vmatprep.subr.bf16.mxu0 0
    %523 = vmatpush2.bf16.msra.mxu0 0
    %524 = vmatprep.subr.bf16.mxu0 0
    %525 = vmatpush2.bf16.msra.mxu0 0
    %526 = vmatprep.subr.bf16.mxu0 0
    %527 = vmatpush2.bf16.msra.mxu0 0
    %528 = vmatprep.subr.bf16.mxu0 0
    %529 = vmatpush2.bf16.msra.mxu0 0
    %530 = vmatprep.subr.bf16.mxu0 0
    %531 = vmatpush2.bf16.msra.mxu0 0
    %532 = vmatprep.subr.bf16.mxu0 0
    %533 = vmatpush2.bf16.msra.mxu0 0
    %534 = vmatprep.mubr.bf16.mxu0 0
    %535 = vmatmul.mubr.bf16.gmra.mxu0 %v418
    %v536 = vpop.f32.mrf.mxu0
    %v537 = vadd.f32 0.0, %v536
    %v538 = vpop.f32.mrf.mxu0
    %v539 = vadd.f32 0.0, %v538
    %v540 = vpop.f32.mrf.mxu0
    %v541 = vadd.f32 0.0, %v540
    %v542 = vpop.f32.mrf.mxu0
    %v543 = vadd.f32 0.0, %v542
    %544 = vmatprep.mubr.bf16.mxu0 0
    %545 = vmatmul.mubr.bf16.gmra.mxu0 %v421
    %v546 = vpop.f32.mrf.mxu0
    %v547 = vadd.f32 0.0, %v546
    %v548 = vpop.f32.mrf.mxu0
    %v549 = vadd.f32 0.0, %v548
    %v550 = vpop.f32.mrf.mxu0
    %v551 = vadd.f32 0.0, %v550
    %v552 = vpop.f32.mrf.mxu0
    %v553 = vadd.f32 0.0, %v552
    %554 = vmatprep.mubr.bf16.mxu0 0
    %555 = vmatmul.mubr.bf16.gmra.mxu0 %v424
    %v556 = vpop.f32.mrf.mxu0
    %v557 = vadd.f32 0.0, %v556
    %v558 = vpop.f32.mrf.mxu0
    %v559 = vadd.f32 0.0, %v558
    %v560 = vpop.f32.mrf.mxu0
    %v561 = vadd.f32 0.0, %v560
    %v562 = vpop.f32.mrf.mxu0
    %v563 = vadd.f32 0.0, %v562
    %564 = vmatprep.mubr.bf16.mxu0 0
    %565 = vmatmul.mubr.bf16.gmra.mxu0 %v427
    %v566 = vpop.f32.mrf.mxu0
    %v567 = vadd.f32 0.0, %v566
    %v568 = vpop.f32.mrf.mxu0
    %v569 = vadd.f32 0.0, %v568
    %v570 = vpop.f32.mrf.mxu0
    %v571 = vadd.f32 0.0, %v570
    %v572 = vpop.f32.mrf.mxu0
    %v573 = vadd.f32 0.0, %v572
    %574 = vdwg.mxu0
    %575 = vmatprep.subr.bf16.mxu0 0
    %576 = vmatpush1.bf16.msra.mxu0 0
    %577 = vmatprep.subr.bf16.mxu0 0
    %578 = vmatpush1.bf16.msra.mxu0 0
    %579 = vmatprep.subr.bf16.mxu0 %v366
    %580 = vmatpush1.bf16.msra.mxu0 %v365
    %581 = vmatprep.subr.bf16.mxu0 %v358
    %582 = vmatpush1.bf16.msra.mxu0 %v357
    %583 = vmatprep.subr.bf16.mxu0 %v350
    %584 = vmatpush1.bf16.msra.mxu0 %v349
    %585 = vmatprep.subr.bf16.mxu0 %v342
    %586 = vmatpush1.bf16.msra.mxu0 %v341
    %587 = vmatprep.subr.bf16.mxu0 %v334
    %588 = vmatpush1.bf16.msra.mxu0 %v333
    %589 = vmatprep.subr.bf16.mxu0 %v326
    %590 = vmatpush1.bf16.msra.mxu0 %v325
    %591 = vmatprep.subr.bf16.mxu0 0
    %592 = vmatpush2.bf16.msra.mxu0 0
    %593 = vmatprep.subr.bf16.mxu0 0
    %594 = vmatpush2.bf16.msra.mxu0 0
    %595 = vmatprep.subr.bf16.mxu0 0
    %596 = vmatpush2.bf16.msra.mxu0 0
    %597 = vmatprep.subr.bf16.mxu0 0
    %598 = vmatpush2.bf16.msra.mxu0 0
    %599 = vmatprep.subr.bf16.mxu0 0
    %600 = vmatpush2.bf16.msra.mxu0 0
    %601 = vmatprep.subr.bf16.mxu0 0
    %602 = vmatpush2.bf16.msra.mxu0 0
    %603 = vmatprep.subr.bf16.mxu0 0
    %604 = vmatpush2.bf16.msra.mxu0 0
    %605 = vmatprep.subr.bf16.mxu0 0
    %606 = vmatpush2.bf16.msra.mxu0 0
    %607 = vmatprep.mubr.bf16.mxu0 0
    %608 = vmatmul.mubr.bf16.gmra.mxu0 %v418
    %v609 = vpop.f32.mrf.mxu0
    %v610 = vadd.f32 0.0, %v609
    %v611 = vpop.f32.mrf.mxu0
    %v612 = vadd.f32 0.0, %v611
    %v613 = vpop.f32.mrf.mxu0
    %v614 = vadd.f32 0.0, %v613
    %v615 = vpop.f32.mrf.mxu0
    %v616 = vadd.f32 0.0, %v615
    %617 = vmatprep.mubr.bf16.mxu0 0
    %618 = vmatmul.mubr.bf16.gmra.mxu0 %v421
    %v619 = vpop.f32.mrf.mxu0
    %v620 = vadd.f32 0.0, %v619
    %v621 = vpop.f32.mrf.mxu0
    %v622 = vadd.f32 0.0, %v621
    %v623 = vpop.f32.mrf.mxu0
    %v624 = vadd.f32 0.0, %v623
    %v625 = vpop.f32.mrf.mxu0
    %v626 = vadd.f32 0.0, %v625
    %627 = vmatprep.mubr.bf16.mxu0 0
    %628 = vmatmul.mubr.bf16.gmra.mxu0 %v424
    %v629 = vpop.f32.mrf.mxu0
    %v630 = vadd.f32 0.0, %v629
    %v631 = vpop.f32.mrf.mxu0
    %v632 = vadd.f32 0.0, %v631
    %v633 = vpop.f32.mrf.mxu0
    %v634 = vadd.f32 0.0, %v633
    %v635 = vpop.f32.mrf.mxu0
    %v636 = vadd.f32 0.0, %v635
    %637 = vmatprep.mubr.bf16.mxu0 0
    %638 = vmatmul.mubr.bf16.gmra.mxu0 %v427
    %v639 = vpop.f32.mrf.mxu0
    %v640 = vadd.f32 0.0, %v639
    %v641 = vpop.f32.mrf.mxu0
    %v642 = vadd.f32 0.0, %v641
    %v643 = vpop.f32.mrf.mxu0
    %v644 = vadd.f32 0.0, %v643
    %v645 = vpop.f32.mrf.mxu0
    %v646 = vadd.f32 0.0, %v645
    %647 = vdwg.mxu0
    %648 = vmatprep.subr.bf16.mxu0 0
    %649 = vmatpush1.bf16.msra.mxu0 0
    %650 = vmatprep.subr.bf16.mxu0 0
    %651 = vmatpush1.bf16.msra.mxu0 0
    %652 = vmatprep.subr.bf16.mxu0 %v368
    %653 = vmatpush1.bf16.msra.mxu0 %v367
    %654 = vmatprep.subr.bf16.mxu0 %v360
    %655 = vmatpush1.bf16.msra.mxu0 %v359
    %656 = vmatprep.subr.bf16.mxu0 %v352
    %657 = vmatpush1.bf16.msra.mxu0 %v351
    %658 = vmatprep.subr.bf16.mxu0 %v344
    %659 = vmatpush1.bf16.msra.mxu0 %v343
    %660 = vmatprep.subr.bf16.mxu0 %v336
    %661 = vmatpush1.bf16.msra.mxu0 %v335
    %662 = vmatprep.subr.bf16.mxu0 %v328
    %663 = vmatpush1.bf16.msra.mxu0 %v327
    %664 = vmatprep.subr.bf16.mxu0 0
    %665 = vmatpush2.bf16.msra.mxu0 0
    %666 = vmatprep.subr.bf16.mxu0 0
    %667 = vmatpush2.bf16.msra.mxu0 0
    %668 = vmatprep.subr.bf16.mxu0 0
    %669 = vmatpush2.bf16.msra.mxu0 0
    %670 = vmatprep.subr.bf16.mxu0 0
    %671 = vmatpush2.bf16.msra.mxu0 0
    %672 = vmatprep.subr.bf16.mxu0 0
    %673 = vmatpush2.bf16.msra.mxu0 0
    %674 = vmatprep.subr.bf16.mxu0 0
    %675 = vmatpush2.bf16.msra.mxu0 0
    %676 = vmatprep.subr.bf16.mxu0 0
    %677 = vmatpush2.bf16.msra.mxu0 0
    %678 = vmatprep.subr.bf16.mxu0 0
    %679 = vmatpush2.bf16.msra.mxu0 0
    %680 = vmatprep.mubr.bf16.mxu0 0
    %681 = vmatmul.mubr.bf16.gmra.mxu0 %v418
    %v682 = vpop.f32.mrf.mxu0
    %v683 = vadd.f32 0.0, %v682
    %v684 = vpop.f32.mrf.mxu0
    %v685 = vadd.f32 0.0, %v684
    %v686 = vpop.f32.mrf.mxu0
    %v687 = vadd.f32 0.0, %v686
    %v688 = vpop.f32.mrf.mxu0
    %v689 = vadd.f32 0.0, %v688
    %690 = vmatprep.mubr.bf16.mxu0 0
    %691 = vmatmul.mubr.bf16.gmra.mxu0 %v421
    %v692 = vpop.f32.mrf.mxu0
    %v693 = vadd.f32 0.0, %v692
    %v694 = vpop.f32.mrf.mxu0
    %v695 = vadd.f32 0.0, %v694
    %v696 = vpop.f32.mrf.mxu0
    %v697 = vadd.f32 0.0, %v696
    %v698 = vpop.f32.mrf.mxu0
    %v699 = vadd.f32 0.0, %v698
    %700 = vmatprep.mubr.bf16.mxu0 0
    %701 = vmatmul.mubr.bf16.gmra.mxu0 %v424
    %v702 = vpop.f32.mrf.mxu0
    %v703 = vadd.f32 0.0, %v702
    %v704 = vpop.f32.mrf.mxu0
    %v705 = vadd.f32 0.0, %v704
    %v706 = vpop.f32.mrf.mxu0
    %v707 = vadd.f32 0.0, %v706
    %v708 = vpop.f32.mrf.mxu0
    %v709 = vadd.f32 0.0, %v708
    %710 = vmatprep.mubr.bf16.mxu0 0
    %711 = vmatmul.mubr.bf16.gmra.mxu0 %v427
    %v712 = vpop.f32.mrf.mxu0
    %v713 = vadd.f32 0.0, %v712
    %v714 = vpop.f32.mrf.mxu0
    %v715 = vadd.f32 0.0, %v714
    %v716 = vpop.f32.mrf.mxu0
    %v717 = vadd.f32 0.0, %v716
    %v718 = vpop.f32.mrf.mxu0
    %v719 = vadd.f32 0.0, %v718
    %720 = vdwg.mxu0
    %v769 = vunpack.c.l.b16 %v64
    %v770 = vunpack.c.h.b16 %v64
    %v771 = vunpack.c.l.b16 %v65
    %v772 = vunpack.c.h.b16 %v65
    %v773 = vunpack.c.l.b16 %v66
    %v774 = vunpack.c.h.b16 %v66
    %v775 = vunpack.c.l.b16 %v67
    %v776 = vunpack.c.h.b16 %v67
    %v777 = vunpack.c.l.b16 %v68
    %v778 = vunpack.c.h.b16 %v68
    %v779 = vunpack.c.l.b16 %v69
    %v780 = vunpack.c.h.b16 %v69
    %v781 = vunpack.c.l.b16 %v70
    %v782 = vunpack.c.h.b16 %v70
    %v783 = vunpack.c.l.b16 %v71
    %v784 = vunpack.c.h.b16 %v71
    %v785 = vunpack.c.l.b16 %v72
    %v786 = vunpack.c.h.b16 %v72
    %v787 = vunpack.c.l.b16 %v73
    %v788 = vunpack.c.h.b16 %v73
    %v789 = vunpack.c.l.b16 %v74
    %v790 = vunpack.c.h.b16 %v74
    %v791 = vunpack.c.l.b16 %v75
    %v792 = vunpack.c.h.b16 %v75
    %v793 = vunpack.c.l.b16 %v76
    %v794 = vunpack.c.h.b16 %v76
    %v795 = vunpack.c.l.b16 %v77
    %v796 = vunpack.c.h.b16 %v77
    %v797 = vunpack.c.l.b16 %v78
    %v798 = vunpack.c.h.b16 %v78
    %v799 = vunpack.c.l.b16 %v79
    %v800 = vunpack.c.h.b16 %v79
    %v801 = vunpack.c.l.b16 %v80
    %v802 = vunpack.c.h.b16 %v80
    %v803 = vunpack.c.l.b16 %v81
    %v804 = vunpack.c.h.b16 %v81
    %v805 = vunpack.c.l.b16 %v82
    %v806 = vunpack.c.h.b16 %v82
    %v807 = vunpack.c.l.b16 %v83
    %v808 = vunpack.c.h.b16 %v83
    %v809 = vunpack.c.l.b16 %v84
    %v810 = vunpack.c.h.b16 %v84
    %v811 = vunpack.c.l.b16 %v85
    %v812 = vunpack.c.h.b16 %v85
    %v813 = vunpack.c.l.b16 %v86
    %v814 = vunpack.c.h.b16 %v86
    %v815 = vunpack.c.l.b16 %v87
    %v816 = vunpack.c.h.b16 %v87
    %v817 = vunpack.c.l.b16 %v88
    %v818 = vunpack.c.h.b16 %v88
    %v819 = vunpack.c.l.b16 %v89
    %v820 = vunpack.c.h.b16 %v89
    %v821 = vunpack.c.l.b16 %v90
    %v822 = vunpack.c.h.b16 %v90
    %v823 = vunpack.c.l.b16 %v91
    %v824 = vunpack.c.h.b16 %v91
    %v825 = vunpack.c.l.b16 %v92
    %v826 = vunpack.c.h.b16 %v92
    %v827 = vunpack.c.l.b16 %v93
    %v828 = vunpack.c.h.b16 %v93
    %v829 = vunpack.c.l.b16 %v94
    %v830 = vunpack.c.h.b16 %v94
    %v831 = vunpack.c.l.b16 %v95
    %v832 = vunpack.c.h.b16 %v95
    %v833 = vunpack.c.l.b16 %v96
    %v834 = vunpack.c.h.b16 %v96
    %v835 = vunpack.c.l.b16 %v97
    %v836 = vunpack.c.h.b16 %v97
    %v837 = vunpack.c.l.b16 %v98
    %v838 = vunpack.c.h.b16 %v98
    %v839 = vunpack.c.l.b16 %v99
    %v840 = vunpack.c.h.b16 %v99
    %v841 = vunpack.c.l.b16 %v100
    %v842 = vunpack.c.h.b16 %v100
    %v843 = vunpack.c.l.b16 %v101
    %v844 = vunpack.c.h.b16 %v101
    %v845 = vunpack.c.l.b16 %v102
    %v846 = vunpack.c.h.b16 %v102
    %v847 = vunpack.c.l.b16 %v103
    %v848 = vunpack.c.h.b16 %v103
    %v849 = vunpack.c.l.b16 %v104
    %v850 = vunpack.c.h.b16 %v104
    %v851 = vunpack.c.l.b16 %v105
    %v852 = vunpack.c.h.b16 %v105
    %v853 = vunpack.c.l.b16 %v106
    %v854 = vunpack.c.h.b16 %v106
    %v855 = vunpack.c.l.b16 %v107
    %v856 = vunpack.c.h.b16 %v107
    %v857 = vunpack.c.l.b16 %v108
    %v858 = vunpack.c.h.b16 %v108
    %v859 = vunpack.c.l.b16 %v109
    %v860 = vunpack.c.h.b16 %v109
    %v861 = vunpack.c.l.b16 %v110
    %v862 = vunpack.c.h.b16 %v110
    %v863 = vunpack.c.l.b16 %v111
    %v864 = vunpack.c.h.b16 %v111
    %v865 = vpack.c.b16 %v777, %v769
    %v866 = vpack.c.b16 %v778, %v770
    %v867 = vpack.c.b16 %v779, %v771
    %v868 = vpack.c.b16 %v780, %v772
    %v869 = vpack.c.b16 %v781, %v773
    %v870 = vpack.c.b16 %v782, %v774
    %v871 = vpack.c.b16 %v783, %v775
    %v872 = vpack.c.b16 %v784, %v776
    %v873 = vpack.c.b16 %v793, %v785
    %v874 = vpack.c.b16 %v794, %v786
    %v875 = vpack.c.b16 %v795, %v787
    %v876 = vpack.c.b16 %v796, %v788
    %v877 = vpack.c.b16 %v797, %v789
    %v878 = vpack.c.b16 %v798, %v790
    %v879 = vpack.c.b16 %v799, %v791
    %v880 = vpack.c.b16 %v800, %v792
    %v881 = vpack.c.b16 %v809, %v801
    %v882 = vpack.c.b16 %v810, %v802
    %v883 = vpack.c.b16 %v811, %v803
    %v884 = vpack.c.b16 %v812, %v804
    %v885 = vpack.c.b16 %v813, %v805
    %v886 = vpack.c.b16 %v814, %v806
    %v887 = vpack.c.b16 %v815, %v807
    %v888 = vpack.c.b16 %v816, %v808
    %v889 = vpack.c.b16 %v825, %v817
    %v890 = vpack.c.b16 %v826, %v818
    %v891 = vpack.c.b16 %v827, %v819
    %v892 = vpack.c.b16 %v828, %v820
    %v893 = vpack.c.b16 %v829, %v821
    %v894 = vpack.c.b16 %v830, %v822
    %v895 = vpack.c.b16 %v831, %v823
    %v896 = vpack.c.b16 %v832, %v824
    %v897 = vpack.c.b16 %v841, %v833
    %v898 = vpack.c.b16 %v842, %v834
    %v899 = vpack.c.b16 %v843, %v835
    %v900 = vpack.c.b16 %v844, %v836
    %v901 = vpack.c.b16 %v845, %v837
    %v902 = vpack.c.b16 %v846, %v838
    %v903 = vpack.c.b16 %v847, %v839
    %v904 = vpack.c.b16 %v848, %v840
    %v905 = vpack.c.b16 %v857, %v849
    %v906 = vpack.c.b16 %v858, %v850
    %v907 = vpack.c.b16 %v859, %v851
    %v908 = vpack.c.b16 %v860, %v852
    %v909 = vpack.c.b16 %v861, %v853
    %v910 = vpack.c.b16 %v862, %v854
    %v911 = vpack.c.b16 %v863, %v855
    %v912 = vpack.c.b16 %v864, %v856
    %v962 = vsel %vm47, %v112, 0
    %v965 = vsel %vm47, %v113, 0
    %v968 = vsel %vm47, %v114, 0
    %v971 = vsel %vm47, %v115, 0
    %973 = vmatprep.subr.bf16.mxu0 0
    %974 = vmatpush1.bf16.msra.mxu0 0
    %975 = vmatprep.subr.bf16.mxu0 0
    %976 = vmatpush1.bf16.msra.mxu0 0
    %977 = vmatprep.subr.bf16.mxu0 %v906
    %978 = vmatpush1.bf16.msra.mxu0 %v905
    %979 = vmatprep.subr.bf16.mxu0 %v898
    %980 = vmatpush1.bf16.msra.mxu0 %v897
    %981 = vmatprep.subr.bf16.mxu0 %v890
    %982 = vmatpush1.bf16.msra.mxu0 %v889
    %983 = vmatprep.subr.bf16.mxu0 %v882
    %984 = vmatpush1.bf16.msra.mxu0 %v881
    %985 = vmatprep.subr.bf16.mxu0 %v874
    %986 = vmatpush1.bf16.msra.mxu0 %v873
    %987 = vmatprep.subr.bf16.mxu0 %v866
    %988 = vmatpush1.bf16.msra.mxu0 %v865
    %989 = vmatprep.subr.bf16.mxu0 0
    %990 = vmatpush2.bf16.msra.mxu0 0
    %991 = vmatprep.subr.bf16.mxu0 0
    %992 = vmatpush2.bf16.msra.mxu0 0
    %993 = vmatprep.subr.bf16.mxu0 0
    %994 = vmatpush2.bf16.msra.mxu0 0
    %995 = vmatprep.subr.bf16.mxu0 0
    %996 = vmatpush2.bf16.msra.mxu0 0
    %997 = vmatprep.subr.bf16.mxu0 0
    %998 = vmatpush2.bf16.msra.mxu0 0
    %999 = vmatprep.subr.bf16.mxu0 0
    %1000 = vmatpush2.bf16.msra.mxu0 0
    %1001 = vmatprep.subr.bf16.mxu0 0
    %1002 = vmatpush2.bf16.msra.mxu0 0
    %1003 = vmatprep.subr.bf16.mxu0 0
    %1004 = vmatpush2.bf16.msra.mxu0 0
    %1005 = vmatprep.mubr.bf16.mxu0 0
    %1006 = vmatmul.mubr.bf16.gmra.mxu0 %v962
    %v1007 = vpop.f32.mrf.mxu0
    %v1008 = vadd.f32 %v464, %v1007
    %v1009 = vpop.f32.mrf.mxu0
    %v1010 = vadd.f32 %v466, %v1009
    %v1011 = vpop.f32.mrf.mxu0
    %v1012 = vadd.f32 %v468, %v1011
    %v1013 = vpop.f32.mrf.mxu0
    %v1014 = vadd.f32 %v470, %v1013
    %1015 = vmatprep.mubr.bf16.mxu0 0
    %1016 = vmatmul.mubr.bf16.gmra.mxu0 %v965
    %v1017 = vpop.f32.mrf.mxu0
    %v1018 = vadd.f32 %v474, %v1017
    %v1019 = vpop.f32.mrf.mxu0
    %v1020 = vadd.f32 %v476, %v1019
    %v1021 = vpop.f32.mrf.mxu0
    %v1022 = vadd.f32 %v478, %v1021
    %v1023 = vpop.f32.mrf.mxu0
    %v1024 = vadd.f32 %v480, %v1023
    %1025 = vmatprep.mubr.bf16.mxu0 0
    %1026 = vmatmul.mubr.bf16.gmra.mxu0 %v968
    %v1027 = vpop.f32.mrf.mxu0
    %v1028 = vadd.f32 %v484, %v1027
    %v1029 = vpop.f32.mrf.mxu0
    %v1030 = vadd.f32 %v486, %v1029
    %v1031 = vpop.f32.mrf.mxu0
    %v1032 = vadd.f32 %v488, %v1031
    %v1033 = vpop.f32.mrf.mxu0
    %v1034 = vadd.f32 %v490, %v1033
    %1035 = vmatprep.mubr.bf16.mxu0 0
    %1036 = vmatmul.mubr.bf16.gmra.mxu0 %v971
    %v1037 = vpop.f32.mrf.mxu0
    %v1038 = vadd.f32 %v494, %v1037
    %v1039 = vpop.f32.mrf.mxu0
    %v1040 = vadd.f32 %v496, %v1039
    %v1041 = vpop.f32.mrf.mxu0
    %v1042 = vadd.f32 %v498, %v1041
    %v1043 = vpop.f32.mrf.mxu0
    %v1044 = vadd.f32 %v500, %v1043
    %1045 = vdwg.mxu0
    %1046 = vmatprep.subr.bf16.mxu0 0
    %1047 = vmatpush1.bf16.msra.mxu0 0
    %1048 = vmatprep.subr.bf16.mxu0 0
    %1049 = vmatpush1.bf16.msra.mxu0 0
    %1050 = vmatprep.subr.bf16.mxu0 %v908
    %1051 = vmatpush1.bf16.msra.mxu0 %v907
    %1052 = vmatprep.subr.bf16.mxu0 %v900
    %1053 = vmatpush1.bf16.msra.mxu0 %v899
    %1054 = vmatprep.subr.bf16.mxu0 %v892
    %1055 = vmatpush1.bf16.msra.mxu0 %v891
    %1056 = vmatprep.subr.bf16.mxu0 %v884
    %1057 = vmatpush1.bf16.msra.mxu0 %v883
    %1058 = vmatprep.subr.bf16.mxu0 %v876
    %1059 = vmatpush1.bf16.msra.mxu0 %v875
    %1060 = vmatprep.subr.bf16.mxu0 %v868
    %1061 = vmatpush1.bf16.msra.mxu0 %v867
    %1062 = vmatprep.subr.bf16.mxu0 0
    %1063 = vmatpush2.bf16.msra.mxu0 0
    %1064 = vmatprep.subr.bf16.mxu0 0
    %1065 = vmatpush2.bf16.msra.mxu0 0
    %1066 = vmatprep.subr.bf16.mxu0 0
    %1067 = vmatpush2.bf16.msra.mxu0 0
    %1068 = vmatprep.subr.bf16.mxu0 0
    %1069 = vmatpush2.bf16.msra.mxu0 0
    %1070 = vmatprep.subr.bf16.mxu0 0
    %1071 = vmatpush2.bf16.msra.mxu0 0
    %1072 = vmatprep.subr.bf16.mxu0 0
    %1073 = vmatpush2.bf16.msra.mxu0 0
    %1074 = vmatprep.subr.bf16.mxu0 0
    %1075 = vmatpush2.bf16.msra.mxu0 0
    %1076 = vmatprep.subr.bf16.mxu0 0
    %1077 = vmatpush2.bf16.msra.mxu0 0
    %1078 = vmatprep.mubr.bf16.mxu0 0
    %1079 = vmatmul.mubr.bf16.gmra.mxu0 %v962
    %v1080 = vpop.f32.mrf.mxu0
    %v1081 = vadd.f32 %v537, %v1080
    %v1082 = vpop.f32.mrf.mxu0
    %v1083 = vadd.f32 %v539, %v1082
    %v1084 = vpop.f32.mrf.mxu0
    %v1085 = vadd.f32 %v541, %v1084
    %v1086 = vpop.f32.mrf.mxu0
    %v1087 = vadd.f32 %v543, %v1086
    %1088 = vmatprep.mubr.bf16.mxu0 0
    %1089 = vmatmul.mubr.bf16.gmra.mxu0 %v965
    %v1090 = vpop.f32.mrf.mxu0
    %v1091 = vadd.f32 %v547, %v1090
    %v1092 = vpop.f32.mrf.mxu0
    %v1093 = vadd.f32 %v549, %v1092
    %v1094 = vpop.f32.mrf.mxu0
    %v1095 = vadd.f32 %v551, %v1094
    %v1096 = vpop.f32.mrf.mxu0
    %v1097 = vadd.f32 %v553, %v1096
    %1098 = vmatprep.mubr.bf16.mxu0 0
    %1099 = vmatmul.mubr.bf16.gmra.mxu0 %v968
    %v1100 = vpop.f32.mrf.mxu0
    %v1101 = vadd.f32 %v557, %v1100
    %v1102 = vpop.f32.mrf.mxu0
    %v1103 = vadd.f32 %v559, %v1102
    %v1104 = vpop.f32.mrf.mxu0
    %v1105 = vadd.f32 %v561, %v1104
    %v1106 = vpop.f32.mrf.mxu0
    %v1107 = vadd.f32 %v563, %v1106
    %1108 = vmatprep.mubr.bf16.mxu0 0
    %1109 = vmatmul.mubr.bf16.gmra.mxu0 %v971
    %v1110 = vpop.f32.mrf.mxu0
    %v1111 = vadd.f32 %v567, %v1110
    %v1112 = vpop.f32.mrf.mxu0
    %v1113 = vadd.f32 %v569, %v1112
    %v1114 = vpop.f32.mrf.mxu0
    %v1115 = vadd.f32 %v571, %v1114
    %v1116 = vpop.f32.mrf.mxu0
    %v1117 = vadd.f32 %v573, %v1116
    %1118 = vdwg.mxu0
    %1119 = vmatprep.subr.bf16.mxu0 0
    %1120 = vmatpush1.bf16.msra.mxu0 0
    %1121 = vmatprep.subr.bf16.mxu0 0
    %1122 = vmatpush1.bf16.msra.mxu0 0
    %1123 = vmatprep.subr.bf16.mxu0 %v910
    %1124 = vmatpush1.bf16.msra.mxu0 %v909
    %1125 = vmatprep.subr.bf16.mxu0 %v902
    %1126 = vmatpush1.bf16.msra.mxu0 %v901
    %1127 = vmatprep.subr.bf16.mxu0 %v894
    %1128 = vmatpush1.bf16.msra.mxu0 %v893
    %1129 = vmatprep.subr.bf16.mxu0 %v886
    %1130 = vmatpush1.bf16.msra.mxu0 %v885
    %1131 = vmatprep.subr.bf16.mxu0 %v878
    %1132 = vmatpush1.bf16.msra.mxu0 %v877
    %1133 = vmatprep.subr.bf16.mxu0 %v870
    %1134 = vmatpush1.bf16.msra.mxu0 %v869
    %1135 = vmatprep.subr.bf16.mxu0 0
    %1136 = vmatpush2.bf16.msra.mxu0 0
    %1137 = vmatprep.subr.bf16.mxu0 0
    %1138 = vmatpush2.bf16.msra.mxu0 0
    %1139 = vmatprep.subr.bf16.mxu0 0
    %1140 = vmatpush2.bf16.msra.mxu0 0
    %1141 = vmatprep.subr.bf16.mxu0 0
    %1142 = vmatpush2.bf16.msra.mxu0 0
    %1143 = vmatprep.subr.bf16.mxu0 0
    %1144 = vmatpush2.bf16.msra.mxu0 0
    %1145 = vmatprep.subr.bf16.mxu0 0
    %1146 = vmatpush2.bf16.msra.mxu0 0
    %1147 = vmatprep.subr.bf16.mxu0 0
    %1148 = vmatpush2.bf16.msra.mxu0 0
    %1149 = vmatprep.subr.bf16.mxu0 0
    %1150 = vmatpush2.bf16.msra.mxu0 0
    %1151 = vmatprep.mubr.bf16.mxu0 0
    %1152 = vmatmul.mubr.bf16.gmra.mxu0 %v962
    %v1153 = vpop.f32.mrf.mxu0
    %v1154 = vadd.f32 %v610, %v1153
    %v1155 = vpop.f32.mrf.mxu0
    %v1156 = vadd.f32 %v612, %v1155
    %v1157 = vpop.f32.mrf.mxu0
    %v1158 = vadd.f32 %v614, %v1157
    %v1159 = vpop.f32.mrf.mxu0
    %v1160 = vadd.f32 %v616, %v1159
    %1161 = vmatprep.mubr.bf16.mxu0 0
    %1162 = vmatmul.mubr.bf16.gmra.mxu0 %v965
    %v1163 = vpop.f32.mrf.mxu0
    %v1164 = vadd.f32 %v620, %v1163
    %v1165 = vpop.f32.mrf.mxu0
    %v1166 = vadd.f32 %v622, %v1165
    %v1167 = vpop.f32.mrf.mxu0
    %v1168 = vadd.f32 %v624, %v1167
    %v1169 = vpop.f32.mrf.mxu0
    %v1170 = vadd.f32 %v626, %v1169
    %1171 = vmatprep.mubr.bf16.mxu0 0
    %1172 = vmatmul.mubr.bf16.gmra.mxu0 %v968
    %v1173 = vpop.f32.mrf.mxu0
    %v1174 = vadd.f32 %v630, %v1173
    %v1175 = vpop.f32.mrf.mxu0
    %v1176 = vadd.f32 %v632, %v1175
    %v1177 = vpop.f32.mrf.mxu0
    %v1178 = vadd.f32 %v634, %v1177
    %v1179 = vpop.f32.mrf.mxu0
    %v1180 = vadd.f32 %v636, %v1179
    %1181 = vmatprep.mubr.bf16.mxu0 0
    %1182 = vmatmul.mubr.bf16.gmra.mxu0 %v971
    %v1183 = vpop.f32.mrf.mxu0
    %v1184 = vadd.f32 %v640, %v1183
    %v1185 = vpop.f32.mrf.mxu0
    %v1186 = vadd.f32 %v642, %v1185
    %v1187 = vpop.f32.mrf.mxu0
    %v1188 = vadd.f32 %v644, %v1187
    %v1189 = vpop.f32.mrf.mxu0
    %v1190 = vadd.f32 %v646, %v1189
    %1191 = vdwg.mxu0
    %1192 = vmatprep.subr.bf16.mxu0 0
    %1193 = vmatpush1.bf16.msra.mxu0 0
    %1194 = vmatprep.subr.bf16.mxu0 0
    %1195 = vmatpush1.bf16.msra.mxu0 0
    %1196 = vmatprep.subr.bf16.mxu0 %v912
    %1197 = vmatpush1.bf16.msra.mxu0 %v911
    %1198 = vmatprep.subr.bf16.mxu0 %v904
    %1199 = vmatpush1.bf16.msra.mxu0 %v903
    %1200 = vmatprep.subr.bf16.mxu0 %v896
    %1201 = vmatpush1.bf16.msra.mxu0 %v895
    %1202 = vmatprep.subr.bf16.mxu0 %v888
    %1203 = vmatpush1.bf16.msra.mxu0 %v887
    %1204 = vmatprep.subr.bf16.mxu0 %v880
    %1205 = vmatpush1.bf16.msra.mxu0 %v879
    %1206 = vmatprep.subr.bf16.mxu0 %v872
    %1207 = vmatpush1.bf16.msra.mxu0 %v871
    %1208 = vmatprep.subr.bf16.mxu0 0
    %1209 = vmatpush2.bf16.msra.mxu0 0
    %1210 = vmatprep.subr.bf16.mxu0 0
    %1211 = vmatpush2.bf16.msra.mxu0 0
    %1212 = vmatprep.subr.bf16.mxu0 0
    %1213 = vmatpush2.bf16.msra.mxu0 0
    %1214 = vmatprep.subr.bf16.mxu0 0
    %1215 = vmatpush2.bf16.msra.mxu0 0
    %1216 = vmatprep.subr.bf16.mxu0 0
    %1217 = vmatpush2.bf16.msra.mxu0 0
    %1218 = vmatprep.subr.bf16.mxu0 0
    %1219 = vmatpush2.bf16.msra.mxu0 0
    %1220 = vmatprep.subr.bf16.mxu0 0
    %1221 = vmatpush2.bf16.msra.mxu0 0
    %1222 = vmatprep.subr.bf16.mxu0 0
    %1223 = vmatpush2.bf16.msra.mxu0 0
    %1224 = vmatprep.mubr.bf16.mxu0 0
    %1225 = vmatmul.mubr.bf16.gmra.mxu0 %v962
    %v1226 = vpop.f32.mrf.mxu0
    %v1227 = vadd.f32 %v683, %v1226
    %v1228 = vpop.f32.mrf.mxu0
    %v1229 = vadd.f32 %v685, %v1228
    %v1230 = vpop.f32.mrf.mxu0
    %v1231 = vadd.f32 %v687, %v1230
    %v1232 = vpop.f32.mrf.mxu0
    %v1233 = vadd.f32 %v689, %v1232
    %1234 = vmatprep.mubr.bf16.mxu0 0
    %1235 = vmatmul.mubr.bf16.gmra.mxu0 %v965
    %v1236 = vpop.f32.mrf.mxu0
    %v1237 = vadd.f32 %v693, %v1236
    %v1238 = vpop.f32.mrf.mxu0
    %v1239 = vadd.f32 %v695, %v1238
    %v1240 = vpop.f32.mrf.mxu0
    %v1241 = vadd.f32 %v697, %v1240
    %v1242 = vpop.f32.mrf.mxu0
    %v1243 = vadd.f32 %v699, %v1242
    %1244 = vmatprep.mubr.bf16.mxu0 0
    %1245 = vmatmul.mubr.bf16.gmra.mxu0 %v968
    %v1246 = vpop.f32.mrf.mxu0
    %v1247 = vadd.f32 %v703, %v1246
    %v1248 = vpop.f32.mrf.mxu0
    %v1249 = vadd.f32 %v705, %v1248
    %v1250 = vpop.f32.mrf.mxu0
    %v1251 = vadd.f32 %v707, %v1250
    %v1252 = vpop.f32.mrf.mxu0
    %v1253 = vadd.f32 %v709, %v1252
    %1254 = vmatprep.mubr.bf16.mxu0 0
    %1255 = vmatmul.mubr.bf16.gmra.mxu0 %v971
    %v1256 = vpop.f32.mrf.mxu0
    %v1257 = vadd.f32 %v713, %v1256
    %v1258 = vpop.f32.mrf.mxu0
    %v1259 = vadd.f32 %v715, %v1258
    %v1260 = vpop.f32.mrf.mxu0
    %v1261 = vadd.f32 %v717, %v1260
    %v1262 = vpop.f32.mrf.mxu0
    %v1263 = vadd.f32 %v719, %v1262
    %1264 = vdwg.mxu0
    %v1265 = vld [vmem:[#allocation2 + $0x2] sm:$0xff]
    %v1266 = vld [vmem:[#allocation2 + $0xa] sm:$0xff]
    %v1267 = vld [vmem:[#allocation2 + $0x12] sm:$0xff]
    %v1268 = vld [vmem:[#allocation2 + $0x1a] sm:$0xff]
    %v1269 = vld [vmem:[#allocation2 + $0x2a] sm:$0xff]
    %v1270 = vld [vmem:[#allocation2 + $0x32] sm:$0xff]
    %v1271 = vld [vmem:[#allocation2 + $0x3a] sm:$0xff]
    %v1272 = vld [vmem:[#allocation2 + $0x42] sm:$0xff]
    %s1273 = scalar_lea.vmem %s1, 768
    %v1274 = vld [vmem:[%s1273] sm:$0xff]
    %v1275 = vld [vmem:[%s1273 + $0x8] sm:$0xff]
    %v1276 = vld [vmem:[%s1273 + $0x10] sm:$0xff]
    %v1277 = vld [vmem:[%s1273 + $0x18] sm:$0xff]
    %v1278 = vld [vmem:[%s1273 + $0x20] sm:$0xff]
    %v1279 = vld [vmem:[%s1273 + $0x28] sm:$0xff]
    %v1280 = vld [vmem:[%s1273 + $0x30] sm:$0xff]
    %v1281 = vld [vmem:[%s1273 + $0x38] sm:$0xff]
    %v1282 = vld [vmem:[%s1273 + $0x40] sm:$0xff]
    %v1283 = vld [vmem:[%s1273 + $0x48] sm:$0xff]
    %v1284 = vld [vmem:[%s1273 + $0x50] sm:$0xff]
    %v1285 = vld [vmem:[%s1273 + $0x58] sm:$0xff]
    %v1286 = vld [vmem:[%s1273 + $0x60] sm:$0xff]
    %v1287 = vld [vmem:[%s1273 + $0x68] sm:$0xff]
    %v1288 = vld [vmem:[%s1273 + $0x70] sm:$0xff]
    %v1289 = vld [vmem:[%s1273 + $0x78] sm:$0xff]
    %v1290 = vld [vmem:[%s1273 + $0x80] sm:$0xff]
    %v1291 = vld [vmem:[%s1273 + $0x88] sm:$0xff]
    %v1292 = vld [vmem:[%s1273 + $0x90] sm:$0xff]
    %v1293 = vld [vmem:[%s1273 + $0x98] sm:$0xff]
    %v1294 = vld [vmem:[%s1273 + $0xa0] sm:$0xff]
    %v1295 = vld [vmem:[%s1273 + $0xa8] sm:$0xff]
    %v1296 = vld [vmem:[%s1273 + $0xb0] sm:$0xff]
    %v1297 = vld [vmem:[%s1273 + $0xb8] sm:$0xff]
    %v1298 = vld [vmem:[%s1273 + $0xc0] sm:$0xff]
    %v1299 = vld [vmem:[%s1273 + $0xc8] sm:$0xff]
    %v1300 = vld [vmem:[%s1273 + $0xd0] sm:$0xff]
    %v1301 = vld [vmem:[%s1273 + $0xd8] sm:$0xff]
    %v1302 = vld [vmem:[%s1273 + $0xe0] sm:$0xff]
    %v1303 = vld [vmem:[%s1273 + $0xe8] sm:$0xff]
    %v1304 = vld [vmem:[%s1273 + $0xf0] sm:$0xff]
    %v1305 = vld [vmem:[%s1273 + $0xf8] sm:$0xff]
    %v1306 = vld [vmem:[%s1273 + $0x100] sm:$0xff]
    %v1307 = vld [vmem:[%s1273 + $0x108] sm:$0xff]
    %v1308 = vld [vmem:[%s1273 + $0x110] sm:$0xff]
    %v1309 = vld [vmem:[%s1273 + $0x118] sm:$0xff]
    %v1310 = vld [vmem:[%s1273 + $0x120] sm:$0xff]
    %v1311 = vld [vmem:[%s1273 + $0x128] sm:$0xff]
    %v1312 = vld [vmem:[%s1273 + $0x130] sm:$0xff]
    %v1313 = vld [vmem:[%s1273 + $0x138] sm:$0xff]
    %v1314 = vld [vmem:[%s1273 + $0x140] sm:$0xff]
    %v1315 = vld [vmem:[%s1273 + $0x148] sm:$0xff]
    %v1316 = vld [vmem:[%s1273 + $0x150] sm:$0xff]
    %v1317 = vld [vmem:[%s1273 + $0x158] sm:$0xff]
    %v1318 = vld [vmem:[%s1273 + $0x160] sm:$0xff]
    %v1319 = vld [vmem:[%s1273 + $0x168] sm:$0xff]
    %v1320 = vld [vmem:[%s1273 + $0x170] sm:$0xff]
    %v1321 = vld [vmem:[%s1273 + $0x178] sm:$0xff]
    %v1322 = vpack.c.bf16 %v1266, %v1265
    %v1323 = vpack.c.bf16 %v1268, %v1267
    %v1324 = vpack.c.bf16 %v1270, %v1269
    %v1325 = vpack.c.bf16 %v1272, %v1271
    %v1374 = vunpack.c.l.b16 %v1274
    %v1375 = vunpack.c.h.b16 %v1274
    %v1376 = vunpack.c.l.b16 %v1275
    %v1377 = vunpack.c.h.b16 %v1275
    %v1378 = vunpack.c.l.b16 %v1276
    %v1379 = vunpack.c.h.b16 %v1276
    %v1380 = vunpack.c.l.b16 %v1277
    %v1381 = vunpack.c.h.b16 %v1277
    %v1382 = vunpack.c.l.b16 %v1278
    %v1383 = vunpack.c.h.b16 %v1278
    %v1384 = vunpack.c.l.b16 %v1279
    %v1385 = vunpack.c.h.b16 %v1279
    %v1386 = vunpack.c.l.b16 %v1280
    %v1387 = vunpack.c.h.b16 %v1280
    %v1388 = vunpack.c.l.b16 %v1281
    %v1389 = vunpack.c.h.b16 %v1281
    %v1390 = vunpack.c.l.b16 %v1282
    %v1391 = vunpack.c.h.b16 %v1282
    %v1392 = vunpack.c.l.b16 %v1283
    %v1393 = vunpack.c.h.b16 %v1283
    %v1394 = vunpack.c.l.b16 %v1284
    %v1395 = vunpack.c.h.b16 %v1284
    %v1396 = vunpack.c.l.b16 %v1285
    %v1397 = vunpack.c.h.b16 %v1285
    %v1398 = vunpack.c.l.b16 %v1286
    %v1399 = vunpack.c.h.b16 %v1286
    %v1400 = vunpack.c.l.b16 %v1287
    %v1401 = vunpack.c.h.b16 %v1287
    %v1402 = vunpack.c.l.b16 %v1288
    %v1403 = vunpack.c.h.b16 %v1288
    %v1404 = vunpack.c.l.b16 %v1289
    %v1405 = vunpack.c.h.b16 %v1289
    %v1406 = vunpack.c.l.b16 %v1290
    %v1407 = vunpack.c.h.b16 %v1290
    %v1408 = vunpack.c.l.b16 %v1291
    %v1409 = vunpack.c.h.b16 %v1291
    %v1410 = vunpack.c.l.b16 %v1292
    %v1411 = vunpack.c.h.b16 %v1292
    %v1412 = vunpack.c.l.b16 %v1293
    %v1413 = vunpack.c.h.b16 %v1293
    %v1414 = vunpack.c.l.b16 %v1294
    %v1415 = vunpack.c.h.b16 %v1294
    %v1416 = vunpack.c.l.b16 %v1295
    %v1417 = vunpack.c.h.b16 %v1295
    %v1418 = vunpack.c.l.b16 %v1296
    %v1419 = vunpack.c.h.b16 %v1296
    %v1420 = vunpack.c.l.b16 %v1297
    %v1421 = vunpack.c.h.b16 %v1297
    %v1422 = vunpack.c.l.b16 %v1298
    %v1423 = vunpack.c.h.b16 %v1298
    %v1424 = vunpack.c.l.b16 %v1299
    %v1425 = vunpack.c.h.b16 %v1299
    %v1426 = vunpack.c.l.b16 %v1300
    %v1427 = vunpack.c.h.b16 %v1300
    %v1428 = vunpack.c.l.b16 %v1301
    %v1429 = vunpack.c.h.b16 %v1301
    %v1430 = vunpack.c.l.b16 %v1302
    %v1431 = vunpack.c.h.b16 %v1302
    %v1432 = vunpack.c.l.b16 %v1303
    %v1433 = vunpack.c.h.b16 %v1303
    %v1434 = vunpack.c.l.b16 %v1304
    %v1435 = vunpack.c.h.b16 %v1304
    %v1436 = vunpack.c.l.b16 %v1305
    %v1437 = vunpack.c.h.b16 %v1305
    %v1438 = vunpack.c.l.b16 %v1306
    %v1439 = vunpack.c.h.b16 %v1306
    %v1440 = vunpack.c.l.b16 %v1307
    %v1441 = vunpack.c.h.b16 %v1307
    %v1442 = vunpack.c.l.b16 %v1308
    %v1443 = vunpack.c.h.b16 %v1308
    %v1444 = vunpack.c.l.b16 %v1309
    %v1445 = vunpack.c.h.b16 %v1309
    %v1446 = vunpack.c.l.b16 %v1310
    %v1447 = vunpack.c.h.b16 %v1310
    %v1448 = vunpack.c.l.b16 %v1311
    %v1449 = vunpack.c.h.b16 %v1311
    %v1450 = vunpack.c.l.b16 %v1312
    %v1451 = vunpack.c.h.b16 %v1312
    %v1452 = vunpack.c.l.b16 %v1313
    %v1453 = vunpack.c.h.b16 %v1313
    %v1454 = vunpack.c.l.b16 %v1314
    %v1455 = vunpack.c.h.b16 %v1314
    %v1456 = vunpack.c.l.b16 %v1315
    %v1457 = vunpack.c.h.b16 %v1315
    %v1458 = vunpack.c.l.b16 %v1316
    %v1459 = vunpack.c.h.b16 %v1316
    %v1460 = vunpack.c.l.b16 %v1317
    %v1461 = vunpack.c.h.b16 %v1317
    %v1462 = vunpack.c.l.b16 %v1318
    %v1463 = vunpack.c.h.b16 %v1318
    %v1464 = vunpack.c.l.b16 %v1319
    %v1465 = vunpack.c.h.b16 %v1319
    %v1466 = vunpack.c.l.b16 %v1320
    %v1467 = vunpack.c.h.b16 %v1320
    %v1468 = vunpack.c.l.b16 %v1321
    %v1469 = vunpack.c.h.b16 %v1321
    %v1470 = vpack.c.b16 %v1382, %v1374
    %v1471 = vpack.c.b16 %v1383, %v1375
    %v1472 = vpack.c.b16 %v1384, %v1376
    %v1473 = vpack.c.b16 %v1385, %v1377
    %v1474 = vpack.c.b16 %v1386, %v1378
    %v1475 = vpack.c.b16 %v1387, %v1379
    %v1476 = vpack.c.b16 %v1388, %v1380
    %v1477 = vpack.c.b16 %v1389, %v1381
    %v1478 = vpack.c.b16 %v1398, %v1390
    %v1479 = vpack.c.b16 %v1399, %v1391
    %v1480 = vpack.c.b16 %v1400, %v1392
    %v1481 = vpack.c.b16 %v1401, %v1393
    %v1482 = vpack.c.b16 %v1402, %v1394
    %v1483 = vpack.c.b16 %v1403, %v1395
    %v1484 = vpack.c.b16 %v1404, %v1396
    %v1485 = vpack.c.b16 %v1405, %v1397
    %v1486 = vpack.c.b16 %v1414, %v1406
    %v1487 = vpack.c.b16 %v1415, %v1407
    %v1488 = vpack.c.b16 %v1416, %v1408
    %v1489 = vpack.c.b16 %v1417, %v1409
    %v1490 = vpack.c.b16 %v1418, %v1410
    %v1491 = vpack.c.b16 %v1419, %v1411
    %v1492 = vpack.c.b16 %v1420, %v1412
    %v1493 = vpack.c.b16 %v1421, %v1413
    %v1494 = vpack.c.b16 %v1430, %v1422
    %v1495 = vpack.c.b16 %v1431, %v1423
    %v1496 = vpack.c.b16 %v1432, %v1424
    %v1497 = vpack.c.b16 %v1433, %v1425
    %v1498 = vpack.c.b16 %v1434, %v1426
    %v1499 = vpack.c.b16 %v1435, %v1427
    %v1500 = vpack.c.b16 %v1436, %v1428
    %v1501 = vpack.c.b16 %v1437, %v1429
    %v1502 = vpack.c.b16 %v1446, %v1438
    %v1503 = vpack.c.b16 %v1447, %v1439
    %v1504 = vpack.c.b16 %v1448, %v1440
    %v1505 = vpack.c.b16 %v1449, %v1441
    %v1506 = vpack.c.b16 %v1450, %v1442
    %v1507 = vpack.c.b16 %v1451, %v1443
    %v1508 = vpack.c.b16 %v1452, %v1444
    %v1509 = vpack.c.b16 %v1453, %v1445
    %v1510 = vpack.c.b16 %v1462, %v1454
    %v1511 = vpack.c.b16 %v1463, %v1455
    %v1512 = vpack.c.b16 %v1464, %v1456
    %v1513 = vpack.c.b16 %v1465, %v1457
    %v1514 = vpack.c.b16 %v1466, %v1458
    %v1515 = vpack.c.b16 %v1467, %v1459
    %v1516 = vpack.c.b16 %v1468, %v1460
    %v1517 = vpack.c.b16 %v1469, %v1461
    %v1567 = vsel %vm47, %v1322, 0
    %v1570 = vsel %vm47, %v1323, 0
    %v1573 = vsel %vm47, %v1324, 0
    %v1576 = vsel %vm47, %v1325, 0
    %1578 = vmatprep.subr.bf16.mxu0 0
    %1579 = vmatpush1.bf16.msra.mxu0 0
    %1580 = vmatprep.subr.bf16.mxu0 0
    %1581 = vmatpush1.bf16.msra.mxu0 0
    %1582 = vmatprep.subr.bf16.mxu0 %v1511
    %1583 = vmatpush1.bf16.msra.mxu0 %v1510
    %1584 = vmatprep.subr.bf16.mxu0 %v1503
    %1585 = vmatpush1.bf16.msra.mxu0 %v1502
    %1586 = vmatprep.subr.bf16.mxu0 %v1495
    %1587 = vmatpush1.bf16.msra.mxu0 %v1494
    %1588 = vmatprep.subr.bf16.mxu0 %v1487
    %1589 = vmatpush1.bf16.msra.mxu0 %v1486
    %1590 = vmatprep.subr.bf16.mxu0 %v1479
    %1591 = vmatpush1.bf16.msra.mxu0 %v1478
    %1592 = vmatprep.subr.bf16.mxu0 %v1471
    %1593 = vmatpush1.bf16.msra.mxu0 %v1470
    %1594 = vmatprep.subr.bf16.mxu0 0
    %1595 = vmatpush2.bf16.msra.mxu0 0
    %1596 = vmatprep.subr.bf16.mxu0 0
    %1597 = vmatpush2.bf16.msra.mxu0 0
    %1598 = vmatprep.subr.bf16.mxu0 0
    %1599 = vmatpush2.bf16.msra.mxu0 0
    %1600 = vmatprep.subr.bf16.mxu0 0
    %1601 = vmatpush2.bf16.msra.mxu0 0
    %1602 = vmatprep.subr.bf16.mxu0 0
    %1603 = vmatpush2.bf16.msra.mxu0 0
    %1604 = vmatprep.subr.bf16.mxu0 0
    %1605 = vmatpush2.bf16.msra.mxu0 0
    %1606 = vmatprep.subr.bf16.mxu0 0
    %1607 = vmatpush2.bf16.msra.mxu0 0
    %1608 = vmatprep.subr.bf16.mxu0 0
    %1609 = vmatpush2.bf16.msra.mxu0 0
    %1610 = vmatprep.mubr.bf16.mxu0 0
    %1611 = vmatmul.mubr.bf16.gmra.mxu0 %v1567
    %v1612 = vpop.f32.mrf.mxu0
    %v1613 = vadd.f32 0.0, %v1612
    %v1614 = vpop.f32.mrf.mxu0
    %v1615 = vadd.f32 0.0, %v1614
    %v1616 = vpop.f32.mrf.mxu0
    %v1617 = vadd.f32 0.0, %v1616
    %v1618 = vpop.f32.mrf.mxu0
    %v1619 = vadd.f32 0.0, %v1618
    %1620 = vmatprep.mubr.bf16.mxu0 0
    %1621 = vmatmul.mubr.bf16.gmra.mxu0 %v1570
    %v1622 = vpop.f32.mrf.mxu0
    %v1623 = vadd.f32 0.0, %v1622
    %v1624 = vpop.f32.mrf.mxu0
    %v1625 = vadd.f32 0.0, %v1624
    %v1626 = vpop.f32.mrf.mxu0
    %v1627 = vadd.f32 0.0, %v1626
    %v1628 = vpop.f32.mrf.mxu0
    %v1629 = vadd.f32 0.0, %v1628
    %1630 = vmatprep.mubr.bf16.mxu0 0
    %1631 = vmatmul.mubr.bf16.gmra.mxu0 %v1573
    %v1632 = vpop.f32.mrf.mxu0
    %v1633 = vadd.f32 0.0, %v1632
    %v1634 = vpop.f32.mrf.mxu0
    %v1635 = vadd.f32 0.0, %v1634
    %v1636 = vpop.f32.mrf.mxu0
    %v1637 = vadd.f32 0.0, %v1636
    %v1638 = vpop.f32.mrf.mxu0
    %v1639 = vadd.f32 0.0, %v1638
    %1640 = vmatprep.mubr.bf16.mxu0 0
    %1641 = vmatmul.mubr.bf16.gmra.mxu0 %v1576
    %v1642 = vpop.f32.mrf.mxu0
    %v1643 = vadd.f32 0.0, %v1642
    %v1644 = vpop.f32.mrf.mxu0
    %v1645 = vadd.f32 0.0, %v1644
    %v1646 = vpop.f32.mrf.mxu0
    %v1647 = vadd.f32 0.0, %v1646
    %v1648 = vpop.f32.mrf.mxu0
    %v1649 = vadd.f32 0.0, %v1648
    %1650 = vdwg.mxu0
    %1651 = vmatprep.subr.bf16.mxu0 0
    %1652 = vmatpush1.bf16.msra.mxu0 0
    %1653 = vmatprep.subr.bf16.mxu0 0
    %1654 = vmatpush1.bf16.msra.mxu0 0
    %1655 = vmatprep.subr.bf16.mxu0 %v1513
    %1656 = vmatpush1.bf16.msra.mxu0 %v1512
    %1657 = vmatprep.subr.bf16.mxu0 %v1505
    %1658 = vmatpush1.bf16.msra.mxu0 %v1504
    %1659 = vmatprep.subr.bf16.mxu0 %v1497
    %1660 = vmatpush1.bf16.msra.mxu0 %v1496
    %1661 = vmatprep.subr.bf16.mxu0 %v1489
    %1662 = vmatpush1.bf16.msra.mxu0 %v1488
    %1663 = vmatprep.subr.bf16.mxu0 %v1481
    %1664 = vmatpush1.bf16.msra.mxu0 %v1480
    %1665 = vmatprep.subr.bf16.mxu0 %v1473
    %1666 = vmatpush1.bf16.msra.mxu0 %v1472
    %1667 = vmatprep.subr.bf16.mxu0 0
    %1668 = vmatpush2.bf16.msra.mxu0 0
    %1669 = vmatprep.subr.bf16.mxu0 0
    %1670 = vmatpush2.bf16.msra.mxu0 0
    %1671 = vmatprep.subr.bf16.mxu0 0
    %1672 = vmatpush2.bf16.msra.mxu0 0
    %1673 = vmatprep.subr.bf16.mxu0 0
    %1674 = vmatpush2.bf16.msra.mxu0 0
    %1675 = vmatprep.subr.bf16.mxu0 0
    %1676 = vmatpush2.bf16.msra.mxu0 0
    %1677 = vmatprep.subr.bf16.mxu0 0
    %1678 = vmatpush2.bf16.msra.mxu0 0
    %1679 = vmatprep.subr.bf16.mxu0 0
    %1680 = vmatpush2.bf16.msra.mxu0 0
    %1681 = vmatprep.subr.bf16.mxu0 0
    %1682 = vmatpush2.bf16.msra.mxu0 0
    %1683 = vmatprep.mubr.bf16.mxu0 0
    %1684 = vmatmul.mubr.bf16.gmra.mxu0 %v1567
    %v1685 = vpop.f32.mrf.mxu0
    %v1686 = vadd.f32 0.0, %v1685
    %v1687 = vpop.f32.mrf.mxu0
    %v1688 = vadd.f32 0.0, %v1687
    %v1689 = vpop.f32.mrf.mxu0
    %v1690 = vadd.f32 0.0, %v1689
    %v1691 = vpop.f32.mrf.mxu0
    %v1692 = vadd.f32 0.0, %v1691
    %1693 = vmatprep.mubr.bf16.mxu0 0
    %1694 = vmatmul.mubr.bf16.gmra.mxu0 %v1570
    %v1695 = vpop.f32.mrf.mxu0
    %v1696 = vadd.f32 0.0, %v1695
    %v1697 = vpop.f32.mrf.mxu0
    %v1698 = vadd.f32 0.0, %v1697
    %v1699 = vpop.f32.mrf.mxu0
    %v1700 = vadd.f32 0.0, %v1699
    %v1701 = vpop.f32.mrf.mxu0
    %v1702 = vadd.f32 0.0, %v1701
    %1703 = vmatprep.mubr.bf16.mxu0 0
    %1704 = vmatmul.mubr.bf16.gmra.mxu0 %v1573
    %v1705 = vpop.f32.mrf.mxu0
    %v1706 = vadd.f32 0.0, %v1705
    %v1707 = vpop.f32.mrf.mxu0
    %v1708 = vadd.f32 0.0, %v1707
    %v1709 = vpop.f32.mrf.mxu0
    %v1710 = vadd.f32 0.0, %v1709
    %v1711 = vpop.f32.mrf.mxu0
    %v1712 = vadd.f32 0.0, %v1711
    %1713 = vmatprep.mubr.bf16.mxu0 0
    %1714 = vmatmul.mubr.bf16.gmra.mxu0 %v1576
    %v1715 = vpop.f32.mrf.mxu0
    %v1716 = vadd.f32 0.0, %v1715
    %v1717 = vpop.f32.mrf.mxu0
    %v1718 = vadd.f32 0.0, %v1717
    %v1719 = vpop.f32.mrf.mxu0
    %v1720 = vadd.f32 0.0, %v1719
    %v1721 = vpop.f32.mrf.mxu0
    %v1722 = vadd.f32 0.0, %v1721
    %1723 = vdwg.mxu0
    %1724 = vmatprep.subr.bf16.mxu0 0
    %1725 = vmatpush1.bf16.msra.mxu0 0
    %1726 = vmatprep.subr.bf16.mxu0 0
    %1727 = vmatpush1.bf16.msra.mxu0 0
    %1728 = vmatprep.subr.bf16.mxu0 %v1515
    %1729 = vmatpush1.bf16.msra.mxu0 %v1514
    %1730 = vmatprep.subr.bf16.mxu0 %v1507
    %1731 = vmatpush1.bf16.msra.mxu0 %v1506
    %1732 = vmatprep.subr.bf16.mxu0 %v1499
    %1733 = vmatpush1.bf16.msra.mxu0 %v1498
    %1734 = vmatprep.subr.bf16.mxu0 %v1491
    %1735 = vmatpush1.bf16.msra.mxu0 %v1490
    %1736 = vmatprep.subr.bf16.mxu0 %v1483
    %1737 = vmatpush1.bf16.msra.mxu0 %v1482
    %1738 = vmatprep.subr.bf16.mxu0 %v1475
    %1739 = vmatpush1.bf16.msra.mxu0 %v1474
    %1740 = vmatprep.subr.bf16.mxu0 0
    %1741 = vmatpush2.bf16.msra.mxu0 0
    %1742 = vmatprep.subr.bf16.mxu0 0
    %1743 = vmatpush2.bf16.msra.mxu0 0
    %1744 = vmatprep.subr.bf16.mxu0 0
    %1745 = vmatpush2.bf16.msra.mxu0 0
    %1746 = vmatprep.subr.bf16.mxu0 0
    %1747 = vmatpush2.bf16.msra.mxu0 0
    %1748 = vmatprep.subr.bf16.mxu0 0
    %1749 = vmatpush2.bf16.msra.mxu0 0
    %1750 = vmatprep.subr.bf16.mxu0 0
    %1751 = vmatpush2.bf16.msra.mxu0 0
    %1752 = vmatprep.subr.bf16.mxu0 0
    %1753 = vmatpush2.bf16.msra.mxu0 0
    %1754 = vmatprep.subr.bf16.mxu0 0
    %1755 = vmatpush2.bf16.msra.mxu0 0
    %1756 = vmatprep.mubr.bf16.mxu0 0
    %1757 = vmatmul.mubr.bf16.gmra.mxu0 %v1567
    %v1758 = vpop.f32.mrf.mxu0
    %v1759 = vadd.f32 0.0, %v1758
    %v1760 = vpop.f32.mrf.mxu0
    %v1761 = vadd.f32 0.0, %v1760
    %v1762 = vpop.f32.mrf.mxu0
    %v1763 = vadd.f32 0.0, %v1762
    %v1764 = vpop.f32.mrf.mxu0
    %v1765 = vadd.f32 0.0, %v1764
    %1766 = vmatprep.mubr.bf16.mxu0 0
    %1767 = vmatmul.mubr.bf16.gmra.mxu0 %v1570
    %v1768 = vpop.f32.mrf.mxu0
    %v1769 = vadd.f32 0.0, %v1768
    %v1770 = vpop.f32.mrf.mxu0
    %v1771 = vadd.f32 0.0, %v1770
    %v1772 = vpop.f32.mrf.mxu0
    %v1773 = vadd.f32 0.0, %v1772
    %v1774 = vpop.f32.mrf.mxu0
    %v1775 = vadd.f32 0.0, %v1774
    %1776 = vmatprep.mubr.bf16.mxu0 0
    %1777 = vmatmul.mubr.bf16.gmra.mxu0 %v1573
    %v1778 = vpop.f32.mrf.mxu0
    %v1779 = vadd.f32 0.0, %v1778
    %v1780 = vpop.f32.mrf.mxu0
    %v1781 = vadd.f32 0.0, %v1780
    %v1782 = vpop.f32.mrf.mxu0
    %v1783 = vadd.f32 0.0, %v1782
    %v1784 = vpop.f32.mrf.mxu0
    %v1785 = vadd.f32 0.0, %v1784
    %1786 = vmatprep.mubr.bf16.mxu0 0
    %1787 = vmatmul.mubr.bf16.gmra.mxu0 %v1576
    %v1788 = vpop.f32.mrf.mxu0
    %v1789 = vadd.f32 0.0, %v1788
    %v1790 = vpop.f32.mrf.mxu0
    %v1791 = vadd.f32 0.0, %v1790
    %v1792 = vpop.f32.mrf.mxu0
    %v1793 = vadd.f32 0.0, %v1792
    %v1794 = vpop.f32.mrf.mxu0
    %v1795 = vadd.f32 0.0, %v1794
    %1796 = vdwg.mxu0
    %1797 = vmatprep.subr.bf16.mxu0 0
    %1798 = vmatpush1.bf16.msra.mxu0 0
    %1799 = vmatprep.subr.bf16.mxu0 0
    %1800 = vmatpush1.bf16.msra.mxu0 0
    %1801 = vmatprep.subr.bf16.mxu0 %v1517
    %1802 = vmatpush1.bf16.msra.mxu0 %v1516
    %1803 = vmatprep.subr.bf16.mxu0 %v1509
    %1804 = vmatpush1.bf16.msra.mxu0 %v1508
    %1805 = vmatprep.subr.bf16.mxu0 %v1501
    %1806 = vmatpush1.bf16.msra.mxu0 %v1500
    %1807 = vmatprep.subr.bf16.mxu0 %v1493
    %1808 = vmatpush1.bf16.msra.mxu0 %v1492
    %1809 = vmatprep.subr.bf16.mxu0 %v1485
    %1810 = vmatpush1.bf16.msra.mxu0 %v1484
    %1811 = vmatprep.subr.bf16.mxu0 %v1477
    %1812 = vmatpush1.bf16.msra.mxu0 %v1476
    %1813 = vmatprep.subr.bf16.mxu0 0
    %1814 = vmatpush2.bf16.msra.mxu0 0
    %1815 = vmatprep.subr.bf16.mxu0 0
    %1816 = vmatpush2.bf16.msra.mxu0 0
    %1817 = vmatprep.subr.bf16.mxu0 0
    %1818 = vmatpush2.bf16.msra.mxu0 0
    %1819 = vmatprep.subr.bf16.mxu0 0
    %1820 = vmatpush2.bf16.msra.mxu0 0
    %1821 = vmatprep.subr.bf16.mxu0 0
    %1822 = vmatpush2.bf16.msra.mxu0 0
    %1823 = vmatprep.subr.bf16.mxu0 0
    %1824 = vmatpush2.bf16.msra.mxu0 0
    %1825 = vmatprep.subr.bf16.mxu0 0
    %1826 = vmatpush2.bf16.msra.mxu0 0
    %1827 = vmatprep.subr.bf16.mxu0 0
    %1828 = vmatpush2.bf16.msra.mxu0 0
    %1829 = vmatprep.mubr.bf16.mxu0 0
    %1830 = vmatmul.mubr.bf16.gmra.mxu0 %v1567
    %v1831 = vpop.f32.mrf.mxu0
    %v1832 = vadd.f32 0.0, %v1831
    %v1833 = vpop.f32.mrf.mxu0
    %v1834 = vadd.f32 0.0, %v1833
    %v1835 = vpop.f32.mrf.mxu0
    %v1836 = vadd.f32 0.0, %v1835
    %v1837 = vpop.f32.mrf.mxu0
    %v1838 = vadd.f32 0.0, %v1837
    %1839 = vmatprep.mubr.bf16.mxu0 0
    %1840 = vmatmul.mubr.bf16.gmra.mxu0 %v1570
    %v1841 = vpop.f32.mrf.mxu0
    %v1842 = vadd.f32 0.0, %v1841
    %v1843 = vpop.f32.mrf.mxu0
    %v1844 = vadd.f32 0.0, %v1843
    %v1845 = vpop.f32.mrf.mxu0
    %v1846 = vadd.f32 0.0, %v1845
    %v1847 = vpop.f32.mrf.mxu0
    %v1848 = vadd.f32 0.0, %v1847
    %1849 = vmatprep.mubr.bf16.mxu0 0
    %1850 = vmatmul.mubr.bf16.gmra.mxu0 %v1573
    %v1851 = vpop.f32.mrf.mxu0
    %v1852 = vadd.f32 0.0, %v1851
    %v1853 = vpop.f32.mrf.mxu0
    %v1854 = vadd.f32 0.0, %v1853
    %v1855 = vpop.f32.mrf.mxu0
    %v1856 = vadd.f32 0.0, %v1855
    %v1857 = vpop.f32.mrf.mxu0
    %v1858 = vadd.f32 0.0, %v1857
    %1859 = vmatprep.mubr.bf16.mxu0 0
    %1860 = vmatmul.mubr.bf16.gmra.mxu0 %v1576
    %v1861 = vpop.f32.mrf.mxu0
    %v1862 = vadd.f32 0.0, %v1861
    %v1863 = vpop.f32.mrf.mxu0
    %v1864 = vadd.f32 0.0, %v1863
    %v1865 = vpop.f32.mrf.mxu0
    %v1866 = vadd.f32 0.0, %v1865
    %v1867 = vpop.f32.mrf.mxu0
    %v1868 = vadd.f32 0.0, %v1867
    %1869 = vdwg.mxu0
    %v1870 = vadd.f32 %v1008, %v1613
    %v1871 = vadd.f32 %v1010, %v1615
    %v1872 = vadd.f32 %v1081, %v1686
    %v1873 = vadd.f32 %v1083, %v1688
    %v1874 = vadd.f32 %v1154, %v1759
    %v1875 = vadd.f32 %v1156, %v1761
    %v1876 = vadd.f32 %v1227, %v1832
    %v1877 = vadd.f32 %v1229, %v1834
    %v1878 = vadd.f32 %v1012, %v1617
    %v1879 = vadd.f32 %v1014, %v1619
    %v1880 = vadd.f32 %v1085, %v1690
    %v1881 = vadd.f32 %v1087, %v1692
    %v1882 = vadd.f32 %v1158, %v1763
    %v1883 = vadd.f32 %v1160, %v1765
    %v1884 = vadd.f32 %v1231, %v1836
    %v1885 = vadd.f32 %v1233, %v1838
    %v1886 = vadd.f32 %v1018, %v1623
    %v1887 = vadd.f32 %v1020, %v1625
    %v1888 = vadd.f32 %v1091, %v1696
    %v1889 = vadd.f32 %v1093, %v1698
    %v1890 = vadd.f32 %v1164, %v1769
    %v1891 = vadd.f32 %v1166, %v1771
    %v1892 = vadd.f32 %v1237, %v1842
    %v1893 = vadd.f32 %v1239, %v1844
    %v1894 = vadd.f32 %v1022, %v1627
    %v1895 = vadd.f32 %v1024, %v1629
    %v1896 = vadd.f32 %v1095, %v1700
    %v1897 = vadd.f32 %v1097, %v1702
    %v1898 = vadd.f32 %v1168, %v1773
    %v1899 = vadd.f32 %v1170, %v1775
    %v1900 = vadd.f32 %v1241, %v1846
    %v1901 = vadd.f32 %v1243, %v1848
    %v1902 = vadd.f32 %v1028, %v1633
    %v1903 = vadd.f32 %v1030, %v1635
    %v1904 = vadd.f32 %v1101, %v1706
    %v1905 = vadd.f32 %v1103, %v1708
    %v1906 = vadd.f32 %v1174, %v1779
    %v1907 = vadd.f32 %v1176, %v1781
    %v1908 = vadd.f32 %v1247, %v1852
    %v1909 = vadd.f32 %v1249, %v1854
    %v1910 = vadd.f32 %v1032, %v1637
    %v1911 = vadd.f32 %v1034, %v1639
    %v1912 = vadd.f32 %v1105, %v1710
    %v1913 = vadd.f32 %v1107, %v1712
    %v1914 = vadd.f32 %v1178, %v1783
    %v1915 = vadd.f32 %v1180, %v1785
    %v1916 = vadd.f32 %v1251, %v1856
    %v1917 = vadd.f32 %v1253, %v1858
    %v1918 = vadd.f32 %v1038, %v1643
    %v1919 = vadd.f32 %v1040, %v1645
    %v1920 = vadd.f32 %v1111, %v1716
    %v1921 = vadd.f32 %v1113, %v1718
    %v1922 = vadd.f32 %v1184, %v1789
    %v1923 = vadd.f32 %v1186, %v1791
    %v1924 = vadd.f32 %v1257, %v1862
    %v1925 = vadd.f32 %v1259, %v1864
    %v1926 = vadd.f32 %v1042, %v1647
    %v1927 = vadd.f32 %v1044, %v1649
    %v1928 = vadd.f32 %v1115, %v1720
    %v1929 = vadd.f32 %v1117, %v1722
    %v1930 = vadd.f32 %v1188, %v1793
    %v1931 = vadd.f32 %v1190, %v1795
    %v1932 = vadd.f32 %v1261, %v1866
    %v1933 = vadd.f32 %v1263, %v1868
    %v1934 = vld [vmem:[%s2] sm:$0xff]
    %v1936 = vlaneseq
    %v1937 = vshrl.u32 %v1936, 7
    %v1938 = vsub.s32 0, %v1937
    %v1939 = vrot.slane %v1934, %v1938
    %v1940 = vlaneseq
    %v1941 = vshrl.u32 %v1940, 7
    %v1942 = vsub.s32 1, %v1941
    %v1943 = vrot.slane %v1934, %v1942
    %v1944 = vlaneseq
    %v1945 = vshrl.u32 %v1944, 7
    %v1946 = vsub.s32 2, %v1945
    %v1947 = vrot.slane %v1934, %v1946
    %v1948 = vlaneseq
    %v1949 = vshrl.u32 %v1948, 7
    %v1950 = vsub.s32 3, %v1949
    %v1951 = vrot.slane %v1934, %v1950
    %v1952 = vlaneseq
    %v1953 = vshrl.u32 %v1952, 7
    %v1954 = vsub.s32 4, %v1953
    %v1955 = vrot.slane %v1934, %v1954
    %v1956 = vlaneseq
    %v1957 = vshrl.u32 %v1956, 7
    %v1958 = vsub.s32 5, %v1957
    %v1959 = vrot.slane %v1934, %v1958
    %v1960 = vlaneseq
    %v1961 = vshrl.u32 %v1960, 7
    %v1962 = vsub.s32 6, %v1961
    %v1963 = vrot.slane %v1934, %v1962
    %v1964 = vlaneseq
    %v1965 = vshrl.u32 %v1964, 7
    %v1966 = vsub.s32 7, %v1965
    %v1967 = vrot.slane %v1934, %v1966
    %v1976 = vadd.f32 %v1870, %v1939
    %v1977 = vadd.f32 %v1871, %v1943
    %v1978 = vadd.f32 %v1872, %v1947
    %v1979 = vadd.f32 %v1873, %v1951
    %v1980 = vadd.f32 %v1874, %v1955
    %v1981 = vadd.f32 %v1875, %v1959
    %v1982 = vadd.f32 %v1876, %v1963
    %v1983 = vadd.f32 %v1877, %v1967
    %v1984 = vadd.f32 %v1878, %v1939
    %v1985 = vadd.f32 %v1879, %v1943
    %v1986 = vadd.f32 %v1880, %v1947
    %v1987 = vadd.f32 %v1881, %v1951
    %v1988 = vadd.f32 %v1882, %v1955
    %v1989 = vadd.f32 %v1883, %v1959
    %v1990 = vadd.f32 %v1884, %v1963
    %v1991 = vadd.f32 %v1885, %v1967
    %v1992 = vadd.f32 %v1886, %v1939
    %v1993 = vadd.f32 %v1887, %v1943
    %v1994 = vadd.f32 %v1888, %v1947
    %v1995 = vadd.f32 %v1889, %v1951
    %v1996 = vadd.f32 %v1890, %v1955
    %v1997 = vadd.f32 %v1891, %v1959
    %v1998 = vadd.f32 %v1892, %v1963
    %v1999 = vadd.f32 %v1893, %v1967
    %v2000 = vadd.f32 %v1894, %v1939
    %v2001 = vadd.f32 %v1895, %v1943
    %v2002 = vadd.f32 %v1896, %v1947
    %v2003 = vadd.f32 %v1897, %v1951
    %v2004 = vadd.f32 %v1898, %v1955
    %v2005 = vadd.f32 %v1899, %v1959
    %v2006 = vadd.f32 %v1900, %v1963
    %v2007 = vadd.f32 %v1901, %v1967
    %v2008 = vadd.f32 %v1902, %v1939
    %v2009 = vadd.f32 %v1903, %v1943
    %v2010 = vadd.f32 %v1904, %v1947
    %v2011 = vadd.f32 %v1905, %v1951
    %v2012 = vadd.f32 %v1906, %v1955
    %v2013 = vadd.f32 %v1907, %v1959
    %v2014 = vadd.f32 %v1908, %v1963
    %v2015 = vadd.f32 %v1909, %v1967
    %v2016 = vadd.f32 %v1910, %v1939
    %v2017 = vadd.f32 %v1911, %v1943
    %v2018 = vadd.f32 %v1912, %v1947
    %v2019 = vadd.f32 %v1913, %v1951
    %v2020 = vadd.f32 %v1914, %v1955
    %v2021 = vadd.f32 %v1915, %v1959
    %v2022 = vadd.f32 %v1916, %v1963
    %v2023 = vadd.f32 %v1917, %v1967
    %v2024 = vadd.f32 %v1918, %v1939
    %v2025 = vadd.f32 %v1919, %v1943
    %v2026 = vadd.f32 %v1920, %v1947
    %v2027 = vadd.f32 %v1921, %v1951
    %v2028 = vadd.f32 %v1922, %v1955
    %v2029 = vadd.f32 %v1923, %v1959
    %v2030 = vadd.f32 %v1924, %v1963
    %v2031 = vadd.f32 %v1925, %v1967
    %v2032 = vadd.f32 %v1926, %v1939
    %v2033 = vadd.f32 %v1927, %v1943
    %v2034 = vadd.f32 %v1928, %v1947
    %v2035 = vadd.f32 %v1929, %v1951
    %v2036 = vadd.f32 %v1930, %v1955
    %v2037 = vadd.f32 %v1931, %v1959
    %v2038 = vadd.f32 %v1932, %v1963
    %v2039 = vadd.f32 %v1933, %v1967
    %v2040 = vmax.f32 %v1976, 0.0
    %v2041 = vmax.f32 %v1977, 0.0
    %v2042 = vmax.f32 %v1978, 0.0
    %v2043 = vmax.f32 %v1979, 0.0
    %v2044 = vmax.f32 %v1980, 0.0
    %v2045 = vmax.f32 %v1981, 0.0
    %v2046 = vmax.f32 %v1982, 0.0
    %v2047 = vmax.f32 %v1983, 0.0
    %v2048 = vmax.f32 %v1984, 0.0
    %v2049 = vmax.f32 %v1985, 0.0
    %v2050 = vmax.f32 %v1986, 0.0
    %v2051 = vmax.f32 %v1987, 0.0
    %v2052 = vmax.f32 %v1988, 0.0
    %v2053 = vmax.f32 %v1989, 0.0
    %v2054 = vmax.f32 %v1990, 0.0
    %v2055 = vmax.f32 %v1991, 0.0
    %v2056 = vmax.f32 %v1992, 0.0
    %v2057 = vmax.f32 %v1993, 0.0
    %v2058 = vmax.f32 %v1994, 0.0
    %v2059 = vmax.f32 %v1995, 0.0
    %v2060 = vmax.f32 %v1996, 0.0
    %v2061 = vmax.f32 %v1997, 0.0
    %v2062 = vmax.f32 %v1998, 0.0
    %v2063 = vmax.f32 %v1999, 0.0
    %v2064 = vmax.f32 %v2000, 0.0
    %v2065 = vmax.f32 %v2001, 0.0
    %v2066 = vmax.f32 %v2002, 0.0
    %v2067 = vmax.f32 %v2003, 0.0
    %v2068 = vmax.f32 %v2004, 0.0
    %v2069 = vmax.f32 %v2005, 0.0
    %v2070 = vmax.f32 %v2006, 0.0
    %v2071 = vmax.f32 %v2007, 0.0
    %v2072 = vmax.f32 %v2008, 0.0
    %v2073 = vmax.f32 %v2009, 0.0
    %v2074 = vmax.f32 %v2010, 0.0
    %v2075 = vmax.f32 %v2011, 0.0
    %v2076 = vmax.f32 %v2012, 0.0
    %v2077 = vmax.f32 %v2013, 0.0
    %v2078 = vmax.f32 %v2014, 0.0
    %v2079 = vmax.f32 %v2015, 0.0
    %v2080 = vmax.f32 %v2016, 0.0
    %v2081 = vmax.f32 %v2017, 0.0
    %v2082 = vmax.f32 %v2018, 0.0
    %v2083 = vmax.f32 %v2019, 0.0
    %v2084 = vmax.f32 %v2020, 0.0
    %v2085 = vmax.f32 %v2021, 0.0
    %v2086 = vmax.f32 %v2022, 0.0
    %v2087 = vmax.f32 %v2023, 0.0
    %v2088 = vmax.f32 %v2024, 0.0
    %v2089 = vmax.f32 %v2025, 0.0
    %v2090 = vmax.f32 %v2026, 0.0
    %v2091 = vmax.f32 %v2027, 0.0
    %v2092 = vmax.f32 %v2028, 0.0
    %v2093 = vmax.f32 %v2029, 0.0
    %v2094 = vmax.f32 %v2030, 0.0
    %v2095 = vmax.f32 %v2031, 0.0
    %v2096 = vmax.f32 %v2032, 0.0
    %v2097 = vmax.f32 %v2033, 0.0
    %v2098 = vmax.f32 %v2034, 0.0
    %v2099 = vmax.f32 %v2035, 0.0
    %v2100 = vmax.f32 %v2036, 0.0
    %v2101 = vmax.f32 %v2037, 0.0
    %v2102 = vmax.f32 %v2038, 0.0
    %v2103 = vmax.f32 %v2039, 0.0
    %v2168 = vcombine.low %v2040, %v2041
    %v2169 = vcombine.high %v2040, %v2041
    %v2170 = vcombine.low %v2042, %v2043
    %v2171 = vcombine.high %v2042, %v2043
    %v2173 = vunpack.c.l.s4 1983009808
    %v2174 = vunpack.c.0.s8 %v2173
    %v2175 = vlaneseq
    %v2176 = vshrl.u32 %v2175, 7
    %v2177 = vsub.s32 %v2174, %v2176
    %v2178 = vrot.slane %v2168, %v2177
    %v2180 = vunpack.c.l.s4 1983009808
    %v2181 = vunpack.c.0.s8 %v2180
    %v2182 = vlaneseq
    %v2183 = vshrl.u32 %v2182, 7
    %v2184 = vsub.s32 %v2181, %v2183
    %v2185 = vrot.slane %v2169, %v2184
    %v2187 = vunpack.c.l.s4 1983009808
    %v2188 = vunpack.c.0.s8 %v2187
    %v2189 = vlaneseq
    %v2190 = vshrl.u32 %v2189, 7
    %v2191 = vsub.s32 %v2188, %v2190
    %v2192 = vrot.slane %v2170, %v2191
    %v2194 = vunpack.c.l.s4 1983009808
    %v2195 = vunpack.c.0.s8 %v2194
    %v2196 = vlaneseq
    %v2197 = vshrl.u32 %v2196, 7
    %v2198 = vsub.s32 %v2195, %v2197
    %v2199 = vrot.slane %v2171, %v2198
    %v2200 = vcombine.low %v2178, %v2192
    %v2201 = vcombine.high %v2178, %v2192
    %v2202 = vcombine.low %v2185, %v2199
    %v2203 = vcombine.high %v2185, %v2199
    %v2204 = vcombine.low %v2044, %v2045
    %v2205 = vcombine.high %v2044, %v2045
    %v2206 = vcombine.low %v2046, %v2047
    %v2207 = vcombine.high %v2046, %v2047
    %v2209 = vunpack.c.l.s4 1983009808
    %v2210 = vunpack.c.0.s8 %v2209
    %v2211 = vlaneseq
    %v2212 = vshrl.u32 %v2211, 7
    %v2213 = vsub.s32 %v2210, %v2212
    %v2214 = vrot.slane %v2204, %v2213
    %v2216 = vunpack.c.l.s4 1983009808
    %v2217 = vunpack.c.0.s8 %v2216
    %v2218 = vlaneseq
    %v2219 = vshrl.u32 %v2218, 7
    %v2220 = vsub.s32 %v2217, %v2219
    %v2221 = vrot.slane %v2205, %v2220
    %v2223 = vunpack.c.l.s4 1983009808
    %v2224 = vunpack.c.0.s8 %v2223
    %v2225 = vlaneseq
    %v2226 = vshrl.u32 %v2225, 7
    %v2227 = vsub.s32 %v2224, %v2226
    %v2228 = vrot.slane %v2206, %v2227
    %v2230 = vunpack.c.l.s4 1983009808
    %v2231 = vunpack.c.0.s8 %v2230
    %v2232 = vlaneseq
    %v2233 = vshrl.u32 %v2232, 7
    %v2234 = vsub.s32 %v2231, %v2233
    %v2235 = vrot.slane %v2207, %v2234
    %v2236 = vcombine.low %v2214, %v2228
    %v2237 = vcombine.high %v2214, %v2228
    %v2238 = vcombine.low %v2221, %v2235
    %v2239 = vcombine.high %v2221, %v2235
    %v2240 = vcombine.low %v2048, %v2049
    %v2241 = vcombine.high %v2048, %v2049
    %v2242 = vcombine.low %v2050, %v2051
    %v2243 = vcombine.high %v2050, %v2051
    %v2245 = vunpack.c.l.s4 1983009808
    %v2246 = vunpack.c.0.s8 %v2245
    %v2247 = vlaneseq
    %v2248 = vshrl.u32 %v2247, 7
    %v2249 = vsub.s32 %v2246, %v2248
    %v2250 = vrot.slane %v2240, %v2249
    %v2252 = vunpack.c.l.s4 1983009808
    %v2253 = vunpack.c.0.s8 %v2252
    %v2254 = vlaneseq
    %v2255 = vshrl.u32 %v2254, 7
    %v2256 = vsub.s32 %v2253, %v2255
    %v2257 = vrot.slane %v2241, %v2256
    %v2259 = vunpack.c.l.s4 1983009808
    %v2260 = vunpack.c.0.s8 %v2259
    %v2261 = vlaneseq
    %v2262 = vshrl.u32 %v2261, 7
    %v2263 = vsub.s32 %v2260, %v2262
    %v2264 = vrot.slane %v2242, %v2263
    %v2266 = vunpack.c.l.s4 1983009808
    %v2267 = vunpack.c.0.s8 %v2266
    %v2268 = vlaneseq
    %v2269 = vshrl.u32 %v2268, 7
    %v2270 = vsub.s32 %v2267, %v2269
    %v2271 = vrot.slane %v2243, %v2270
    %v2272 = vcombine.low %v2250, %v2264
    %v2273 = vcombine.high %v2250, %v2264
    %v2274 = vcombine.low %v2257, %v2271
    %v2275 = vcombine.high %v2257, %v2271
    %v2276 = vcombine.low %v2052, %v2053
    %v2277 = vcombine.high %v2052, %v2053
    %v2278 = vcombine.low %v2054, %v2055
    %v2279 = vcombine.high %v2054, %v2055
    %v2281 = vunpack.c.l.s4 1983009808
    %v2282 = vunpack.c.0.s8 %v2281
    %v2283 = vlaneseq
    %v2284 = vshrl.u32 %v2283, 7
    %v2285 = vsub.s32 %v2282, %v2284
    %v2286 = vrot.slane %v2276, %v2285
    %v2288 = vunpack.c.l.s4 1983009808
    %v2289 = vunpack.c.0.s8 %v2288
    %v2290 = vlaneseq
    %v2291 = vshrl.u32 %v2290, 7
    %v2292 = vsub.s32 %v2289, %v2291
    %v2293 = vrot.slane %v2277, %v2292
    %v2295 = vunpack.c.l.s4 1983009808
    %v2296 = vunpack.c.0.s8 %v2295
    %v2297 = vlaneseq
    %v2298 = vshrl.u32 %v2297, 7
    %v2299 = vsub.s32 %v2296, %v2298
    %v2300 = vrot.slane %v2278, %v2299
    %v2302 = vunpack.c.l.s4 1983009808
    %v2303 = vunpack.c.0.s8 %v2302
    %v2304 = vlaneseq
    %v2305 = vshrl.u32 %v2304, 7
    %v2306 = vsub.s32 %v2303, %v2305
    %v2307 = vrot.slane %v2279, %v2306
    %v2308 = vcombine.low %v2286, %v2300
    %v2309 = vcombine.high %v2286, %v2300
    %v2310 = vcombine.low %v2293, %v2307
    %v2311 = vcombine.high %v2293, %v2307
    %v2312 = vcombine.low %v2056, %v2057
    %v2313 = vcombine.high %v2056, %v2057
    %v2314 = vcombine.low %v2058, %v2059
    %v2315 = vcombine.high %v2058, %v2059
    %v2317 = vunpack.c.l.s4 1983009808
    %v2318 = vunpack.c.0.s8 %v2317
    %v2319 = vlaneseq
    %v2320 = vshrl.u32 %v2319, 7
    %v2321 = vsub.s32 %v2318, %v2320
    %v2322 = vrot.slane %v2312, %v2321
    %v2324 = vunpack.c.l.s4 1983009808
    %v2325 = vunpack.c.0.s8 %v2324
    %v2326 = vlaneseq
    %v2327 = vshrl.u32 %v2326, 7
    %v2328 = vsub.s32 %v2325, %v2327
    %v2329 = vrot.slane %v2313, %v2328
    %v2331 = vunpack.c.l.s4 1983009808
    %v2332 = vunpack.c.0.s8 %v2331
    %v2333 = vlaneseq
    %v2334 = vshrl.u32 %v2333, 7
    %v2335 = vsub.s32 %v2332, %v2334
    %v2336 = vrot.slane %v2314, %v2335
    %v2338 = vunpack.c.l.s4 1983009808
    %v2339 = vunpack.c.0.s8 %v2338
    %v2340 = vlaneseq
    %v2341 = vshrl.u32 %v2340, 7
    %v2342 = vsub.s32 %v2339, %v2341
    %v2343 = vrot.slane %v2315, %v2342
    %v2344 = vcombine.low %v2322, %v2336
    %v2345 = vcombine.high %v2322, %v2336
    %v2346 = vcombine.low %v2329, %v2343
    %v2347 = vcombine.high %v2329, %v2343
    %v2348 = vcombine.low %v2060, %v2061
    %v2349 = vcombine.high %v2060, %v2061
    %v2350 = vcombine.low %v2062, %v2063
    %v2351 = vcombine.high %v2062, %v2063
    %v2353 = vunpack.c.l.s4 1983009808
    %v2354 = vunpack.c.0.s8 %v2353
    %v2355 = vlaneseq
    %v2356 = vshrl.u32 %v2355, 7
    %v2357 = vsub.s32 %v2354, %v2356
    %v2358 = vrot.slane %v2348, %v2357
    %v2360 = vunpack.c.l.s4 1983009808
    %v2361 = vunpack.c.0.s8 %v2360
    %v2362 = vlaneseq
    %v2363 = vshrl.u32 %v2362, 7
    %v2364 = vsub.s32 %v2361, %v2363
    %v2365 = vrot.slane %v2349, %v2364
    %v2367 = vunpack.c.l.s4 1983009808
    %v2368 = vunpack.c.0.s8 %v2367
    %v2369 = vlaneseq
    %v2370 = vshrl.u32 %v2369, 7
    %v2371 = vsub.s32 %v2368, %v2370
    %v2372 = vrot.slane %v2350, %v2371
    %v2374 = vunpack.c.l.s4 1983009808
    %v2375 = vunpack.c.0.s8 %v2374
    %v2376 = vlaneseq
    %v2377 = vshrl.u32 %v2376, 7
    %v2378 = vsub.s32 %v2375, %v2377
    %v2379 = vrot.slane %v2351, %v2378
    %v2380 = vcombine.low %v2358, %v2372
    %v2381 = vcombine.high %v2358, %v2372
    %v2382 = vcombine.low %v2365, %v2379
    %v2383 = vcombine.high %v2365, %v2379
    %v2384 = vcombine.low %v2064, %v2065
    %v2385 = vcombine.high %v2064, %v2065
    %v2386 = vcombine.low %v2066, %v2067
    %v2387 = vcombine.high %v2066, %v2067
    %v2389 = vunpack.c.l.s4 1983009808
    %v2390 = vunpack.c.0.s8 %v2389
    %v2391 = vlaneseq
    %v2392 = vshrl.u32 %v2391, 7
    %v2393 = vsub.s32 %v2390, %v2392
    %v2394 = vrot.slane %v2384, %v2393
    %v2396 = vunpack.c.l.s4 1983009808
    %v2397 = vunpack.c.0.s8 %v2396
    %v2398 = vlaneseq
    %v2399 = vshrl.u32 %v2398, 7
    %v2400 = vsub.s32 %v2397, %v2399
    %v2401 = vrot.slane %v2385, %v2400
    %v2403 = vunpack.c.l.s4 1983009808
    %v2404 = vunpack.c.0.s8 %v2403
    %v2405 = vlaneseq
    %v2406 = vshrl.u32 %v2405, 7
    %v2407 = vsub.s32 %v2404, %v2406
    %v2408 = vrot.slane %v2386, %v2407
    %v2410 = vunpack.c.l.s4 1983009808
    %v2411 = vunpack.c.0.s8 %v2410
    %v2412 = vlaneseq
    %v2413 = vshrl.u32 %v2412, 7
    %v2414 = vsub.s32 %v2411, %v2413
    %v2415 = vrot.slane %v2387, %v2414
    %v2416 = vcombine.low %v2394, %v2408
    %v2417 = vcombine.high %v2394, %v2408
    %v2418 = vcombine.low %v2401, %v2415
    %v2419 = vcombine.high %v2401, %v2415
    %v2420 = vcombine.low %v2068, %v2069
    %v2421 = vcombine.high %v2068, %v2069
    %v2422 = vcombine.low %v2070, %v2071
    %v2423 = vcombine.high %v2070, %v2071
    %v2425 = vunpack.c.l.s4 1983009808
    %v2426 = vunpack.c.0.s8 %v2425
    %v2427 = vlaneseq
    %v2428 = vshrl.u32 %v2427, 7
    %v2429 = vsub.s32 %v2426, %v2428
    %v2430 = vrot.slane %v2420, %v2429
    %v2432 = vunpack.c.l.s4 1983009808
    %v2433 = vunpack.c.0.s8 %v2432
    %v2434 = vlaneseq
    %v2435 = vshrl.u32 %v2434, 7
    %v2436 = vsub.s32 %v2433, %v2435
    %v2437 = vrot.slane %v2421, %v2436
    %v2439 = vunpack.c.l.s4 1983009808
    %v2440 = vunpack.c.0.s8 %v2439
    %v2441 = vlaneseq
    %v2442 = vshrl.u32 %v2441, 7
    %v2443 = vsub.s32 %v2440, %v2442
    %v2444 = vrot.slane %v2422, %v2443
    %v2446 = vunpack.c.l.s4 1983009808
    %v2447 = vunpack.c.0.s8 %v2446
    %v2448 = vlaneseq
    %v2449 = vshrl.u32 %v2448, 7
    %v2450 = vsub.s32 %v2447, %v2449
    %v2451 = vrot.slane %v2423, %v2450
    %v2452 = vcombine.low %v2430, %v2444
    %v2453 = vcombine.high %v2430, %v2444
    %v2454 = vcombine.low %v2437, %v2451
    %v2455 = vcombine.high %v2437, %v2451
    %v2456 = vcombine.low %v2072, %v2073
    %v2457 = vcombine.high %v2072, %v2073
    %v2458 = vcombine.low %v2074, %v2075
    %v2459 = vcombine.high %v2074, %v2075
    %v2461 = vunpack.c.l.s4 1983009808
    %v2462 = vunpack.c.0.s8 %v2461
    %v2463 = vlaneseq
    %v2464 = vshrl.u32 %v2463, 7
    %v2465 = vsub.s32 %v2462, %v2464
    %v2466 = vrot.slane %v2456, %v2465
    %v2468 = vunpack.c.l.s4 1983009808
    %v2469 = vunpack.c.0.s8 %v2468
    %v2470 = vlaneseq
    %v2471 = vshrl.u32 %v2470, 7
    %v2472 = vsub.s32 %v2469, %v2471
    %v2473 = vrot.slane %v2457, %v2472
    %v2475 = vunpack.c.l.s4 1983009808
    %v2476 = vunpack.c.0.s8 %v2475
    %v2477 = vlaneseq
    %v2478 = vshrl.u32 %v2477, 7
    %v2479 = vsub.s32 %v2476, %v2478
    %v2480 = vrot.slane %v2458, %v2479
    %v2482 = vunpack.c.l.s4 1983009808
    %v2483 = vunpack.c.0.s8 %v2482
    %v2484 = vlaneseq
    %v2485 = vshrl.u32 %v2484, 7
    %v2486 = vsub.s32 %v2483, %v2485
    %v2487 = vrot.slane %v2459, %v2486
    %v2488 = vcombine.low %v2466, %v2480
    %v2489 = vcombine.high %v2466, %v2480
    %v2490 = vcombine.low %v2473, %v2487
    %v2491 = vcombine.high %v2473, %v2487
    %v2492 = vcombine.low %v2076, %v2077
    %v2493 = vcombine.high %v2076, %v2077
    %v2494 = vcombine.low %v2078, %v2079
    %v2495 = vcombine.high %v2078, %v2079
    %v2497 = vunpack.c.l.s4 1983009808
    %v2498 = vunpack.c.0.s8 %v2497
    %v2499 = vlaneseq
    %v2500 = vshrl.u32 %v2499, 7
    %v2501 = vsub.s32 %v2498, %v2500
    %v2502 = vrot.slane %v2492, %v2501
    %v2504 = vunpack.c.l.s4 1983009808
    %v2505 = vunpack.c.0.s8 %v2504
    %v2506 = vlaneseq
    %v2507 = vshrl.u32 %v2506, 7
    %v2508 = vsub.s32 %v2505, %v2507
    %v2509 = vrot.slane %v2493, %v2508
    %v2511 = vunpack.c.l.s4 1983009808
    %v2512 = vunpack.c.0.s8 %v2511
    %v2513 = vlaneseq
    %v2514 = vshrl.u32 %v2513, 7
    %v2515 = vsub.s32 %v2512, %v2514
    %v2516 = vrot.slane %v2494, %v2515
    %v2518 = vunpack.c.l.s4 1983009808
    %v2519 = vunpack.c.0.s8 %v2518
    %v2520 = vlaneseq
    %v2521 = vshrl.u32 %v2520, 7
    %v2522 = vsub.s32 %v2519, %v2521
    %v2523 = vrot.slane %v2495, %v2522
    %v2524 = vcombine.low %v2502, %v2516
    %v2525 = vcombine.high %v2502, %v2516
    %v2526 = vcombine.low %v2509, %v2523
    %v2527 = vcombine.high %v2509, %v2523
    %v2528 = vcombine.low %v2080, %v2081
    %v2529 = vcombine.high %v2080, %v2081
    %v2530 = vcombine.low %v2082, %v2083
    %v2531 = vcombine.high %v2082, %v2083
    %v2533 = vunpack.c.l.s4 1983009808
    %v2534 = vunpack.c.0.s8 %v2533
    %v2535 = vlaneseq
    %v2536 = vshrl.u32 %v2535, 7
    %v2537 = vsub.s32 %v2534, %v2536
    %v2538 = vrot.slane %v2528, %v2537
    %v2540 = vunpack.c.l.s4 1983009808
    %v2541 = vunpack.c.0.s8 %v2540
    %v2542 = vlaneseq
    %v2543 = vshrl.u32 %v2542, 7
    %v2544 = vsub.s32 %v2541, %v2543
    %v2545 = vrot.slane %v2529, %v2544
    %v2547 = vunpack.c.l.s4 1983009808
    %v2548 = vunpack.c.0.s8 %v2547
    %v2549 = vlaneseq
    %v2550 = vshrl.u32 %v2549, 7
    %v2551 = vsub.s32 %v2548, %v2550
    %v2552 = vrot.slane %v2530, %v2551
    %v2554 = vunpack.c.l.s4 1983009808
    %v2555 = vunpack.c.0.s8 %v2554
    %v2556 = vlaneseq
    %v2557 = vshrl.u32 %v2556, 7
    %v2558 = vsub.s32 %v2555, %v2557
    %v2559 = vrot.slane %v2531, %v2558
    %v2560 = vcombine.low %v2538, %v2552
    %v2561 = vcombine.high %v2538, %v2552
    %v2562 = vcombine.low %v2545, %v2559
    %v2563 = vcombine.high %v2545, %v2559
    %v2564 = vcombine.low %v2084, %v2085
    %v2565 = vcombine.high %v2084, %v2085
    %v2566 = vcombine.low %v2086, %v2087
    %v2567 = vcombine.high %v2086, %v2087
    %v2569 = vunpack.c.l.s4 1983009808
    %v2570 = vunpack.c.0.s8 %v2569
    %v2571 = vlaneseq
    %v2572 = vshrl.u32 %v2571, 7
    %v2573 = vsub.s32 %v2570, %v2572
    %v2574 = vrot.slane %v2564, %v2573
    %v2576 = vunpack.c.l.s4 1983009808
    %v2577 = vunpack.c.0.s8 %v2576
    %v2578 = vlaneseq
    %v2579 = vshrl.u32 %v2578, 7
    %v2580 = vsub.s32 %v2577, %v2579
    %v2581 = vrot.slane %v2565, %v2580
    %v2583 = vunpack.c.l.s4 1983009808
    %v2584 = vunpack.c.0.s8 %v2583
    %v2585 = vlaneseq
    %v2586 = vshrl.u32 %v2585, 7
    %v2587 = vsub.s32 %v2584, %v2586
    %v2588 = vrot.slane %v2566, %v2587
    %v2590 = vunpack.c.l.s4 1983009808
    %v2591 = vunpack.c.0.s8 %v2590
    %v2592 = vlaneseq
    %v2593 = vshrl.u32 %v2592, 7
    %v2594 = vsub.s32 %v2591, %v2593
    %v2595 = vrot.slane %v2567, %v2594
    %v2596 = vcombine.low %v2574, %v2588
    %v2597 = vcombine.high %v2574, %v2588
    %v2598 = vcombine.low %v2581, %v2595
    %v2599 = vcombine.high %v2581, %v2595
    %v2600 = vcombine.low %v2088, %v2089
    %v2601 = vcombine.high %v2088, %v2089
    %v2602 = vcombine.low %v2090, %v2091
    %v2603 = vcombine.high %v2090, %v2091
    %v2605 = vunpack.c.l.s4 1983009808
    %v2606 = vunpack.c.0.s8 %v2605
    %v2607 = vlaneseq
    %v2608 = vshrl.u32 %v2607, 7
    %v2609 = vsub.s32 %v2606, %v2608
    %v2610 = vrot.slane %v2600, %v2609
    %v2612 = vunpack.c.l.s4 1983009808
    %v2613 = vunpack.c.0.s8 %v2612
    %v2614 = vlaneseq
    %v2615 = vshrl.u32 %v2614, 7
    %v2616 = vsub.s32 %v2613, %v2615
    %v2617 = vrot.slane %v2601, %v2616
    %v2619 = vunpack.c.l.s4 1983009808
    %v2620 = vunpack.c.0.s8 %v2619
    %v2621 = vlaneseq
    %v2622 = vshrl.u32 %v2621, 7
    %v2623 = vsub.s32 %v2620, %v2622
    %v2624 = vrot.slane %v2602, %v2623
    %v2626 = vunpack.c.l.s4 1983009808
    %v2627 = vunpack.c.0.s8 %v2626
    %v2628 = vlaneseq
    %v2629 = vshrl.u32 %v2628, 7
    %v2630 = vsub.s32 %v2627, %v2629
    %v2631 = vrot.slane %v2603, %v2630
    %v2632 = vcombine.low %v2610, %v2624
    %v2633 = vcombine.high %v2610, %v2624
    %v2634 = vcombine.low %v2617, %v2631
    %v2635 = vcombine.high %v2617, %v2631
    %v2636 = vcombine.low %v2092, %v2093
    %v2637 = vcombine.high %v2092, %v2093
    %v2638 = vcombine.low %v2094, %v2095
    %v2639 = vcombine.high %v2094, %v2095
    %v2641 = vunpack.c.l.s4 1983009808
    %v2642 = vunpack.c.0.s8 %v2641
    %v2643 = vlaneseq
    %v2644 = vshrl.u32 %v2643, 7
    %v2645 = vsub.s32 %v2642, %v2644
    %v2646 = vrot.slane %v2636, %v2645
    %v2648 = vunpack.c.l.s4 1983009808
    %v2649 = vunpack.c.0.s8 %v2648
    %v2650 = vlaneseq
    %v2651 = vshrl.u32 %v2650, 7
    %v2652 = vsub.s32 %v2649, %v2651
    %v2653 = vrot.slane %v2637, %v2652
    %v2655 = vunpack.c.l.s4 1983009808
    %v2656 = vunpack.c.0.s8 %v2655
    %v2657 = vlaneseq
    %v2658 = vshrl.u32 %v2657, 7
    %v2659 = vsub.s32 %v2656, %v2658
    %v2660 = vrot.slane %v2638, %v2659
    %v2662 = vunpack.c.l.s4 1983009808
    %v2663 = vunpack.c.0.s8 %v2662
    %v2664 = vlaneseq
    %v2665 = vshrl.u32 %v2664, 7
    %v2666 = vsub.s32 %v2663, %v2665
    %v2667 = vrot.slane %v2639, %v2666
    %v2668 = vcombine.low %v2646, %v2660
    %v2669 = vcombine.high %v2646, %v2660
    %v2670 = vcombine.low %v2653, %v2667
    %v2671 = vcombine.high %v2653, %v2667
    %v2672 = vcombine.low %v2096, %v2097
    %v2673 = vcombine.high %v2096, %v2097
    %v2674 = vcombine.low %v2098, %v2099
    %v2675 = vcombine.high %v2098, %v2099
    %v2677 = vunpack.c.l.s4 1983009808
    %v2678 = vunpack.c.0.s8 %v2677
    %v2679 = vlaneseq
    %v2680 = vshrl.u32 %v2679, 7
    %v2681 = vsub.s32 %v2678, %v2680
    %v2682 = vrot.slane %v2672, %v2681
    %v2684 = vunpack.c.l.s4 1983009808
    %v2685 = vunpack.c.0.s8 %v2684
    %v2686 = vlaneseq
    %v2687 = vshrl.u32 %v2686, 7
    %v2688 = vsub.s32 %v2685, %v2687
    %v2689 = vrot.slane %v2673, %v2688
    %v2691 = vunpack.c.l.s4 1983009808
    %v2692 = vunpack.c.0.s8 %v2691
    %v2693 = vlaneseq
    %v2694 = vshrl.u32 %v2693, 7
    %v2695 = vsub.s32 %v2692, %v2694
    %v2696 = vrot.slane %v2674, %v2695
    %v2698 = vunpack.c.l.s4 1983009808
    %v2699 = vunpack.c.0.s8 %v2698
    %v2700 = vlaneseq
    %v2701 = vshrl.u32 %v2700, 7
    %v2702 = vsub.s32 %v2699, %v2701
    %v2703 = vrot.slane %v2675, %v2702
    %v2704 = vcombine.low %v2682, %v2696
    %v2705 = vcombine.high %v2682, %v2696
    %v2706 = vcombine.low %v2689, %v2703
    %v2707 = vcombine.high %v2689, %v2703
    %v2708 = vcombine.low %v2100, %v2101
    %v2709 = vcombine.high %v2100, %v2101
    %v2710 = vcombine.low %v2102, %v2103
    %v2711 = vcombine.high %v2102, %v2103
    %v2713 = vunpack.c.l.s4 1983009808
    %v2714 = vunpack.c.0.s8 %v2713
    %v2715 = vlaneseq
    %v2716 = vshrl.u32 %v2715, 7
    %v2717 = vsub.s32 %v2714, %v2716
    %v2718 = vrot.slane %v2708, %v2717
    %v2720 = vunpack.c.l.s4 1983009808
    %v2721 = vunpack.c.0.s8 %v2720
    %v2722 = vlaneseq
    %v2723 = vshrl.u32 %v2722, 7
    %v2724 = vsub.s32 %v2721, %v2723
    %v2725 = vrot.slane %v2709, %v2724
    %v2727 = vunpack.c.l.s4 1983009808
    %v2728 = vunpack.c.0.s8 %v2727
    %v2729 = vlaneseq
    %v2730 = vshrl.u32 %v2729, 7
    %v2731 = vsub.s32 %v2728, %v2730
    %v2732 = vrot.slane %v2710, %v2731
    %v2734 = vunpack.c.l.s4 1983009808
    %v2735 = vunpack.c.0.s8 %v2734
    %v2736 = vlaneseq
    %v2737 = vshrl.u32 %v2736, 7
    %v2738 = vsub.s32 %v2735, %v2737
    %v2739 = vrot.slane %v2711, %v2738
    %v2740 = vcombine.low %v2718, %v2732
    %v2741 = vcombine.high %v2718, %v2732
    %v2742 = vcombine.low %v2725, %v2739
    %v2743 = vcombine.high %v2725, %v2739
    %v2808 = vrot.slane %v2200, 7
    %v2809 = vrot.slane %v2808, 2
    %v2810 = vrot.slane %v2236, 7
    %v2811 = vrot.slane %v2810, 2
    %v2812 = vrot.slane %v2201, 7
    %v2813 = vrot.slane %v2812, 2
    %v2814 = vrot.slane %v2237, 7
    %v2815 = vrot.slane %v2814, 2
    %v2816 = vrot.slane %v2202, 7
    %v2817 = vrot.slane %v2816, 2
    %v2818 = vrot.slane %v2238, 7
    %v2819 = vrot.slane %v2818, 2
    %v2820 = vrot.slane %v2203, 7
    %v2821 = vrot.slane %v2820, 2
    %v2822 = vrot.slane %v2239, 7
    %v2823 = vrot.slane %v2822, 2
    %v2824 = vrot.slane %v2272, 7
    %v2825 = vrot.slane %v2824, 2
    %v2826 = vrot.slane %v2308, 7
    %v2827 = vrot.slane %v2826, 2
    %v2828 = vrot.slane %v2273, 7
    %v2829 = vrot.slane %v2828, 2
    %v2830 = vrot.slane %v2309, 7
    %v2831 = vrot.slane %v2830, 2
    %v2832 = vrot.slane %v2274, 7
    %v2833 = vrot.slane %v2832, 2
    %v2834 = vrot.slane %v2310, 7
    %v2835 = vrot.slane %v2834, 2
    %v2836 = vrot.slane %v2275, 7
    %v2837 = vrot.slane %v2836, 2
    %v2838 = vrot.slane %v2311, 7
    %v2839 = vrot.slane %v2838, 2
    %v2840 = vrot.slane %v2344, 7
    %v2841 = vrot.slane %v2840, 2
    %v2842 = vrot.slane %v2380, 7
    %v2843 = vrot.slane %v2842, 2
    %v2844 = vrot.slane %v2345, 7
    %v2845 = vrot.slane %v2844, 2
    %v2846 = vrot.slane %v2381, 7
    %v2847 = vrot.slane %v2846, 2
    %v2848 = vrot.slane %v2346, 7
    %v2849 = vrot.slane %v2848, 2
    %v2850 = vrot.slane %v2382, 7
    %v2851 = vrot.slane %v2850, 2
    %v2852 = vrot.slane %v2347, 7
    %v2853 = vrot.slane %v2852, 2
    %v2854 = vrot.slane %v2383, 7
    %v2855 = vrot.slane %v2854, 2
    %v2856 = vrot.slane %v2416, 7
    %v2857 = vrot.slane %v2856, 2
    %v2858 = vrot.slane %v2452, 7
    %v2859 = vrot.slane %v2858, 2
    %v2860 = vrot.slane %v2417, 7
    %v2861 = vrot.slane %v2860, 2
    %v2862 = vrot.slane %v2453, 7
    %v2863 = vrot.slane %v2862, 2
    %v2864 = vrot.slane %v2418, 7
    %v2865 = vrot.slane %v2864, 2
    %v2866 = vrot.slane %v2454, 7
    %v2867 = vrot.slane %v2866, 2
    %v2868 = vrot.slane %v2419, 7
    %v2869 = vrot.slane %v2868, 2
    %v2870 = vrot.slane %v2455, 7
    %v2871 = vrot.slane %v2870, 2
    %v2872 = vrot.slane %v2488, 7
    %v2873 = vrot.slane %v2872, 2
    %v2874 = vrot.slane %v2524, 7
    %v2875 = vrot.slane %v2874, 2
    %v2876 = vrot.slane %v2489, 7
    %v2877 = vrot.slane %v2876, 2
    %v2878 = vrot.slane %v2525, 7
    %v2879 = vrot.slane %v2878, 2
    %v2880 = vrot.slane %v2490, 7
    %v2881 = vrot.slane %v2880, 2
    %v2882 = vrot.slane %v2526, 7
    %v2883 = vrot.slane %v2882, 2
    %v2884 = vrot.slane %v2491, 7
    %v2885 = vrot.slane %v2884, 2
    %v2886 = vrot.slane %v2527, 7
    %v2887 = vrot.slane %v2886, 2
    %v2888 = vrot.slane %v2560, 7
    %v2889 = vrot.slane %v2888, 2
    %v2890 = vrot.slane %v2596, 7
    %v2891 = vrot.slane %v2890, 2
    %v2892 = vrot.slane %v2561, 7
    %v2893 = vrot.slane %v2892, 2
    %v2894 = vrot.slane %v2597, 7
    %v2895 = vrot.slane %v2894, 2
    %v2896 = vrot.slane %v2562, 7
    %v2897 = vrot.slane %v2896, 2
    %v2898 = vrot.slane %v2598, 7
    %v2899 = vrot.slane %v2898, 2
    %v2900 = vrot.slane %v2563, 7
    %v2901 = vrot.slane %v2900, 2
    %v2902 = vrot.slane %v2599, 7
    %v2903 = vrot.slane %v2902, 2
    %v2904 = vrot.slane %v2632, 7
    %v2905 = vrot.slane %v2904, 2
    %v2906 = vrot.slane %v2668, 7
    %v2907 = vrot.slane %v2906, 2
    %v2908 = vrot.slane %v2633, 7
    %v2909 = vrot.slane %v2908, 2
    %v2910 = vrot.slane %v2669, 7
    %v2911 = vrot.slane %v2910, 2
    %v2912 = vrot.slane %v2634, 7
    %v2913 = vrot.slane %v2912, 2
    %v2914 = vrot.slane %v2670, 7
    %v2915 = vrot.slane %v2914, 2
    %v2916 = vrot.slane %v2635, 7
    %v2917 = vrot.slane %v2916, 2
    %v2918 = vrot.slane %v2671, 7
    %v2919 = vrot.slane %v2918, 2
    %v2920 = vrot.slane %v2704, 7
    %v2921 = vrot.slane %v2920, 2
    %v2922 = vrot.slane %v2740, 7
    %v2923 = vrot.slane %v2922, 2
    %v2924 = vrot.slane %v2705, 7
    %v2925 = vrot.slane %v2924, 2
    %v2926 = vrot.slane %v2741, 7
    %v2927 = vrot.slane %v2926, 2
    %v2928 = vrot.slane %v2706, 7
    %v2929 = vrot.slane %v2928, 2
    %v2930 = vrot.slane %v2742, 7
    %v2931 = vrot.slane %v2930, 2
    %v2932 = vrot.slane %v2707, 7
    %v2933 = vrot.slane %v2932, 2
    %v2934 = vrot.slane %v2743, 7
    %v2935 = vrot.slane %v2934, 2
    %v3000 = vmax.f32 %v2200, %v2809
    %v3001 = vmax.f32 %v2236, %v2811
    %v3002 = vmax.f32 %v2201, %v2813
    %v3003 = vmax.f32 %v2237, %v2815
    %v3004 = vmax.f32 %v2202, %v2817
    %v3005 = vmax.f32 %v2238, %v2819
    %v3006 = vmax.f32 %v2203, %v2821
    %v3007 = vmax.f32 %v2239, %v2823
    %v3008 = vmax.f32 %v2272, %v2825
    %v3009 = vmax.f32 %v2308, %v2827
    %v3010 = vmax.f32 %v2273, %v2829
    %v3011 = vmax.f32 %v2309, %v2831
    %v3012 = vmax.f32 %v2274, %v2833
    %v3013 = vmax.f32 %v2310, %v2835
    %v3014 = vmax.f32 %v2275, %v2837
    %v3015 = vmax.f32 %v2311, %v2839
    %v3016 = vmax.f32 %v2344, %v2841
    %v3017 = vmax.f32 %v2380, %v2843
    %v3018 = vmax.f32 %v2345, %v2845
    %v3019 = vmax.f32 %v2381, %v2847
    %v3020 = vmax.f32 %v2346, %v2849
    %v3021 = vmax.f32 %v2382, %v2851
    %v3022 = vmax.f32 %v2347, %v2853
    %v3023 = vmax.f32 %v2383, %v2855
    %v3024 = vmax.f32 %v2416, %v2857
    %v3025 = vmax.f32 %v2452, %v2859
    %v3026 = vmax.f32 %v2417, %v2861
    %v3027 = vmax.f32 %v2453, %v2863
    %v3028 = vmax.f32 %v2418, %v2865
    %v3029 = vmax.f32 %v2454, %v2867
    %v3030 = vmax.f32 %v2419, %v2869
    %v3031 = vmax.f32 %v2455, %v2871
    %v3032 = vmax.f32 %v2488, %v2873
    %v3033 = vmax.f32 %v2524, %v2875
    %v3034 = vmax.f32 %v2489, %v2877
    %v3035 = vmax.f32 %v2525, %v2879
    %v3036 = vmax.f32 %v2490, %v2881
    %v3037 = vmax.f32 %v2526, %v2883
    %v3038 = vmax.f32 %v2491, %v2885
    %v3039 = vmax.f32 %v2527, %v2887
    %v3040 = vmax.f32 %v2560, %v2889
    %v3041 = vmax.f32 %v2596, %v2891
    %v3042 = vmax.f32 %v2561, %v2893
    %v3043 = vmax.f32 %v2597, %v2895
    %v3044 = vmax.f32 %v2562, %v2897
    %v3045 = vmax.f32 %v2598, %v2899
    %v3046 = vmax.f32 %v2563, %v2901
    %v3047 = vmax.f32 %v2599, %v2903
    %v3048 = vmax.f32 %v2632, %v2905
    %v3049 = vmax.f32 %v2668, %v2907
    %v3050 = vmax.f32 %v2633, %v2909
    %v3051 = vmax.f32 %v2669, %v2911
    %v3052 = vmax.f32 %v2634, %v2913
    %v3053 = vmax.f32 %v2670, %v2915
    %v3054 = vmax.f32 %v2635, %v2917
    %v3055 = vmax.f32 %v2671, %v2919
    %v3056 = vmax.f32 %v2704, %v2921
    %v3057 = vmax.f32 %v2740, %v2923
    %v3058 = vmax.f32 %v2705, %v2925
    %v3059 = vmax.f32 %v2741, %v2927
    %v3060 = vmax.f32 %v2706, %v2929
    %v3061 = vmax.f32 %v2742, %v2931
    %v3062 = vmax.f32 %v2707, %v2933
    %v3063 = vmax.f32 %v2743, %v2935
    %v3064 = vmax.f32 %v3000, %v3001
    %v3065 = vmax.f32 %v3002, %v3003
    %v3066 = vmax.f32 %v3004, %v3005
    %v3067 = vmax.f32 %v3006, %v3007
    %v3068 = vmax.f32 %v3008, %v3009
    %v3069 = vmax.f32 %v3010, %v3011
    %v3070 = vmax.f32 %v3012, %v3013
    %v3071 = vmax.f32 %v3014, %v3015
    %v3072 = vmax.f32 %v3016, %v3017
    %v3073 = vmax.f32 %v3018, %v3019
    %v3074 = vmax.f32 %v3020, %v3021
    %v3075 = vmax.f32 %v3022, %v3023
    %v3076 = vmax.f32 %v3024, %v3025
    %v3077 = vmax.f32 %v3026, %v3027
    %v3078 = vmax.f32 %v3028, %v3029
    %v3079 = vmax.f32 %v3030, %v3031
    %v3080 = vmax.f32 %v3032, %v3033
    %v3081 = vmax.f32 %v3034, %v3035
    %v3082 = vmax.f32 %v3036, %v3037
    %v3083 = vmax.f32 %v3038, %v3039
    %v3084 = vmax.f32 %v3040, %v3041
    %v3085 = vmax.f32 %v3042, %v3043
    %v3086 = vmax.f32 %v3044, %v3045
    %v3087 = vmax.f32 %v3046, %v3047
    %v3088 = vmax.f32 %v3048, %v3049
    %v3089 = vmax.f32 %v3050, %v3051
    %v3090 = vmax.f32 %v3052, %v3053
    %v3091 = vmax.f32 %v3054, %v3055
    %v3092 = vmax.f32 %v3056, %v3057
    %v3093 = vmax.f32 %v3058, %v3059
    %v3094 = vmax.f32 %v3060, %v3061
    %v3095 = vmax.f32 %v3062, %v3063
    %v3096 = vlaneseq
    %vm3097 = vcmp.ge.s32.totalorder %v3096, 0
    %vm3098 = vcmp.lt.s32.totalorder %v3096, 512
    %vm3099 = vmand %vm3097, %vm3098
    %3100 = vst.msk [vmem:[#allocation3] ss:$8 sm:$0xf] %vm3099, 0.0
    %3101 = vst.msk [vmem:[#allocation3] ss:$8 sm:$0x0] %vm3099, 0.0
    %s3102 = scalar_lea.vmem [#allocation3], 96
    %3103 = vst.msk [vmem:[%s3102] ss:$8 sm:$0xf] %vm3099, 0.0
    %3104 = vst.msk [vmem:[%s3102] ss:$8 sm:$0x0] %vm3099, 0.0
    %s3105 = scalar_lea.vmem [#allocation3], 65
    %3106 = vst.msk [vmem:[%s3105] ss:$8 sm:$0xf] %vm3099, 0.0
    %3107 = vst.msk [vmem:[%s3105] ss:$8 sm:$0x0] %vm3099, 0.0
    %s3108 = scalar_lea.vmem [#allocation3], 161
    %3109 = vst.msk [vmem:[%s3108] ss:$8 sm:$0xf] %vm3099, 0.0
    %3110 = vst.msk [vmem:[%s3108] ss:$8 sm:$0x0] %vm3099, 0.0
    %v3143 = vlaneseq
    %v3144 = vshrl.u32 %v3143, 7
    %v3145 = vsub.s32 0, %v3144
    %v3146 = vrot.slane %v3064, %v3145
    %v3147 = vlaneseq
    %v3148 = vshrl.u32 %v3147, 7
    %v3149 = vsub.s32 2, %v3148
    %v3150 = vrot.slane %v3064, %v3149
    %v3151 = vlaneseq
    %v3152 = vshrl.u32 %v3151, 7
    %v3153 = vsub.s32 4, %v3152
    %v3154 = vrot.slane %v3064, %v3153
    %v3155 = vlaneseq
    %v3156 = vshrl.u32 %v3155, 7
    %v3157 = vsub.s32 6, %v3156
    %v3158 = vrot.slane %v3064, %v3157
    %v3159 = vlaneseq
    %v3160 = vshrl.u32 %v3159, 7
    %v3161 = vsub.s32 0, %v3160
    %v3162 = vrot.slane %v3065, %v3161
    %v3163 = vlaneseq
    %v3164 = vshrl.u32 %v3163, 7
    %v3165 = vsub.s32 2, %v3164
    %v3166 = vrot.slane %v3065, %v3165
    %v3167 = vlaneseq
    %v3168 = vshrl.u32 %v3167, 7
    %v3169 = vsub.s32 4, %v3168
    %v3170 = vrot.slane %v3065, %v3169
    %v3171 = vlaneseq
    %v3172 = vshrl.u32 %v3171, 7
    %v3173 = vsub.s32 6, %v3172
    %v3174 = vrot.slane %v3065, %v3173
    %v3175 = vlaneseq
    %v3176 = vshrl.u32 %v3175, 7
    %v3177 = vsub.s32 0, %v3176
    %v3178 = vrot.slane %v3066, %v3177
    %v3179 = vlaneseq
    %v3180 = vshrl.u32 %v3179, 7
    %v3181 = vsub.s32 2, %v3180
    %v3182 = vrot.slane %v3066, %v3181
    %v3183 = vlaneseq
    %v3184 = vshrl.u32 %v3183, 7
    %v3185 = vsub.s32 4, %v3184
    %v3186 = vrot.slane %v3066, %v3185
    %v3187 = vlaneseq
    %v3188 = vshrl.u32 %v3187, 7
    %v3189 = vsub.s32 6, %v3188
    %v3190 = vrot.slane %v3066, %v3189
    %v3191 = vlaneseq
    %v3192 = vshrl.u32 %v3191, 7
    %v3193 = vsub.s32 0, %v3192
    %v3194 = vrot.slane %v3067, %v3193
    %v3195 = vlaneseq
    %v3196 = vshrl.u32 %v3195, 7
    %v3197 = vsub.s32 2, %v3196
    %v3198 = vrot.slane %v3067, %v3197
    %v3199 = vlaneseq
    %v3200 = vshrl.u32 %v3199, 7
    %v3201 = vsub.s32 4, %v3200
    %v3202 = vrot.slane %v3067, %v3201
    %v3203 = vlaneseq
    %v3204 = vshrl.u32 %v3203, 7
    %v3205 = vsub.s32 6, %v3204
    %v3206 = vrot.slane %v3067, %v3205
    %v3207 = vlaneseq
    %v3208 = vshrl.u32 %v3207, 7
    %v3209 = vsub.s32 0, %v3208
    %v3210 = vrot.slane %v3068, %v3209
    %v3211 = vlaneseq
    %v3212 = vshrl.u32 %v3211, 7
    %v3213 = vsub.s32 2, %v3212
    %v3214 = vrot.slane %v3068, %v3213
    %v3215 = vlaneseq
    %v3216 = vshrl.u32 %v3215, 7
    %v3217 = vsub.s32 4, %v3216
    %v3218 = vrot.slane %v3068, %v3217
    %v3219 = vlaneseq
    %v3220 = vshrl.u32 %v3219, 7
    %v3221 = vsub.s32 6, %v3220
    %v3222 = vrot.slane %v3068, %v3221
    %v3223 = vlaneseq
    %v3224 = vshrl.u32 %v3223, 7
    %v3225 = vsub.s32 0, %v3224
    %v3226 = vrot.slane %v3069, %v3225
    %v3227 = vlaneseq
    %v3228 = vshrl.u32 %v3227, 7
    %v3229 = vsub.s32 2, %v3228
    %v3230 = vrot.slane %v3069, %v3229
    %v3231 = vlaneseq
    %v3232 = vshrl.u32 %v3231, 7
    %v3233 = vsub.s32 4, %v3232
    %v3234 = vrot.slane %v3069, %v3233
    %v3235 = vlaneseq
    %v3236 = vshrl.u32 %v3235, 7
    %v3237 = vsub.s32 6, %v3236
    %v3238 = vrot.slane %v3069, %v3237
    %v3239 = vlaneseq
    %v3240 = vshrl.u32 %v3239, 7
    %v3241 = vsub.s32 0, %v3240
    %v3242 = vrot.slane %v3070, %v3241
    %v3243 = vlaneseq
    %v3244 = vshrl.u32 %v3243, 7
    %v3245 = vsub.s32 2, %v3244
    %v3246 = vrot.slane %v3070, %v3245
    %v3247 = vlaneseq
    %v3248 = vshrl.u32 %v3247, 7
    %v3249 = vsub.s32 4, %v3248
    %v3250 = vrot.slane %v3070, %v3249
    %v3251 = vlaneseq
    %v3252 = vshrl.u32 %v3251, 7
    %v3253 = vsub.s32 6, %v3252
    %v3254 = vrot.slane %v3070, %v3253
    %v3255 = vlaneseq
    %v3256 = vshrl.u32 %v3255, 7
    %v3257 = vsub.s32 0, %v3256
    %v3258 = vrot.slane %v3071, %v3257
    %v3259 = vlaneseq
    %v3260 = vshrl.u32 %v3259, 7
    %v3261 = vsub.s32 2, %v3260
    %v3262 = vrot.slane %v3071, %v3261
    %v3263 = vlaneseq
    %v3264 = vshrl.u32 %v3263, 7
    %v3265 = vsub.s32 4, %v3264
    %v3266 = vrot.slane %v3071, %v3265
    %v3267 = vlaneseq
    %v3268 = vshrl.u32 %v3267, 7
    %v3269 = vsub.s32 6, %v3268
    %v3270 = vrot.slane %v3071, %v3269
    %v3271 = vlaneseq
    %v3272 = vshrl.u32 %v3271, 7
    %v3273 = vsub.s32 0, %v3272
    %v3274 = vrot.slane %v3072, %v3273
    %v3275 = vlaneseq
    %v3276 = vshrl.u32 %v3275, 7
    %v3277 = vsub.s32 2, %v3276
    %v3278 = vrot.slane %v3072, %v3277
    %v3279 = vlaneseq
    %v3280 = vshrl.u32 %v3279, 7
    %v3281 = vsub.s32 4, %v3280
    %v3282 = vrot.slane %v3072, %v3281
    %v3283 = vlaneseq
    %v3284 = vshrl.u32 %v3283, 7
    %v3285 = vsub.s32 6, %v3284
    %v3286 = vrot.slane %v3072, %v3285
    %v3287 = vlaneseq
    %v3288 = vshrl.u32 %v3287, 7
    %v3289 = vsub.s32 0, %v3288
    %v3290 = vrot.slane %v3073, %v3289
    %v3291 = vlaneseq
    %v3292 = vshrl.u32 %v3291, 7
    %v3293 = vsub.s32 2, %v3292
    %v3294 = vrot.slane %v3073, %v3293
    %v3295 = vlaneseq
    %v3296 = vshrl.u32 %v3295, 7
    %v3297 = vsub.s32 4, %v3296
    %v3298 = vrot.slane %v3073, %v3297
    %v3299 = vlaneseq
    %v3300 = vshrl.u32 %v3299, 7
    %v3301 = vsub.s32 6, %v3300
    %v3302 = vrot.slane %v3073, %v3301
    %v3303 = vlaneseq
    %v3304 = vshrl.u32 %v3303, 7
    %v3305 = vsub.s32 0, %v3304
    %v3306 = vrot.slane %v3074, %v3305
    %v3307 = vlaneseq
    %v3308 = vshrl.u32 %v3307, 7
    %v3309 = vsub.s32 2, %v3308
    %v3310 = vrot.slane %v3074, %v3309
    %v3311 = vlaneseq
    %v3312 = vshrl.u32 %v3311, 7
    %v3313 = vsub.s32 4, %v3312
    %v3314 = vrot.slane %v3074, %v3313
    %v3315 = vlaneseq
    %v3316 = vshrl.u32 %v3315, 7
    %v3317 = vsub.s32 6, %v3316
    %v3318 = vrot.slane %v3074, %v3317
    %v3319 = vlaneseq
    %v3320 = vshrl.u32 %v3319, 7
    %v3321 = vsub.s32 0, %v3320
    %v3322 = vrot.slane %v3075, %v3321
    %v3323 = vlaneseq
    %v3324 = vshrl.u32 %v3323, 7
    %v3325 = vsub.s32 2, %v3324
    %v3326 = vrot.slane %v3075, %v3325
    %v3327 = vlaneseq
    %v3328 = vshrl.u32 %v3327, 7
    %v3329 = vsub.s32 4, %v3328
    %v3330 = vrot.slane %v3075, %v3329
    %v3331 = vlaneseq
    %v3332 = vshrl.u32 %v3331, 7
    %v3333 = vsub.s32 6, %v3332
    %v3334 = vrot.slane %v3075, %v3333
    %v3335 = vlaneseq
    %v3336 = vshrl.u32 %v3335, 7
    %v3337 = vsub.s32 0, %v3336
    %v3338 = vrot.slane %v3076, %v3337
    %v3339 = vlaneseq
    %v3340 = vshrl.u32 %v3339, 7
    %v3341 = vsub.s32 2, %v3340
    %v3342 = vrot.slane %v3076, %v3341
    %v3343 = vlaneseq
    %v3344 = vshrl.u32 %v3343, 7
    %v3345 = vsub.s32 4, %v3344
    %v3346 = vrot.slane %v3076, %v3345
    %v3347 = vlaneseq
    %v3348 = vshrl.u32 %v3347, 7
    %v3349 = vsub.s32 6, %v3348
    %v3350 = vrot.slane %v3076, %v3349
    %v3351 = vlaneseq
    %v3352 = vshrl.u32 %v3351, 7
    %v3353 = vsub.s32 0, %v3352
    %v3354 = vrot.slane %v3077, %v3353
    %v3355 = vlaneseq
    %v3356 = vshrl.u32 %v3355, 7
    %v3357 = vsub.s32 2, %v3356
    %v3358 = vrot.slane %v3077, %v3357
    %v3359 = vlaneseq
    %v3360 = vshrl.u32 %v3359, 7
    %v3361 = vsub.s32 4, %v3360
    %v3362 = vrot.slane %v3077, %v3361
    %v3363 = vlaneseq
    %v3364 = vshrl.u32 %v3363, 7
    %v3365 = vsub.s32 6, %v3364
    %v3366 = vrot.slane %v3077, %v3365
    %v3367 = vlaneseq
    %v3368 = vshrl.u32 %v3367, 7
    %v3369 = vsub.s32 0, %v3368
    %v3370 = vrot.slane %v3078, %v3369
    %v3371 = vlaneseq
    %v3372 = vshrl.u32 %v3371, 7
    %v3373 = vsub.s32 2, %v3372
    %v3374 = vrot.slane %v3078, %v3373
    %v3375 = vlaneseq
    %v3376 = vshrl.u32 %v3375, 7
    %v3377 = vsub.s32 4, %v3376
    %v3378 = vrot.slane %v3078, %v3377
    %v3379 = vlaneseq
    %v3380 = vshrl.u32 %v3379, 7
    %v3381 = vsub.s32 6, %v3380
    %v3382 = vrot.slane %v3078, %v3381
    %v3383 = vlaneseq
    %v3384 = vshrl.u32 %v3383, 7
    %v3385 = vsub.s32 0, %v3384
    %v3386 = vrot.slane %v3079, %v3385
    %v3387 = vlaneseq
    %v3388 = vshrl.u32 %v3387, 7
    %v3389 = vsub.s32 2, %v3388
    %v3390 = vrot.slane %v3079, %v3389
    %v3391 = vlaneseq
    %v3392 = vshrl.u32 %v3391, 7
    %v3393 = vsub.s32 4, %v3392
    %v3394 = vrot.slane %v3079, %v3393
    %v3395 = vlaneseq
    %v3396 = vshrl.u32 %v3395, 7
    %v3397 = vsub.s32 6, %v3396
    %v3398 = vrot.slane %v3079, %v3397
    %v3399 = vlaneseq
    %v3400 = vshrl.u32 %v3399, 7
    %v3401 = vsub.s32 0, %v3400
    %v3402 = vrot.slane %v3080, %v3401
    %v3403 = vlaneseq
    %v3404 = vshrl.u32 %v3403, 7
    %v3405 = vsub.s32 2, %v3404
    %v3406 = vrot.slane %v3080, %v3405
    %v3407 = vlaneseq
    %v3408 = vshrl.u32 %v3407, 7
    %v3409 = vsub.s32 4, %v3408
    %v3410 = vrot.slane %v3080, %v3409
    %v3411 = vlaneseq
    %v3412 = vshrl.u32 %v3411, 7
    %v3413 = vsub.s32 6, %v3412
    %v3414 = vrot.slane %v3080, %v3413
    %v3415 = vlaneseq
    %v3416 = vshrl.u32 %v3415, 7
    %v3417 = vsub.s32 0, %v3416
    %v3418 = vrot.slane %v3081, %v3417
    %v3419 = vlaneseq
    %v3420 = vshrl.u32 %v3419, 7
    %v3421 = vsub.s32 2, %v3420
    %v3422 = vrot.slane %v3081, %v3421
    %v3423 = vlaneseq
    %v3424 = vshrl.u32 %v3423, 7
    %v3425 = vsub.s32 4, %v3424
    %v3426 = vrot.slane %v3081, %v3425
    %v3427 = vlaneseq
    %v3428 = vshrl.u32 %v3427, 7
    %v3429 = vsub.s32 6, %v3428
    %v3430 = vrot.slane %v3081, %v3429
    %v3431 = vlaneseq
    %v3432 = vshrl.u32 %v3431, 7
    %v3433 = vsub.s32 0, %v3432
    %v3434 = vrot.slane %v3082, %v3433
    %v3435 = vlaneseq
    %v3436 = vshrl.u32 %v3435, 7
    %v3437 = vsub.s32 2, %v3436
    %v3438 = vrot.slane %v3082, %v3437
    %v3439 = vlaneseq
    %v3440 = vshrl.u32 %v3439, 7
    %v3441 = vsub.s32 4, %v3440
    %v3442 = vrot.slane %v3082, %v3441
    %v3443 = vlaneseq
    %v3444 = vshrl.u32 %v3443, 7
    %v3445 = vsub.s32 6, %v3444
    %v3446 = vrot.slane %v3082, %v3445
    %v3447 = vlaneseq
    %v3448 = vshrl.u32 %v3447, 7
    %v3449 = vsub.s32 0, %v3448
    %v3450 = vrot.slane %v3083, %v3449
    %v3451 = vlaneseq
    %v3452 = vshrl.u32 %v3451, 7
    %v3453 = vsub.s32 2, %v3452
    %v3454 = vrot.slane %v3083, %v3453
    %v3455 = vlaneseq
    %v3456 = vshrl.u32 %v3455, 7
    %v3457 = vsub.s32 4, %v3456
    %v3458 = vrot.slane %v3083, %v3457
    %v3459 = vlaneseq
    %v3460 = vshrl.u32 %v3459, 7
    %v3461 = vsub.s32 6, %v3460
    %v3462 = vrot.slane %v3083, %v3461
    %v3463 = vlaneseq
    %v3464 = vshrl.u32 %v3463, 7
    %v3465 = vsub.s32 0, %v3464
    %v3466 = vrot.slane %v3084, %v3465
    %v3467 = vlaneseq
    %v3468 = vshrl.u32 %v3467, 7
    %v3469 = vsub.s32 2, %v3468
    %v3470 = vrot.slane %v3084, %v3469
    %v3471 = vlaneseq
    %v3472 = vshrl.u32 %v3471, 7
    %v3473 = vsub.s32 4, %v3472
    %v3474 = vrot.slane %v3084, %v3473
    %v3475 = vlaneseq
    %v3476 = vshrl.u32 %v3475, 7
    %v3477 = vsub.s32 6, %v3476
    %v3478 = vrot.slane %v3084, %v3477
    %v3479 = vlaneseq
    %v3480 = vshrl.u32 %v3479, 7
    %v3481 = vsub.s32 0, %v3480
    %v3482 = vrot.slane %v3085, %v3481
    %v3483 = vlaneseq
    %v3484 = vshrl.u32 %v3483, 7
    %v3485 = vsub.s32 2, %v3484
    %v3486 = vrot.slane %v3085, %v3485
    %v3487 = vlaneseq
    %v3488 = vshrl.u32 %v3487, 7
    %v3489 = vsub.s32 4, %v3488
    %v3490 = vrot.slane %v3085, %v3489
    %v3491 = vlaneseq
    %v3492 = vshrl.u32 %v3491, 7
    %v3493 = vsub.s32 6, %v3492
    %v3494 = vrot.slane %v3085, %v3493
    %v3495 = vlaneseq
    %v3496 = vshrl.u32 %v3495, 7
    %v3497 = vsub.s32 0, %v3496
    %v3498 = vrot.slane %v3086, %v3497
    %v3499 = vlaneseq
    %v3500 = vshrl.u32 %v3499, 7
    %v3501 = vsub.s32 2, %v3500
    %v3502 = vrot.slane %v3086, %v3501
    %v3503 = vlaneseq
    %v3504 = vshrl.u32 %v3503, 7
    %v3505 = vsub.s32 4, %v3504
    %v3506 = vrot.slane %v3086, %v3505
    %v3507 = vlaneseq
    %v3508 = vshrl.u32 %v3507, 7
    %v3509 = vsub.s32 6, %v3508
    %v3510 = vrot.slane %v3086, %v3509
    %v3511 = vlaneseq
    %v3512 = vshrl.u32 %v3511, 7
    %v3513 = vsub.s32 0, %v3512
    %v3514 = vrot.slane %v3087, %v3513
    %v3515 = vlaneseq
    %v3516 = vshrl.u32 %v3515, 7
    %v3517 = vsub.s32 2, %v3516
    %v3518 = vrot.slane %v3087, %v3517
    %v3519 = vlaneseq
    %v3520 = vshrl.u32 %v3519, 7
    %v3521 = vsub.s32 4, %v3520
    %v3522 = vrot.slane %v3087, %v3521
    %v3523 = vlaneseq
    %v3524 = vshrl.u32 %v3523, 7
    %v3525 = vsub.s32 6, %v3524
    %v3526 = vrot.slane %v3087, %v3525
    %v3527 = vlaneseq
    %v3528 = vshrl.u32 %v3527, 7
    %v3529 = vsub.s32 0, %v3528
    %v3530 = vrot.slane %v3088, %v3529
    %v3531 = vlaneseq
    %v3532 = vshrl.u32 %v3531, 7
    %v3533 = vsub.s32 2, %v3532
    %v3534 = vrot.slane %v3088, %v3533
    %v3535 = vlaneseq
    %v3536 = vshrl.u32 %v3535, 7
    %v3537 = vsub.s32 4, %v3536
    %v3538 = vrot.slane %v3088, %v3537
    %v3539 = vlaneseq
    %v3540 = vshrl.u32 %v3539, 7
    %v3541 = vsub.s32 6, %v3540
    %v3542 = vrot.slane %v3088, %v3541
    %v3543 = vlaneseq
    %v3544 = vshrl.u32 %v3543, 7
    %v3545 = vsub.s32 0, %v3544
    %v3546 = vrot.slane %v3089, %v3545
    %v3547 = vlaneseq
    %v3548 = vshrl.u32 %v3547, 7
    %v3549 = vsub.s32 2, %v3548
    %v3550 = vrot.slane %v3089, %v3549
    %v3551 = vlaneseq
    %v3552 = vshrl.u32 %v3551, 7
    %v3553 = vsub.s32 4, %v3552
    %v3554 = vrot.slane %v3089, %v3553
    %v3555 = vlaneseq
    %v3556 = vshrl.u32 %v3555, 7
    %v3557 = vsub.s32 6, %v3556
    %v3558 = vrot.slane %v3089, %v3557
    %v3559 = vlaneseq
    %v3560 = vshrl.u32 %v3559, 7
    %v3561 = vsub.s32 0, %v3560
    %v3562 = vrot.slane %v3090, %v3561
    %v3563 = vlaneseq
    %v3564 = vshrl.u32 %v3563, 7
    %v3565 = vsub.s32 2, %v3564
    %v3566 = vrot.slane %v3090, %v3565
    %v3567 = vlaneseq
    %v3568 = vshrl.u32 %v3567, 7
    %v3569 = vsub.s32 4, %v3568
    %v3570 = vrot.slane %v3090, %v3569
    %v3571 = vlaneseq
    %v3572 = vshrl.u32 %v3571, 7
    %v3573 = vsub.s32 6, %v3572
    %v3574 = vrot.slane %v3090, %v3573
    %v3575 = vlaneseq
    %v3576 = vshrl.u32 %v3575, 7
    %v3577 = vsub.s32 0, %v3576
    %v3578 = vrot.slane %v3091, %v3577
    %v3579 = vlaneseq
    %v3580 = vshrl.u32 %v3579, 7
    %v3581 = vsub.s32 2, %v3580
    %v3582 = vrot.slane %v3091, %v3581
    %v3583 = vlaneseq
    %v3584 = vshrl.u32 %v3583, 7
    %v3585 = vsub.s32 4, %v3584
    %v3586 = vrot.slane %v3091, %v3585
    %v3587 = vlaneseq
    %v3588 = vshrl.u32 %v3587, 7
    %v3589 = vsub.s32 6, %v3588
    %v3590 = vrot.slane %v3091, %v3589
    %v3591 = vlaneseq
    %v3592 = vshrl.u32 %v3591, 7
    %v3593 = vsub.s32 0, %v3592
    %v3594 = vrot.slane %v3092, %v3593
    %v3595 = vlaneseq
    %v3596 = vshrl.u32 %v3595, 7
    %v3597 = vsub.s32 2, %v3596
    %v3598 = vrot.slane %v3092, %v3597
    %v3599 = vlaneseq
    %v3600 = vshrl.u32 %v3599, 7
    %v3601 = vsub.s32 4, %v3600
    %v3602 = vrot.slane %v3092, %v3601
    %v3603 = vlaneseq
    %v3604 = vshrl.u32 %v3603, 7
    %v3605 = vsub.s32 6, %v3604
    %v3606 = vrot.slane %v3092, %v3605
    %v3607 = vlaneseq
    %v3608 = vshrl.u32 %v3607, 7
    %v3609 = vsub.s32 0, %v3608
    %v3610 = vrot.slane %v3093, %v3609
    %v3611 = vlaneseq
    %v3612 = vshrl.u32 %v3611, 7
    %v3613 = vsub.s32 2, %v3612
    %v3614 = vrot.slane %v3093, %v3613
    %v3615 = vlaneseq
    %v3616 = vshrl.u32 %v3615, 7
    %v3617 = vsub.s32 4, %v3616
    %v3618 = vrot.slane %v3093, %v3617
    %v3619 = vlaneseq
    %v3620 = vshrl.u32 %v3619, 7
    %v3621 = vsub.s32 6, %v3620
    %v3622 = vrot.slane %v3093, %v3621
    %v3623 = vlaneseq
    %v3624 = vshrl.u32 %v3623, 7
    %v3625 = vsub.s32 0, %v3624
    %v3626 = vrot.slane %v3094, %v3625
    %v3627 = vlaneseq
    %v3628 = vshrl.u32 %v3627, 7
    %v3629 = vsub.s32 2, %v3628
    %v3630 = vrot.slane %v3094, %v3629
    %v3631 = vlaneseq
    %v3632 = vshrl.u32 %v3631, 7
    %v3633 = vsub.s32 4, %v3632
    %v3634 = vrot.slane %v3094, %v3633
    %v3635 = vlaneseq
    %v3636 = vshrl.u32 %v3635, 7
    %v3637 = vsub.s32 6, %v3636
    %v3638 = vrot.slane %v3094, %v3637
    %v3639 = vlaneseq
    %v3640 = vshrl.u32 %v3639, 7
    %v3641 = vsub.s32 0, %v3640
    %v3642 = vrot.slane %v3095, %v3641
    %v3643 = vlaneseq
    %v3644 = vshrl.u32 %v3643, 7
    %v3645 = vsub.s32 2, %v3644
    %v3646 = vrot.slane %v3095, %v3645
    %v3647 = vlaneseq
    %v3648 = vshrl.u32 %v3647, 7
    %v3649 = vsub.s32 4, %v3648
    %v3650 = vrot.slane %v3095, %v3649
    %v3651 = vlaneseq
    %v3652 = vshrl.u32 %v3651, 7
    %v3653 = vsub.s32 6, %v3652
    %v3654 = vrot.slane %v3095, %v3653
    %vm3655 = vcmask 1042434
    %v3656 = vsel %vm3655, %v3162, %v3146
    %vm3657 = vcmask 1043459
    %v3658 = vsel %vm3657, %v3178, %v3656
    %vm3659 = vcmask 1044484
    %v3660 = vsel %vm3659, %v3194, %v3658
    %vm3661 = vcmask 1045509
    %v3662 = vsel %vm3661, %v3210, %v3660
    %vm3663 = vcmask 1046534
    %v3664 = vsel %vm3663, %v3226, %v3662
    %vm3665 = vcmask 1047559
    %v3666 = vsel %vm3665, %v3242, %v3664
    %v3667 = vsel %vm3655, %v3166, %v3150
    %v3668 = vsel %vm3657, %v3182, %v3667
    %v3669 = vsel %vm3659, %v3198, %v3668
    %v3670 = vsel %vm3661, %v3214, %v3669
    %v3671 = vsel %vm3663, %v3230, %v3670
    %v3672 = vsel %vm3665, %v3246, %v3671
    %v3673 = vsel %vm3655, %v3170, %v3154
    %v3674 = vsel %vm3657, %v3186, %v3673
    %v3675 = vsel %vm3659, %v3202, %v3674
    %v3676 = vsel %vm3661, %v3218, %v3675
    %v3677 = vsel %vm3663, %v3234, %v3676
    %v3678 = vsel %vm3665, %v3250, %v3677
    %v3679 = vsel %vm3655, %v3174, %v3158
    %v3680 = vsel %vm3657, %v3190, %v3679
    %v3681 = vsel %vm3659, %v3206, %v3680
    %v3682 = vsel %vm3661, %v3222, %v3681
    %v3683 = vsel %vm3663, %v3238, %v3682
    %v3684 = vsel %vm3665, %v3254, %v3683
    %vm3685 = vcmask 1041409
    %v3686 = vsel %vm3685, %v3274, %v3258
    %v3687 = vsel %vm3655, %v3290, %v3686
    %v3688 = vsel %vm3657, %v3306, %v3687
    %v3689 = vsel %vm3659, %v3322, %v3688
    %v3690 = vsel %vm3661, %v3338, %v3689
    %v3691 = vsel %vm3663, %v3354, %v3690
    %v3692 = vsel %vm3665, %v3370, %v3691
    %v3693 = vsel %vm3685, %v3278, %v3262
    %v3694 = vsel %vm3655, %v3294, %v3693
    %v3695 = vsel %vm3657, %v3310, %v3694
    %v3696 = vsel %vm3659, %v3326, %v3695
    %v3697 = vsel %vm3661, %v3342, %v3696
    %v3698 = vsel %vm3663, %v3358, %v3697
    %v3699 = vsel %vm3665, %v3374, %v3698
    %v3700 = vsel %vm3685, %v3282, %v3266
    %v3701 = vsel %vm3655, %v3298, %v3700
    %v3702 = vsel %vm3657, %v3314, %v3701
    %v3703 = vsel %vm3659, %v3330, %v3702
    %v3704 = vsel %vm3661, %v3346, %v3703
    %v3705 = vsel %vm3663, %v3362, %v3704
    %v3706 = vsel %vm3665, %v3378, %v3705
    %v3707 = vsel %vm3685, %v3286, %v3270
    %v3708 = vsel %vm3655, %v3302, %v3707
    %v3709 = vsel %vm3657, %v3318, %v3708
    %v3710 = vsel %vm3659, %v3334, %v3709
    %v3711 = vsel %vm3661, %v3350, %v3710
    %v3712 = vsel %vm3663, %v3366, %v3711
    %v3713 = vsel %vm3665, %v3382, %v3712
    %v3714 = vsel %vm3655, %v3418, %v3402
    %v3715 = vsel %vm3657, %v3434, %v3714
    %v3716 = vsel %vm3659, %v3450, %v3715
    %v3717 = vsel %vm3661, %v3466, %v3716
    %v3718 = vsel %vm3663, %v3482, %v3717
    %v3719 = vsel %vm3665, %v3498, %v3718
    %v3720 = vsel %vm3655, %v3422, %v3406
    %v3721 = vsel %vm3657, %v3438, %v3720
    %v3722 = vsel %vm3659, %v3454, %v3721
    %v3723 = vsel %vm3661, %v3470, %v3722
    %v3724 = vsel %vm3663, %v3486, %v3723
    %v3725 = vsel %vm3665, %v3502, %v3724
    %v3726 = vsel %vm3655, %v3426, %v3410
    %v3727 = vsel %vm3657, %v3442, %v3726
    %v3728 = vsel %vm3659, %v3458, %v3727
    %v3729 = vsel %vm3661, %v3474, %v3728
    %v3730 = vsel %vm3663, %v3490, %v3729
    %v3731 = vsel %vm3665, %v3506, %v3730
    %v3732 = vsel %vm3655, %v3430, %v3414
    %v3733 = vsel %vm3657, %v3446, %v3732
    %v3734 = vsel %vm3659, %v3462, %v3733
    %v3735 = vsel %vm3661, %v3478, %v3734
    %v3736 = vsel %vm3663, %v3494, %v3735
    %v3737 = vsel %vm3665, %v3510, %v3736
    %v3738 = vsel %vm3685, %v3530, %v3514
    %v3739 = vsel %vm3655, %v3546, %v3738
    %v3740 = vsel %vm3657, %v3562, %v3739
    %v3741 = vsel %vm3659, %v3578, %v3740
    %v3742 = vsel %vm3661, %v3594, %v3741
    %v3743 = vsel %vm3663, %v3610, %v3742
    %v3744 = vsel %vm3665, %v3626, %v3743
    %v3745 = vsel %vm3685, %v3534, %v3518
    %v3746 = vsel %vm3655, %v3550, %v3745
    %v3747 = vsel %vm3657, %v3566, %v3746
    %v3748 = vsel %vm3659, %v3582, %v3747
    %v3749 = vsel %vm3661, %v3598, %v3748
    %v3750 = vsel %vm3663, %v3614, %v3749
    %v3751 = vsel %vm3665, %v3630, %v3750
    %v3752 = vsel %vm3685, %v3538, %v3522
    %v3753 = vsel %vm3655, %v3554, %v3752
    %v3754 = vsel %vm3657, %v3570, %v3753
    %v3755 = vsel %vm3659, %v3586, %v3754
    %v3756 = vsel %vm3661, %v3602, %v3755
    %v3757 = vsel %vm3663, %v3618, %v3756
    %v3758 = vsel %vm3665, %v3634, %v3757
    %v3759 = vsel %vm3685, %v3542, %v3526
    %v3760 = vsel %vm3655, %v3558, %v3759
    %v3761 = vsel %vm3657, %v3574, %v3760
    %v3762 = vsel %vm3659, %v3590, %v3761
    %v3763 = vsel %vm3661, %v3606, %v3762
    %v3764 = vsel %vm3663, %v3622, %v3763
    %v3765 = vsel %vm3665, %v3638, %v3764
    %3790 = vst [vmem:[#allocation3] sm:$0xfe] %v3666
    %3791 = vst [vmem:[#allocation3 + $0x8] sm:$0xfe] %v3672
    %3792 = vst [vmem:[#allocation3 + $0x10] sm:$0xfe] %v3678
    %3793 = vst [vmem:[#allocation3 + $0x18] sm:$0xfe] %v3684
    %3794 = vst [vmem:[#allocation3 + $0x20] sm:$0xff] %v3692
    %3795 = vst [vmem:[#allocation3 + $0x28] sm:$0xff] %v3699
    %3796 = vst [vmem:[#allocation3 + $0x30] sm:$0xff] %v3706
    %3797 = vst [vmem:[#allocation3 + $0x38] sm:$0xff] %v3713
    %3798 = vst [vmem:[#allocation3 + $0x40] sm:$0x1] %v3386
    %3799 = vst [vmem:[#allocation3 + $0x48] sm:$0x1] %v3390
    %3800 = vst [vmem:[#allocation3 + $0x50] sm:$0x1] %v3394
    %3801 = vst [vmem:[#allocation3 + $0x58] sm:$0x1] %v3398
    %3802 = vst [vmem:[#allocation3 + $0x60] sm:$0xfe] %v3719
    %3803 = vst [vmem:[#allocation3 + $0x68] sm:$0xfe] %v3725
    %3804 = vst [vmem:[#allocation3 + $0x70] sm:$0xfe] %v3731
    %3805 = vst [vmem:[#allocation3 + $0x78] sm:$0xfe] %v3737
    %3806 = vst [vmem:[#allocation3 + $0x80] sm:$0xff] %v3744
    %3807 = vst [vmem:[#allocation3 + $0x88] sm:$0xff] %v3751
    %3808 = vst [vmem:[#allocation3 + $0x90] sm:$0xff] %v3758
    %3809 = vst [vmem:[#allocation3 + $0x98] sm:$0xff] %v3765
    %3810 = vst [vmem:[#allocation3 + $0xa0] sm:$0x1] %v3642
    %3811 = vst [vmem:[#allocation3 + $0xa8] sm:$0x1] %v3646
    %3812 = vst [vmem:[#allocation3 + $0xb0] sm:$0x1] %v3650
    %3813 = vst [vmem:[#allocation3 + $0xb8] sm:$0x1] %v3654
    %v3814 = vld [vmem:[#allocation3] sm:$0xff]
    %v3815 = vld [vmem:[#allocation3 + $0x8] sm:$0xff]
    %v3816 = vld [vmem:[#allocation3 + $0x10] sm:$0xff]
    %v3817 = vld [vmem:[#allocation3 + $0x18] sm:$0xff]
    %v3818 = vld [vmem:[#allocation3 + $0x20] sm:$0xff]
    %v3819 = vld [vmem:[#allocation3 + $0x28] sm:$0xff]
    %v3820 = vld [vmem:[#allocation3 + $0x30] sm:$0xff]
    %v3821 = vld [vmem:[#allocation3 + $0x38] sm:$0xff]
    %v3822 = vld [vmem:[#allocation3 + $0x60] sm:$0xff]
    %v3823 = vld [vmem:[#allocation3 + $0x68] sm:$0xff]
    %v3824 = vld [vmem:[#allocation3 + $0x70] sm:$0xff]
    %v3825 = vld [vmem:[#allocation3 + $0x78] sm:$0xff]
    %v3826 = vld [vmem:[#allocation3 + $0x80] sm:$0xff]
    %v3827 = vld [vmem:[#allocation3 + $0x88] sm:$0xff]
    %v3828 = vld [vmem:[#allocation3 + $0x90] sm:$0xff]
    %v3829 = vld [vmem:[#allocation3 + $0x98] sm:$0xff]
    %v3830 = vld [vmem:[%s3] sm:$0xff]
    %v3831 = vld [vmem:[%s3 + $0x8] sm:$0xff]
    %v3832 = vld [vmem:[%s3 + $0x10] sm:$0xff]
    %v3833 = vld [vmem:[%s3 + $0x18] sm:$0xff]
    %v3834 = vld [vmem:[%s3 + $0x20] sm:$0xff]
    %v3835 = vld [vmem:[%s3 + $0x28] sm:$0xff]
    %v3836 = vld [vmem:[%s3 + $0x30] sm:$0xff]
    %v3837 = vld [vmem:[%s3 + $0x38] sm:$0xff]
    %v3838 = vld [vmem:[%s3 + $0x40] sm:$0xff]
    %v3839 = vld [vmem:[%s3 + $0x48] sm:$0xff]
    %v3840 = vld [vmem:[%s3 + $0x50] sm:$0xff]
    %v3841 = vld [vmem:[%s3 + $0x58] sm:$0xff]
    %v3842 = vld [vmem:[%s3 + $0x60] sm:$0xff]
    %v3843 = vld [vmem:[%s3 + $0x68] sm:$0xff]
    %v3844 = vld [vmem:[%s3 + $0x70] sm:$0xff]
    %v3845 = vld [vmem:[%s3 + $0x78] sm:$0xff]
    %v3846 = vld [vmem:[%s3 + $0x80] sm:$0xff]
    %v3847 = vld [vmem:[%s3 + $0x88] sm:$0xff]
    %v3848 = vld [vmem:[%s3 + $0x90] sm:$0xff]
    %v3849 = vld [vmem:[%s3 + $0x98] sm:$0xff]
    %v3850 = vld [vmem:[%s3 + $0xa0] sm:$0xff]
    %v3851 = vld [vmem:[%s3 + $0xa8] sm:$0xff]
    %v3852 = vld [vmem:[%s3 + $0xb0] sm:$0xff]
    %v3853 = vld [vmem:[%s3 + $0xb8] sm:$0xff]
    %v3854 = vld [vmem:[%s3 + $0xc0] sm:$0xff]
    %v3855 = vld [vmem:[%s3 + $0xc8] sm:$0xff]
    %v3856 = vld [vmem:[%s3 + $0xd0] sm:$0xff]
    %v3857 = vld [vmem:[%s3 + $0xd8] sm:$0xff]
    %v3858 = vld [vmem:[%s3 + $0xe0] sm:$0xff]
    %v3859 = vld [vmem:[%s3 + $0xe8] sm:$0xff]
    %v3860 = vld [vmem:[%s3 + $0xf0] sm:$0xff]
    %v3861 = vld [vmem:[%s3 + $0xf8] sm:$0xff]
    %v3862 = vld [vmem:[%s3 + $0x100] sm:$0xff]
    %v3863 = vld [vmem:[%s3 + $0x108] sm:$0xff]
    %v3864 = vld [vmem:[%s3 + $0x110] sm:$0xff]
    %v3865 = vld [vmem:[%s3 + $0x118] sm:$0xff]
    %v3866 = vld [vmem:[%s3 + $0x120] sm:$0xff]
    %v3867 = vld [vmem:[%s3 + $0x128] sm:$0xff]
    %v3868 = vld [vmem:[%s3 + $0x130] sm:$0xff]
    %v3869 = vld [vmem:[%s3 + $0x138] sm:$0xff]
    %v3870 = vld [vmem:[%s3 + $0x140] sm:$0xff]
    %v3871 = vld [vmem:[%s3 + $0x148] sm:$0xff]
    %v3872 = vld [vmem:[%s3 + $0x150] sm:$0xff]
    %v3873 = vld [vmem:[%s3 + $0x158] sm:$0xff]
    %v3874 = vld [vmem:[%s3 + $0x160] sm:$0xff]
    %v3875 = vld [vmem:[%s3 + $0x168] sm:$0xff]
    %v3876 = vld [vmem:[%s3 + $0x170] sm:$0xff]
    %v3877 = vld [vmem:[%s3 + $0x178] sm:$0xff]
    %v3878 = vld [vmem:[%s3 + $0x180] sm:$0xff]
    %v3879 = vld [vmem:[%s3 + $0x188] sm:$0xff]
    %v3880 = vld [vmem:[%s3 + $0x190] sm:$0xff]
    %v3881 = vld [vmem:[%s3 + $0x198] sm:$0xff]
    %v3882 = vld [vmem:[%s3 + $0x1a0] sm:$0xff]
    %v3883 = vld [vmem:[%s3 + $0x1a8] sm:$0xff]
    %v3884 = vld [vmem:[%s3 + $0x1b0] sm:$0xff]
    %v3885 = vld [vmem:[%s3 + $0x1b8] sm:$0xff]
    %v3886 = vld [vmem:[%s3 + $0x1c0] sm:$0xff]
    %v3887 = vld [vmem:[%s3 + $0x1c8] sm:$0xff]
    %v3888 = vld [vmem:[%s3 + $0x1d0] sm:$0xff]
    %v3889 = vld [vmem:[%s3 + $0x1d8] sm:$0xff]
    %v3890 = vld [vmem:[%s3 + $0x1e0] sm:$0xff]
    %v3891 = vld [vmem:[%s3 + $0x1e8] sm:$0xff]
    %v3892 = vld [vmem:[%s3 + $0x1f0] sm:$0xff]
    %v3893 = vld [vmem:[%s3 + $0x1f8] sm:$0xff]
    %v3894 = vld [vmem:[%s3 + $0x200] sm:$0xff]
    %v3895 = vld [vmem:[%s3 + $0x208] sm:$0xff]
    %v3896 = vld [vmem:[%s3 + $0x210] sm:$0xff]
    %v3897 = vld [vmem:[%s3 + $0x218] sm:$0xff]
    %v3898 = vld [vmem:[%s3 + $0x220] sm:$0xff]
    %v3899 = vld [vmem:[%s3 + $0x228] sm:$0xff]
    %v3900 = vld [vmem:[%s3 + $0x230] sm:$0xff]
    %v3901 = vld [vmem:[%s3 + $0x238] sm:$0xff]
    %v3902 = vld [vmem:[%s3 + $0x240] sm:$0xff]
    %v3903 = vld [vmem:[%s3 + $0x248] sm:$0xff]
    %v3904 = vld [vmem:[%s3 + $0x250] sm:$0xff]
    %v3905 = vld [vmem:[%s3 + $0x258] sm:$0xff]
    %v3906 = vld [vmem:[%s3 + $0x260] sm:$0xff]
    %v3907 = vld [vmem:[%s3 + $0x268] sm:$0xff]
    %v3908 = vld [vmem:[%s3 + $0x270] sm:$0xff]
    %v3909 = vld [vmem:[%s3 + $0x278] sm:$0xff]
    %v3910 = vld [vmem:[%s3 + $0x280] sm:$0xff]
    %v3911 = vld [vmem:[%s3 + $0x288] sm:$0xff]
    %v3912 = vld [vmem:[%s3 + $0x290] sm:$0xff]
    %v3913 = vld [vmem:[%s3 + $0x298] sm:$0xff]
    %v3914 = vld [vmem:[%s3 + $0x2a0] sm:$0xff]
    %v3915 = vld [vmem:[%s3 + $0x2a8] sm:$0xff]
    %v3916 = vld [vmem:[%s3 + $0x2b0] sm:$0xff]
    %v3917 = vld [vmem:[%s3 + $0x2b8] sm:$0xff]
    %v3918 = vld [vmem:[%s3 + $0x2c0] sm:$0xff]
    %v3919 = vld [vmem:[%s3 + $0x2c8] sm:$0xff]
    %v3920 = vld [vmem:[%s3 + $0x2d0] sm:$0xff]
    %v3921 = vld [vmem:[%s3 + $0x2d8] sm:$0xff]
    %v3922 = vld [vmem:[%s3 + $0x2e0] sm:$0xff]
    %v3923 = vld [vmem:[%s3 + $0x2e8] sm:$0xff]
    %v3924 = vld [vmem:[%s3 + $0x2f0] sm:$0xff]
    %v3925 = vld [vmem:[%s3 + $0x2f8] sm:$0xff]
    %v3926 = vld [vmem:[%s3 + $0x300] sm:$0xff]
    %v3927 = vld [vmem:[%s3 + $0x308] sm:$0xff]
    %v3928 = vld [vmem:[%s3 + $0x310] sm:$0xff]
    %v3929 = vld [vmem:[%s3 + $0x318] sm:$0xff]
    %v3930 = vld [vmem:[%s3 + $0x320] sm:$0xff]
    %v3931 = vld [vmem:[%s3 + $0x328] sm:$0xff]
    %v3932 = vld [vmem:[%s3 + $0x330] sm:$0xff]
    %v3933 = vld [vmem:[%s3 + $0x338] sm:$0xff]
    %v3934 = vld [vmem:[%s3 + $0x340] sm:$0xff]
    %v3935 = vld [vmem:[%s3 + $0x348] sm:$0xff]
    %v3936 = vld [vmem:[%s3 + $0x350] sm:$0xff]
    %v3937 = vld [vmem:[%s3 + $0x358] sm:$0xff]
    %v3938 = vld [vmem:[%s3 + $0x360] sm:$0xff]
    %v3939 = vld [vmem:[%s3 + $0x368] sm:$0xff]
    %v3940 = vld [vmem:[%s3 + $0x370] sm:$0xff]
    %v3941 = vld [vmem:[%s3 + $0x378] sm:$0xff]
    %v3942 = vld [vmem:[%s3 + $0x380] sm:$0xff]
    %v3943 = vld [vmem:[%s3 + $0x388] sm:$0xff]
    %v3944 = vld [vmem:[%s3 + $0x390] sm:$0xff]
    %v3945 = vld [vmem:[%s3 + $0x398] sm:$0xff]
    %v3946 = vld [vmem:[%s3 + $0x3a0] sm:$0xff]
    %v3947 = vld [vmem:[%s3 + $0x3a8] sm:$0xff]
    %v3948 = vld [vmem:[%s3 + $0x3b0] sm:$0xff]
    %v3949 = vld [vmem:[%s3 + $0x3b8] sm:$0xff]
    %v3950 = vld [vmem:[%s3 + $0x3c0] sm:$0xff]
    %v3951 = vld [vmem:[%s3 + $0x3c8] sm:$0xff]
    %v3952 = vld [vmem:[%s3 + $0x3d0] sm:$0xff]
    %v3953 = vld [vmem:[%s3 + $0x3d8] sm:$0xff]
    %v3954 = vld [vmem:[%s3 + $0x3e0] sm:$0xff]
    %v3955 = vld [vmem:[%s3 + $0x3e8] sm:$0xff]
    %v3956 = vld [vmem:[%s3 + $0x3f0] sm:$0xff]
    %v3957 = vld [vmem:[%s3 + $0x3f8] sm:$0xff]
    %v3958 = vld [vmem:[%s3 + $0x400] sm:$0xff]
    %v3959 = vld [vmem:[%s3 + $0x408] sm:$0xff]
    %v3960 = vld [vmem:[%s3 + $0x410] sm:$0xff]
    %v3961 = vld [vmem:[%s3 + $0x418] sm:$0xff]
    %v3962 = vld [vmem:[%s3 + $0x420] sm:$0xff]
    %v3963 = vld [vmem:[%s3 + $0x428] sm:$0xff]
    %v3964 = vld [vmem:[%s3 + $0x430] sm:$0xff]
    %v3965 = vld [vmem:[%s3 + $0x438] sm:$0xff]
    %v3966 = vld [vmem:[%s3 + $0x440] sm:$0xff]
    %v3967 = vld [vmem:[%s3 + $0x448] sm:$0xff]
    %v3968 = vld [vmem:[%s3 + $0x450] sm:$0xff]
    %v3969 = vld [vmem:[%s3 + $0x458] sm:$0xff]
    %v3970 = vld [vmem:[%s3 + $0x460] sm:$0xff]
    %v3971 = vld [vmem:[%s3 + $0x468] sm:$0xff]
    %v3972 = vld [vmem:[%s3 + $0x470] sm:$0xff]
    %v3973 = vld [vmem:[%s3 + $0x478] sm:$0xff]
    %v3974 = vld [vmem:[%s3 + $0x480] sm:$0xff]
    %v3975 = vld [vmem:[%s3 + $0x488] sm:$0xff]
    %v3976 = vld [vmem:[%s3 + $0x490] sm:$0xff]
    %v3977 = vld [vmem:[%s3 + $0x498] sm:$0xff]
    %v3978 = vld [vmem:[%s3 + $0x4a0] sm:$0xff]
    %v3979 = vld [vmem:[%s3 + $0x4a8] sm:$0xff]
    %v3980 = vld [vmem:[%s3 + $0x4b0] sm:$0xff]
    %v3981 = vld [vmem:[%s3 + $0x4b8] sm:$0xff]
    %v3982 = vld [vmem:[%s3 + $0x4c0] sm:$0xff]
    %v3983 = vld [vmem:[%s3 + $0x4c8] sm:$0xff]
    %v3984 = vld [vmem:[%s3 + $0x4d0] sm:$0xff]
    %v3985 = vld [vmem:[%s3 + $0x4d8] sm:$0xff]
    %v3986 = vld [vmem:[%s3 + $0x4e0] sm:$0xff]
    %v3987 = vld [vmem:[%s3 + $0x4e8] sm:$0xff]
    %v3988 = vld [vmem:[%s3 + $0x4f0] sm:$0xff]
    %v3989 = vld [vmem:[%s3 + $0x4f8] sm:$0xff]
    %v3990 = vld [vmem:[%s3 + $0x500] sm:$0xff]
    %v3991 = vld [vmem:[%s3 + $0x508] sm:$0xff]
    %v3992 = vld [vmem:[%s3 + $0x510] sm:$0xff]
    %v3993 = vld [vmem:[%s3 + $0x518] sm:$0xff]
    %v3994 = vld [vmem:[%s3 + $0x520] sm:$0xff]
    %v3995 = vld [vmem:[%s3 + $0x528] sm:$0xff]
    %v3996 = vld [vmem:[%s3 + $0x530] sm:$0xff]
    %v3997 = vld [vmem:[%s3 + $0x538] sm:$0xff]
    %v3998 = vld [vmem:[%s3 + $0x540] sm:$0xff]
    %v3999 = vld [vmem:[%s3 + $0x548] sm:$0xff]
    %v4000 = vld [vmem:[%s3 + $0x550] sm:$0xff]
    %v4001 = vld [vmem:[%s3 + $0x558] sm:$0xff]
    %v4002 = vld [vmem:[%s3 + $0x560] sm:$0xff]
    %v4003 = vld [vmem:[%s3 + $0x568] sm:$0xff]
    %v4004 = vld [vmem:[%s3 + $0x570] sm:$0xff]
    %v4005 = vld [vmem:[%s3 + $0x578] sm:$0xff]
    %v4006 = vld [vmem:[%s3 + $0x580] sm:$0xff]
    %v4007 = vld [vmem:[%s3 + $0x588] sm:$0xff]
    %v4008 = vld [vmem:[%s3 + $0x590] sm:$0xff]
    %v4009 = vld [vmem:[%s3 + $0x598] sm:$0xff]
    %v4010 = vld [vmem:[%s3 + $0x5a0] sm:$0xff]
    %v4011 = vld [vmem:[%s3 + $0x5a8] sm:$0xff]
    %v4012 = vld [vmem:[%s3 + $0x5b0] sm:$0xff]
    %v4013 = vld [vmem:[%s3 + $0x5b8] sm:$0xff]
    %v4014 = vld [vmem:[%s3 + $0x5c0] sm:$0xff]
    %v4015 = vld [vmem:[%s3 + $0x5c8] sm:$0xff]
    %v4016 = vld [vmem:[%s3 + $0x5d0] sm:$0xff]
    %v4017 = vld [vmem:[%s3 + $0x5d8] sm:$0xff]
    %v4018 = vld [vmem:[%s3 + $0x5e0] sm:$0xff]
    %v4019 = vld [vmem:[%s3 + $0x5e8] sm:$0xff]
    %v4020 = vld [vmem:[%s3 + $0x5f0] sm:$0xff]
    %v4021 = vld [vmem:[%s3 + $0x5f8] sm:$0xff]
    %v4022 = vld [vmem:[%s3 + $0x600] sm:$0xff]
    %v4023 = vld [vmem:[%s3 + $0x608] sm:$0xff]
    %v4024 = vld [vmem:[%s3 + $0x610] sm:$0xff]
    %v4025 = vld [vmem:[%s3 + $0x618] sm:$0xff]
    %v4026 = vld [vmem:[%s3 + $0x620] sm:$0xff]
    %v4027 = vld [vmem:[%s3 + $0x628] sm:$0xff]
    %v4028 = vld [vmem:[%s3 + $0x630] sm:$0xff]
    %v4029 = vld [vmem:[%s3 + $0x638] sm:$0xff]
    %v4030 = vld [vmem:[%s3 + $0x640] sm:$0xff]
    %v4031 = vld [vmem:[%s3 + $0x648] sm:$0xff]
    %v4032 = vld [vmem:[%s3 + $0x650] sm:$0xff]
    %v4033 = vld [vmem:[%s3 + $0x658] sm:$0xff]
    %v4034 = vld [vmem:[%s3 + $0x660] sm:$0xff]
    %v4035 = vld [vmem:[%s3 + $0x668] sm:$0xff]
    %v4036 = vld [vmem:[%s3 + $0x670] sm:$0xff]
    %v4037 = vld [vmem:[%s3 + $0x678] sm:$0xff]
    %v4038 = vld [vmem:[%s3 + $0x680] sm:$0xff]
    %v4039 = vld [vmem:[%s3 + $0x688] sm:$0xff]
    %v4040 = vld [vmem:[%s3 + $0x690] sm:$0xff]
    %v4041 = vld [vmem:[%s3 + $0x698] sm:$0xff]
    %v4042 = vld [vmem:[%s3 + $0x6a0] sm:$0xff]
    %v4043 = vld [vmem:[%s3 + $0x6a8] sm:$0xff]
    %v4044 = vld [vmem:[%s3 + $0x6b0] sm:$0xff]
    %v4045 = vld [vmem:[%s3 + $0x6b8] sm:$0xff]
    %v4046 = vld [vmem:[%s3 + $0x6c0] sm:$0xff]
    %v4047 = vld [vmem:[%s3 + $0x6c8] sm:$0xff]
    %v4048 = vld [vmem:[%s3 + $0x6d0] sm:$0xff]
    %v4049 = vld [vmem:[%s3 + $0x6d8] sm:$0xff]
    %v4050 = vld [vmem:[%s3 + $0x6e0] sm:$0xff]
    %v4051 = vld [vmem:[%s3 + $0x6e8] sm:$0xff]
    %v4052 = vld [vmem:[%s3 + $0x6f0] sm:$0xff]
    %v4053 = vld [vmem:[%s3 + $0x6f8] sm:$0xff]
    %v4054 = vld [vmem:[%s3 + $0x700] sm:$0xff]
    %v4055 = vld [vmem:[%s3 + $0x708] sm:$0xff]
    %v4056 = vld [vmem:[%s3 + $0x710] sm:$0xff]
    %v4057 = vld [vmem:[%s3 + $0x718] sm:$0xff]
    %v4058 = vld [vmem:[%s3 + $0x720] sm:$0xff]
    %v4059 = vld [vmem:[%s3 + $0x728] sm:$0xff]
    %v4060 = vld [vmem:[%s3 + $0x730] sm:$0xff]
    %v4061 = vld [vmem:[%s3 + $0x738] sm:$0xff]
    %v4062 = vld [vmem:[%s3 + $0x740] sm:$0xff]
    %v4063 = vld [vmem:[%s3 + $0x748] sm:$0xff]
    %v4064 = vld [vmem:[%s3 + $0x750] sm:$0xff]
    %v4065 = vld [vmem:[%s3 + $0x758] sm:$0xff]
    %v4066 = vld [vmem:[%s3 + $0x760] sm:$0xff]
    %v4067 = vld [vmem:[%s3 + $0x768] sm:$0xff]
    %v4068 = vld [vmem:[%s3 + $0x770] sm:$0xff]
    %v4069 = vld [vmem:[%s3 + $0x778] sm:$0xff]
    %v4070 = vld [vmem:[%s3 + $0x780] sm:$0xff]
    %v4071 = vld [vmem:[%s3 + $0x788] sm:$0xff]
    %v4072 = vld [vmem:[%s3 + $0x790] sm:$0xff]
    %v4073 = vld [vmem:[%s3 + $0x798] sm:$0xff]
    %v4074 = vld [vmem:[%s3 + $0x7a0] sm:$0xff]
    %v4075 = vld [vmem:[%s3 + $0x7a8] sm:$0xff]
    %v4076 = vld [vmem:[%s3 + $0x7b0] sm:$0xff]
    %v4077 = vld [vmem:[%s3 + $0x7b8] sm:$0xff]
    %v4078 = vld [vmem:[%s3 + $0x7c0] sm:$0xff]
    %v4079 = vld [vmem:[%s3 + $0x7c8] sm:$0xff]
    %v4080 = vld [vmem:[%s3 + $0x7d0] sm:$0xff]
    %v4081 = vld [vmem:[%s3 + $0x7d8] sm:$0xff]
    %v4082 = vld [vmem:[%s3 + $0x7e0] sm:$0xff]
    %v4083 = vld [vmem:[%s3 + $0x7e8] sm:$0xff]
    %v4084 = vld [vmem:[%s3 + $0x7f0] sm:$0xff]
    %v4085 = vld [vmem:[%s3 + $0x7f8] sm:$0xff]
    %v4086 = vpack.c.bf16 %v3818, %v3814
    %v4087 = vpack.c.bf16 %v3819, %v3815
    %v4088 = vpack.c.bf16 %v3820, %v3816
    %v4089 = vpack.c.bf16 %v3821, %v3817
    %v4090 = vpack.c.bf16 %v3826, %v3822
    %v4091 = vpack.c.bf16 %v3827, %v3823
    %v4092 = vpack.c.bf16 %v3828, %v3824
    %v4093 = vpack.c.bf16 %v3829, %v3825
    %v4094 = vld [vmem:[#allocation3] sm:$0xfe]
    %v4095 = vld [vmem:[#allocation3 + $0x8] sm:$0xfe]
    %v4096 = vld [vmem:[#allocation3 + $0x10] sm:$0xfe]
    %v4097 = vld [vmem:[#allocation3 + $0x18] sm:$0xfe]
    %v4098 = vld [vmem:[#allocation3 + $0x40] sm:$0x1]
    %v4099 = vld [vmem:[#allocation3 + $0x48] sm:$0x1]
    %v4100 = vld [vmem:[#allocation3 + $0x50] sm:$0x1]
    %v4101 = vld [vmem:[#allocation3 + $0x58] sm:$0x1]
    %v4102 = vld [vmem:[#allocation3 + $0x60] sm:$0xfe]
    %v4103 = vld [vmem:[#allocation3 + $0x68] sm:$0xfe]
    %v4104 = vld [vmem:[#allocation3 + $0x70] sm:$0xfe]
    %v4105 = vld [vmem:[#allocation3 + $0x78] sm:$0xfe]
    %v4106 = vld [vmem:[#allocation3 + $0xa0] sm:$0x1]
    %v4107 = vld [vmem:[#allocation3 + $0xa8] sm:$0x1]
    %v4108 = vld [vmem:[#allocation3 + $0xb0] sm:$0x1]
    %v4109 = vld [vmem:[#allocation3 + $0xb8] sm:$0x1]
    %vm4134 = vcmask 1046528
    %v4135 = vrot.slane %v4094, 1
    %v4136 = vrot.slane %v3818, 1
    %v4137 = vsel %vm4134, %v4135, %v4136
    %v4138 = vrot.slane %v4095, 1
    %v4139 = vrot.slane %v3819, 1
    %v4140 = vsel %vm4134, %v4138, %v4139
    %v4141 = vrot.slane %v4096, 1
    %v4142 = vrot.slane %v3820, 1
    %v4143 = vsel %vm4134, %v4141, %v4142
    %v4144 = vrot.slane %v4097, 1
    %v4145 = vrot.slane %v3821, 1
    %v4146 = vsel %vm4134, %v4144, %v4145
    %v4147 = vrot.slane %v4098, 1
    %v4148 = vsel %vm4134, %v4136, %v4147
    %v4149 = vrot.slane %v4099, 1
    %v4150 = vsel %vm4134, %v4139, %v4149
    %v4151 = vrot.slane %v4100, 1
    %v4152 = vsel %vm4134, %v4142, %v4151
    %v4153 = vrot.slane %v4101, 1
    %v4154 = vsel %vm4134, %v4145, %v4153
    %v4155 = vrot.slane %v4102, 1
    %v4156 = vrot.slane %v3826, 1
    %v4157 = vsel %vm4134, %v4155, %v4156
    %v4158 = vrot.slane %v4103, 1
    %v4159 = vrot.slane %v3827, 1
    %v4160 = vsel %vm4134, %v4158, %v4159
    %v4161 = vrot.slane %v4104, 1
    %v4162 = vrot.slane %v3828, 1
    %v4163 = vsel %vm4134, %v4161, %v4162
    %v4164 = vrot.slane %v4105, 1
    %v4165 = vrot.slane %v3829, 1
    %v4166 = vsel %vm4134, %v4164, %v4165
    %v4167 = vrot.slane %v4106, 1
    %v4168 = vsel %vm4134, %v4156, %v4167
    %v4169 = vrot.slane %v4107, 1
    %v4170 = vsel %vm4134, %v4159, %v4169
    %v4171 = vrot.slane %v4108, 1
    %v4172 = vsel %vm4134, %v4162, %v4171
    %v4173 = vrot.slane %v4109, 1
    %v4174 = vsel %vm4134, %v4165, %v4173
    %s4191 = scalar_lea.vmem %s3, 2048
    %v4192 = vld [vmem:[%s4191] sm:$0xff]
    %v4193 = vld [vmem:[%s4191 + $0x8] sm:$0xff]
    %v4194 = vld [vmem:[%s4191 + $0x10] sm:$0xff]
    %v4195 = vld [vmem:[%s4191 + $0x18] sm:$0xff]
    %v4196 = vld [vmem:[%s4191 + $0x20] sm:$0xff]
    %v4197 = vld [vmem:[%s4191 + $0x28] sm:$0xff]
    %v4198 = vld [vmem:[%s4191 + $0x30] sm:$0xff]
    %v4199 = vld [vmem:[%s4191 + $0x38] sm:$0xff]
    %v4200 = vld [vmem:[%s4191 + $0x40] sm:$0xff]
    %v4201 = vld [vmem:[%s4191 + $0x48] sm:$0xff]
    %v4202 = vld [vmem:[%s4191 + $0x50] sm:$0xff]
    %v4203 = vld [vmem:[%s4191 + $0x58] sm:$0xff]
    %v4204 = vld [vmem:[%s4191 + $0x60] sm:$0xff]
    %v4205 = vld [vmem:[%s4191 + $0x68] sm:$0xff]
    %v4206 = vld [vmem:[%s4191 + $0x70] sm:$0xff]
    %v4207 = vld [vmem:[%s4191 + $0x78] sm:$0xff]
    %v4208 = vld [vmem:[%s4191 + $0x80] sm:$0xff]
    %v4209 = vld [vmem:[%s4191 + $0x88] sm:$0xff]
    %v4210 = vld [vmem:[%s4191 + $0x90] sm:$0xff]
    %v4211 = vld [vmem:[%s4191 + $0x98] sm:$0xff]
    %v4212 = vld [vmem:[%s4191 + $0xa0] sm:$0xff]
    %v4213 = vld [vmem:[%s4191 + $0xa8] sm:$0xff]
    %v4214 = vld [vmem:[%s4191 + $0xb0] sm:$0xff]
    %v4215 = vld [vmem:[%s4191 + $0xb8] sm:$0xff]
    %v4216 = vld [vmem:[%s4191 + $0xc0] sm:$0xff]
    %v4217 = vld [vmem:[%s4191 + $0xc8] sm:$0xff]
    %v4218 = vld [vmem:[%s4191 + $0xd0] sm:$0xff]
    %v4219 = vld [vmem:[%s4191 + $0xd8] sm:$0xff]
    %v4220 = vld [vmem:[%s4191 + $0xe0] sm:$0xff]
    %v4221 = vld [vmem:[%s4191 + $0xe8] sm:$0xff]
    %v4222 = vld [vmem:[%s4191 + $0xf0] sm:$0xff]
    %v4223 = vld [vmem:[%s4191 + $0xf8] sm:$0xff]
    %v4224 = vld [vmem:[%s4191 + $0x100] sm:$0xff]
    %v4225 = vld [vmem:[%s4191 + $0x108] sm:$0xff]
    %v4226 = vld [vmem:[%s4191 + $0x110] sm:$0xff]
    %v4227 = vld [vmem:[%s4191 + $0x118] sm:$0xff]
    %v4228 = vld [vmem:[%s4191 + $0x120] sm:$0xff]
    %v4229 = vld [vmem:[%s4191 + $0x128] sm:$0xff]
    %v4230 = vld [vmem:[%s4191 + $0x130] sm:$0xff]
    %v4231 = vld [vmem:[%s4191 + $0x138] sm:$0xff]
    %v4232 = vld [vmem:[%s4191 + $0x140] sm:$0xff]
    %v4233 = vld [vmem:[%s4191 + $0x148] sm:$0xff]
    %v4234 = vld [vmem:[%s4191 + $0x150] sm:$0xff]
    %v4235 = vld [vmem:[%s4191 + $0x158] sm:$0xff]
    %v4236 = vld [vmem:[%s4191 + $0x160] sm:$0xff]
    %v4237 = vld [vmem:[%s4191 + $0x168] sm:$0xff]
    %v4238 = vld [vmem:[%s4191 + $0x170] sm:$0xff]
    %v4239 = vld [vmem:[%s4191 + $0x178] sm:$0xff]
    %v4240 = vld [vmem:[%s4191 + $0x180] sm:$0xff]
    %v4241 = vld [vmem:[%s4191 + $0x188] sm:$0xff]
    %v4242 = vld [vmem:[%s4191 + $0x190] sm:$0xff]
    %v4243 = vld [vmem:[%s4191 + $0x198] sm:$0xff]
    %v4244 = vld [vmem:[%s4191 + $0x1a0] sm:$0xff]
    %v4245 = vld [vmem:[%s4191 + $0x1a8] sm:$0xff]
    %v4246 = vld [vmem:[%s4191 + $0x1b0] sm:$0xff]
    %v4247 = vld [vmem:[%s4191 + $0x1b8] sm:$0xff]
    %v4248 = vld [vmem:[%s4191 + $0x1c0] sm:$0xff]
    %v4249 = vld [vmem:[%s4191 + $0x1c8] sm:$0xff]
    %v4250 = vld [vmem:[%s4191 + $0x1d0] sm:$0xff]
    %v4251 = vld [vmem:[%s4191 + $0x1d8] sm:$0xff]
    %v4252 = vld [vmem:[%s4191 + $0x1e0] sm:$0xff]
    %v4253 = vld [vmem:[%s4191 + $0x1e8] sm:$0xff]
    %v4254 = vld [vmem:[%s4191 + $0x1f0] sm:$0xff]
    %v4255 = vld [vmem:[%s4191 + $0x1f8] sm:$0xff]
    %v4256 = vld [vmem:[%s4191 + $0x200] sm:$0xff]
    %v4257 = vld [vmem:[%s4191 + $0x208] sm:$0xff]
    %v4258 = vld [vmem:[%s4191 + $0x210] sm:$0xff]
    %v4259 = vld [vmem:[%s4191 + $0x218] sm:$0xff]
    %v4260 = vld [vmem:[%s4191 + $0x220] sm:$0xff]
    %v4261 = vld [vmem:[%s4191 + $0x228] sm:$0xff]
    %v4262 = vld [vmem:[%s4191 + $0x230] sm:$0xff]
    %v4263 = vld [vmem:[%s4191 + $0x238] sm:$0xff]
    %v4264 = vld [vmem:[%s4191 + $0x240] sm:$0xff]
    %v4265 = vld [vmem:[%s4191 + $0x248] sm:$0xff]
    %v4266 = vld [vmem:[%s4191 + $0x250] sm:$0xff]
    %v4267 = vld [vmem:[%s4191 + $0x258] sm:$0xff]
    %v4268 = vld [vmem:[%s4191 + $0x260] sm:$0xff]
    %v4269 = vld [vmem:[%s4191 + $0x268] sm:$0xff]
    %v4270 = vld [vmem:[%s4191 + $0x270] sm:$0xff]
    %v4271 = vld [vmem:[%s4191 + $0x278] sm:$0xff]
    %v4272 = vld [vmem:[%s4191 + $0x280] sm:$0xff]
    %v4273 = vld [vmem:[%s4191 + $0x288] sm:$0xff]
    %v4274 = vld [vmem:[%s4191 + $0x290] sm:$0xff]
    %v4275 = vld [vmem:[%s4191 + $0x298] sm:$0xff]
    %v4276 = vld [vmem:[%s4191 + $0x2a0] sm:$0xff]
    %v4277 = vld [vmem:[%s4191 + $0x2a8] sm:$0xff]
    %v4278 = vld [vmem:[%s4191 + $0x2b0] sm:$0xff]
    %v4279 = vld [vmem:[%s4191 + $0x2b8] sm:$0xff]
    %v4280 = vld [vmem:[%s4191 + $0x2c0] sm:$0xff]
    %v4281 = vld [vmem:[%s4191 + $0x2c8] sm:$0xff]
    %v4282 = vld [vmem:[%s4191 + $0x2d0] sm:$0xff]
    %v4283 = vld [vmem:[%s4191 + $0x2d8] sm:$0xff]
    %v4284 = vld [vmem:[%s4191 + $0x2e0] sm:$0xff]
    %v4285 = vld [vmem:[%s4191 + $0x2e8] sm:$0xff]
    %v4286 = vld [vmem:[%s4191 + $0x2f0] sm:$0xff]
    %v4287 = vld [vmem:[%s4191 + $0x2f8] sm:$0xff]
    %v4288 = vld [vmem:[%s4191 + $0x300] sm:$0xff]
    %v4289 = vld [vmem:[%s4191 + $0x308] sm:$0xff]
    %v4290 = vld [vmem:[%s4191 + $0x310] sm:$0xff]
    %v4291 = vld [vmem:[%s4191 + $0x318] sm:$0xff]
    %v4292 = vld [vmem:[%s4191 + $0x320] sm:$0xff]
    %v4293 = vld [vmem:[%s4191 + $0x328] sm:$0xff]
    %v4294 = vld [vmem:[%s4191 + $0x330] sm:$0xff]
    %v4295 = vld [vmem:[%s4191 + $0x338] sm:$0xff]
    %v4296 = vld [vmem:[%s4191 + $0x340] sm:$0xff]
    %v4297 = vld [vmem:[%s4191 + $0x348] sm:$0xff]
    %v4298 = vld [vmem:[%s4191 + $0x350] sm:$0xff]
    %v4299 = vld [vmem:[%s4191 + $0x358] sm:$0xff]
    %v4300 = vld [vmem:[%s4191 + $0x360] sm:$0xff]
    %v4301 = vld [vmem:[%s4191 + $0x368] sm:$0xff]
    %v4302 = vld [vmem:[%s4191 + $0x370] sm:$0xff]
    %v4303 = vld [vmem:[%s4191 + $0x378] sm:$0xff]
    %v4304 = vld [vmem:[%s4191 + $0x380] sm:$0xff]
    %v4305 = vld [vmem:[%s4191 + $0x388] sm:$0xff]
    %v4306 = vld [vmem:[%s4191 + $0x390] sm:$0xff]
    %v4307 = vld [vmem:[%s4191 + $0x398] sm:$0xff]
    %v4308 = vld [vmem:[%s4191 + $0x3a0] sm:$0xff]
    %v4309 = vld [vmem:[%s4191 + $0x3a8] sm:$0xff]
    %v4310 = vld [vmem:[%s4191 + $0x3b0] sm:$0xff]
    %v4311 = vld [vmem:[%s4191 + $0x3b8] sm:$0xff]
    %v4312 = vld [vmem:[%s4191 + $0x3c0] sm:$0xff]
    %v4313 = vld [vmem:[%s4191 + $0x3c8] sm:$0xff]
    %v4314 = vld [vmem:[%s4191 + $0x3d0] sm:$0xff]
    %v4315 = vld [vmem:[%s4191 + $0x3d8] sm:$0xff]
    %v4316 = vld [vmem:[%s4191 + $0x3e0] sm:$0xff]
    %v4317 = vld [vmem:[%s4191 + $0x3e8] sm:$0xff]
    %v4318 = vld [vmem:[%s4191 + $0x3f0] sm:$0xff]
    %v4319 = vld [vmem:[%s4191 + $0x3f8] sm:$0xff]
    %v4320 = vld [vmem:[%s4191 + $0x400] sm:$0xff]
    %v4321 = vld [vmem:[%s4191 + $0x408] sm:$0xff]
    %v4322 = vld [vmem:[%s4191 + $0x410] sm:$0xff]
    %v4323 = vld [vmem:[%s4191 + $0x418] sm:$0xff]
    %v4324 = vld [vmem:[%s4191 + $0x420] sm:$0xff]
    %v4325 = vld [vmem:[%s4191 + $0x428] sm:$0xff]
    %v4326 = vld [vmem:[%s4191 + $0x430] sm:$0xff]
    %v4327 = vld [vmem:[%s4191 + $0x438] sm:$0xff]
    %v4328 = vld [vmem:[%s4191 + $0x440] sm:$0xff]
    %v4329 = vld [vmem:[%s4191 + $0x448] sm:$0xff]
    %v4330 = vld [vmem:[%s4191 + $0x450] sm:$0xff]
    %v4331 = vld [vmem:[%s4191 + $0x458] sm:$0xff]
    %v4332 = vld [vmem:[%s4191 + $0x460] sm:$0xff]
    %v4333 = vld [vmem:[%s4191 + $0x468] sm:$0xff]
    %v4334 = vld [vmem:[%s4191 + $0x470] sm:$0xff]
    %v4335 = vld [vmem:[%s4191 + $0x478] sm:$0xff]
    %v4336 = vld [vmem:[%s4191 + $0x480] sm:$0xff]
    %v4337 = vld [vmem:[%s4191 + $0x488] sm:$0xff]
    %v4338 = vld [vmem:[%s4191 + $0x490] sm:$0xff]
    %v4339 = vld [vmem:[%s4191 + $0x498] sm:$0xff]
    %v4340 = vld [vmem:[%s4191 + $0x4a0] sm:$0xff]
    %v4341 = vld [vmem:[%s4191 + $0x4a8] sm:$0xff]
    %v4342 = vld [vmem:[%s4191 + $0x4b0] sm:$0xff]
    %v4343 = vld [vmem:[%s4191 + $0x4b8] sm:$0xff]
    %v4344 = vld [vmem:[%s4191 + $0x4c0] sm:$0xff]
    %v4345 = vld [vmem:[%s4191 + $0x4c8] sm:$0xff]
    %v4346 = vld [vmem:[%s4191 + $0x4d0] sm:$0xff]
    %v4347 = vld [vmem:[%s4191 + $0x4d8] sm:$0xff]
    %v4348 = vld [vmem:[%s4191 + $0x4e0] sm:$0xff]
    %v4349 = vld [vmem:[%s4191 + $0x4e8] sm:$0xff]
    %v4350 = vld [vmem:[%s4191 + $0x4f0] sm:$0xff]
    %v4351 = vld [vmem:[%s4191 + $0x4f8] sm:$0xff]
    %v4352 = vld [vmem:[%s4191 + $0x500] sm:$0xff]
    %v4353 = vld [vmem:[%s4191 + $0x508] sm:$0xff]
    %v4354 = vld [vmem:[%s4191 + $0x510] sm:$0xff]
    %v4355 = vld [vmem:[%s4191 + $0x518] sm:$0xff]
    %v4356 = vld [vmem:[%s4191 + $0x520] sm:$0xff]
    %v4357 = vld [vmem:[%s4191 + $0x528] sm:$0xff]
    %v4358 = vld [vmem:[%s4191 + $0x530] sm:$0xff]
    %v4359 = vld [vmem:[%s4191 + $0x538] sm:$0xff]
    %v4360 = vld [vmem:[%s4191 + $0x540] sm:$0xff]
    %v4361 = vld [vmem:[%s4191 + $0x548] sm:$0xff]
    %v4362 = vld [vmem:[%s4191 + $0x550] sm:$0xff]
    %v4363 = vld [vmem:[%s4191 + $0x558] sm:$0xff]
    %v4364 = vld [vmem:[%s4191 + $0x560] sm:$0xff]
    %v4365 = vld [vmem:[%s4191 + $0x568] sm:$0xff]
    %v4366 = vld [vmem:[%s4191 + $0x570] sm:$0xff]
    %v4367 = vld [vmem:[%s4191 + $0x578] sm:$0xff]
    %v4368 = vld [vmem:[%s4191 + $0x580] sm:$0xff]
    %v4369 = vld [vmem:[%s4191 + $0x588] sm:$0xff]
    %v4370 = vld [vmem:[%s4191 + $0x590] sm:$0xff]
    %v4371 = vld [vmem:[%s4191 + $0x598] sm:$0xff]
    %v4372 = vld [vmem:[%s4191 + $0x5a0] sm:$0xff]
    %v4373 = vld [vmem:[%s4191 + $0x5a8] sm:$0xff]
    %v4374 = vld [vmem:[%s4191 + $0x5b0] sm:$0xff]
    %v4375 = vld [vmem:[%s4191 + $0x5b8] sm:$0xff]
    %v4376 = vld [vmem:[%s4191 + $0x5c0] sm:$0xff]
    %v4377 = vld [vmem:[%s4191 + $0x5c8] sm:$0xff]
    %v4378 = vld [vmem:[%s4191 + $0x5d0] sm:$0xff]
    %v4379 = vld [vmem:[%s4191 + $0x5d8] sm:$0xff]
    %v4380 = vld [vmem:[%s4191 + $0x5e0] sm:$0xff]
    %v4381 = vld [vmem:[%s4191 + $0x5e8] sm:$0xff]
    %v4382 = vld [vmem:[%s4191 + $0x5f0] sm:$0xff]
    %v4383 = vld [vmem:[%s4191 + $0x5f8] sm:$0xff]
    %v4384 = vld [vmem:[%s4191 + $0x600] sm:$0xff]
    %v4385 = vld [vmem:[%s4191 + $0x608] sm:$0xff]
    %v4386 = vld [vmem:[%s4191 + $0x610] sm:$0xff]
    %v4387 = vld [vmem:[%s4191 + $0x618] sm:$0xff]
    %v4388 = vld [vmem:[%s4191 + $0x620] sm:$0xff]
    %v4389 = vld [vmem:[%s4191 + $0x628] sm:$0xff]
    %v4390 = vld [vmem:[%s4191 + $0x630] sm:$0xff]
    %v4391 = vld [vmem:[%s4191 + $0x638] sm:$0xff]
    %v4392 = vld [vmem:[%s4191 + $0x640] sm:$0xff]
    %v4393 = vld [vmem:[%s4191 + $0x648] sm:$0xff]
    %v4394 = vld [vmem:[%s4191 + $0x650] sm:$0xff]
    %v4395 = vld [vmem:[%s4191 + $0x658] sm:$0xff]
    %v4396 = vld [vmem:[%s4191 + $0x660] sm:$0xff]
    %v4397 = vld [vmem:[%s4191 + $0x668] sm:$0xff]
    %v4398 = vld [vmem:[%s4191 + $0x670] sm:$0xff]
    %v4399 = vld [vmem:[%s4191 + $0x678] sm:$0xff]
    %v4400 = vld [vmem:[%s4191 + $0x680] sm:$0xff]
    %v4401 = vld [vmem:[%s4191 + $0x688] sm:$0xff]
    %v4402 = vld [vmem:[%s4191 + $0x690] sm:$0xff]
    %v4403 = vld [vmem:[%s4191 + $0x698] sm:$0xff]
    %v4404 = vld [vmem:[%s4191 + $0x6a0] sm:$0xff]
    %v4405 = vld [vmem:[%s4191 + $0x6a8] sm:$0xff]
    %v4406 = vld [vmem:[%s4191 + $0x6b0] sm:$0xff]
    %v4407 = vld [vmem:[%s4191 + $0x6b8] sm:$0xff]
    %v4408 = vld [vmem:[%s4191 + $0x6c0] sm:$0xff]
    %v4409 = vld [vmem:[%s4191 + $0x6c8] sm:$0xff]
    %v4410 = vld [vmem:[%s4191 + $0x6d0] sm:$0xff]
    %v4411 = vld [vmem:[%s4191 + $0x6d8] sm:$0xff]
    %v4412 = vld [vmem:[%s4191 + $0x6e0] sm:$0xff]
    %v4413 = vld [vmem:[%s4191 + $0x6e8] sm:$0xff]
    %v4414 = vld [vmem:[%s4191 + $0x6f0] sm:$0xff]
    %v4415 = vld [vmem:[%s4191 + $0x6f8] sm:$0xff]
    %v4416 = vld [vmem:[%s4191 + $0x700] sm:$0xff]
    %v4417 = vld [vmem:[%s4191 + $0x708] sm:$0xff]
    %v4418 = vld [vmem:[%s4191 + $0x710] sm:$0xff]
    %v4419 = vld [vmem:[%s4191 + $0x718] sm:$0xff]
    %v4420 = vld [vmem:[%s4191 + $0x720] sm:$0xff]
    %v4421 = vld [vmem:[%s4191 + $0x728] sm:$0xff]
    %v4422 = vld [vmem:[%s4191 + $0x730] sm:$0xff]
    %v4423 = vld [vmem:[%s4191 + $0x738] sm:$0xff]
    %v4424 = vld [vmem:[%s4191 + $0x740] sm:$0xff]
    %v4425 = vld [vmem:[%s4191 + $0x748] sm:$0xff]
    %v4426 = vld [vmem:[%s4191 + $0x750] sm:$0xff]
    %v4427 = vld [vmem:[%s4191 + $0x758] sm:$0xff]
    %v4428 = vld [vmem:[%s4191 + $0x760] sm:$0xff]
    %v4429 = vld [vmem:[%s4191 + $0x768] sm:$0xff]
    %v4430 = vld [vmem:[%s4191 + $0x770] sm:$0xff]
    %v4431 = vld [vmem:[%s4191 + $0x778] sm:$0xff]
    %v4432 = vld [vmem:[%s4191 + $0x780] sm:$0xff]
    %v4433 = vld [vmem:[%s4191 + $0x788] sm:$0xff]
    %v4434 = vld [vmem:[%s4191 + $0x790] sm:$0xff]
    %v4435 = vld [vmem:[%s4191 + $0x798] sm:$0xff]
    %v4436 = vld [vmem:[%s4191 + $0x7a0] sm:$0xff]
    %v4437 = vld [vmem:[%s4191 + $0x7a8] sm:$0xff]
    %v4438 = vld [vmem:[%s4191 + $0x7b0] sm:$0xff]
    %v4439 = vld [vmem:[%s4191 + $0x7b8] sm:$0xff]
    %v4440 = vld [vmem:[%s4191 + $0x7c0] sm:$0xff]
    %v4441 = vld [vmem:[%s4191 + $0x7c8] sm:$0xff]
    %v4442 = vld [vmem:[%s4191 + $0x7d0] sm:$0xff]
    %v4443 = vld [vmem:[%s4191 + $0x7d8] sm:$0xff]
    %v4444 = vld [vmem:[%s4191 + $0x7e0] sm:$0xff]
    %v4445 = vld [vmem:[%s4191 + $0x7e8] sm:$0xff]
    %v4446 = vld [vmem:[%s4191 + $0x7f0] sm:$0xff]
    %v4447 = vld [vmem:[%s4191 + $0x7f8] sm:$0xff]
    %v4448 = vpack.c.bf16 %v4148, %v4137
    %v4449 = vpack.c.bf16 %v4150, %v4140
    %v4450 = vpack.c.bf16 %v4152, %v4143
    %v4451 = vpack.c.bf16 %v4154, %v4146
    %v4452 = vpack.c.bf16 %v4168, %v4157
    %v4453 = vpack.c.bf16 %v4170, %v4160
    %v4454 = vpack.c.bf16 %v4172, %v4163
    %v4455 = vpack.c.bf16 %v4174, %v4166
    %v4712 = vunpack.c.l.b16 %v4192
    %v4713 = vunpack.c.h.b16 %v4192
    %v4714 = vunpack.c.l.b16 %v4193
    %v4715 = vunpack.c.h.b16 %v4193
    %v4716 = vunpack.c.l.b16 %v4194
    %v4717 = vunpack.c.h.b16 %v4194
    %v4718 = vunpack.c.l.b16 %v4195
    %v4719 = vunpack.c.h.b16 %v4195
    %v4720 = vunpack.c.l.b16 %v4196
    %v4721 = vunpack.c.h.b16 %v4196
    %v4722 = vunpack.c.l.b16 %v4197
    %v4723 = vunpack.c.h.b16 %v4197
    %v4724 = vunpack.c.l.b16 %v4198
    %v4725 = vunpack.c.h.b16 %v4198
    %v4726 = vunpack.c.l.b16 %v4199
    %v4727 = vunpack.c.h.b16 %v4199
    %v4728 = vunpack.c.l.b16 %v4200
    %v4729 = vunpack.c.h.b16 %v4200
    %v4730 = vunpack.c.l.b16 %v4201
    %v4731 = vunpack.c.h.b16 %v4201
    %v4732 = vunpack.c.l.b16 %v4202
    %v4733 = vunpack.c.h.b16 %v4202
    %v4734 = vunpack.c.l.b16 %v4203
    %v4735 = vunpack.c.h.b16 %v4203
    %v4736 = vunpack.c.l.b16 %v4204
    %v4737 = vunpack.c.h.b16 %v4204
    %v4738 = vunpack.c.l.b16 %v4205
    %v4739 = vunpack.c.h.b16 %v4205
    %v4740 = vunpack.c.l.b16 %v4206
    %v4741 = vunpack.c.h.b16 %v4206
    %v4742 = vunpack.c.l.b16 %v4207
    %v4743 = vunpack.c.h.b16 %v4207
    %v4744 = vunpack.c.l.b16 %v4208
    %v4745 = vunpack.c.h.b16 %v4208
    %v4746 = vunpack.c.l.b16 %v4209
    %v4747 = vunpack.c.h.b16 %v4209
    %v4748 = vunpack.c.l.b16 %v4210
    %v4749 = vunpack.c.h.b16 %v4210
    %v4750 = vunpack.c.l.b16 %v4211
    %v4751 = vunpack.c.h.b16 %v4211
    %v4752 = vunpack.c.l.b16 %v4212
    %v4753 = vunpack.c.h.b16 %v4212
    %v4754 = vunpack.c.l.b16 %v4213
    %v4755 = vunpack.c.h.b16 %v4213
    %v4756 = vunpack.c.l.b16 %v4214
    %v4757 = vunpack.c.h.b16 %v4214
    %v4758 = vunpack.c.l.b16 %v4215
    %v4759 = vunpack.c.h.b16 %v4215
    %v4760 = vunpack.c.l.b16 %v4216
    %v4761 = vunpack.c.h.b16 %v4216
    %v4762 = vunpack.c.l.b16 %v4217
    %v4763 = vunpack.c.h.b16 %v4217
    %v4764 = vunpack.c.l.b16 %v4218
    %v4765 = vunpack.c.h.b16 %v4218
    %v4766 = vunpack.c.l.b16 %v4219
    %v4767 = vunpack.c.h.b16 %v4219
    %v4768 = vunpack.c.l.b16 %v4220
    %v4769 = vunpack.c.h.b16 %v4220
    %v4770 = vunpack.c.l.b16 %v4221
    %v4771 = vunpack.c.h.b16 %v4221
    %v4772 = vunpack.c.l.b16 %v4222
    %v4773 = vunpack.c.h.b16 %v4222
    %v4774 = vunpack.c.l.b16 %v4223
    %v4775 = vunpack.c.h.b16 %v4223
    %v4776 = vunpack.c.l.b16 %v4224
    %v4777 = vunpack.c.h.b16 %v4224
    %v4778 = vunpack.c.l.b16 %v4225
    %v4779 = vunpack.c.h.b16 %v4225
    %v4780 = vunpack.c.l.b16 %v4226
    %v4781 = vunpack.c.h.b16 %v4226
    %v4782 = vunpack.c.l.b16 %v4227
    %v4783 = vunpack.c.h.b16 %v4227
    %v4784 = vunpack.c.l.b16 %v4228
    %v4785 = vunpack.c.h.b16 %v4228
    %v4786 = vunpack.c.l.b16 %v4229
    %v4787 = vunpack.c.h.b16 %v4229
    %v4788 = vunpack.c.l.b16 %v4230
    %v4789 = vunpack.c.h.b16 %v4230
    %v4790 = vunpack.c.l.b16 %v4231
    %v4791 = vunpack.c.h.b16 %v4231
    %v4792 = vunpack.c.l.b16 %v4232
    %v4793 = vunpack.c.h.b16 %v4232
    %v4794 = vunpack.c.l.b16 %v4233
    %v4795 = vunpack.c.h.b16 %v4233
    %v4796 = vunpack.c.l.b16 %v4234
    %v4797 = vunpack.c.h.b16 %v4234
    %v4798 = vunpack.c.l.b16 %v4235
    %v4799 = vunpack.c.h.b16 %v4235
    %v4800 = vunpack.c.l.b16 %v4236
    %v4801 = vunpack.c.h.b16 %v4236
    %v4802 = vunpack.c.l.b16 %v4237
    %v4803 = vunpack.c.h.b16 %v4237
    %v4804 = vunpack.c.l.b16 %v4238
    %v4805 = vunpack.c.h.b16 %v4238
    %v4806 = vunpack.c.l.b16 %v4239
    %v4807 = vunpack.c.h.b16 %v4239
    %v4808 = vunpack.c.l.b16 %v4240
    %v4809 = vunpack.c.h.b16 %v4240
    %v4810 = vunpack.c.l.b16 %v4241
    %v4811 = vunpack.c.h.b16 %v4241
    %v4812 = vunpack.c.l.b16 %v4242
    %v4813 = vunpack.c.h.b16 %v4242
    %v4814 = vunpack.c.l.b16 %v4243
    %v4815 = vunpack.c.h.b16 %v4243
    %v4816 = vunpack.c.l.b16 %v4244
    %v4817 = vunpack.c.h.b16 %v4244
    %v4818 = vunpack.c.l.b16 %v4245
    %v4819 = vunpack.c.h.b16 %v4245
    %v4820 = vunpack.c.l.b16 %v4246
    %v4821 = vunpack.c.h.b16 %v4246
    %v4822 = vunpack.c.l.b16 %v4247
    %v4823 = vunpack.c.h.b16 %v4247
    %v4824 = vunpack.c.l.b16 %v4248
    %v4825 = vunpack.c.h.b16 %v4248
    %v4826 = vunpack.c.l.b16 %v4249
    %v4827 = vunpack.c.h.b16 %v4249
    %v4828 = vunpack.c.l.b16 %v4250
    %v4829 = vunpack.c.h.b16 %v4250
    %v4830 = vunpack.c.l.b16 %v4251
    %v4831 = vunpack.c.h.b16 %v4251
    %v4832 = vunpack.c.l.b16 %v4252
    %v4833 = vunpack.c.h.b16 %v4252
    %v4834 = vunpack.c.l.b16 %v4253
    %v4835 = vunpack.c.h.b16 %v4253
    %v4836 = vunpack.c.l.b16 %v4254
    %v4837 = vunpack.c.h.b16 %v4254
    %v4838 = vunpack.c.l.b16 %v4255
    %v4839 = vunpack.c.h.b16 %v4255
    %v4840 = vunpack.c.l.b16 %v4256
    %v4841 = vunpack.c.h.b16 %v4256
    %v4842 = vunpack.c.l.b16 %v4257
    %v4843 = vunpack.c.h.b16 %v4257
    %v4844 = vunpack.c.l.b16 %v4258
    %v4845 = vunpack.c.h.b16 %v4258
    %v4846 = vunpack.c.l.b16 %v4259
    %v4847 = vunpack.c.h.b16 %v4259
    %v4848 = vunpack.c.l.b16 %v4260
    %v4849 = vunpack.c.h.b16 %v4260
    %v4850 = vunpack.c.l.b16 %v4261
    %v4851 = vunpack.c.h.b16 %v4261
    %v4852 = vunpack.c.l.b16 %v4262
    %v4853 = vunpack.c.h.b16 %v4262
    %v4854 = vunpack.c.l.b16 %v4263
    %v4855 = vunpack.c.h.b16 %v4263
    %v4856 = vunpack.c.l.b16 %v4264
    %v4857 = vunpack.c.h.b16 %v4264
    %v4858 = vunpack.c.l.b16 %v4265
    %v4859 = vunpack.c.h.b16 %v4265
    %v4860 = vunpack.c.l.b16 %v4266
    %v4861 = vunpack.c.h.b16 %v4266
    %v4862 = vunpack.c.l.b16 %v4267
    %v4863 = vunpack.c.h.b16 %v4267
    %v4864 = vunpack.c.l.b16 %v4268
    %v4865 = vunpack.c.h.b16 %v4268
    %v4866 = vunpack.c.l.b16 %v4269
    %v4867 = vunpack.c.h.b16 %v4269
    %v4868 = vunpack.c.l.b16 %v4270
    %v4869 = vunpack.c.h.b16 %v4270
    %v4870 = vunpack.c.l.b16 %v4271
    %v4871 = vunpack.c.h.b16 %v4271
    %v4872 = vunpack.c.l.b16 %v4272
    %v4873 = vunpack.c.h.b16 %v4272
    %v4874 = vunpack.c.l.b16 %v4273
    %v4875 = vunpack.c.h.b16 %v4273
    %v4876 = vunpack.c.l.b16 %v4274
    %v4877 = vunpack.c.h.b16 %v4274
    %v4878 = vunpack.c.l.b16 %v4275
    %v4879 = vunpack.c.h.b16 %v4275
    %v4880 = vunpack.c.l.b16 %v4276
    %v4881 = vunpack.c.h.b16 %v4276
    %v4882 = vunpack.c.l.b16 %v4277
    %v4883 = vunpack.c.h.b16 %v4277
    %v4884 = vunpack.c.l.b16 %v4278
    %v4885 = vunpack.c.h.b16 %v4278
    %v4886 = vunpack.c.l.b16 %v4279
    %v4887 = vunpack.c.h.b16 %v4279
    %v4888 = vunpack.c.l.b16 %v4280
    %v4889 = vunpack.c.h.b16 %v4280
    %v4890 = vunpack.c.l.b16 %v4281
    %v4891 = vunpack.c.h.b16 %v4281
    %v4892 = vunpack.c.l.b16 %v4282
    %v4893 = vunpack.c.h.b16 %v4282
    %v4894 = vunpack.c.l.b16 %v4283
    %v4895 = vunpack.c.h.b16 %v4283
    %v4896 = vunpack.c.l.b16 %v4284
    %v4897 = vunpack.c.h.b16 %v4284
    %v4898 = vunpack.c.l.b16 %v4285
    %v4899 = vunpack.c.h.b16 %v4285
    %v4900 = vunpack.c.l.b16 %v4286
    %v4901 = vunpack.c.h.b16 %v4286
    %v4902 = vunpack.c.l.b16 %v4287
    %v4903 = vunpack.c.h.b16 %v4287
    %v4904 = vunpack.c.l.b16 %v4288
    %v4905 = vunpack.c.h.b16 %v4288
    %v4906 = vunpack.c.l.b16 %v4289
    %v4907 = vunpack.c.h.b16 %v4289
    %v4908 = vunpack.c.l.b16 %v4290
    %v4909 = vunpack.c.h.b16 %v4290
    %v4910 = vunpack.c.l.b16 %v4291
    %v4911 = vunpack.c.h.b16 %v4291
    %v4912 = vunpack.c.l.b16 %v4292
    %v4913 = vunpack.c.h.b16 %v4292
    %v4914 = vunpack.c.l.b16 %v4293
    %v4915 = vunpack.c.h.b16 %v4293
    %v4916 = vunpack.c.l.b16 %v4294
    %v4917 = vunpack.c.h.b16 %v4294
    %v4918 = vunpack.c.l.b16 %v4295
    %v4919 = vunpack.c.h.b16 %v4295
    %v4920 = vunpack.c.l.b16 %v4296
    %v4921 = vunpack.c.h.b16 %v4296
    %v4922 = vunpack.c.l.b16 %v4297
    %v4923 = vunpack.c.h.b16 %v4297
    %v4924 = vunpack.c.l.b16 %v4298
    %v4925 = vunpack.c.h.b16 %v4298
    %v4926 = vunpack.c.l.b16 %v4299
    %v4927 = vunpack.c.h.b16 %v4299
    %v4928 = vunpack.c.l.b16 %v4300
    %v4929 = vunpack.c.h.b16 %v4300
    %v4930 = vunpack.c.l.b16 %v4301
    %v4931 = vunpack.c.h.b16 %v4301
    %v4932 = vunpack.c.l.b16 %v4302
    %v4933 = vunpack.c.h.b16 %v4302
    %v4934 = vunpack.c.l.b16 %v4303
    %v4935 = vunpack.c.h.b16 %v4303
    %v4936 = vunpack.c.l.b16 %v4304
    %v4937 = vunpack.c.h.b16 %v4304
    %v4938 = vunpack.c.l.b16 %v4305
    %v4939 = vunpack.c.h.b16 %v4305
    %v4940 = vunpack.c.l.b16 %v4306
    %v4941 = vunpack.c.h.b16 %v4306
    %v4942 = vunpack.c.l.b16 %v4307
    %v4943 = vunpack.c.h.b16 %v4307
    %v4944 = vunpack.c.l.b16 %v4308
    %v4945 = vunpack.c.h.b16 %v4308
    %v4946 = vunpack.c.l.b16 %v4309
    %v4947 = vunpack.c.h.b16 %v4309
    %v4948 = vunpack.c.l.b16 %v4310
    %v4949 = vunpack.c.h.b16 %v4310
    %v4950 = vunpack.c.l.b16 %v4311
    %v4951 = vunpack.c.h.b16 %v4311
    %v4952 = vunpack.c.l.b16 %v4312
    %v4953 = vunpack.c.h.b16 %v4312
    %v4954 = vunpack.c.l.b16 %v4313
    %v4955 = vunpack.c.h.b16 %v4313
    %v4956 = vunpack.c.l.b16 %v4314
    %v4957 = vunpack.c.h.b16 %v4314
    %v4958 = vunpack.c.l.b16 %v4315
    %v4959 = vunpack.c.h.b16 %v4315
    %v4960 = vunpack.c.l.b16 %v4316
    %v4961 = vunpack.c.h.b16 %v4316
    %v4962 = vunpack.c.l.b16 %v4317
    %v4963 = vunpack.c.h.b16 %v4317
    %v4964 = vunpack.c.l.b16 %v4318
    %v4965 = vunpack.c.h.b16 %v4318
    %v4966 = vunpack.c.l.b16 %v4319
    %v4967 = vunpack.c.h.b16 %v4319
    %v4968 = vunpack.c.l.b16 %v4320
    %v4969 = vunpack.c.h.b16 %v4320
    %v4970 = vunpack.c.l.b16 %v4321
    %v4971 = vunpack.c.h.b16 %v4321
    %v4972 = vunpack.c.l.b16 %v4322
    %v4973 = vunpack.c.h.b16 %v4322
    %v4974 = vunpack.c.l.b16 %v4323
    %v4975 = vunpack.c.h.b16 %v4323
    %v4976 = vunpack.c.l.b16 %v4324
    %v4977 = vunpack.c.h.b16 %v4324
    %v4978 = vunpack.c.l.b16 %v4325
    %v4979 = vunpack.c.h.b16 %v4325
    %v4980 = vunpack.c.l.b16 %v4326
    %v4981 = vunpack.c.h.b16 %v4326
    %v4982 = vunpack.c.l.b16 %v4327
    %v4983 = vunpack.c.h.b16 %v4327
    %v4984 = vunpack.c.l.b16 %v4328
    %v4985 = vunpack.c.h.b16 %v4328
    %v4986 = vunpack.c.l.b16 %v4329
    %v4987 = vunpack.c.h.b16 %v4329
    %v4988 = vunpack.c.l.b16 %v4330
    %v4989 = vunpack.c.h.b16 %v4330
    %v4990 = vunpack.c.l.b16 %v4331
    %v4991 = vunpack.c.h.b16 %v4331
    %v4992 = vunpack.c.l.b16 %v4332
    %v4993 = vunpack.c.h.b16 %v4332
    %v4994 = vunpack.c.l.b16 %v4333
    %v4995 = vunpack.c.h.b16 %v4333
    %v4996 = vunpack.c.l.b16 %v4334
    %v4997 = vunpack.c.h.b16 %v4334
    %v4998 = vunpack.c.l.b16 %v4335
    %v4999 = vunpack.c.h.b16 %v4335
    %v5000 = vunpack.c.l.b16 %v4336
    %v5001 = vunpack.c.h.b16 %v4336
    %v5002 = vunpack.c.l.b16 %v4337
    %v5003 = vunpack.c.h.b16 %v4337
    %v5004 = vunpack.c.l.b16 %v4338
    %v5005 = vunpack.c.h.b16 %v4338
    %v5006 = vunpack.c.l.b16 %v4339
    %v5007 = vunpack.c.h.b16 %v4339
    %v5008 = vunpack.c.l.b16 %v4340
    %v5009 = vunpack.c.h.b16 %v4340
    %v5010 = vunpack.c.l.b16 %v4341
    %v5011 = vunpack.c.h.b16 %v4341
    %v5012 = vunpack.c.l.b16 %v4342
    %v5013 = vunpack.c.h.b16 %v4342
    %v5014 = vunpack.c.l.b16 %v4343
    %v5015 = vunpack.c.h.b16 %v4343
    %v5016 = vunpack.c.l.b16 %v4344
    %v5017 = vunpack.c.h.b16 %v4344
    %v5018 = vunpack.c.l.b16 %v4345
    %v5019 = vunpack.c.h.b16 %v4345
    %v5020 = vunpack.c.l.b16 %v4346
    %v5021 = vunpack.c.h.b16 %v4346
    %v5022 = vunpack.c.l.b16 %v4347
    %v5023 = vunpack.c.h.b16 %v4347
    %v5024 = vunpack.c.l.b16 %v4348
    %v5025 = vunpack.c.h.b16 %v4348
    %v5026 = vunpack.c.l.b16 %v4349
    %v5027 = vunpack.c.h.b16 %v4349
    %v5028 = vunpack.c.l.b16 %v4350
    %v5029 = vunpack.c.h.b16 %v4350
    %v5030 = vunpack.c.l.b16 %v4351
    %v5031 = vunpack.c.h.b16 %v4351
    %v5032 = vunpack.c.l.b16 %v4352
    %v5033 = vunpack.c.h.b16 %v4352
    %v5034 = vunpack.c.l.b16 %v4353
    %v5035 = vunpack.c.h.b16 %v4353
    %v5036 = vunpack.c.l.b16 %v4354
    %v5037 = vunpack.c.h.b16 %v4354
    %v5038 = vunpack.c.l.b16 %v4355
    %v5039 = vunpack.c.h.b16 %v4355
    %v5040 = vunpack.c.l.b16 %v4356
    %v5041 = vunpack.c.h.b16 %v4356
    %v5042 = vunpack.c.l.b16 %v4357
    %v5043 = vunpack.c.h.b16 %v4357
    %v5044 = vunpack.c.l.b16 %v4358
    %v5045 = vunpack.c.h.b16 %v4358
    %v5046 = vunpack.c.l.b16 %v4359
    %v5047 = vunpack.c.h.b16 %v4359
    %v5048 = vunpack.c.l.b16 %v4360
    %v5049 = vunpack.c.h.b16 %v4360
    %v5050 = vunpack.c.l.b16 %v4361
    %v5051 = vunpack.c.h.b16 %v4361
    %v5052 = vunpack.c.l.b16 %v4362
    %v5053 = vunpack.c.h.b16 %v4362
    %v5054 = vunpack.c.l.b16 %v4363
    %v5055 = vunpack.c.h.b16 %v4363
    %v5056 = vunpack.c.l.b16 %v4364
    %v5057 = vunpack.c.h.b16 %v4364
    %v5058 = vunpack.c.l.b16 %v4365
    %v5059 = vunpack.c.h.b16 %v4365
    %v5060 = vunpack.c.l.b16 %v4366
    %v5061 = vunpack.c.h.b16 %v4366
    %v5062 = vunpack.c.l.b16 %v4367
    %v5063 = vunpack.c.h.b16 %v4367
    %v5064 = vunpack.c.l.b16 %v4368
    %v5065 = vunpack.c.h.b16 %v4368
    %v5066 = vunpack.c.l.b16 %v4369
    %v5067 = vunpack.c.h.b16 %v4369
    %v5068 = vunpack.c.l.b16 %v4370
    %v5069 = vunpack.c.h.b16 %v4370
    %v5070 = vunpack.c.l.b16 %v4371
    %v5071 = vunpack.c.h.b16 %v4371
    %v5072 = vunpack.c.l.b16 %v4372
    %v5073 = vunpack.c.h.b16 %v4372
    %v5074 = vunpack.c.l.b16 %v4373
    %v5075 = vunpack.c.h.b16 %v4373
    %v5076 = vunpack.c.l.b16 %v4374
    %v5077 = vunpack.c.h.b16 %v4374
    %v5078 = vunpack.c.l.b16 %v4375
    %v5079 = vunpack.c.h.b16 %v4375
    %v5080 = vunpack.c.l.b16 %v4376
    %v5081 = vunpack.c.h.b16 %v4376
    %v5082 = vunpack.c.l.b16 %v4377
    %v5083 = vunpack.c.h.b16 %v4377
    %v5084 = vunpack.c.l.b16 %v4378
    %v5085 = vunpack.c.h.b16 %v4378
    %v5086 = vunpack.c.l.b16 %v4379
    %v5087 = vunpack.c.h.b16 %v4379
    %v5088 = vunpack.c.l.b16 %v4380
    %v5089 = vunpack.c.h.b16 %v4380
    %v5090 = vunpack.c.l.b16 %v4381
    %v5091 = vunpack.c.h.b16 %v4381
    %v5092 = vunpack.c.l.b16 %v4382
    %v5093 = vunpack.c.h.b16 %v4382
    %v5094 = vunpack.c.l.b16 %v4383
    %v5095 = vunpack.c.h.b16 %v4383
    %v5096 = vunpack.c.l.b16 %v4384
    %v5097 = vunpack.c.h.b16 %v4384
    %v5098 = vunpack.c.l.b16 %v4385
    %v5099 = vunpack.c.h.b16 %v4385
    %v5100 = vunpack.c.l.b16 %v4386
    %v5101 = vunpack.c.h.b16 %v4386
    %v5102 = vunpack.c.l.b16 %v4387
    %v5103 = vunpack.c.h.b16 %v4387
    %v5104 = vunpack.c.l.b16 %v4388
    %v5105 = vunpack.c.h.b16 %v4388
    %v5106 = vunpack.c.l.b16 %v4389
    %v5107 = vunpack.c.h.b16 %v4389
    %v5108 = vunpack.c.l.b16 %v4390
    %v5109 = vunpack.c.h.b16 %v4390
    %v5110 = vunpack.c.l.b16 %v4391
    %v5111 = vunpack.c.h.b16 %v4391
    %v5112 = vunpack.c.l.b16 %v4392
    %v5113 = vunpack.c.h.b16 %v4392
    %v5114 = vunpack.c.l.b16 %v4393
    %v5115 = vunpack.c.h.b16 %v4393
    %v5116 = vunpack.c.l.b16 %v4394
    %v5117 = vunpack.c.h.b16 %v4394
    %v5118 = vunpack.c.l.b16 %v4395
    %v5119 = vunpack.c.h.b16 %v4395
    %v5120 = vunpack.c.l.b16 %v4396
    %v5121 = vunpack.c.h.b16 %v4396
    %v5122 = vunpack.c.l.b16 %v4397
    %v5123 = vunpack.c.h.b16 %v4397
    %v5124 = vunpack.c.l.b16 %v4398
    %v5125 = vunpack.c.h.b16 %v4398
    %v5126 = vunpack.c.l.b16 %v4399
    %v5127 = vunpack.c.h.b16 %v4399
    %v5128 = vunpack.c.l.b16 %v4400
    %v5129 = vunpack.c.h.b16 %v4400
    %v5130 = vunpack.c.l.b16 %v4401
    %v5131 = vunpack.c.h.b16 %v4401
    %v5132 = vunpack.c.l.b16 %v4402
    %v5133 = vunpack.c.h.b16 %v4402
    %v5134 = vunpack.c.l.b16 %v4403
    %v5135 = vunpack.c.h.b16 %v4403
    %v5136 = vunpack.c.l.b16 %v4404
    %v5137 = vunpack.c.h.b16 %v4404
    %v5138 = vunpack.c.l.b16 %v4405
    %v5139 = vunpack.c.h.b16 %v4405
    %v5140 = vunpack.c.l.b16 %v4406
    %v5141 = vunpack.c.h.b16 %v4406
    %v5142 = vunpack.c.l.b16 %v4407
    %v5143 = vunpack.c.h.b16 %v4407
    %v5144 = vunpack.c.l.b16 %v4408
    %v5145 = vunpack.c.h.b16 %v4408
    %v5146 = vunpack.c.l.b16 %v4409
    %v5147 = vunpack.c.h.b16 %v4409
    %v5148 = vunpack.c.l.b16 %v4410
    %v5149 = vunpack.c.h.b16 %v4410
    %v5150 = vunpack.c.l.b16 %v4411
    %v5151 = vunpack.c.h.b16 %v4411
    %v5152 = vunpack.c.l.b16 %v4412
    %v5153 = vunpack.c.h.b16 %v4412
    %v5154 = vunpack.c.l.b16 %v4413
    %v5155 = vunpack.c.h.b16 %v4413
    %v5156 = vunpack.c.l.b16 %v4414
    %v5157 = vunpack.c.h.b16 %v4414
    %v5158 = vunpack.c.l.b16 %v4415
    %v5159 = vunpack.c.h.b16 %v4415
    %v5160 = vunpack.c.l.b16 %v4416
    %v5161 = vunpack.c.h.b16 %v4416
    %v5162 = vunpack.c.l.b16 %v4417
    %v5163 = vunpack.c.h.b16 %v4417
    %v5164 = vunpack.c.l.b16 %v4418
    %v5165 = vunpack.c.h.b16 %v4418
    %v5166 = vunpack.c.l.b16 %v4419
    %v5167 = vunpack.c.h.b16 %v4419
    %v5168 = vunpack.c.l.b16 %v4420
    %v5169 = vunpack.c.h.b16 %v4420
    %v5170 = vunpack.c.l.b16 %v4421
    %v5171 = vunpack.c.h.b16 %v4421
    %v5172 = vunpack.c.l.b16 %v4422
    %v5173 = vunpack.c.h.b16 %v4422
    %v5174 = vunpack.c.l.b16 %v4423
    %v5175 = vunpack.c.h.b16 %v4423
    %v5176 = vunpack.c.l.b16 %v4424
    %v5177 = vunpack.c.h.b16 %v4424
    %v5178 = vunpack.c.l.b16 %v4425
    %v5179 = vunpack.c.h.b16 %v4425
    %v5180 = vunpack.c.l.b16 %v4426
    %v5181 = vunpack.c.h.b16 %v4426
    %v5182 = vunpack.c.l.b16 %v4427
    %v5183 = vunpack.c.h.b16 %v4427
    %v5184 = vunpack.c.l.b16 %v4428
    %v5185 = vunpack.c.h.b16 %v4428
    %v5186 = vunpack.c.l.b16 %v4429
    %v5187 = vunpack.c.h.b16 %v4429
    %v5188 = vunpack.c.l.b16 %v4430
    %v5189 = vunpack.c.h.b16 %v4430
    %v5190 = vunpack.c.l.b16 %v4431
    %v5191 = vunpack.c.h.b16 %v4431
    %v5192 = vunpack.c.l.b16 %v4432
    %v5193 = vunpack.c.h.b16 %v4432
    %v5194 = vunpack.c.l.b16 %v4433
    %v5195 = vunpack.c.h.b16 %v4433
    %v5196 = vunpack.c.l.b16 %v4434
    %v5197 = vunpack.c.h.b16 %v4434
    %v5198 = vunpack.c.l.b16 %v4435
    %v5199 = vunpack.c.h.b16 %v4435
    %v5200 = vunpack.c.l.b16 %v4436
    %v5201 = vunpack.c.h.b16 %v4436
    %v5202 = vunpack.c.l.b16 %v4437
    %v5203 = vunpack.c.h.b16 %v4437
    %v5204 = vunpack.c.l.b16 %v4438
    %v5205 = vunpack.c.h.b16 %v4438
    %v5206 = vunpack.c.l.b16 %v4439
    %v5207 = vunpack.c.h.b16 %v4439
    %v5208 = vunpack.c.l.b16 %v4440
    %v5209 = vunpack.c.h.b16 %v4440
    %v5210 = vunpack.c.l.b16 %v4441
    %v5211 = vunpack.c.h.b16 %v4441
    %v5212 = vunpack.c.l.b16 %v4442
    %v5213 = vunpack.c.h.b16 %v4442
    %v5214 = vunpack.c.l.b16 %v4443
    %v5215 = vunpack.c.h.b16 %v4443
    %v5216 = vunpack.c.l.b16 %v4444
    %v5217 = vunpack.c.h.b16 %v4444
    %v5218 = vunpack.c.l.b16 %v4445
    %v5219 = vunpack.c.h.b16 %v4445
    %v5220 = vunpack.c.l.b16 %v4446
    %v5221 = vunpack.c.h.b16 %v4446
    %v5222 = vunpack.c.l.b16 %v4447
    %v5223 = vunpack.c.h.b16 %v4447
    %v5224 = vpack.c.b16 %v4720, %v4712
    %v5225 = vpack.c.b16 %v4721, %v4713
    %v5226 = vpack.c.b16 %v4722, %v4714
    %v5227 = vpack.c.b16 %v4723, %v4715
    %v5228 = vpack.c.b16 %v4724, %v4716
    %v5229 = vpack.c.b16 %v4725, %v4717
    %v5230 = vpack.c.b16 %v4726, %v4718
    %v5231 = vpack.c.b16 %v4727, %v4719
    %v5232 = vpack.c.b16 %v4736, %v4728
    %v5233 = vpack.c.b16 %v4737, %v4729
    %v5234 = vpack.c.b16 %v4738, %v4730
    %v5235 = vpack.c.b16 %v4739, %v4731
    %v5236 = vpack.c.b16 %v4740, %v4732
    %v5237 = vpack.c.b16 %v4741, %v4733
    %v5238 = vpack.c.b16 %v4742, %v4734
    %v5239 = vpack.c.b16 %v4743, %v4735
    %v5240 = vpack.c.b16 %v4752, %v4744
    %v5241 = vpack.c.b16 %v4753, %v4745
    %v5242 = vpack.c.b16 %v4754, %v4746
    %v5243 = vpack.c.b16 %v4755, %v4747
    %v5244 = vpack.c.b16 %v4756, %v4748
    %v5245 = vpack.c.b16 %v4757, %v4749
    %v5246 = vpack.c.b16 %v4758, %v4750
    %v5247 = vpack.c.b16 %v4759, %v4751
    %v5248 = vpack.c.b16 %v4768, %v4760
    %v5249 = vpack.c.b16 %v4769, %v4761
    %v5250 = vpack.c.b16 %v4770, %v4762
    %v5251 = vpack.c.b16 %v4771, %v4763
    %v5252 = vpack.c.b16 %v4772, %v4764
    %v5253 = vpack.c.b16 %v4773, %v4765
    %v5254 = vpack.c.b16 %v4774, %v4766
    %v5255 = vpack.c.b16 %v4775, %v4767
    %v5256 = vpack.c.b16 %v4784, %v4776
    %v5257 = vpack.c.b16 %v4785, %v4777
    %v5258 = vpack.c.b16 %v4786, %v4778
    %v5259 = vpack.c.b16 %v4787, %v4779
    %v5260 = vpack.c.b16 %v4788, %v4780
    %v5261 = vpack.c.b16 %v4789, %v4781
    %v5262 = vpack.c.b16 %v4790, %v4782
    %v5263 = vpack.c.b16 %v4791, %v4783
    %v5264 = vpack.c.b16 %v4800, %v4792
    %v5265 = vpack.c.b16 %v4801, %v4793
    %v5266 = vpack.c.b16 %v4802, %v4794
    %v5267 = vpack.c.b16 %v4803, %v4795
    %v5268 = vpack.c.b16 %v4804, %v4796
    %v5269 = vpack.c.b16 %v4805, %v4797
    %v5270 = vpack.c.b16 %v4806, %v4798
    %v5271 = vpack.c.b16 %v4807, %v4799
    %v5272 = vpack.c.b16 %v4816, %v4808
    %v5273 = vpack.c.b16 %v4817, %v4809
    %v5274 = vpack.c.b16 %v4818, %v4810
    %v5275 = vpack.c.b16 %v4819, %v4811
    %v5276 = vpack.c.b16 %v4820, %v4812
    %v5277 = vpack.c.b16 %v4821, %v4813
    %v5278 = vpack.c.b16 %v4822, %v4814
    %v5279 = vpack.c.b16 %v4823, %v4815
    %v5280 = vpack.c.b16 %v4832, %v4824
    %v5281 = vpack.c.b16 %v4833, %v4825
    %v5282 = vpack.c.b16 %v4834, %v4826
    %v5283 = vpack.c.b16 %v4835, %v4827
    %v5284 = vpack.c.b16 %v4836, %v4828
    %v5285 = vpack.c.b16 %v4837, %v4829
    %v5286 = vpack.c.b16 %v4838, %v4830
    %v5287 = vpack.c.b16 %v4839, %v4831
    %v5288 = vpack.c.b16 %v4848, %v4840
    %v5289 = vpack.c.b16 %v4849, %v4841
    %v5290 = vpack.c.b16 %v4850, %v4842
    %v5291 = vpack.c.b16 %v4851, %v4843
    %v5292 = vpack.c.b16 %v4852, %v4844
    %v5293 = vpack.c.b16 %v4853, %v4845
    %v5294 = vpack.c.b16 %v4854, %v4846
    %v5295 = vpack.c.b16 %v4855, %v4847
    %v5296 = vpack.c.b16 %v4864, %v4856
    %v5297 = vpack.c.b16 %v4865, %v4857
    %v5298 = vpack.c.b16 %v4866, %v4858
    %v5299 = vpack.c.b16 %v4867, %v4859
    %v5300 = vpack.c.b16 %v4868, %v4860
    %v5301 = vpack.c.b16 %v4869, %v4861
    %v5302 = vpack.c.b16 %v4870, %v4862
    %v5303 = vpack.c.b16 %v4871, %v4863
    %v5304 = vpack.c.b16 %v4880, %v4872
    %v5305 = vpack.c.b16 %v4881, %v4873
    %v5306 = vpack.c.b16 %v4882, %v4874
    %v5307 = vpack.c.b16 %v4883, %v4875
    %v5308 = vpack.c.b16 %v4884, %v4876
    %v5309 = vpack.c.b16 %v4885, %v4877
    %v5310 = vpack.c.b16 %v4886, %v4878
    %v5311 = vpack.c.b16 %v4887, %v4879
    %v5312 = vpack.c.b16 %v4896, %v4888
    %v5313 = vpack.c.b16 %v4897, %v4889
    %v5314 = vpack.c.b16 %v4898, %v4890
    %v5315 = vpack.c.b16 %v4899, %v4891
    %v5316 = vpack.c.b16 %v4900, %v4892
    %v5317 = vpack.c.b16 %v4901, %v4893
    %v5318 = vpack.c.b16 %v4902, %v4894
    %v5319 = vpack.c.b16 %v4903, %v4895
    %v5320 = vpack.c.b16 %v4912, %v4904
    %v5321 = vpack.c.b16 %v4913, %v4905
    %v5322 = vpack.c.b16 %v4914, %v4906
    %v5323 = vpack.c.b16 %v4915, %v4907
    %v5324 = vpack.c.b16 %v4916, %v4908
    %v5325 = vpack.c.b16 %v4917, %v4909
    %v5326 = vpack.c.b16 %v4918, %v4910
    %v5327 = vpack.c.b16 %v4919, %v4911
    %v5328 = vpack.c.b16 %v4928, %v4920
    %v5329 = vpack.c.b16 %v4929, %v4921
    %v5330 = vpack.c.b16 %v4930, %v4922
    %v5331 = vpack.c.b16 %v4931, %v4923
    %v5332 = vpack.c.b16 %v4932, %v4924
    %v5333 = vpack.c.b16 %v4933, %v4925
    %v5334 = vpack.c.b16 %v4934, %v4926
    %v5335 = vpack.c.b16 %v4935, %v4927
    %v5336 = vpack.c.b16 %v4944, %v4936
    %v5337 = vpack.c.b16 %v4945, %v4937
    %v5338 = vpack.c.b16 %v4946, %v4938
    %v5339 = vpack.c.b16 %v4947, %v4939
    %v5340 = vpack.c.b16 %v4948, %v4940
    %v5341 = vpack.c.b16 %v4949, %v4941
    %v5342 = vpack.c.b16 %v4950, %v4942
    %v5343 = vpack.c.b16 %v4951, %v4943
    %v5344 = vpack.c.b16 %v4960, %v4952
    %v5345 = vpack.c.b16 %v4961, %v4953
    %v5346 = vpack.c.b16 %v4962, %v4954
    %v5347 = vpack.c.b16 %v4963, %v4955
    %v5348 = vpack.c.b16 %v4964, %v4956
    %v5349 = vpack.c.b16 %v4965, %v4957
    %v5350 = vpack.c.b16 %v4966, %v4958
    %v5351 = vpack.c.b16 %v4967, %v4959
    %v5352 = vpack.c.b16 %v4976, %v4968
    %v5353 = vpack.c.b16 %v4977, %v4969
    %v5354 = vpack.c.b16 %v4978, %v4970
    %v5355 = vpack.c.b16 %v4979, %v4971
    %v5356 = vpack.c.b16 %v4980, %v4972
    %v5357 = vpack.c.b16 %v4981, %v4973
    %v5358 = vpack.c.b16 %v4982, %v4974
    %v5359 = vpack.c.b16 %v4983, %v4975
    %v5360 = vpack.c.b16 %v4992, %v4984
    %v5361 = vpack.c.b16 %v4993, %v4985
    %v5362 = vpack.c.b16 %v4994, %v4986
    %v5363 = vpack.c.b16 %v4995, %v4987
    %v5364 = vpack.c.b16 %v4996, %v4988
    %v5365 = vpack.c.b16 %v4997, %v4989
    %v5366 = vpack.c.b16 %v4998, %v4990
    %v5367 = vpack.c.b16 %v4999, %v4991
    %v5368 = vpack.c.b16 %v5008, %v5000
    %v5369 = vpack.c.b16 %v5009, %v5001
    %v5370 = vpack.c.b16 %v5010, %v5002
    %v5371 = vpack.c.b16 %v5011, %v5003
    %v5372 = vpack.c.b16 %v5012, %v5004
    %v5373 = vpack.c.b16 %v5013, %v5005
    %v5374 = vpack.c.b16 %v5014, %v5006
    %v5375 = vpack.c.b16 %v5015, %v5007
    %v5376 = vpack.c.b16 %v5024, %v5016
    %v5377 = vpack.c.b16 %v5025, %v5017
    %v5378 = vpack.c.b16 %v5026, %v5018
    %v5379 = vpack.c.b16 %v5027, %v5019
    %v5380 = vpack.c.b16 %v5028, %v5020
    %v5381 = vpack.c.b16 %v5029, %v5021
    %v5382 = vpack.c.b16 %v5030, %v5022
    %v5383 = vpack.c.b16 %v5031, %v5023
    %v5384 = vpack.c.b16 %v5040, %v5032
    %v5385 = vpack.c.b16 %v5041, %v5033
    %v5386 = vpack.c.b16 %v5042, %v5034
    %v5387 = vpack.c.b16 %v5043, %v5035
    %v5388 = vpack.c.b16 %v5044, %v5036
    %v5389 = vpack.c.b16 %v5045, %v5037
    %v5390 = vpack.c.b16 %v5046, %v5038
    %v5391 = vpack.c.b16 %v5047, %v5039
    %v5392 = vpack.c.b16 %v5056, %v5048
    %v5393 = vpack.c.b16 %v5057, %v5049
    %v5394 = vpack.c.b16 %v5058, %v5050
    %v5395 = vpack.c.b16 %v5059, %v5051
    %v5396 = vpack.c.b16 %v5060, %v5052
    %v5397 = vpack.c.b16 %v5061, %v5053
    %v5398 = vpack.c.b16 %v5062, %v5054
    %v5399 = vpack.c.b16 %v5063, %v5055
    %v5400 = vpack.c.b16 %v5072, %v5064
    %v5401 = vpack.c.b16 %v5073, %v5065
    %v5402 = vpack.c.b16 %v5074, %v5066
    %v5403 = vpack.c.b16 %v5075, %v5067
    %v5404 = vpack.c.b16 %v5076, %v5068
    %v5405 = vpack.c.b16 %v5077, %v5069
    %v5406 = vpack.c.b16 %v5078, %v5070
    %v5407 = vpack.c.b16 %v5079, %v5071
    %v5408 = vpack.c.b16 %v5088, %v5080
    %v5409 = vpack.c.b16 %v5089, %v5081
    %v5410 = vpack.c.b16 %v5090, %v5082
    %v5411 = vpack.c.b16 %v5091, %v5083
    %v5412 = vpack.c.b16 %v5092, %v5084
    %v5413 = vpack.c.b16 %v5093, %v5085
    %v5414 = vpack.c.b16 %v5094, %v5086
    %v5415 = vpack.c.b16 %v5095, %v5087
    %v5416 = vpack.c.b16 %v5104, %v5096
    %v5417 = vpack.c.b16 %v5105, %v5097
    %v5418 = vpack.c.b16 %v5106, %v5098
    %v5419 = vpack.c.b16 %v5107, %v5099
    %v5420 = vpack.c.b16 %v5108, %v5100
    %v5421 = vpack.c.b16 %v5109, %v5101
    %v5422 = vpack.c.b16 %v5110, %v5102
    %v5423 = vpack.c.b16 %v5111, %v5103
    %v5424 = vpack.c.b16 %v5120, %v5112
    %v5425 = vpack.c.b16 %v5121, %v5113
    %v5426 = vpack.c.b16 %v5122, %v5114
    %v5427 = vpack.c.b16 %v5123, %v5115
    %v5428 = vpack.c.b16 %v5124, %v5116
    %v5429 = vpack.c.b16 %v5125, %v5117
    %v5430 = vpack.c.b16 %v5126, %v5118
    %v5431 = vpack.c.b16 %v5127, %v5119
    %v5432 = vpack.c.b16 %v5136, %v5128
    %v5433 = vpack.c.b16 %v5137, %v5129
    %v5434 = vpack.c.b16 %v5138, %v5130
    %v5435 = vpack.c.b16 %v5139, %v5131
    %v5436 = vpack.c.b16 %v5140, %v5132
    %v5437 = vpack.c.b16 %v5141, %v5133
    %v5438 = vpack.c.b16 %v5142, %v5134
    %v5439 = vpack.c.b16 %v5143, %v5135
    %v5440 = vpack.c.b16 %v5152, %v5144
    %v5441 = vpack.c.b16 %v5153, %v5145
    %v5442 = vpack.c.b16 %v5154, %v5146
    %v5443 = vpack.c.b16 %v5155, %v5147
    %v5444 = vpack.c.b16 %v5156, %v5148
    %v5445 = vpack.c.b16 %v5157, %v5149
    %v5446 = vpack.c.b16 %v5158, %v5150
    %v5447 = vpack.c.b16 %v5159, %v5151
    %v5448 = vpack.c.b16 %v5168, %v5160
    %v5449 = vpack.c.b16 %v5169, %v5161
    %v5450 = vpack.c.b16 %v5170, %v5162
    %v5451 = vpack.c.b16 %v5171, %v5163
    %v5452 = vpack.c.b16 %v5172, %v5164
    %v5453 = vpack.c.b16 %v5173, %v5165
    %v5454 = vpack.c.b16 %v5174, %v5166
    %v5455 = vpack.c.b16 %v5175, %v5167
    %v5456 = vpack.c.b16 %v5184, %v5176
    %v5457 = vpack.c.b16 %v5185, %v5177
    %v5458 = vpack.c.b16 %v5186, %v5178
    %v5459 = vpack.c.b16 %v5187, %v5179
    %v5460 = vpack.c.b16 %v5188, %v5180
    %v5461 = vpack.c.b16 %v5189, %v5181
    %v5462 = vpack.c.b16 %v5190, %v5182
    %v5463 = vpack.c.b16 %v5191, %v5183
    %v5464 = vpack.c.b16 %v5200, %v5192
    %v5465 = vpack.c.b16 %v5201, %v5193
    %v5466 = vpack.c.b16 %v5202, %v5194
    %v5467 = vpack.c.b16 %v5203, %v5195
    %v5468 = vpack.c.b16 %v5204, %v5196
    %v5469 = vpack.c.b16 %v5205, %v5197
    %v5470 = vpack.c.b16 %v5206, %v5198
    %v5471 = vpack.c.b16 %v5207, %v5199
    %v5472 = vpack.c.b16 %v5216, %v5208
    %v5473 = vpack.c.b16 %v5217, %v5209
    %v5474 = vpack.c.b16 %v5218, %v5210
    %v5475 = vpack.c.b16 %v5219, %v5211
    %v5476 = vpack.c.b16 %v5220, %v5212
    %v5477 = vpack.c.b16 %v5221, %v5213
    %v5478 = vpack.c.b16 %v5222, %v5214
    %v5479 = vpack.c.b16 %v5223, %v5215
    %5736 = vmatprep.subr.bf16.mxu0 %v5281
    %5737 = vmatpush1.bf16.msra.mxu0 %v5280
    %5738 = vmatprep.subr.bf16.mxu0 %v5273
    %5739 = vmatpush1.bf16.msra.mxu0 %v5272
    %5740 = vmatprep.subr.bf16.mxu0 %v5265
    %5741 = vmatpush1.bf16.msra.mxu0 %v5264
    %5742 = vmatprep.subr.bf16.mxu0 %v5257
    %5743 = vmatpush1.bf16.msra.mxu0 %v5256
    %5744 = vmatprep.subr.bf16.mxu0 %v5249
    %5745 = vmatpush1.bf16.msra.mxu0 %v5248
    %5746 = vmatprep.subr.bf16.mxu0 %v5241
    %5747 = vmatpush1.bf16.msra.mxu0 %v5240
    %5748 = vmatprep.subr.bf16.mxu0 %v5233
    %5749 = vmatpush1.bf16.msra.mxu0 %v5232
    %5750 = vmatprep.subr.bf16.mxu0 %v5225
    %5751 = vmatpush1.bf16.msra.mxu0 %v5224
    %5752 = vmatprep.subr.bf16.mxu0 %v5345
    %5753 = vmatpush2.bf16.msra.mxu0 %v5344
    %5754 = vmatprep.subr.bf16.mxu0 %v5337
    %5755 = vmatpush2.bf16.msra.mxu0 %v5336
    %5756 = vmatprep.subr.bf16.mxu0 %v5329
    %5757 = vmatpush2.bf16.msra.mxu0 %v5328
    %5758 = vmatprep.subr.bf16.mxu0 %v5321
    %5759 = vmatpush2.bf16.msra.mxu0 %v5320
    %5760 = vmatprep.subr.bf16.mxu0 %v5313
    %5761 = vmatpush2.bf16.msra.mxu0 %v5312
    %5762 = vmatprep.subr.bf16.mxu0 %v5305
    %5763 = vmatpush2.bf16.msra.mxu0 %v5304
    %5764 = vmatprep.subr.bf16.mxu0 %v5297
    %5765 = vmatpush2.bf16.msra.mxu0 %v5296
    %5766 = vmatprep.subr.bf16.mxu0 %v5289
    %5767 = vmatpush2.bf16.msra.mxu0 %v5288
    %5768 = vmatprep.mubr.bf16.mxu0 %v4449
    %5769 = vmatmul.mubr.bf16.gmra.mxu0 %v4448
    %v5770 = vpop.f32.mrf.mxu0
    %v5771 = vadd.f32 0.0, %v5770
    %v5772 = vpop.f32.mrf.mxu0
    %v5773 = vadd.f32 0.0, %v5772
    %v5774 = vpop.f32.mrf.mxu0
    %v5775 = vadd.f32 0.0, %v5774
    %v5776 = vpop.f32.mrf.mxu0
    %v5777 = vadd.f32 0.0, %v5776
    %5778 = vmatprep.mubr.bf16.mxu0 %v4453
    %5779 = vmatmul.mubr.bf16.gmra.mxu0 %v4452
    %v5780 = vpop.f32.mrf.mxu0
    %v5781 = vadd.f32 0.0, %v5780
    %v5782 = vpop.f32.mrf.mxu0
    %v5783 = vadd.f32 0.0, %v5782
    %v5784 = vpop.f32.mrf.mxu0
    %v5785 = vadd.f32 0.0, %v5784
    %v5786 = vpop.f32.mrf.mxu0
    %v5787 = vadd.f32 0.0, %v5786
    %5788 = vdwg.mxu0
    %5789 = vmatprep.subr.bf16.mxu0 %v5409
    %5790 = vmatpush1.bf16.msra.mxu0 %v5408
    %5791 = vmatprep.subr.bf16.mxu0 %v5401
    %5792 = vmatpush1.bf16.msra.mxu0 %v5400
    %5793 = vmatprep.subr.bf16.mxu0 %v5393
    %5794 = vmatpush1.bf16.msra.mxu0 %v5392
    %5795 = vmatprep.subr.bf16.mxu0 %v5385
    %5796 = vmatpush1.bf16.msra.mxu0 %v5384
    %5797 = vmatprep.subr.bf16.mxu0 %v5377
    %5798 = vmatpush1.bf16.msra.mxu0 %v5376
    %5799 = vmatprep.subr.bf16.mxu0 %v5369
    %5800 = vmatpush1.bf16.msra.mxu0 %v5368
    %5801 = vmatprep.subr.bf16.mxu0 %v5361
    %5802 = vmatpush1.bf16.msra.mxu0 %v5360
    %5803 = vmatprep.subr.bf16.mxu0 %v5353
    %5804 = vmatpush1.bf16.msra.mxu0 %v5352
    %5805 = vmatprep.subr.bf16.mxu0 %v5473
    %5806 = vmatpush2.bf16.msra.mxu0 %v5472
    %5807 = vmatprep.subr.bf16.mxu0 %v5465
    %5808 = vmatpush2.bf16.msra.mxu0 %v5464
    %5809 = vmatprep.subr.bf16.mxu0 %v5457
    %5810 = vmatpush2.bf16.msra.mxu0 %v5456
    %5811 = vmatprep.subr.bf16.mxu0 %v5449
    %5812 = vmatpush2.bf16.msra.mxu0 %v5448
    %5813 = vmatprep.subr.bf16.mxu0 %v5441
    %5814 = vmatpush2.bf16.msra.mxu0 %v5440
    %5815 = vmatprep.subr.bf16.mxu0 %v5433
    %5816 = vmatpush2.bf16.msra.mxu0 %v5432
    %5817 = vmatprep.subr.bf16.mxu0 %v5425
    %5818 = vmatpush2.bf16.msra.mxu0 %v5424
    %5819 = vmatprep.subr.bf16.mxu0 %v5417
    %5820 = vmatpush2.bf16.msra.mxu0 %v5416
    %5821 = vmatprep.mubr.bf16.mxu0 %v4451
    %5822 = vmatmul.mubr.bf16.gmra.mxu0 %v4450
    %v5823 = vpop.f32.mrf.mxu0
    %v5824 = vadd.f32 %v5771, %v5823
    %v5825 = vpop.f32.mrf.mxu0
    %v5826 = vadd.f32 %v5773, %v5825
    %v5827 = vpop.f32.mrf.mxu0
    %v5828 = vadd.f32 %v5775, %v5827
    %v5829 = vpop.f32.mrf.mxu0
    %v5830 = vadd.f32 %v5777, %v5829
    %5831 = vmatprep.mubr.bf16.mxu0 %v4455
    %5832 = vmatmul.mubr.bf16.gmra.mxu0 %v4454
    %v5833 = vpop.f32.mrf.mxu0
    %v5834 = vadd.f32 %v5781, %v5833
    %v5835 = vpop.f32.mrf.mxu0
    %v5836 = vadd.f32 %v5783, %v5835
    %v5837 = vpop.f32.mrf.mxu0
    %v5838 = vadd.f32 %v5785, %v5837
    %v5839 = vpop.f32.mrf.mxu0
    %v5840 = vadd.f32 %v5787, %v5839
    %5841 = vdwg.mxu0
    %5842 = vmatprep.subr.bf16.mxu0 %v5283
    %5843 = vmatpush1.bf16.msra.mxu0 %v5282
    %5844 = vmatprep.subr.bf16.mxu0 %v5275
    %5845 = vmatpush1.bf16.msra.mxu0 %v5274
    %5846 = vmatprep.subr.bf16.mxu0 %v5267
    %5847 = vmatpush1.bf16.msra.mxu0 %v5266
    %5848 = vmatprep.subr.bf16.mxu0 %v5259
    %5849 = vmatpush1.bf16.msra.mxu0 %v5258
    %5850 = vmatprep.subr.bf16.mxu0 %v5251
    %5851 = vmatpush1.bf16.msra.mxu0 %v5250
    %5852 = vmatprep.subr.bf16.mxu0 %v5243
    %5853 = vmatpush1.bf16.msra.mxu0 %v5242
    %5854 = vmatprep.subr.bf16.mxu0 %v5235
    %5855 = vmatpush1.bf16.msra.mxu0 %v5234
    %5856 = vmatprep.subr.bf16.mxu0 %v5227
    %5857 = vmatpush1.bf16.msra.mxu0 %v5226
    %5858 = vmatprep.subr.bf16.mxu0 %v5347
    %5859 = vmatpush2.bf16.msra.mxu0 %v5346
    %5860 = vmatprep.subr.bf16.mxu0 %v5339
    %5861 = vmatpush2.bf16.msra.mxu0 %v5338
    %5862 = vmatprep.subr.bf16.mxu0 %v5331
    %5863 = vmatpush2.bf16.msra.mxu0 %v5330
    %5864 = vmatprep.subr.bf16.mxu0 %v5323
    %5865 = vmatpush2.bf16.msra.mxu0 %v5322
    %5866 = vmatprep.subr.bf16.mxu0 %v5315
    %5867 = vmatpush2.bf16.msra.mxu0 %v5314
    %5868 = vmatprep.subr.bf16.mxu0 %v5307
    %5869 = vmatpush2.bf16.msra.mxu0 %v5306
    %5870 = vmatprep.subr.bf16.mxu0 %v5299
    %5871 = vmatpush2.bf16.msra.mxu0 %v5298
    %5872 = vmatprep.subr.bf16.mxu0 %v5291
    %5873 = vmatpush2.bf16.msra.mxu0 %v5290
    %5874 = vmatprep.mubr.bf16.mxu0 %v4449
    %5875 = vmatmul.mubr.bf16.gmra.mxu0 %v4448
    %v5876 = vpop.f32.mrf.mxu0
    %v5877 = vadd.f32 0.0, %v5876
    %v5878 = vpop.f32.mrf.mxu0
    %v5879 = vadd.f32 0.0, %v5878
    %v5880 = vpop.f32.mrf.mxu0
    %v5881 = vadd.f32 0.0, %v5880
    %v5882 = vpop.f32.mrf.mxu0
    %v5883 = vadd.f32 0.0, %v5882
    %5884 = vmatprep.mubr.bf16.mxu0 %v4453
    %5885 = vmatmul.mubr.bf16.gmra.mxu0 %v4452
    %v5886 = vpop.f32.mrf.mxu0
    %v5887 = vadd.f32 0.0, %v5886
    %v5888 = vpop.f32.mrf.mxu0
    %v5889 = vadd.f32 0.0, %v5888
    %v5890 = vpop.f32.mrf.mxu0
    %v5891 = vadd.f32 0.0, %v5890
    %v5892 = vpop.f32.mrf.mxu0
    %v5893 = vadd.f32 0.0, %v5892
    %5894 = vdwg.mxu0
    %5895 = vmatprep.subr.bf16.mxu0 %v5411
    %5896 = vmatpush1.bf16.msra.mxu0 %v5410
    %5897 = vmatprep.subr.bf16.mxu0 %v5403
    %5898 = vmatpush1.bf16.msra.mxu0 %v5402
    %5899 = vmatprep.subr.bf16.mxu0 %v5395
    %5900 = vmatpush1.bf16.msra.mxu0 %v5394
    %5901 = vmatprep.subr.bf16.mxu0 %v5387
    %5902 = vmatpush1.bf16.msra.mxu0 %v5386
    %5903 = vmatprep.subr.bf16.mxu0 %v5379
    %5904 = vmatpush1.bf16.msra.mxu0 %v5378
    %5905 = vmatprep.subr.bf16.mxu0 %v5371
    %5906 = vmatpush1.bf16.msra.mxu0 %v5370
    %5907 = vmatprep.subr.bf16.mxu0 %v5363
    %5908 = vmatpush1.bf16.msra.mxu0 %v5362
    %5909 = vmatprep.subr.bf16.mxu0 %v5355
    %5910 = vmatpush1.bf16.msra.mxu0 %v5354
    %5911 = vmatprep.subr.bf16.mxu0 %v5475
    %5912 = vmatpush2.bf16.msra.mxu0 %v5474
    %5913 = vmatprep.subr.bf16.mxu0 %v5467
    %5914 = vmatpush2.bf16.msra.mxu0 %v5466
    %5915 = vmatprep.subr.bf16.mxu0 %v5459
    %5916 = vmatpush2.bf16.msra.mxu0 %v5458
    %5917 = vmatprep.subr.bf16.mxu0 %v5451
    %5918 = vmatpush2.bf16.msra.mxu0 %v5450
    %5919 = vmatprep.subr.bf16.mxu0 %v5443
    %5920 = vmatpush2.bf16.msra.mxu0 %v5442
    %5921 = vmatprep.subr.bf16.mxu0 %v5435
    %5922 = vmatpush2.bf16.msra.mxu0 %v5434
    %5923 = vmatprep.subr.bf16.mxu0 %v5427
    %5924 = vmatpush2.bf16.msra.mxu0 %v5426
    %5925 = vmatprep.subr.bf16.mxu0 %v5419
    %5926 = vmatpush2.bf16.msra.mxu0 %v5418
    %5927 = vmatprep.mubr.bf16.mxu0 %v4451
    %5928 = vmatmul.mubr.bf16.gmra.mxu0 %v4450
    %v5929 = vpop.f32.mrf.mxu0
    %v5930 = vadd.f32 %v5877, %v5929
    %v5931 = vpop.f32.mrf.mxu0
    %v5932 = vadd.f32 %v5879, %v5931
    %v5933 = vpop.f32.mrf.mxu0
    %v5934 = vadd.f32 %v5881, %v5933
    %v5935 = vpop.f32.mrf.mxu0
    %v5936 = vadd.f32 %v5883, %v5935
    %5937 = vmatprep.mubr.bf16.mxu0 %v4455
    %5938 = vmatmul.mubr.bf16.gmra.mxu0 %v4454
    %v5939 = vpop.f32.mrf.mxu0
    %v5940 = vadd.f32 %v5887, %v5939
    %v5941 = vpop.f32.mrf.mxu0
    %v5942 = vadd.f32 %v5889, %v5941
    %v5943 = vpop.f32.mrf.mxu0
    %v5944 = vadd.f32 %v5891, %v5943
    %v5945 = vpop.f32.mrf.mxu0
    %v5946 = vadd.f32 %v5893, %v5945
    %5947 = vdwg.mxu0
    %5948 = vmatprep.subr.bf16.mxu0 %v5285
    %5949 = vmatpush1.bf16.msra.mxu0 %v5284
    %5950 = vmatprep.subr.bf16.mxu0 %v5277
    %5951 = vmatpush1.bf16.msra.mxu0 %v5276
    %5952 = vmatprep.subr.bf16.mxu0 %v5269
    %5953 = vmatpush1.bf16.msra.mxu0 %v5268
    %5954 = vmatprep.subr.bf16.mxu0 %v5261
    %5955 = vmatpush1.bf16.msra.mxu0 %v5260
    %5956 = vmatprep.subr.bf16.mxu0 %v5253
    %5957 = vmatpush1.bf16.msra.mxu0 %v5252
    %5958 = vmatprep.subr.bf16.mxu0 %v5245
    %5959 = vmatpush1.bf16.msra.mxu0 %v5244
    %5960 = vmatprep.subr.bf16.mxu0 %v5237
    %5961 = vmatpush1.bf16.msra.mxu0 %v5236
    %5962 = vmatprep.subr.bf16.mxu0 %v5229
    %5963 = vmatpush1.bf16.msra.mxu0 %v5228
    %5964 = vmatprep.subr.bf16.mxu0 %v5349
    %5965 = vmatpush2.bf16.msra.mxu0 %v5348
    %5966 = vmatprep.subr.bf16.mxu0 %v5341
    %5967 = vmatpush2.bf16.msra.mxu0 %v5340
    %5968 = vmatprep.subr.bf16.mxu0 %v5333
    %5969 = vmatpush2.bf16.msra.mxu0 %v5332
    %5970 = vmatprep.subr.bf16.mxu0 %v5325
    %5971 = vmatpush2.bf16.msra.mxu0 %v5324
    %5972 = vmatprep.subr.bf16.mxu0 %v5317
    %5973 = vmatpush2.bf16.msra.mxu0 %v5316
    %5974 = vmatprep.subr.bf16.mxu0 %v5309
    %5975 = vmatpush2.bf16.msra.mxu0 %v5308
    %5976 = vmatprep.subr.bf16.mxu0 %v5301
    %5977 = vmatpush2.bf16.msra.mxu0 %v5300
    %5978 = vmatprep.subr.bf16.mxu0 %v5293
    %5979 = vmatpush2.bf16.msra.mxu0 %v5292
    %5980 = vmatprep.mubr.bf16.mxu0 %v4449
    %5981 = vmatmul.mubr.bf16.gmra.mxu0 %v4448
    %v5982 = vpop.f32.mrf.mxu0
    %v5983 = vadd.f32 0.0, %v5982
    %v5984 = vpop.f32.mrf.mxu0
    %v5985 = vadd.f32 0.0, %v5984
    %v5986 = vpop.f32.mrf.mxu0
    %v5987 = vadd.f32 0.0, %v5986
    %v5988 = vpop.f32.mrf.mxu0
    %v5989 = vadd.f32 0.0, %v5988
    %5990 = vmatprep.mubr.bf16.mxu0 %v4453
    %5991 = vmatmul.mubr.bf16.gmra.mxu0 %v4452
    %v5992 = vpop.f32.mrf.mxu0
    %v5993 = vadd.f32 0.0, %v5992
    %v5994 = vpop.f32.mrf.mxu0
    %v5995 = vadd.f32 0.0, %v5994
    %v5996 = vpop.f32.mrf.mxu0
    %v5997 = vadd.f32 0.0, %v5996
    %v5998 = vpop.f32.mrf.mxu0
    %v5999 = vadd.f32 0.0, %v5998
    %6000 = vdwg.mxu0
    %6001 = vmatprep.subr.bf16.mxu0 %v5413
    %6002 = vmatpush1.bf16.msra.mxu0 %v5412
    %6003 = vmatprep.subr.bf16.mxu0 %v5405
    %6004 = vmatpush1.bf16.msra.mxu0 %v5404
    %6005 = vmatprep.subr.bf16.mxu0 %v5397
    %6006 = vmatpush1.bf16.msra.mxu0 %v5396
    %6007 = vmatprep.subr.bf16.mxu0 %v5389
    %6008 = vmatpush1.bf16.msra.mxu0 %v5388
    %6009 = vmatprep.subr.bf16.mxu0 %v5381
    %6010 = vmatpush1.bf16.msra.mxu0 %v5380
    %6011 = vmatprep.subr.bf16.mxu0 %v5373
    %6012 = vmatpush1.bf16.msra.mxu0 %v5372
    %6013 = vmatprep.subr.bf16.mxu0 %v5365
    %6014 = vmatpush1.bf16.msra.mxu0 %v5364
    %6015 = vmatprep.subr.bf16.mxu0 %v5357
    %6016 = vmatpush1.bf16.msra.mxu0 %v5356
    %6017 = vmatprep.subr.bf16.mxu0 %v5477
    %6018 = vmatpush2.bf16.msra.mxu0 %v5476
    %6019 = vmatprep.subr.bf16.mxu0 %v5469
    %6020 = vmatpush2.bf16.msra.mxu0 %v5468
    %6021 = vmatprep.subr.bf16.mxu0 %v5461
    %6022 = vmatpush2.bf16.msra.mxu0 %v5460
    %6023 = vmatprep.subr.bf16.mxu0 %v5453
    %6024 = vmatpush2.bf16.msra.mxu0 %v5452
    %6025 = vmatprep.subr.bf16.mxu0 %v5445
    %6026 = vmatpush2.bf16.msra.mxu0 %v5444
    %6027 = vmatprep.subr.bf16.mxu0 %v5437
    %6028 = vmatpush2.bf16.msra.mxu0 %v5436
    %6029 = vmatprep.subr.bf16.mxu0 %v5429
    %6030 = vmatpush2.bf16.msra.mxu0 %v5428
    %6031 = vmatprep.subr.bf16.mxu0 %v5421
    %6032 = vmatpush2.bf16.msra.mxu0 %v5420
    %6033 = vmatprep.mubr.bf16.mxu0 %v4451
    %6034 = vmatmul.mubr.bf16.gmra.mxu0 %v4450
    %v6035 = vpop.f32.mrf.mxu0
    %v6036 = vadd.f32 %v5983, %v6035
    %v6037 = vpop.f32.mrf.mxu0
    %v6038 = vadd.f32 %v5985, %v6037
    %v6039 = vpop.f32.mrf.mxu0
    %v6040 = vadd.f32 %v5987, %v6039
    %v6041 = vpop.f32.mrf.mxu0
    %v6042 = vadd.f32 %v5989, %v6041
    %6043 = vmatprep.mubr.bf16.mxu0 %v4455
    %6044 = vmatmul.mubr.bf16.gmra.mxu0 %v4454
    %v6045 = vpop.f32.mrf.mxu0
    %v6046 = vadd.f32 %v5993, %v6045
    %v6047 = vpop.f32.mrf.mxu0
    %v6048 = vadd.f32 %v5995, %v6047
    %v6049 = vpop.f32.mrf.mxu0
    %v6050 = vadd.f32 %v5997, %v6049
    %v6051 = vpop.f32.mrf.mxu0
    %v6052 = vadd.f32 %v5999, %v6051
    %6053 = vdwg.mxu0
    %6054 = vmatprep.subr.bf16.mxu0 %v5287
    %6055 = vmatpush1.bf16.msra.mxu0 %v5286
    %6056 = vmatprep.subr.bf16.mxu0 %v5279
    %6057 = vmatpush1.bf16.msra.mxu0 %v5278
    %6058 = vmatprep.subr.bf16.mxu0 %v5271
    %6059 = vmatpush1.bf16.msra.mxu0 %v5270
    %6060 = vmatprep.subr.bf16.mxu0 %v5263
    %6061 = vmatpush1.bf16.msra.mxu0 %v5262
    %6062 = vmatprep.subr.bf16.mxu0 %v5255
    %6063 = vmatpush1.bf16.msra.mxu0 %v5254
    %6064 = vmatprep.subr.bf16.mxu0 %v5247
    %6065 = vmatpush1.bf16.msra.mxu0 %v5246
    %6066 = vmatprep.subr.bf16.mxu0 %v5239
    %6067 = vmatpush1.bf16.msra.mxu0 %v5238
    %6068 = vmatprep.subr.bf16.mxu0 %v5231
    %6069 = vmatpush1.bf16.msra.mxu0 %v5230
    %6070 = vmatprep.subr.bf16.mxu0 %v5351
    %6071 = vmatpush2.bf16.msra.mxu0 %v5350
    %6072 = vmatprep.subr.bf16.mxu0 %v5343
    %6073 = vmatpush2.bf16.msra.mxu0 %v5342
    %6074 = vmatprep.subr.bf16.mxu0 %v5335
    %6075 = vmatpush2.bf16.msra.mxu0 %v5334
    %6076 = vmatprep.subr.bf16.mxu0 %v5327
    %6077 = vmatpush2.bf16.msra.mxu0 %v5326
    %6078 = vmatprep.subr.bf16.mxu0 %v5319
    %6079 = vmatpush2.bf16.msra.mxu0 %v5318
    %6080 = vmatprep.subr.bf16.mxu0 %v5311
    %6081 = vmatpush2.bf16.msra.mxu0 %v5310
    %6082 = vmatprep.subr.bf16.mxu0 %v5303
    %6083 = vmatpush2.bf16.msra.mxu0 %v5302
    %6084 = vmatprep.subr.bf16.mxu0 %v5295
    %6085 = vmatpush2.bf16.msra.mxu0 %v5294
    %6086 = vmatprep.mubr.bf16.mxu0 %v4449
    %6087 = vmatmul.mubr.bf16.gmra.mxu0 %v4448
    %v6088 = vpop.f32.mrf.mxu0
    %v6089 = vadd.f32 0.0, %v6088
    %v6090 = vpop.f32.mrf.mxu0
    %v6091 = vadd.f32 0.0, %v6090
    %v6092 = vpop.f32.mrf.mxu0
    %v6093 = vadd.f32 0.0, %v6092
    %v6094 = vpop.f32.mrf.mxu0
    %v6095 = vadd.f32 0.0, %v6094
    %6096 = vmatprep.mubr.bf16.mxu0 %v4453
    %6097 = vmatmul.mubr.bf16.gmra.mxu0 %v4452
    %v6098 = vpop.f32.mrf.mxu0
    %v6099 = vadd.f32 0.0, %v6098
    %v6100 = vpop.f32.mrf.mxu0
    %v6101 = vadd.f32 0.0, %v6100
    %v6102 = vpop.f32.mrf.mxu0
    %v6103 = vadd.f32 0.0, %v6102
    %v6104 = vpop.f32.mrf.mxu0
    %v6105 = vadd.f32 0.0, %v6104
    %6106 = vdwg.mxu0
    %6107 = vmatprep.subr.bf16.mxu0 %v5415
    %6108 = vmatpush1.bf16.msra.mxu0 %v5414
    %6109 = vmatprep.subr.bf16.mxu0 %v5407
    %6110 = vmatpush1.bf16.msra.mxu0 %v5406
    %6111 = vmatprep.subr.bf16.mxu0 %v5399
    %6112 = vmatpush1.bf16.msra.mxu0 %v5398
    %6113 = vmatprep.subr.bf16.mxu0 %v5391
    %6114 = vmatpush1.bf16.msra.mxu0 %v5390
    %6115 = vmatprep.subr.bf16.mxu0 %v5383
    %6116 = vmatpush1.bf16.msra.mxu0 %v5382
    %6117 = vmatprep.subr.bf16.mxu0 %v5375
    %6118 = vmatpush1.bf16.msra.mxu0 %v5374
    %6119 = vmatprep.subr.bf16.mxu0 %v5367
    %6120 = vmatpush1.bf16.msra.mxu0 %v5366
    %6121 = vmatprep.subr.bf16.mxu0 %v5359
    %6122 = vmatpush1.bf16.msra.mxu0 %v5358
    %6123 = vmatprep.subr.bf16.mxu0 %v5479
    %6124 = vmatpush2.bf16.msra.mxu0 %v5478
    %6125 = vmatprep.subr.bf16.mxu0 %v5471
    %6126 = vmatpush2.bf16.msra.mxu0 %v5470
    %6127 = vmatprep.subr.bf16.mxu0 %v5463
    %6128 = vmatpush2.bf16.msra.mxu0 %v5462
    %6129 = vmatprep.subr.bf16.mxu0 %v5455
    %6130 = vmatpush2.bf16.msra.mxu0 %v5454
    %6131 = vmatprep.subr.bf16.mxu0 %v5447
    %6132 = vmatpush2.bf16.msra.mxu0 %v5446
    %6133 = vmatprep.subr.bf16.mxu0 %v5439
    %6134 = vmatpush2.bf16.msra.mxu0 %v5438
    %6135 = vmatprep.subr.bf16.mxu0 %v5431
    %6136 = vmatpush2.bf16.msra.mxu0 %v5430
    %6137 = vmatprep.subr.bf16.mxu0 %v5423
    %6138 = vmatpush2.bf16.msra.mxu0 %v5422
    %6139 = vmatprep.mubr.bf16.mxu0 %v4451
    %6140 = vmatmul.mubr.bf16.gmra.mxu0 %v4450
    %v6141 = vpop.f32.mrf.mxu0
    %v6142 = vadd.f32 %v6089, %v6141
    %v6143 = vpop.f32.mrf.mxu0
    %v6144 = vadd.f32 %v6091, %v6143
    %v6145 = vpop.f32.mrf.mxu0
    %v6146 = vadd.f32 %v6093, %v6145
    %v6147 = vpop.f32.mrf.mxu0
    %v6148 = vadd.f32 %v6095, %v6147
    %6149 = vmatprep.mubr.bf16.mxu0 %v4455
    %6150 = vmatmul.mubr.bf16.gmra.mxu0 %v4454
    %v6151 = vpop.f32.mrf.mxu0
    %v6152 = vadd.f32 %v6099, %v6151
    %v6153 = vpop.f32.mrf.mxu0
    %v6154 = vadd.f32 %v6101, %v6153
    %v6155 = vpop.f32.mrf.mxu0
    %v6156 = vadd.f32 %v6103, %v6155
    %v6157 = vpop.f32.mrf.mxu0
    %v6158 = vadd.f32 %v6105, %v6157
    %6159 = vdwg.mxu0
    %v6416 = vunpack.c.l.b16 %v3830
    %v6417 = vunpack.c.h.b16 %v3830
    %v6418 = vunpack.c.l.b16 %v3831
    %v6419 = vunpack.c.h.b16 %v3831
    %v6420 = vunpack.c.l.b16 %v3832
    %v6421 = vunpack.c.h.b16 %v3832
    %v6422 = vunpack.c.l.b16 %v3833
    %v6423 = vunpack.c.h.b16 %v3833
    %v6424 = vunpack.c.l.b16 %v3834
    %v6425 = vunpack.c.h.b16 %v3834
    %v6426 = vunpack.c.l.b16 %v3835
    %v6427 = vunpack.c.h.b16 %v3835
    %v6428 = vunpack.c.l.b16 %v3836
    %v6429 = vunpack.c.h.b16 %v3836
    %v6430 = vunpack.c.l.b16 %v3837
    %v6431 = vunpack.c.h.b16 %v3837
    %v6432 = vunpack.c.l.b16 %v3838
    %v6433 = vunpack.c.h.b16 %v3838
    %v6434 = vunpack.c.l.b16 %v3839
    %v6435 = vunpack.c.h.b16 %v3839
    %v6436 = vunpack.c.l.b16 %v3840
    %v6437 = vunpack.c.h.b16 %v3840
    %v6438 = vunpack.c.l.b16 %v3841
    %v6439 = vunpack.c.h.b16 %v3841
    %v6440 = vunpack.c.l.b16 %v3842
    %v6441 = vunpack.c.h.b16 %v3842
    %v6442 = vunpack.c.l.b16 %v3843
    %v6443 = vunpack.c.h.b16 %v3843
    %v6444 = vunpack.c.l.b16 %v3844
    %v6445 = vunpack.c.h.b16 %v3844
    %v6446 = vunpack.c.l.b16 %v3845
    %v6447 = vunpack.c.h.b16 %v3845
    %v6448 = vunpack.c.l.b16 %v3846
    %v6449 = vunpack.c.h.b16 %v3846
    %v6450 = vunpack.c.l.b16 %v3847
    %v6451 = vunpack.c.h.b16 %v3847
    %v6452 = vunpack.c.l.b16 %v3848
    %v6453 = vunpack.c.h.b16 %v3848
    %v6454 = vunpack.c.l.b16 %v3849
    %v6455 = vunpack.c.h.b16 %v3849
    %v6456 = vunpack.c.l.b16 %v3850
    %v6457 = vunpack.c.h.b16 %v3850
    %v6458 = vunpack.c.l.b16 %v3851
    %v6459 = vunpack.c.h.b16 %v3851
    %v6460 = vunpack.c.l.b16 %v3852
    %v6461 = vunpack.c.h.b16 %v3852
    %v6462 = vunpack.c.l.b16 %v3853
    %v6463 = vunpack.c.h.b16 %v3853
    %v6464 = vunpack.c.l.b16 %v3854
    %v6465 = vunpack.c.h.b16 %v3854
    %v6466 = vunpack.c.l.b16 %v3855
    %v6467 = vunpack.c.h.b16 %v3855
    %v6468 = vunpack.c.l.b16 %v3856
    %v6469 = vunpack.c.h.b16 %v3856
    %v6470 = vunpack.c.l.b16 %v3857
    %v6471 = vunpack.c.h.b16 %v3857
    %v6472 = vunpack.c.l.b16 %v3858
    %v6473 = vunpack.c.h.b16 %v3858
    %v6474 = vunpack.c.l.b16 %v3859
    %v6475 = vunpack.c.h.b16 %v3859
    %v6476 = vunpack.c.l.b16 %v3860
    %v6477 = vunpack.c.h.b16 %v3860
    %v6478 = vunpack.c.l.b16 %v3861
    %v6479 = vunpack.c.h.b16 %v3861
    %v6480 = vunpack.c.l.b16 %v3862
    %v6481 = vunpack.c.h.b16 %v3862
    %v6482 = vunpack.c.l.b16 %v3863
    %v6483 = vunpack.c.h.b16 %v3863
    %v6484 = vunpack.c.l.b16 %v3864
    %v6485 = vunpack.c.h.b16 %v3864
    %v6486 = vunpack.c.l.b16 %v3865
    %v6487 = vunpack.c.h.b16 %v3865
    %v6488 = vunpack.c.l.b16 %v3866
    %v6489 = vunpack.c.h.b16 %v3866
    %v6490 = vunpack.c.l.b16 %v3867
    %v6491 = vunpack.c.h.b16 %v3867
    %v6492 = vunpack.c.l.b16 %v3868
    %v6493 = vunpack.c.h.b16 %v3868
    %v6494 = vunpack.c.l.b16 %v3869
    %v6495 = vunpack.c.h.b16 %v3869
    %v6496 = vunpack.c.l.b16 %v3870
    %v6497 = vunpack.c.h.b16 %v3870
    %v6498 = vunpack.c.l.b16 %v3871
    %v6499 = vunpack.c.h.b16 %v3871
    %v6500 = vunpack.c.l.b16 %v3872
    %v6501 = vunpack.c.h.b16 %v3872
    %v6502 = vunpack.c.l.b16 %v3873
    %v6503 = vunpack.c.h.b16 %v3873
    %v6504 = vunpack.c.l.b16 %v3874
    %v6505 = vunpack.c.h.b16 %v3874
    %v6506 = vunpack.c.l.b16 %v3875
    %v6507 = vunpack.c.h.b16 %v3875
    %v6508 = vunpack.c.l.b16 %v3876
    %v6509 = vunpack.c.h.b16 %v3876
    %v6510 = vunpack.c.l.b16 %v3877
    %v6511 = vunpack.c.h.b16 %v3877
    %v6512 = vunpack.c.l.b16 %v3878
    %v6513 = vunpack.c.h.b16 %v3878
    %v6514 = vunpack.c.l.b16 %v3879
    %v6515 = vunpack.c.h.b16 %v3879
    %v6516 = vunpack.c.l.b16 %v3880
    %v6517 = vunpack.c.h.b16 %v3880
    %v6518 = vunpack.c.l.b16 %v3881
    %v6519 = vunpack.c.h.b16 %v3881
    %v6520 = vunpack.c.l.b16 %v3882
    %v6521 = vunpack.c.h.b16 %v3882
    %v6522 = vunpack.c.l.b16 %v3883
    %v6523 = vunpack.c.h.b16 %v3883
    %v6524 = vunpack.c.l.b16 %v3884
    %v6525 = vunpack.c.h.b16 %v3884
    %v6526 = vunpack.c.l.b16 %v3885
    %v6527 = vunpack.c.h.b16 %v3885
    %v6528 = vunpack.c.l.b16 %v3886
    %v6529 = vunpack.c.h.b16 %v3886
    %v6530 = vunpack.c.l.b16 %v3887
    %v6531 = vunpack.c.h.b16 %v3887
    %v6532 = vunpack.c.l.b16 %v3888
    %v6533 = vunpack.c.h.b16 %v3888
    %v6534 = vunpack.c.l.b16 %v3889
    %v6535 = vunpack.c.h.b16 %v3889
    %v6536 = vunpack.c.l.b16 %v3890
    %v6537 = vunpack.c.h.b16 %v3890
    %v6538 = vunpack.c.l.b16 %v3891
    %v6539 = vunpack.c.h.b16 %v3891
    %v6540 = vunpack.c.l.b16 %v3892
    %v6541 = vunpack.c.h.b16 %v3892
    %v6542 = vunpack.c.l.b16 %v3893
    %v6543 = vunpack.c.h.b16 %v3893
    %v6544 = vunpack.c.l.b16 %v3894
    %v6545 = vunpack.c.h.b16 %v3894
    %v6546 = vunpack.c.l.b16 %v3895
    %v6547 = vunpack.c.h.b16 %v3895
    %v6548 = vunpack.c.l.b16 %v3896
    %v6549 = vunpack.c.h.b16 %v3896
    %v6550 = vunpack.c.l.b16 %v3897
    %v6551 = vunpack.c.h.b16 %v3897
    %v6552 = vunpack.c.l.b16 %v3898
    %v6553 = vunpack.c.h.b16 %v3898
    %v6554 = vunpack.c.l.b16 %v3899
    %v6555 = vunpack.c.h.b16 %v3899
    %v6556 = vunpack.c.l.b16 %v3900
    %v6557 = vunpack.c.h.b16 %v3900
    %v6558 = vunpack.c.l.b16 %v3901
    %v6559 = vunpack.c.h.b16 %v3901
    %v6560 = vunpack.c.l.b16 %v3902
    %v6561 = vunpack.c.h.b16 %v3902
    %v6562 = vunpack.c.l.b16 %v3903
    %v6563 = vunpack.c.h.b16 %v3903
    %v6564 = vunpack.c.l.b16 %v3904
    %v6565 = vunpack.c.h.b16 %v3904
    %v6566 = vunpack.c.l.b16 %v3905
    %v6567 = vunpack.c.h.b16 %v3905
    %v6568 = vunpack.c.l.b16 %v3906
    %v6569 = vunpack.c.h.b16 %v3906
    %v6570 = vunpack.c.l.b16 %v3907
    %v6571 = vunpack.c.h.b16 %v3907
    %v6572 = vunpack.c.l.b16 %v3908
    %v6573 = vunpack.c.h.b16 %v3908
    %v6574 = vunpack.c.l.b16 %v3909
    %v6575 = vunpack.c.h.b16 %v3909
    %v6576 = vunpack.c.l.b16 %v3910
    %v6577 = vunpack.c.h.b16 %v3910
    %v6578 = vunpack.c.l.b16 %v3911
    %v6579 = vunpack.c.h.b16 %v3911
    %v6580 = vunpack.c.l.b16 %v3912
    %v6581 = vunpack.c.h.b16 %v3912
    %v6582 = vunpack.c.l.b16 %v3913
    %v6583 = vunpack.c.h.b16 %v3913
    %v6584 = vunpack.c.l.b16 %v3914
    %v6585 = vunpack.c.h.b16 %v3914
    %v6586 = vunpack.c.l.b16 %v3915
    %v6587 = vunpack.c.h.b16 %v3915
    %v6588 = vunpack.c.l.b16 %v3916
    %v6589 = vunpack.c.h.b16 %v3916
    %v6590 = vunpack.c.l.b16 %v3917
    %v6591 = vunpack.c.h.b16 %v3917
    %v6592 = vunpack.c.l.b16 %v3918
    %v6593 = vunpack.c.h.b16 %v3918
    %v6594 = vunpack.c.l.b16 %v3919
    %v6595 = vunpack.c.h.b16 %v3919
    %v6596 = vunpack.c.l.b16 %v3920
    %v6597 = vunpack.c.h.b16 %v3920
    %v6598 = vunpack.c.l.b16 %v3921
    %v6599 = vunpack.c.h.b16 %v3921
    %v6600 = vunpack.c.l.b16 %v3922
    %v6601 = vunpack.c.h.b16 %v3922
    %v6602 = vunpack.c.l.b16 %v3923
    %v6603 = vunpack.c.h.b16 %v3923
    %v6604 = vunpack.c.l.b16 %v3924
    %v6605 = vunpack.c.h.b16 %v3924
    %v6606 = vunpack.c.l.b16 %v3925
    %v6607 = vunpack.c.h.b16 %v3925
    %v6608 = vunpack.c.l.b16 %v3926
    %v6609 = vunpack.c.h.b16 %v3926
    %v6610 = vunpack.c.l.b16 %v3927
    %v6611 = vunpack.c.h.b16 %v3927
    %v6612 = vunpack.c.l.b16 %v3928
    %v6613 = vunpack.c.h.b16 %v3928
    %v6614 = vunpack.c.l.b16 %v3929
    %v6615 = vunpack.c.h.b16 %v3929
    %v6616 = vunpack.c.l.b16 %v3930
    %v6617 = vunpack.c.h.b16 %v3930
    %v6618 = vunpack.c.l.b16 %v3931
    %v6619 = vunpack.c.h.b16 %v3931
    %v6620 = vunpack.c.l.b16 %v3932
    %v6621 = vunpack.c.h.b16 %v3932
    %v6622 = vunpack.c.l.b16 %v3933
    %v6623 = vunpack.c.h.b16 %v3933
    %v6624 = vunpack.c.l.b16 %v3934
    %v6625 = vunpack.c.h.b16 %v3934
    %v6626 = vunpack.c.l.b16 %v3935
    %v6627 = vunpack.c.h.b16 %v3935
    %v6628 = vunpack.c.l.b16 %v3936
    %v6629 = vunpack.c.h.b16 %v3936
    %v6630 = vunpack.c.l.b16 %v3937
    %v6631 = vunpack.c.h.b16 %v3937
    %v6632 = vunpack.c.l.b16 %v3938
    %v6633 = vunpack.c.h.b16 %v3938
    %v6634 = vunpack.c.l.b16 %v3939
    %v6635 = vunpack.c.h.b16 %v3939
    %v6636 = vunpack.c.l.b16 %v3940
    %v6637 = vunpack.c.h.b16 %v3940
    %v6638 = vunpack.c.l.b16 %v3941
    %v6639 = vunpack.c.h.b16 %v3941
    %v6640 = vunpack.c.l.b16 %v3942
    %v6641 = vunpack.c.h.b16 %v3942
    %v6642 = vunpack.c.l.b16 %v3943
    %v6643 = vunpack.c.h.b16 %v3943
    %v6644 = vunpack.c.l.b16 %v3944
    %v6645 = vunpack.c.h.b16 %v3944
    %v6646 = vunpack.c.l.b16 %v3945
    %v6647 = vunpack.c.h.b16 %v3945
    %v6648 = vunpack.c.l.b16 %v3946
    %v6649 = vunpack.c.h.b16 %v3946
    %v6650 = vunpack.c.l.b16 %v3947
    %v6651 = vunpack.c.h.b16 %v3947
    %v6652 = vunpack.c.l.b16 %v3948
    %v6653 = vunpack.c.h.b16 %v3948
    %v6654 = vunpack.c.l.b16 %v3949
    %v6655 = vunpack.c.h.b16 %v3949
    %v6656 = vunpack.c.l.b16 %v3950
    %v6657 = vunpack.c.h.b16 %v3950
    %v6658 = vunpack.c.l.b16 %v3951
    %v6659 = vunpack.c.h.b16 %v3951
    %v6660 = vunpack.c.l.b16 %v3952
    %v6661 = vunpack.c.h.b16 %v3952
    %v6662 = vunpack.c.l.b16 %v3953
    %v6663 = vunpack.c.h.b16 %v3953
    %v6664 = vunpack.c.l.b16 %v3954
    %v6665 = vunpack.c.h.b16 %v3954
    %v6666 = vunpack.c.l.b16 %v3955
    %v6667 = vunpack.c.h.b16 %v3955
    %v6668 = vunpack.c.l.b16 %v3956
    %v6669 = vunpack.c.h.b16 %v3956
    %v6670 = vunpack.c.l.b16 %v3957
    %v6671 = vunpack.c.h.b16 %v3957
    %v6672 = vunpack.c.l.b16 %v3958
    %v6673 = vunpack.c.h.b16 %v3958
    %v6674 = vunpack.c.l.b16 %v3959
    %v6675 = vunpack.c.h.b16 %v3959
    %v6676 = vunpack.c.l.b16 %v3960
    %v6677 = vunpack.c.h.b16 %v3960
    %v6678 = vunpack.c.l.b16 %v3961
    %v6679 = vunpack.c.h.b16 %v3961
    %v6680 = vunpack.c.l.b16 %v3962
    %v6681 = vunpack.c.h.b16 %v3962
    %v6682 = vunpack.c.l.b16 %v3963
    %v6683 = vunpack.c.h.b16 %v3963
    %v6684 = vunpack.c.l.b16 %v3964
    %v6685 = vunpack.c.h.b16 %v3964
    %v6686 = vunpack.c.l.b16 %v3965
    %v6687 = vunpack.c.h.b16 %v3965
    %v6688 = vunpack.c.l.b16 %v3966
    %v6689 = vunpack.c.h.b16 %v3966
    %v6690 = vunpack.c.l.b16 %v3967
    %v6691 = vunpack.c.h.b16 %v3967
    %v6692 = vunpack.c.l.b16 %v3968
    %v6693 = vunpack.c.h.b16 %v3968
    %v6694 = vunpack.c.l.b16 %v3969
    %v6695 = vunpack.c.h.b16 %v3969
    %v6696 = vunpack.c.l.b16 %v3970
    %v6697 = vunpack.c.h.b16 %v3970
    %v6698 = vunpack.c.l.b16 %v3971
    %v6699 = vunpack.c.h.b16 %v3971
    %v6700 = vunpack.c.l.b16 %v3972
    %v6701 = vunpack.c.h.b16 %v3972
    %v6702 = vunpack.c.l.b16 %v3973
    %v6703 = vunpack.c.h.b16 %v3973
    %v6704 = vunpack.c.l.b16 %v3974
    %v6705 = vunpack.c.h.b16 %v3974
    %v6706 = vunpack.c.l.b16 %v3975
    %v6707 = vunpack.c.h.b16 %v3975
    %v6708 = vunpack.c.l.b16 %v3976
    %v6709 = vunpack.c.h.b16 %v3976
    %v6710 = vunpack.c.l.b16 %v3977
    %v6711 = vunpack.c.h.b16 %v3977
    %v6712 = vunpack.c.l.b16 %v3978
    %v6713 = vunpack.c.h.b16 %v3978
    %v6714 = vunpack.c.l.b16 %v3979
    %v6715 = vunpack.c.h.b16 %v3979
    %v6716 = vunpack.c.l.b16 %v3980
    %v6717 = vunpack.c.h.b16 %v3980
    %v6718 = vunpack.c.l.b16 %v3981
    %v6719 = vunpack.c.h.b16 %v3981
    %v6720 = vunpack.c.l.b16 %v3982
    %v6721 = vunpack.c.h.b16 %v3982
    %v6722 = vunpack.c.l.b16 %v3983
    %v6723 = vunpack.c.h.b16 %v3983
    %v6724 = vunpack.c.l.b16 %v3984
    %v6725 = vunpack.c.h.b16 %v3984
    %v6726 = vunpack.c.l.b16 %v3985
    %v6727 = vunpack.c.h.b16 %v3985
    %v6728 = vunpack.c.l.b16 %v3986
    %v6729 = vunpack.c.h.b16 %v3986
    %v6730 = vunpack.c.l.b16 %v3987
    %v6731 = vunpack.c.h.b16 %v3987
    %v6732 = vunpack.c.l.b16 %v3988
    %v6733 = vunpack.c.h.b16 %v3988
    %v6734 = vunpack.c.l.b16 %v3989
    %v6735 = vunpack.c.h.b16 %v3989
    %v6736 = vunpack.c.l.b16 %v3990
    %v6737 = vunpack.c.h.b16 %v3990
    %v6738 = vunpack.c.l.b16 %v3991
    %v6739 = vunpack.c.h.b16 %v3991
    %v6740 = vunpack.c.l.b16 %v3992
    %v6741 = vunpack.c.h.b16 %v3992
    %v6742 = vunpack.c.l.b16 %v3993
    %v6743 = vunpack.c.h.b16 %v3993
    %v6744 = vunpack.c.l.b16 %v3994
    %v6745 = vunpack.c.h.b16 %v3994
    %v6746 = vunpack.c.l.b16 %v3995
    %v6747 = vunpack.c.h.b16 %v3995
    %v6748 = vunpack.c.l.b16 %v3996
    %v6749 = vunpack.c.h.b16 %v3996
    %v6750 = vunpack.c.l.b16 %v3997
    %v6751 = vunpack.c.h.b16 %v3997
    %v6752 = vunpack.c.l.b16 %v3998
    %v6753 = vunpack.c.h.b16 %v3998
    %v6754 = vunpack.c.l.b16 %v3999
    %v6755 = vunpack.c.h.b16 %v3999
    %v6756 = vunpack.c.l.b16 %v4000
    %v6757 = vunpack.c.h.b16 %v4000
    %v6758 = vunpack.c.l.b16 %v4001
    %v6759 = vunpack.c.h.b16 %v4001
    %v6760 = vunpack.c.l.b16 %v4002
    %v6761 = vunpack.c.h.b16 %v4002
    %v6762 = vunpack.c.l.b16 %v4003
    %v6763 = vunpack.c.h.b16 %v4003
    %v6764 = vunpack.c.l.b16 %v4004
    %v6765 = vunpack.c.h.b16 %v4004
    %v6766 = vunpack.c.l.b16 %v4005
    %v6767 = vunpack.c.h.b16 %v4005
    %v6768 = vunpack.c.l.b16 %v4006
    %v6769 = vunpack.c.h.b16 %v4006
    %v6770 = vunpack.c.l.b16 %v4007
    %v6771 = vunpack.c.h.b16 %v4007
    %v6772 = vunpack.c.l.b16 %v4008
    %v6773 = vunpack.c.h.b16 %v4008
    %v6774 = vunpack.c.l.b16 %v4009
    %v6775 = vunpack.c.h.b16 %v4009
    %v6776 = vunpack.c.l.b16 %v4010
    %v6777 = vunpack.c.h.b16 %v4010
    %v6778 = vunpack.c.l.b16 %v4011
    %v6779 = vunpack.c.h.b16 %v4011
    %v6780 = vunpack.c.l.b16 %v4012
    %v6781 = vunpack.c.h.b16 %v4012
    %v6782 = vunpack.c.l.b16 %v4013
    %v6783 = vunpack.c.h.b16 %v4013
    %v6784 = vunpack.c.l.b16 %v4014
    %v6785 = vunpack.c.h.b16 %v4014
    %v6786 = vunpack.c.l.b16 %v4015
    %v6787 = vunpack.c.h.b16 %v4015
    %v6788 = vunpack.c.l.b16 %v4016
    %v6789 = vunpack.c.h.b16 %v4016
    %v6790 = vunpack.c.l.b16 %v4017
    %v6791 = vunpack.c.h.b16 %v4017
    %v6792 = vunpack.c.l.b16 %v4018
    %v6793 = vunpack.c.h.b16 %v4018
    %v6794 = vunpack.c.l.b16 %v4019
    %v6795 = vunpack.c.h.b16 %v4019
    %v6796 = vunpack.c.l.b16 %v4020
    %v6797 = vunpack.c.h.b16 %v4020
    %v6798 = vunpack.c.l.b16 %v4021
    %v6799 = vunpack.c.h.b16 %v4021
    %v6800 = vunpack.c.l.b16 %v4022
    %v6801 = vunpack.c.h.b16 %v4022
    %v6802 = vunpack.c.l.b16 %v4023
    %v6803 = vunpack.c.h.b16 %v4023
    %v6804 = vunpack.c.l.b16 %v4024
    %v6805 = vunpack.c.h.b16 %v4024
    %v6806 = vunpack.c.l.b16 %v4025
    %v6807 = vunpack.c.h.b16 %v4025
    %v6808 = vunpack.c.l.b16 %v4026
    %v6809 = vunpack.c.h.b16 %v4026
    %v6810 = vunpack.c.l.b16 %v4027
    %v6811 = vunpack.c.h.b16 %v4027
    %v6812 = vunpack.c.l.b16 %v4028
    %v6813 = vunpack.c.h.b16 %v4028
    %v6814 = vunpack.c.l.b16 %v4029
    %v6815 = vunpack.c.h.b16 %v4029
    %v6816 = vunpack.c.l.b16 %v4030
    %v6817 = vunpack.c.h.b16 %v4030
    %v6818 = vunpack.c.l.b16 %v4031
    %v6819 = vunpack.c.h.b16 %v4031
    %v6820 = vunpack.c.l.b16 %v4032
    %v6821 = vunpack.c.h.b16 %v4032
    %v6822 = vunpack.c.l.b16 %v4033
    %v6823 = vunpack.c.h.b16 %v4033
    %v6824 = vunpack.c.l.b16 %v4034
    %v6825 = vunpack.c.h.b16 %v4034
    %v6826 = vunpack.c.l.b16 %v4035
    %v6827 = vunpack.c.h.b16 %v4035
    %v6828 = vunpack.c.l.b16 %v4036
    %v6829 = vunpack.c.h.b16 %v4036
    %v6830 = vunpack.c.l.b16 %v4037
    %v6831 = vunpack.c.h.b16 %v4037
    %v6832 = vunpack.c.l.b16 %v4038
    %v6833 = vunpack.c.h.b16 %v4038
    %v6834 = vunpack.c.l.b16 %v4039
    %v6835 = vunpack.c.h.b16 %v4039
    %v6836 = vunpack.c.l.b16 %v4040
    %v6837 = vunpack.c.h.b16 %v4040
    %v6838 = vunpack.c.l.b16 %v4041
    %v6839 = vunpack.c.h.b16 %v4041
    %v6840 = vunpack.c.l.b16 %v4042
    %v6841 = vunpack.c.h.b16 %v4042
    %v6842 = vunpack.c.l.b16 %v4043
    %v6843 = vunpack.c.h.b16 %v4043
    %v6844 = vunpack.c.l.b16 %v4044
    %v6845 = vunpack.c.h.b16 %v4044
    %v6846 = vunpack.c.l.b16 %v4045
    %v6847 = vunpack.c.h.b16 %v4045
    %v6848 = vunpack.c.l.b16 %v4046
    %v6849 = vunpack.c.h.b16 %v4046
    %v6850 = vunpack.c.l.b16 %v4047
    %v6851 = vunpack.c.h.b16 %v4047
    %v6852 = vunpack.c.l.b16 %v4048
    %v6853 = vunpack.c.h.b16 %v4048
    %v6854 = vunpack.c.l.b16 %v4049
    %v6855 = vunpack.c.h.b16 %v4049
    %v6856 = vunpack.c.l.b16 %v4050
    %v6857 = vunpack.c.h.b16 %v4050
    %v6858 = vunpack.c.l.b16 %v4051
    %v6859 = vunpack.c.h.b16 %v4051
    %v6860 = vunpack.c.l.b16 %v4052
    %v6861 = vunpack.c.h.b16 %v4052
    %v6862 = vunpack.c.l.b16 %v4053
    %v6863 = vunpack.c.h.b16 %v4053
    %v6864 = vunpack.c.l.b16 %v4054
    %v6865 = vunpack.c.h.b16 %v4054
    %v6866 = vunpack.c.l.b16 %v4055
    %v6867 = vunpack.c.h.b16 %v4055
    %v6868 = vunpack.c.l.b16 %v4056
    %v6869 = vunpack.c.h.b16 %v4056
    %v6870 = vunpack.c.l.b16 %v4057
    %v6871 = vunpack.c.h.b16 %v4057
    %v6872 = vunpack.c.l.b16 %v4058
    %v6873 = vunpack.c.h.b16 %v4058
    %v6874 = vunpack.c.l.b16 %v4059
    %v6875 = vunpack.c.h.b16 %v4059
    %v6876 = vunpack.c.l.b16 %v4060
    %v6877 = vunpack.c.h.b16 %v4060
    %v6878 = vunpack.c.l.b16 %v4061
    %v6879 = vunpack.c.h.b16 %v4061
    %v6880 = vunpack.c.l.b16 %v4062
    %v6881 = vunpack.c.h.b16 %v4062
    %v6882 = vunpack.c.l.b16 %v4063
    %v6883 = vunpack.c.h.b16 %v4063
    %v6884 = vunpack.c.l.b16 %v4064
    %v6885 = vunpack.c.h.b16 %v4064
    %v6886 = vunpack.c.l.b16 %v4065
    %v6887 = vunpack.c.h.b16 %v4065
    %v6888 = vunpack.c.l.b16 %v4066
    %v6889 = vunpack.c.h.b16 %v4066
    %v6890 = vunpack.c.l.b16 %v4067
    %v6891 = vunpack.c.h.b16 %v4067
    %v6892 = vunpack.c.l.b16 %v4068
    %v6893 = vunpack.c.h.b16 %v4068
    %v6894 = vunpack.c.l.b16 %v4069
    %v6895 = vunpack.c.h.b16 %v4069
    %v6896 = vunpack.c.l.b16 %v4070
    %v6897 = vunpack.c.h.b16 %v4070
    %v6898 = vunpack.c.l.b16 %v4071
    %v6899 = vunpack.c.h.b16 %v4071
    %v6900 = vunpack.c.l.b16 %v4072
    %v6901 = vunpack.c.h.b16 %v4072
    %v6902 = vunpack.c.l.b16 %v4073
    %v6903 = vunpack.c.h.b16 %v4073
    %v6904 = vunpack.c.l.b16 %v4074
    %v6905 = vunpack.c.h.b16 %v4074
    %v6906 = vunpack.c.l.b16 %v4075
    %v6907 = vunpack.c.h.b16 %v4075
    %v6908 = vunpack.c.l.b16 %v4076
    %v6909 = vunpack.c.h.b16 %v4076
    %v6910 = vunpack.c.l.b16 %v4077
    %v6911 = vunpack.c.h.b16 %v4077
    %v6912 = vunpack.c.l.b16 %v4078
    %v6913 = vunpack.c.h.b16 %v4078
    %v6914 = vunpack.c.l.b16 %v4079
    %v6915 = vunpack.c.h.b16 %v4079
    %v6916 = vunpack.c.l.b16 %v4080
    %v6917 = vunpack.c.h.b16 %v4080
    %v6918 = vunpack.c.l.b16 %v4081
    %v6919 = vunpack.c.h.b16 %v4081
    %v6920 = vunpack.c.l.b16 %v4082
    %v6921 = vunpack.c.h.b16 %v4082
    %v6922 = vunpack.c.l.b16 %v4083
    %v6923 = vunpack.c.h.b16 %v4083
    %v6924 = vunpack.c.l.b16 %v4084
    %v6925 = vunpack.c.h.b16 %v4084
    %v6926 = vunpack.c.l.b16 %v4085
    %v6927 = vunpack.c.h.b16 %v4085
    %v6928 = vpack.c.b16 %v6424, %v6416
    %v6929 = vpack.c.b16 %v6425, %v6417
    %v6930 = vpack.c.b16 %v6426, %v6418
    %v6931 = vpack.c.b16 %v6427, %v6419
    %v6932 = vpack.c.b16 %v6428, %v6420
    %v6933 = vpack.c.b16 %v6429, %v6421
    %v6934 = vpack.c.b16 %v6430, %v6422
    %v6935 = vpack.c.b16 %v6431, %v6423
    %v6936 = vpack.c.b16 %v6440, %v6432
    %v6937 = vpack.c.b16 %v6441, %v6433
    %v6938 = vpack.c.b16 %v6442, %v6434
    %v6939 = vpack.c.b16 %v6443, %v6435
    %v6940 = vpack.c.b16 %v6444, %v6436
    %v6941 = vpack.c.b16 %v6445, %v6437
    %v6942 = vpack.c.b16 %v6446, %v6438
    %v6943 = vpack.c.b16 %v6447, %v6439
    %v6944 = vpack.c.b16 %v6456, %v6448
    %v6945 = vpack.c.b16 %v6457, %v6449
    %v6946 = vpack.c.b16 %v6458, %v6450
    %v6947 = vpack.c.b16 %v6459, %v6451
    %v6948 = vpack.c.b16 %v6460, %v6452
    %v6949 = vpack.c.b16 %v6461, %v6453
    %v6950 = vpack.c.b16 %v6462, %v6454
    %v6951 = vpack.c.b16 %v6463, %v6455
    %v6952 = vpack.c.b16 %v6472, %v6464
    %v6953 = vpack.c.b16 %v6473, %v6465
    %v6954 = vpack.c.b16 %v6474, %v6466
    %v6955 = vpack.c.b16 %v6475, %v6467
    %v6956 = vpack.c.b16 %v6476, %v6468
    %v6957 = vpack.c.b16 %v6477, %v6469
    %v6958 = vpack.c.b16 %v6478, %v6470
    %v6959 = vpack.c.b16 %v6479, %v6471
    %v6960 = vpack.c.b16 %v6488, %v6480
    %v6961 = vpack.c.b16 %v6489, %v6481
    %v6962 = vpack.c.b16 %v6490, %v6482
    %v6963 = vpack.c.b16 %v6491, %v6483
    %v6964 = vpack.c.b16 %v6492, %v6484
    %v6965 = vpack.c.b16 %v6493, %v6485
    %v6966 = vpack.c.b16 %v6494, %v6486
    %v6967 = vpack.c.b16 %v6495, %v6487
    %v6968 = vpack.c.b16 %v6504, %v6496
    %v6969 = vpack.c.b16 %v6505, %v6497
    %v6970 = vpack.c.b16 %v6506, %v6498
    %v6971 = vpack.c.b16 %v6507, %v6499
    %v6972 = vpack.c.b16 %v6508, %v6500
    %v6973 = vpack.c.b16 %v6509, %v6501
    %v6974 = vpack.c.b16 %v6510, %v6502
    %v6975 = vpack.c.b16 %v6511, %v6503
    %v6976 = vpack.c.b16 %v6520, %v6512
    %v6977 = vpack.c.b16 %v6521, %v6513
    %v6978 = vpack.c.b16 %v6522, %v6514
    %v6979 = vpack.c.b16 %v6523, %v6515
    %v6980 = vpack.c.b16 %v6524, %v6516
    %v6981 = vpack.c.b16 %v6525, %v6517
    %v6982 = vpack.c.b16 %v6526, %v6518
    %v6983 = vpack.c.b16 %v6527, %v6519
    %v6984 = vpack.c.b16 %v6536, %v6528
    %v6985 = vpack.c.b16 %v6537, %v6529
    %v6986 = vpack.c.b16 %v6538, %v6530
    %v6987 = vpack.c.b16 %v6539, %v6531
    %v6988 = vpack.c.b16 %v6540, %v6532
    %v6989 = vpack.c.b16 %v6541, %v6533
    %v6990 = vpack.c.b16 %v6542, %v6534
    %v6991 = vpack.c.b16 %v6543, %v6535
    %v6992 = vpack.c.b16 %v6552, %v6544
    %v6993 = vpack.c.b16 %v6553, %v6545
    %v6994 = vpack.c.b16 %v6554, %v6546
    %v6995 = vpack.c.b16 %v6555, %v6547
    %v6996 = vpack.c.b16 %v6556, %v6548
    %v6997 = vpack.c.b16 %v6557, %v6549
    %v6998 = vpack.c.b16 %v6558, %v6550
    %v6999 = vpack.c.b16 %v6559, %v6551
    %v7000 = vpack.c.b16 %v6568, %v6560
    %v7001 = vpack.c.b16 %v6569, %v6561
    %v7002 = vpack.c.b16 %v6570, %v6562
    %v7003 = vpack.c.b16 %v6571, %v6563
    %v7004 = vpack.c.b16 %v6572, %v6564
    %v7005 = vpack.c.b16 %v6573, %v6565
    %v7006 = vpack.c.b16 %v6574, %v6566
    %v7007 = vpack.c.b16 %v6575, %v6567
    %v7008 = vpack.c.b16 %v6584, %v6576
    %v7009 = vpack.c.b16 %v6585, %v6577
    %v7010 = vpack.c.b16 %v6586, %v6578
    %v7011 = vpack.c.b16 %v6587, %v6579
    %v7012 = vpack.c.b16 %v6588, %v6580
    %v7013 = vpack.c.b16 %v6589, %v6581
    %v7014 = vpack.c.b16 %v6590, %v6582
    %v7015 = vpack.c.b16 %v6591, %v6583
    %v7016 = vpack.c.b16 %v6600, %v6592
    %v7017 = vpack.c.b16 %v6601, %v6593
    %v7018 = vpack.c.b16 %v6602, %v6594
    %v7019 = vpack.c.b16 %v6603, %v6595
    %v7020 = vpack.c.b16 %v6604, %v6596
    %v7021 = vpack.c.b16 %v6605, %v6597
    %v7022 = vpack.c.b16 %v6606, %v6598
    %v7023 = vpack.c.b16 %v6607, %v6599
    %v7024 = vpack.c.b16 %v6616, %v6608
    %v7025 = vpack.c.b16 %v6617, %v6609
    %v7026 = vpack.c.b16 %v6618, %v6610
    %v7027 = vpack.c.b16 %v6619, %v6611
    %v7028 = vpack.c.b16 %v6620, %v6612
    %v7029 = vpack.c.b16 %v6621, %v6613
    %v7030 = vpack.c.b16 %v6622, %v6614
    %v7031 = vpack.c.b16 %v6623, %v6615
    %v7032 = vpack.c.b16 %v6632, %v6624
    %v7033 = vpack.c.b16 %v6633, %v6625
    %v7034 = vpack.c.b16 %v6634, %v6626
    %v7035 = vpack.c.b16 %v6635, %v6627
    %v7036 = vpack.c.b16 %v6636, %v6628
    %v7037 = vpack.c.b16 %v6637, %v6629
    %v7038 = vpack.c.b16 %v6638, %v6630
    %v7039 = vpack.c.b16 %v6639, %v6631
    %v7040 = vpack.c.b16 %v6648, %v6640
    %v7041 = vpack.c.b16 %v6649, %v6641
    %v7042 = vpack.c.b16 %v6650, %v6642
    %v7043 = vpack.c.b16 %v6651, %v6643
    %v7044 = vpack.c.b16 %v6652, %v6644
    %v7045 = vpack.c.b16 %v6653, %v6645
    %v7046 = vpack.c.b16 %v6654, %v6646
    %v7047 = vpack.c.b16 %v6655, %v6647
    %v7048 = vpack.c.b16 %v6664, %v6656
    %v7049 = vpack.c.b16 %v6665, %v6657
    %v7050 = vpack.c.b16 %v6666, %v6658
    %v7051 = vpack.c.b16 %v6667, %v6659
    %v7052 = vpack.c.b16 %v6668, %v6660
    %v7053 = vpack.c.b16 %v6669, %v6661
    %v7054 = vpack.c.b16 %v6670, %v6662
    %v7055 = vpack.c.b16 %v6671, %v6663
    %v7056 = vpack.c.b16 %v6680, %v6672
    %v7057 = vpack.c.b16 %v6681, %v6673
    %v7058 = vpack.c.b16 %v6682, %v6674
    %v7059 = vpack.c.b16 %v6683, %v6675
    %v7060 = vpack.c.b16 %v6684, %v6676
    %v7061 = vpack.c.b16 %v6685, %v6677
    %v7062 = vpack.c.b16 %v6686, %v6678
    %v7063 = vpack.c.b16 %v6687, %v6679
    %v7064 = vpack.c.b16 %v6696, %v6688
    %v7065 = vpack.c.b16 %v6697, %v6689
    %v7066 = vpack.c.b16 %v6698, %v6690
    %v7067 = vpack.c.b16 %v6699, %v6691
    %v7068 = vpack.c.b16 %v6700, %v6692
    %v7069 = vpack.c.b16 %v6701, %v6693
    %v7070 = vpack.c.b16 %v6702, %v6694
    %v7071 = vpack.c.b16 %v6703, %v6695
    %v7072 = vpack.c.b16 %v6712, %v6704
    %v7073 = vpack.c.b16 %v6713, %v6705
    %v7074 = vpack.c.b16 %v6714, %v6706
    %v7075 = vpack.c.b16 %v6715, %v6707
    %v7076 = vpack.c.b16 %v6716, %v6708
    %v7077 = vpack.c.b16 %v6717, %v6709
    %v7078 = vpack.c.b16 %v6718, %v6710
    %v7079 = vpack.c.b16 %v6719, %v6711
    %v7080 = vpack.c.b16 %v6728, %v6720
    %v7081 = vpack.c.b16 %v6729, %v6721
    %v7082 = vpack.c.b16 %v6730, %v6722
    %v7083 = vpack.c.b16 %v6731, %v6723
    %v7084 = vpack.c.b16 %v6732, %v6724
    %v7085 = vpack.c.b16 %v6733, %v6725
    %v7086 = vpack.c.b16 %v6734, %v6726
    %v7087 = vpack.c.b16 %v6735, %v6727
    %v7088 = vpack.c.b16 %v6744, %v6736
    %v7089 = vpack.c.b16 %v6745, %v6737
    %v7090 = vpack.c.b16 %v6746, %v6738
    %v7091 = vpack.c.b16 %v6747, %v6739
    %v7092 = vpack.c.b16 %v6748, %v6740
    %v7093 = vpack.c.b16 %v6749, %v6741
    %v7094 = vpack.c.b16 %v6750, %v6742
    %v7095 = vpack.c.b16 %v6751, %v6743
    %v7096 = vpack.c.b16 %v6760, %v6752
    %v7097 = vpack.c.b16 %v6761, %v6753
    %v7098 = vpack.c.b16 %v6762, %v6754
    %v7099 = vpack.c.b16 %v6763, %v6755
    %v7100 = vpack.c.b16 %v6764, %v6756
    %v7101 = vpack.c.b16 %v6765, %v6757
    %v7102 = vpack.c.b16 %v6766, %v6758
    %v7103 = vpack.c.b16 %v6767, %v6759
    %v7104 = vpack.c.b16 %v6776, %v6768
    %v7105 = vpack.c.b16 %v6777, %v6769
    %v7106 = vpack.c.b16 %v6778, %v6770
    %v7107 = vpack.c.b16 %v6779, %v6771
    %v7108 = vpack.c.b16 %v6780, %v6772
    %v7109 = vpack.c.b16 %v6781, %v6773
    %v7110 = vpack.c.b16 %v6782, %v6774
    %v7111 = vpack.c.b16 %v6783, %v6775
    %v7112 = vpack.c.b16 %v6792, %v6784
    %v7113 = vpack.c.b16 %v6793, %v6785
    %v7114 = vpack.c.b16 %v6794, %v6786
    %v7115 = vpack.c.b16 %v6795, %v6787
    %v7116 = vpack.c.b16 %v6796, %v6788
    %v7117 = vpack.c.b16 %v6797, %v6789
    %v7118 = vpack.c.b16 %v6798, %v6790
    %v7119 = vpack.c.b16 %v6799, %v6791
    %v7120 = vpack.c.b16 %v6808, %v6800
    %v7121 = vpack.c.b16 %v6809, %v6801
    %v7122 = vpack.c.b16 %v6810, %v6802
    %v7123 = vpack.c.b16 %v6811, %v6803
    %v7124 = vpack.c.b16 %v6812, %v6804
    %v7125 = vpack.c.b16 %v6813, %v6805
    %v7126 = vpack.c.b16 %v6814, %v6806
    %v7127 = vpack.c.b16 %v6815, %v6807
    %v7128 = vpack.c.b16 %v6824, %v6816
    %v7129 = vpack.c.b16 %v6825, %v6817
    %v7130 = vpack.c.b16 %v6826, %v6818
    %v7131 = vpack.c.b16 %v6827, %v6819
    %v7132 = vpack.c.b16 %v6828, %v6820
    %v7133 = vpack.c.b16 %v6829, %v6821
    %v7134 = vpack.c.b16 %v6830, %v6822
    %v7135 = vpack.c.b16 %v6831, %v6823
    %v7136 = vpack.c.b16 %v6840, %v6832
    %v7137 = vpack.c.b16 %v6841, %v6833
    %v7138 = vpack.c.b16 %v6842, %v6834
    %v7139 = vpack.c.b16 %v6843, %v6835
    %v7140 = vpack.c.b16 %v6844, %v6836
    %v7141 = vpack.c.b16 %v6845, %v6837
    %v7142 = vpack.c.b16 %v6846, %v6838
    %v7143 = vpack.c.b16 %v6847, %v6839
    %v7144 = vpack.c.b16 %v6856, %v6848
    %v7145 = vpack.c.b16 %v6857, %v6849
    %v7146 = vpack.c.b16 %v6858, %v6850
    %v7147 = vpack.c.b16 %v6859, %v6851
    %v7148 = vpack.c.b16 %v6860, %v6852
    %v7149 = vpack.c.b16 %v6861, %v6853
    %v7150 = vpack.c.b16 %v6862, %v6854
    %v7151 = vpack.c.b16 %v6863, %v6855
    %v7152 = vpack.c.b16 %v6872, %v6864
    %v7153 = vpack.c.b16 %v6873, %v6865
    %v7154 = vpack.c.b16 %v6874, %v6866
    %v7155 = vpack.c.b16 %v6875, %v6867
    %v7156 = vpack.c.b16 %v6876, %v6868
    %v7157 = vpack.c.b16 %v6877, %v6869
    %v7158 = vpack.c.b16 %v6878, %v6870
    %v7159 = vpack.c.b16 %v6879, %v6871
    %v7160 = vpack.c.b16 %v6888, %v6880
    %v7161 = vpack.c.b16 %v6889, %v6881
    %v7162 = vpack.c.b16 %v6890, %v6882
    %v7163 = vpack.c.b16 %v6891, %v6883
    %v7164 = vpack.c.b16 %v6892, %v6884
    %v7165 = vpack.c.b16 %v6893, %v6885
    %v7166 = vpack.c.b16 %v6894, %v6886
    %v7167 = vpack.c.b16 %v6895, %v6887
    %v7168 = vpack.c.b16 %v6904, %v6896
    %v7169 = vpack.c.b16 %v6905, %v6897
    %v7170 = vpack.c.b16 %v6906, %v6898
    %v7171 = vpack.c.b16 %v6907, %v6899
    %v7172 = vpack.c.b16 %v6908, %v6900
    %v7173 = vpack.c.b16 %v6909, %v6901
    %v7174 = vpack.c.b16 %v6910, %v6902
    %v7175 = vpack.c.b16 %v6911, %v6903
    %v7176 = vpack.c.b16 %v6920, %v6912
    %v7177 = vpack.c.b16 %v6921, %v6913
    %v7178 = vpack.c.b16 %v6922, %v6914
    %v7179 = vpack.c.b16 %v6923, %v6915
    %v7180 = vpack.c.b16 %v6924, %v6916
    %v7181 = vpack.c.b16 %v6925, %v6917
    %v7182 = vpack.c.b16 %v6926, %v6918
    %v7183 = vpack.c.b16 %v6927, %v6919
    %7440 = vmatprep.subr.bf16.mxu0 %v6985
    %7441 = vmatpush1.bf16.msra.mxu0 %v6984
    %7442 = vmatprep.subr.bf16.mxu0 %v6977
    %7443 = vmatpush1.bf16.msra.mxu0 %v6976
    %7444 = vmatprep.subr.bf16.mxu0 %v6969
    %7445 = vmatpush1.bf16.msra.mxu0 %v6968
    %7446 = vmatprep.subr.bf16.mxu0 %v6961
    %7447 = vmatpush1.bf16.msra.mxu0 %v6960
    %7448 = vmatprep.subr.bf16.mxu0 %v6953
    %7449 = vmatpush1.bf16.msra.mxu0 %v6952
    %7450 = vmatprep.subr.bf16.mxu0 %v6945
    %7451 = vmatpush1.bf16.msra.mxu0 %v6944
    %7452 = vmatprep.subr.bf16.mxu0 %v6937
    %7453 = vmatpush1.bf16.msra.mxu0 %v6936
    %7454 = vmatprep.subr.bf16.mxu0 %v6929
    %7455 = vmatpush1.bf16.msra.mxu0 %v6928
    %7456 = vmatprep.subr.bf16.mxu0 %v7049
    %7457 = vmatpush2.bf16.msra.mxu0 %v7048
    %7458 = vmatprep.subr.bf16.mxu0 %v7041
    %7459 = vmatpush2.bf16.msra.mxu0 %v7040
    %7460 = vmatprep.subr.bf16.mxu0 %v7033
    %7461 = vmatpush2.bf16.msra.mxu0 %v7032
    %7462 = vmatprep.subr.bf16.mxu0 %v7025
    %7463 = vmatpush2.bf16.msra.mxu0 %v7024
    %7464 = vmatprep.subr.bf16.mxu0 %v7017
    %7465 = vmatpush2.bf16.msra.mxu0 %v7016
    %7466 = vmatprep.subr.bf16.mxu0 %v7009
    %7467 = vmatpush2.bf16.msra.mxu0 %v7008
    %7468 = vmatprep.subr.bf16.mxu0 %v7001
    %7469 = vmatpush2.bf16.msra.mxu0 %v7000
    %7470 = vmatprep.subr.bf16.mxu0 %v6993
    %7471 = vmatpush2.bf16.msra.mxu0 %v6992
    %7472 = vmatprep.mubr.bf16.mxu0 %v4087
    %7473 = vmatmul.mubr.bf16.gmra.mxu0 %v4086
    %v7474 = vpop.f32.mrf.mxu0
    %v7475 = vadd.f32 %v5824, %v7474
    %v7476 = vpop.f32.mrf.mxu0
    %v7477 = vadd.f32 %v5826, %v7476
    %v7478 = vpop.f32.mrf.mxu0
    %v7479 = vadd.f32 %v5828, %v7478
    %v7480 = vpop.f32.mrf.mxu0
    %v7481 = vadd.f32 %v5830, %v7480
    %7482 = vmatprep.mubr.bf16.mxu0 %v4091
    %7483 = vmatmul.mubr.bf16.gmra.mxu0 %v4090
    %v7484 = vpop.f32.mrf.mxu0
    %v7485 = vadd.f32 %v5834, %v7484
    %v7486 = vpop.f32.mrf.mxu0
    %v7487 = vadd.f32 %v5836, %v7486
    %v7488 = vpop.f32.mrf.mxu0
    %v7489 = vadd.f32 %v5838, %v7488
    %v7490 = vpop.f32.mrf.mxu0
    %v7491 = vadd.f32 %v5840, %v7490
    %7492 = vdwg.mxu0
    %7493 = vmatprep.subr.bf16.mxu0 %v7113
    %7494 = vmatpush1.bf16.msra.mxu0 %v7112
    %7495 = vmatprep.subr.bf16.mxu0 %v7105
    %7496 = vmatpush1.bf16.msra.mxu0 %v7104
    %7497 = vmatprep.subr.bf16.mxu0 %v7097
    %7498 = vmatpush1.bf16.msra.mxu0 %v7096
    %7499 = vmatprep.subr.bf16.mxu0 %v7089
    %7500 = vmatpush1.bf16.msra.mxu0 %v7088
    %7501 = vmatprep.subr.bf16.mxu0 %v7081
    %7502 = vmatpush1.bf16.msra.mxu0 %v7080
    %7503 = vmatprep.subr.bf16.mxu0 %v7073
    %7504 = vmatpush1.bf16.msra.mxu0 %v7072
    %7505 = vmatprep.subr.bf16.mxu0 %v7065
    %7506 = vmatpush1.bf16.msra.mxu0 %v7064
    %7507 = vmatprep.subr.bf16.mxu0 %v7057
    %7508 = vmatpush1.bf16.msra.mxu0 %v7056
    %7509 = vmatprep.subr.bf16.mxu0 %v7177
    %7510 = vmatpush2.bf16.msra.mxu0 %v7176
    %7511 = vmatprep.subr.bf16.mxu0 %v7169
    %7512 = vmatpush2.bf16.msra.mxu0 %v7168
    %7513 = vmatprep.subr.bf16.mxu0 %v7161
    %7514 = vmatpush2.bf16.msra.mxu0 %v7160
    %7515 = vmatprep.subr.bf16.mxu0 %v7153
    %7516 = vmatpush2.bf16.msra.mxu0 %v7152
    %7517 = vmatprep.subr.bf16.mxu0 %v7145
    %7518 = vmatpush2.bf16.msra.mxu0 %v7144
    %7519 = vmatprep.subr.bf16.mxu0 %v7137
    %7520 = vmatpush2.bf16.msra.mxu0 %v7136
    %7521 = vmatprep.subr.bf16.mxu0 %v7129
    %7522 = vmatpush2.bf16.msra.mxu0 %v7128
    %7523 = vmatprep.subr.bf16.mxu0 %v7121
    %7524 = vmatpush2.bf16.msra.mxu0 %v7120
    %7525 = vmatprep.mubr.bf16.mxu0 %v4089
    %7526 = vmatmul.mubr.bf16.gmra.mxu0 %v4088
    %v7527 = vpop.f32.mrf.mxu0
    %v7528 = vadd.f32 %v7475, %v7527
    %v7529 = vpop.f32.mrf.mxu0
    %v7530 = vadd.f32 %v7477, %v7529
    %v7531 = vpop.f32.mrf.mxu0
    %v7532 = vadd.f32 %v7479, %v7531
    %v7533 = vpop.f32.mrf.mxu0
    %v7534 = vadd.f32 %v7481, %v7533
    %7535 = vmatprep.mubr.bf16.mxu0 %v4093
    %7536 = vmatmul.mubr.bf16.gmra.mxu0 %v4092
    %v7537 = vpop.f32.mrf.mxu0
    %v7538 = vadd.f32 %v7485, %v7537
    %v7539 = vpop.f32.mrf.mxu0
    %v7540 = vadd.f32 %v7487, %v7539
    %v7541 = vpop.f32.mrf.mxu0
    %v7542 = vadd.f32 %v7489, %v7541
    %v7543 = vpop.f32.mrf.mxu0
    %v7544 = vadd.f32 %v7491, %v7543
    %7545 = vdwg.mxu0
    %7546 = vmatprep.subr.bf16.mxu0 %v6987
    %7547 = vmatpush1.bf16.msra.mxu0 %v6986
    %7548 = vmatprep.subr.bf16.mxu0 %v6979
    %7549 = vmatpush1.bf16.msra.mxu0 %v6978
    %7550 = vmatprep.subr.bf16.mxu0 %v6971
    %7551 = vmatpush1.bf16.msra.mxu0 %v6970
    %7552 = vmatprep.subr.bf16.mxu0 %v6963
    %7553 = vmatpush1.bf16.msra.mxu0 %v6962
    %7554 = vmatprep.subr.bf16.mxu0 %v6955
    %7555 = vmatpush1.bf16.msra.mxu0 %v6954
    %7556 = vmatprep.subr.bf16.mxu0 %v6947
    %7557 = vmatpush1.bf16.msra.mxu0 %v6946
    %7558 = vmatprep.subr.bf16.mxu0 %v6939
    %7559 = vmatpush1.bf16.msra.mxu0 %v6938
    %7560 = vmatprep.subr.bf16.mxu0 %v6931
    %7561 = vmatpush1.bf16.msra.mxu0 %v6930
    %7562 = vmatprep.subr.bf16.mxu0 %v7051
    %7563 = vmatpush2.bf16.msra.mxu0 %v7050
    %7564 = vmatprep.subr.bf16.mxu0 %v7043
    %7565 = vmatpush2.bf16.msra.mxu0 %v7042
    %7566 = vmatprep.subr.bf16.mxu0 %v7035
    %7567 = vmatpush2.bf16.msra.mxu0 %v7034
    %7568 = vmatprep.subr.bf16.mxu0 %v7027
    %7569 = vmatpush2.bf16.msra.mxu0 %v7026
    %7570 = vmatprep.subr.bf16.mxu0 %v7019
    %7571 = vmatpush2.bf16.msra.mxu0 %v7018
    %7572 = vmatprep.subr.bf16.mxu0 %v7011
    %7573 = vmatpush2.bf16.msra.mxu0 %v7010
    %7574 = vmatprep.subr.bf16.mxu0 %v7003
    %7575 = vmatpush2.bf16.msra.mxu0 %v7002
    %7576 = vmatprep.subr.bf16.mxu0 %v6995
    %7577 = vmatpush2.bf16.msra.mxu0 %v6994
    %7578 = vmatprep.mubr.bf16.mxu0 %v4087
    %7579 = vmatmul.mubr.bf16.gmra.mxu0 %v4086
    %v7580 = vpop.f32.mrf.mxu0
    %v7581 = vadd.f32 %v5930, %v7580
    %v7582 = vpop.f32.mrf.mxu0
    %v7583 = vadd.f32 %v5932, %v7582
    %v7584 = vpop.f32.mrf.mxu0
    %v7585 = vadd.f32 %v5934, %v7584
    %v7586 = vpop.f32.mrf.mxu0
    %v7587 = vadd.f32 %v5936, %v7586
    %7588 = vmatprep.mubr.bf16.mxu0 %v4091
    %7589 = vmatmul.mubr.bf16.gmra.mxu0 %v4090
    %v7590 = vpop.f32.mrf.mxu0
    %v7591 = vadd.f32 %v5940, %v7590
    %v7592 = vpop.f32.mrf.mxu0
    %v7593 = vadd.f32 %v5942, %v7592
    %v7594 = vpop.f32.mrf.mxu0
    %v7595 = vadd.f32 %v5944, %v7594
    %v7596 = vpop.f32.mrf.mxu0
    %v7597 = vadd.f32 %v5946, %v7596
    %7598 = vdwg.mxu0
    %7599 = vmatprep.subr.bf16.mxu0 %v7115
    %7600 = vmatpush1.bf16.msra.mxu0 %v7114
    %7601 = vmatprep.subr.bf16.mxu0 %v7107
    %7602 = vmatpush1.bf16.msra.mxu0 %v7106
    %7603 = vmatprep.subr.bf16.mxu0 %v7099
    %7604 = vmatpush1.bf16.msra.mxu0 %v7098
    %7605 = vmatprep.subr.bf16.mxu0 %v7091
    %7606 = vmatpush1.bf16.msra.mxu0 %v7090
    %7607 = vmatprep.subr.bf16.mxu0 %v7083
    %7608 = vmatpush1.bf16.msra.mxu0 %v7082
    %7609 = vmatprep.subr.bf16.mxu0 %v7075
    %7610 = vmatpush1.bf16.msra.mxu0 %v7074
    %7611 = vmatprep.subr.bf16.mxu0 %v7067
    %7612 = vmatpush1.bf16.msra.mxu0 %v7066
    %7613 = vmatprep.subr.bf16.mxu0 %v7059
    %7614 = vmatpush1.bf16.msra.mxu0 %v7058
    %7615 = vmatprep.subr.bf16.mxu0 %v7179
    %7616 = vmatpush2.bf16.msra.mxu0 %v7178
    %7617 = vmatprep.subr.bf16.mxu0 %v7171
    %7618 = vmatpush2.bf16.msra.mxu0 %v7170
    %7619 = vmatprep.subr.bf16.mxu0 %v7163
    %7620 = vmatpush2.bf16.msra.mxu0 %v7162
    %7621 = vmatprep.subr.bf16.mxu0 %v7155
    %7622 = vmatpush2.bf16.msra.mxu0 %v7154
    %7623 = vmatprep.subr.bf16.mxu0 %v7147
    %7624 = vmatpush2.bf16.msra.mxu0 %v7146
    %7625 = vmatprep.subr.bf16.mxu0 %v7139
    %7626 = vmatpush2.bf16.msra.mxu0 %v7138
    %7627 = vmatprep.subr.bf16.mxu0 %v7131
    %7628 = vmatpush2.bf16.msra.mxu0 %v7130
    %7629 = vmatprep.subr.bf16.mxu0 %v7123
    %7630 = vmatpush2.bf16.msra.mxu0 %v7122
    %7631 = vmatprep.mubr.bf16.mxu0 %v4089
    %7632 = vmatmul.mubr.bf16.gmra.mxu0 %v4088
    %v7633 = vpop.f32.mrf.mxu0
    %v7634 = vadd.f32 %v7581, %v7633
    %v7635 = vpop.f32.mrf.mxu0
    %v7636 = vadd.f32 %v7583, %v7635
    %v7637 = vpop.f32.mrf.mxu0
    %v7638 = vadd.f32 %v7585, %v7637
    %v7639 = vpop.f32.mrf.mxu0
    %v7640 = vadd.f32 %v7587, %v7639
    %7641 = vmatprep.mubr.bf16.mxu0 %v4093
    %7642 = vmatmul.mubr.bf16.gmra.mxu0 %v4092
    %v7643 = vpop.f32.mrf.mxu0
    %v7644 = vadd.f32 %v7591, %v7643
    %v7645 = vpop.f32.mrf.mxu0
    %v7646 = vadd.f32 %v7593, %v7645
    %v7647 = vpop.f32.mrf.mxu0
    %v7648 = vadd.f32 %v7595, %v7647
    %v7649 = vpop.f32.mrf.mxu0
    %v7650 = vadd.f32 %v7597, %v7649
    %7651 = vdwg.mxu0
    %7652 = vmatprep.subr.bf16.mxu0 %v6989
    %7653 = vmatpush1.bf16.msra.mxu0 %v6988
    %7654 = vmatprep.subr.bf16.mxu0 %v6981
    %7655 = vmatpush1.bf16.msra.mxu0 %v6980
    %7656 = vmatprep.subr.bf16.mxu0 %v6973
    %7657 = vmatpush1.bf16.msra.mxu0 %v6972
    %7658 = vmatprep.subr.bf16.mxu0 %v6965
    %7659 = vmatpush1.bf16.msra.mxu0 %v6964
    %7660 = vmatprep.subr.bf16.mxu0 %v6957
    %7661 = vmatpush1.bf16.msra.mxu0 %v6956
    %7662 = vmatprep.subr.bf16.mxu0 %v6949
    %7663 = vmatpush1.bf16.msra.mxu0 %v6948
    %7664 = vmatprep.subr.bf16.mxu0 %v6941
    %7665 = vmatpush1.bf16.msra.mxu0 %v6940
    %7666 = vmatprep.subr.bf16.mxu0 %v6933
    %7667 = vmatpush1.bf16.msra.mxu0 %v6932
    %7668 = vmatprep.subr.bf16.mxu0 %v7053
    %7669 = vmatpush2.bf16.msra.mxu0 %v7052
    %7670 = vmatprep.subr.bf16.mxu0 %v7045
    %7671 = vmatpush2.bf16.msra.mxu0 %v7044
    %7672 = vmatprep.subr.bf16.mxu0 %v7037
    %7673 = vmatpush2.bf16.msra.mxu0 %v7036
    %7674 = vmatprep.subr.bf16.mxu0 %v7029
    %7675 = vmatpush2.bf16.msra.mxu0 %v7028
    %7676 = vmatprep.subr.bf16.mxu0 %v7021
    %7677 = vmatpush2.bf16.msra.mxu0 %v7020
    %7678 = vmatprep.subr.bf16.mxu0 %v7013
    %7679 = vmatpush2.bf16.msra.mxu0 %v7012
    %7680 = vmatprep.subr.bf16.mxu0 %v7005
    %7681 = vmatpush2.bf16.msra.mxu0 %v7004
    %7682 = vmatprep.subr.bf16.mxu0 %v6997
    %7683 = vmatpush2.bf16.msra.mxu0 %v6996
    %7684 = vmatprep.mubr.bf16.mxu0 %v4087
    %7685 = vmatmul.mubr.bf16.gmra.mxu0 %v4086
    %v7686 = vpop.f32.mrf.mxu0
    %v7687 = vadd.f32 %v6036, %v7686
    %v7688 = vpop.f32.mrf.mxu0
    %v7689 = vadd.f32 %v6038, %v7688
    %v7690 = vpop.f32.mrf.mxu0
    %v7691 = vadd.f32 %v6040, %v7690
    %v7692 = vpop.f32.mrf.mxu0
    %v7693 = vadd.f32 %v6042, %v7692
    %7694 = vmatprep.mubr.bf16.mxu0 %v4091
    %7695 = vmatmul.mubr.bf16.gmra.mxu0 %v4090
    %v7696 = vpop.f32.mrf.mxu0
    %v7697 = vadd.f32 %v6046, %v7696
    %v7698 = vpop.f32.mrf.mxu0
    %v7699 = vadd.f32 %v6048, %v7698
    %v7700 = vpop.f32.mrf.mxu0
    %v7701 = vadd.f32 %v6050, %v7700
    %v7702 = vpop.f32.mrf.mxu0
    %v7703 = vadd.f32 %v6052, %v7702
    %7704 = vdwg.mxu0
    %7705 = vmatprep.subr.bf16.mxu0 %v7117
    %7706 = vmatpush1.bf16.msra.mxu0 %v7116
    %7707 = vmatprep.subr.bf16.mxu0 %v7109
    %7708 = vmatpush1.bf16.msra.mxu0 %v7108
    %7709 = vmatprep.subr.bf16.mxu0 %v7101
    %7710 = vmatpush1.bf16.msra.mxu0 %v7100
    %7711 = vmatprep.subr.bf16.mxu0 %v7093
    %7712 = vmatpush1.bf16.msra.mxu0 %v7092
    %7713 = vmatprep.subr.bf16.mxu0 %v7085
    %7714 = vmatpush1.bf16.msra.mxu0 %v7084
    %7715 = vmatprep.subr.bf16.mxu0 %v7077
    %7716 = vmatpush1.bf16.msra.mxu0 %v7076
    %7717 = vmatprep.subr.bf16.mxu0 %v7069
    %7718 = vmatpush1.bf16.msra.mxu0 %v7068
    %7719 = vmatprep.subr.bf16.mxu0 %v7061
    %7720 = vmatpush1.bf16.msra.mxu0 %v7060
    %7721 = vmatprep.subr.bf16.mxu0 %v7181
    %7722 = vmatpush2.bf16.msra.mxu0 %v7180
    %7723 = vmatprep.subr.bf16.mxu0 %v7173
    %7724 = vmatpush2.bf16.msra.mxu0 %v7172
    %7725 = vmatprep.subr.bf16.mxu0 %v7165
    %7726 = vmatpush2.bf16.msra.mxu0 %v7164
    %7727 = vmatprep.subr.bf16.mxu0 %v7157
    %7728 = vmatpush2.bf16.msra.mxu0 %v7156
    %7729 = vmatprep.subr.bf16.mxu0 %v7149
    %7730 = vmatpush2.bf16.msra.mxu0 %v7148
    %7731 = vmatprep.subr.bf16.mxu0 %v7141
    %7732 = vmatpush2.bf16.msra.mxu0 %v7140
    %7733 = vmatprep.subr.bf16.mxu0 %v7133
    %7734 = vmatpush2.bf16.msra.mxu0 %v7132
    %7735 = vmatprep.subr.bf16.mxu0 %v7125
    %7736 = vmatpush2.bf16.msra.mxu0 %v7124
    %7737 = vmatprep.mubr.bf16.mxu0 %v4089
    %7738 = vmatmul.mubr.bf16.gmra.mxu0 %v4088
    %v7739 = vpop.f32.mrf.mxu0
    %v7740 = vadd.f32 %v7687, %v7739
    %v7741 = vpop.f32.mrf.mxu0
    %v7742 = vadd.f32 %v7689, %v7741
    %v7743 = vpop.f32.mrf.mxu0
    %v7744 = vadd.f32 %v7691, %v7743
    %v7745 = vpop.f32.mrf.mxu0
    %v7746 = vadd.f32 %v7693, %v7745
    %7747 = vmatprep.mubr.bf16.mxu0 %v4093
    %7748 = vmatmul.mubr.bf16.gmra.mxu0 %v4092
    %v7749 = vpop.f32.mrf.mxu0
    %v7750 = vadd.f32 %v7697, %v7749
    %v7751 = vpop.f32.mrf.mxu0
    %v7752 = vadd.f32 %v7699, %v7751
    %v7753 = vpop.f32.mrf.mxu0
    %v7754 = vadd.f32 %v7701, %v7753
    %v7755 = vpop.f32.mrf.mxu0
    %v7756 = vadd.f32 %v7703, %v7755
    %7757 = vdwg.mxu0
    %7758 = vmatprep.subr.bf16.mxu0 %v6991
    %7759 = vmatpush1.bf16.msra.mxu0 %v6990
    %7760 = vmatprep.subr.bf16.mxu0 %v6983
    %7761 = vmatpush1.bf16.msra.mxu0 %v6982
    %7762 = vmatprep.subr.bf16.mxu0 %v6975
    %7763 = vmatpush1.bf16.msra.mxu0 %v6974
    %7764 = vmatprep.subr.bf16.mxu0 %v6967
    %7765 = vmatpush1.bf16.msra.mxu0 %v6966
    %7766 = vmatprep.subr.bf16.mxu0 %v6959
    %7767 = vmatpush1.bf16.msra.mxu0 %v6958
    %7768 = vmatprep.subr.bf16.mxu0 %v6951
    %7769 = vmatpush1.bf16.msra.mxu0 %v6950
    %7770 = vmatprep.subr.bf16.mxu0 %v6943
    %7771 = vmatpush1.bf16.msra.mxu0 %v6942
    %7772 = vmatprep.subr.bf16.mxu0 %v6935
    %7773 = vmatpush1.bf16.msra.mxu0 %v6934
    %7774 = vmatprep.subr.bf16.mxu0 %v7055
    %7775 = vmatpush2.bf16.msra.mxu0 %v7054
    %7776 = vmatprep.subr.bf16.mxu0 %v7047
    %7777 = vmatpush2.bf16.msra.mxu0 %v7046
    %7778 = vmatprep.subr.bf16.mxu0 %v7039
    %7779 = vmatpush2.bf16.msra.mxu0 %v7038
    %7780 = vmatprep.subr.bf16.mxu0 %v7031
    %7781 = vmatpush2.bf16.msra.mxu0 %v7030
    %7782 = vmatprep.subr.bf16.mxu0 %v7023
    %7783 = vmatpush2.bf16.msra.mxu0 %v7022
    %7784 = vmatprep.subr.bf16.mxu0 %v7015
    %7785 = vmatpush2.bf16.msra.mxu0 %v7014
    %7786 = vmatprep.subr.bf16.mxu0 %v7007
    %7787 = vmatpush2.bf16.msra.mxu0 %v7006
    %7788 = vmatprep.subr.bf16.mxu0 %v6999
    %7789 = vmatpush2.bf16.msra.mxu0 %v6998
    %7790 = vmatprep.mubr.bf16.mxu0 %v4087
    %7791 = vmatmul.mubr.bf16.gmra.mxu0 %v4086
    %v7792 = vpop.f32.mrf.mxu0
    %v7793 = vadd.f32 %v6142, %v7792
    %v7794 = vpop.f32.mrf.mxu0
    %v7795 = vadd.f32 %v6144, %v7794
    %v7796 = vpop.f32.mrf.mxu0
    %v7797 = vadd.f32 %v6146, %v7796
    %v7798 = vpop.f32.mrf.mxu0
    %v7799 = vadd.f32 %v6148, %v7798
    %7800 = vmatprep.mubr.bf16.mxu0 %v4091
    %7801 = vmatmul.mubr.bf16.gmra.mxu0 %v4090
    %v7802 = vpop.f32.mrf.mxu0
    %v7803 = vadd.f32 %v6152, %v7802
    %v7804 = vpop.f32.mrf.mxu0
    %v7805 = vadd.f32 %v6154, %v7804
    %v7806 = vpop.f32.mrf.mxu0
    %v7807 = vadd.f32 %v6156, %v7806
    %v7808 = vpop.f32.mrf.mxu0
    %v7809 = vadd.f32 %v6158, %v7808
    %7810 = vdwg.mxu0
    %7811 = vmatprep.subr.bf16.mxu0 %v7119
    %7812 = vmatpush1.bf16.msra.mxu0 %v7118
    %7813 = vmatprep.subr.bf16.mxu0 %v7111
    %7814 = vmatpush1.bf16.msra.mxu0 %v7110
    %7815 = vmatprep.subr.bf16.mxu0 %v7103
    %7816 = vmatpush1.bf16.msra.mxu0 %v7102
    %7817 = vmatprep.subr.bf16.mxu0 %v7095
    %7818 = vmatpush1.bf16.msra.mxu0 %v7094
    %7819 = vmatprep.subr.bf16.mxu0 %v7087
    %7820 = vmatpush1.bf16.msra.mxu0 %v7086
    %7821 = vmatprep.subr.bf16.mxu0 %v7079
    %7822 = vmatpush1.bf16.msra.mxu0 %v7078
    %7823 = vmatprep.subr.bf16.mxu0 %v7071
    %7824 = vmatpush1.bf16.msra.mxu0 %v7070
    %7825 = vmatprep.subr.bf16.mxu0 %v7063
    %7826 = vmatpush1.bf16.msra.mxu0 %v7062
    %7827 = vmatprep.subr.bf16.mxu0 %v7183
    %7828 = vmatpush2.bf16.msra.mxu0 %v7182
    %7829 = vmatprep.subr.bf16.mxu0 %v7175
    %7830 = vmatpush2.bf16.msra.mxu0 %v7174
    %7831 = vmatprep.subr.bf16.mxu0 %v7167
    %7832 = vmatpush2.bf16.msra.mxu0 %v7166
    %7833 = vmatprep.subr.bf16.mxu0 %v7159
    %7834 = vmatpush2.bf16.msra.mxu0 %v7158
    %7835 = vmatprep.subr.bf16.mxu0 %v7151
    %7836 = vmatpush2.bf16.msra.mxu0 %v7150
    %7837 = vmatprep.subr.bf16.mxu0 %v7143
    %7838 = vmatpush2.bf16.msra.mxu0 %v7142
    %7839 = vmatprep.subr.bf16.mxu0 %v7135
    %7840 = vmatpush2.bf16.msra.mxu0 %v7134
    %7841 = vmatprep.subr.bf16.mxu0 %v7127
    %7842 = vmatpush2.bf16.msra.mxu0 %v7126
    %7843 = vmatprep.mubr.bf16.mxu0 %v4089
    %7844 = vmatmul.mubr.bf16.gmra.mxu0 %v4088
    %v7845 = vpop.f32.mrf.mxu0
    %v7846 = vadd.f32 %v7793, %v7845
    %v7847 = vpop.f32.mrf.mxu0
    %v7848 = vadd.f32 %v7795, %v7847
    %v7849 = vpop.f32.mrf.mxu0
    %v7850 = vadd.f32 %v7797, %v7849
    %v7851 = vpop.f32.mrf.mxu0
    %v7852 = vadd.f32 %v7799, %v7851
    %7853 = vmatprep.mubr.bf16.mxu0 %v4093
    %7854 = vmatmul.mubr.bf16.gmra.mxu0 %v4092
    %v7855 = vpop.f32.mrf.mxu0
    %v7856 = vadd.f32 %v7803, %v7855
    %v7857 = vpop.f32.mrf.mxu0
    %v7858 = vadd.f32 %v7805, %v7857
    %v7859 = vpop.f32.mrf.mxu0
    %v7860 = vadd.f32 %v7807, %v7859
    %v7861 = vpop.f32.mrf.mxu0
    %v7862 = vadd.f32 %v7809, %v7861
    %7863 = vdwg.mxu0
    %v7864 = vld [vmem:[#allocation3] sm:$0xfc]
    %v7865 = vld [vmem:[#allocation3 + $0x8] sm:$0xfc]
    %v7866 = vld [vmem:[#allocation3 + $0x10] sm:$0xfc]
    %v7867 = vld [vmem:[#allocation3 + $0x18] sm:$0xfc]
    %v7868 = vld [vmem:[#allocation3 + $0x40] sm:$0x3]
    %v7869 = vld [vmem:[#allocation3 + $0x48] sm:$0x3]
    %v7870 = vld [vmem:[#allocation3 + $0x50] sm:$0x3]
    %v7871 = vld [vmem:[#allocation3 + $0x58] sm:$0x3]
    %v7872 = vld [vmem:[#allocation3 + $0x60] sm:$0xfc]
    %v7873 = vld [vmem:[#allocation3 + $0x68] sm:$0xfc]
    %v7874 = vld [vmem:[#allocation3 + $0x70] sm:$0xfc]
    %v7875 = vld [vmem:[#allocation3 + $0x78] sm:$0xfc]
    %v7876 = vld [vmem:[#allocation3 + $0xa0] sm:$0x3]
    %v7877 = vld [vmem:[#allocation3 + $0xa8] sm:$0x3]
    %v7878 = vld [vmem:[#allocation3 + $0xb0] sm:$0x3]
    %v7879 = vld [vmem:[#allocation3 + $0xb8] sm:$0x3]
    %vm7896 = vcmask 1045504
    %v7897 = vrot.slane %v7864, 2
    %v7898 = vrot.slane %v3818, 2
    %v7899 = vsel %vm7896, %v7897, %v7898
    %v7900 = vrot.slane %v7865, 2
    %v7901 = vrot.slane %v3819, 2
    %v7902 = vsel %vm7896, %v7900, %v7901
    %v7903 = vrot.slane %v7866, 2
    %v7904 = vrot.slane %v3820, 2
    %v7905 = vsel %vm7896, %v7903, %v7904
    %v7906 = vrot.slane %v7867, 2
    %v7907 = vrot.slane %v3821, 2
    %v7908 = vsel %vm7896, %v7906, %v7907
    %v7909 = vrot.slane %v7868, 2
    %v7910 = vsel %vm7896, %v7898, %v7909
    %v7911 = vrot.slane %v7869, 2
    %v7912 = vsel %vm7896, %v7901, %v7911
    %v7913 = vrot.slane %v7870, 2
    %v7914 = vsel %vm7896, %v7904, %v7913
    %v7915 = vrot.slane %v7871, 2
    %v7916 = vsel %vm7896, %v7907, %v7915
    %v7917 = vrot.slane %v7872, 2
    %v7918 = vrot.slane %v3826, 2
    %v7919 = vsel %vm7896, %v7917, %v7918
    %v7920 = vrot.slane %v7873, 2
    %v7921 = vrot.slane %v3827, 2
    %v7922 = vsel %vm7896, %v7920, %v7921
    %v7923 = vrot.slane %v7874, 2
    %v7924 = vrot.slane %v3828, 2
    %v7925 = vsel %vm7896, %v7923, %v7924
    %v7926 = vrot.slane %v7875, 2
    %v7927 = vrot.slane %v3829, 2
    %v7928 = vsel %vm7896, %v7926, %v7927
    %v7929 = vrot.slane %v7876, 2
    %v7930 = vsel %vm7896, %v7918, %v7929
    %v7931 = vrot.slane %v7877, 2
    %v7932 = vsel %vm7896, %v7921, %v7931
    %v7933 = vrot.slane %v7878, 2
    %v7934 = vsel %vm7896, %v7924, %v7933
    %v7935 = vrot.slane %v7879, 2
    %v7936 = vsel %vm7896, %v7927, %v7935
    %s7953 = scalar_lea.vmem %s3, 4096
    %v7954 = vld [vmem:[%s7953] sm:$0xff]
    %v7955 = vld [vmem:[%s7953 + $0x8] sm:$0xff]
    %v7956 = vld [vmem:[%s7953 + $0x10] sm:$0xff]
    %v7957 = vld [vmem:[%s7953 + $0x18] sm:$0xff]
    %v7958 = vld [vmem:[%s7953 + $0x20] sm:$0xff]
    %v7959 = vld [vmem:[%s7953 + $0x28] sm:$0xff]
    %v7960 = vld [vmem:[%s7953 + $0x30] sm:$0xff]
    %v7961 = vld [vmem:[%s7953 + $0x38] sm:$0xff]
    %v7962 = vld [vmem:[%s7953 + $0x40] sm:$0xff]
    %v7963 = vld [vmem:[%s7953 + $0x48] sm:$0xff]
    %v7964 = vld [vmem:[%s7953 + $0x50] sm:$0xff]
    %v7965 = vld [vmem:[%s7953 + $0x58] sm:$0xff]
    %v7966 = vld [vmem:[%s7953 + $0x60] sm:$0xff]
    %v7967 = vld [vmem:[%s7953 + $0x68] sm:$0xff]
    %v7968 = vld [vmem:[%s7953 + $0x70] sm:$0xff]
    %v7969 = vld [vmem:[%s7953 + $0x78] sm:$0xff]
    %v7970 = vld [vmem:[%s7953 + $0x80] sm:$0xff]
    %v7971 = vld [vmem:[%s7953 + $0x88] sm:$0xff]
    %v7972 = vld [vmem:[%s7953 + $0x90] sm:$0xff]
    %v7973 = vld [vmem:[%s7953 + $0x98] sm:$0xff]
    %v7974 = vld [vmem:[%s7953 + $0xa0] sm:$0xff]
    %v7975 = vld [vmem:[%s7953 + $0xa8] sm:$0xff]
    %v7976 = vld [vmem:[%s7953 + $0xb0] sm:$0xff]
    %v7977 = vld [vmem:[%s7953 + $0xb8] sm:$0xff]
    %v7978 = vld [vmem:[%s7953 + $0xc0] sm:$0xff]
    %v7979 = vld [vmem:[%s7953 + $0xc8] sm:$0xff]
    %v7980 = vld [vmem:[%s7953 + $0xd0] sm:$0xff]
    %v7981 = vld [vmem:[%s7953 + $0xd8] sm:$0xff]
    %v7982 = vld [vmem:[%s7953 + $0xe0] sm:$0xff]
    %v7983 = vld [vmem:[%s7953 + $0xe8] sm:$0xff]
    %v7984 = vld [vmem:[%s7953 + $0xf0] sm:$0xff]
    %v7985 = vld [vmem:[%s7953 + $0xf8] sm:$0xff]
    %v7986 = vld [vmem:[%s7953 + $0x100] sm:$0xff]
    %v7987 = vld [vmem:[%s7953 + $0x108] sm:$0xff]
    %v7988 = vld [vmem:[%s7953 + $0x110] sm:$0xff]
    %v7989 = vld [vmem:[%s7953 + $0x118] sm:$0xff]
    %v7990 = vld [vmem:[%s7953 + $0x120] sm:$0xff]
    %v7991 = vld [vmem:[%s7953 + $0x128] sm:$0xff]
    %v7992 = vld [vmem:[%s7953 + $0x130] sm:$0xff]
    %v7993 = vld [vmem:[%s7953 + $0x138] sm:$0xff]
    %v7994 = vld [vmem:[%s7953 + $0x140] sm:$0xff]
    %v7995 = vld [vmem:[%s7953 + $0x148] sm:$0xff]
    %v7996 = vld [vmem:[%s7953 + $0x150] sm:$0xff]
    %v7997 = vld [vmem:[%s7953 + $0x158] sm:$0xff]
    %v7998 = vld [vmem:[%s7953 + $0x160] sm:$0xff]
    %v7999 = vld [vmem:[%s7953 + $0x168] sm:$0xff]
    %v8000 = vld [vmem:[%s7953 + $0x170] sm:$0xff]
    %v8001 = vld [vmem:[%s7953 + $0x178] sm:$0xff]
    %v8002 = vld [vmem:[%s7953 + $0x180] sm:$0xff]
    %v8003 = vld [vmem:[%s7953 + $0x188] sm:$0xff]
    %v8004 = vld [vmem:[%s7953 + $0x190] sm:$0xff]
    %v8005 = vld [vmem:[%s7953 + $0x198] sm:$0xff]
    %v8006 = vld [vmem:[%s7953 + $0x1a0] sm:$0xff]
    %v8007 = vld [vmem:[%s7953 + $0x1a8] sm:$0xff]
    %v8008 = vld [vmem:[%s7953 + $0x1b0] sm:$0xff]
    %v8009 = vld [vmem:[%s7953 + $0x1b8] sm:$0xff]
    %v8010 = vld [vmem:[%s7953 + $0x1c0] sm:$0xff]
    %v8011 = vld [vmem:[%s7953 + $0x1c8] sm:$0xff]
    %v8012 = vld [vmem:[%s7953 + $0x1d0] sm:$0xff]
    %v8013 = vld [vmem:[%s7953 + $0x1d8] sm:$0xff]
    %v8014 = vld [vmem:[%s7953 + $0x1e0] sm:$0xff]
    %v8015 = vld [vmem:[%s7953 + $0x1e8] sm:$0xff]
    %v8016 = vld [vmem:[%s7953 + $0x1f0] sm:$0xff]
    %v8017 = vld [vmem:[%s7953 + $0x1f8] sm:$0xff]
    %v8018 = vld [vmem:[%s7953 + $0x200] sm:$0xff]
    %v8019 = vld [vmem:[%s7953 + $0x208] sm:$0xff]
    %v8020 = vld [vmem:[%s7953 + $0x210] sm:$0xff]
    %v8021 = vld [vmem:[%s7953 + $0x218] sm:$0xff]
    %v8022 = vld [vmem:[%s7953 + $0x220] sm:$0xff]
    %v8023 = vld [vmem:[%s7953 + $0x228] sm:$0xff]
    %v8024 = vld [vmem:[%s7953 + $0x230] sm:$0xff]
    %v8025 = vld [vmem:[%s7953 + $0x238] sm:$0xff]
    %v8026 = vld [vmem:[%s7953 + $0x240] sm:$0xff]
    %v8027 = vld [vmem:[%s7953 + $0x248] sm:$0xff]
    %v8028 = vld [vmem:[%s7953 + $0x250] sm:$0xff]
    %v8029 = vld [vmem:[%s7953 + $0x258] sm:$0xff]
    %v8030 = vld [vmem:[%s7953 + $0x260] sm:$0xff]
    %v8031 = vld [vmem:[%s7953 + $0x268] sm:$0xff]
    %v8032 = vld [vmem:[%s7953 + $0x270] sm:$0xff]
    %v8033 = vld [vmem:[%s7953 + $0x278] sm:$0xff]
    %v8034 = vld [vmem:[%s7953 + $0x280] sm:$0xff]
    %v8035 = vld [vmem:[%s7953 + $0x288] sm:$0xff]
    %v8036 = vld [vmem:[%s7953 + $0x290] sm:$0xff]
    %v8037 = vld [vmem:[%s7953 + $0x298] sm:$0xff]
    %v8038 = vld [vmem:[%s7953 + $0x2a0] sm:$0xff]
    %v8039 = vld [vmem:[%s7953 + $0x2a8] sm:$0xff]
    %v8040 = vld [vmem:[%s7953 + $0x2b0] sm:$0xff]
    %v8041 = vld [vmem:[%s7953 + $0x2b8] sm:$0xff]
    %v8042 = vld [vmem:[%s7953 + $0x2c0] sm:$0xff]
    %v8043 = vld [vmem:[%s7953 + $0x2c8] sm:$0xff]
    %v8044 = vld [vmem:[%s7953 + $0x2d0] sm:$0xff]
    %v8045 = vld [vmem:[%s7953 + $0x2d8] sm:$0xff]
    %v8046 = vld [vmem:[%s7953 + $0x2e0] sm:$0xff]
    %v8047 = vld [vmem:[%s7953 + $0x2e8] sm:$0xff]
    %v8048 = vld [vmem:[%s7953 + $0x2f0] sm:$0xff]
    %v8049 = vld [vmem:[%s7953 + $0x2f8] sm:$0xff]
    %v8050 = vld [vmem:[%s7953 + $0x300] sm:$0xff]
    %v8051 = vld [vmem:[%s7953 + $0x308] sm:$0xff]
    %v8052 = vld [vmem:[%s7953 + $0x310] sm:$0xff]
    %v8053 = vld [vmem:[%s7953 + $0x318] sm:$0xff]
    %v8054 = vld [vmem:[%s7953 + $0x320] sm:$0xff]
    %v8055 = vld [vmem:[%s7953 + $0x328] sm:$0xff]
    %v8056 = vld [vmem:[%s7953 + $0x330] sm:$0xff]
    %v8057 = vld [vmem:[%s7953 + $0x338] sm:$0xff]
    %v8058 = vld [vmem:[%s7953 + $0x340] sm:$0xff]
    %v8059 = vld [vmem:[%s7953 + $0x348] sm:$0xff]
    %v8060 = vld [vmem:[%s7953 + $0x350] sm:$0xff]
    %v8061 = vld [vmem:[%s7953 + $0x358] sm:$0xff]
    %v8062 = vld [vmem:[%s7953 + $0x360] sm:$0xff]
    %v8063 = vld [vmem:[%s7953 + $0x368] sm:$0xff]
    %v8064 = vld [vmem:[%s7953 + $0x370] sm:$0xff]
    %v8065 = vld [vmem:[%s7953 + $0x378] sm:$0xff]
    %v8066 = vld [vmem:[%s7953 + $0x380] sm:$0xff]
    %v8067 = vld [vmem:[%s7953 + $0x388] sm:$0xff]
    %v8068 = vld [vmem:[%s7953 + $0x390] sm:$0xff]
    %v8069 = vld [vmem:[%s7953 + $0x398] sm:$0xff]
    %v8070 = vld [vmem:[%s7953 + $0x3a0] sm:$0xff]
    %v8071 = vld [vmem:[%s7953 + $0x3a8] sm:$0xff]
    %v8072 = vld [vmem:[%s7953 + $0x3b0] sm:$0xff]
    %v8073 = vld [vmem:[%s7953 + $0x3b8] sm:$0xff]
    %v8074 = vld [vmem:[%s7953 + $0x3c0] sm:$0xff]
    %v8075 = vld [vmem:[%s7953 + $0x3c8] sm:$0xff]
    %v8076 = vld [vmem:[%s7953 + $0x3d0] sm:$0xff]
    %v8077 = vld [vmem:[%s7953 + $0x3d8] sm:$0xff]
    %v8078 = vld [vmem:[%s7953 + $0x3e0] sm:$0xff]
    %v8079 = vld [vmem:[%s7953 + $0x3e8] sm:$0xff]
    %v8080 = vld [vmem:[%s7953 + $0x3f0] sm:$0xff]
    %v8081 = vld [vmem:[%s7953 + $0x3f8] sm:$0xff]
    %v8082 = vld [vmem:[%s7953 + $0x400] sm:$0xff]
    %v8083 = vld [vmem:[%s7953 + $0x408] sm:$0xff]
    %v8084 = vld [vmem:[%s7953 + $0x410] sm:$0xff]
    %v8085 = vld [vmem:[%s7953 + $0x418] sm:$0xff]
    %v8086 = vld [vmem:[%s7953 + $0x420] sm:$0xff]
    %v8087 = vld [vmem:[%s7953 + $0x428] sm:$0xff]
    %v8088 = vld [vmem:[%s7953 + $0x430] sm:$0xff]
    %v8089 = vld [vmem:[%s7953 + $0x438] sm:$0xff]
    %v8090 = vld [vmem:[%s7953 + $0x440] sm:$0xff]
    %v8091 = vld [vmem:[%s7953 + $0x448] sm:$0xff]
    %v8092 = vld [vmem:[%s7953 + $0x450] sm:$0xff]
    %v8093 = vld [vmem:[%s7953 + $0x458] sm:$0xff]
    %v8094 = vld [vmem:[%s7953 + $0x460] sm:$0xff]
    %v8095 = vld [vmem:[%s7953 + $0x468] sm:$0xff]
    %v8096 = vld [vmem:[%s7953 + $0x470] sm:$0xff]
    %v8097 = vld [vmem:[%s7953 + $0x478] sm:$0xff]
    %v8098 = vld [vmem:[%s7953 + $0x480] sm:$0xff]
    %v8099 = vld [vmem:[%s7953 + $0x488] sm:$0xff]
    %v8100 = vld [vmem:[%s7953 + $0x490] sm:$0xff]
    %v8101 = vld [vmem:[%s7953 + $0x498] sm:$0xff]
    %v8102 = vld [vmem:[%s7953 + $0x4a0] sm:$0xff]
    %v8103 = vld [vmem:[%s7953 + $0x4a8] sm:$0xff]
    %v8104 = vld [vmem:[%s7953 + $0x4b0] sm:$0xff]
    %v8105 = vld [vmem:[%s7953 + $0x4b8] sm:$0xff]
    %v8106 = vld [vmem:[%s7953 + $0x4c0] sm:$0xff]
    %v8107 = vld [vmem:[%s7953 + $0x4c8] sm:$0xff]
    %v8108 = vld [vmem:[%s7953 + $0x4d0] sm:$0xff]
    %v8109 = vld [vmem:[%s7953 + $0x4d8] sm:$0xff]
    %v8110 = vld [vmem:[%s7953 + $0x4e0] sm:$0xff]
    %v8111 = vld [vmem:[%s7953 + $0x4e8] sm:$0xff]
    %v8112 = vld [vmem:[%s7953 + $0x4f0] sm:$0xff]
    %v8113 = vld [vmem:[%s7953 + $0x4f8] sm:$0xff]
    %v8114 = vld [vmem:[%s7953 + $0x500] sm:$0xff]
    %v8115 = vld [vmem:[%s7953 + $0x508] sm:$0xff]
    %v8116 = vld [vmem:[%s7953 + $0x510] sm:$0xff]
    %v8117 = vld [vmem:[%s7953 + $0x518] sm:$0xff]
    %v8118 = vld [vmem:[%s7953 + $0x520] sm:$0xff]
    %v8119 = vld [vmem:[%s7953 + $0x528] sm:$0xff]
    %v8120 = vld [vmem:[%s7953 + $0x530] sm:$0xff]
    %v8121 = vld [vmem:[%s7953 + $0x538] sm:$0xff]
    %v8122 = vld [vmem:[%s7953 + $0x540] sm:$0xff]
    %v8123 = vld [vmem:[%s7953 + $0x548] sm:$0xff]
    %v8124 = vld [vmem:[%s7953 + $0x550] sm:$0xff]
    %v8125 = vld [vmem:[%s7953 + $0x558] sm:$0xff]
    %v8126 = vld [vmem:[%s7953 + $0x560] sm:$0xff]
    %v8127 = vld [vmem:[%s7953 + $0x568] sm:$0xff]
    %v8128 = vld [vmem:[%s7953 + $0x570] sm:$0xff]
    %v8129 = vld [vmem:[%s7953 + $0x578] sm:$0xff]
    %v8130 = vld [vmem:[%s7953 + $0x580] sm:$0xff]
    %v8131 = vld [vmem:[%s7953 + $0x588] sm:$0xff]
    %v8132 = vld [vmem:[%s7953 + $0x590] sm:$0xff]
    %v8133 = vld [vmem:[%s7953 + $0x598] sm:$0xff]
    %v8134 = vld [vmem:[%s7953 + $0x5a0] sm:$0xff]
    %v8135 = vld [vmem:[%s7953 + $0x5a8] sm:$0xff]
    %v8136 = vld [vmem:[%s7953 + $0x5b0] sm:$0xff]
    %v8137 = vld [vmem:[%s7953 + $0x5b8] sm:$0xff]
    %v8138 = vld [vmem:[%s7953 + $0x5c0] sm:$0xff]
    %v8139 = vld [vmem:[%s7953 + $0x5c8] sm:$0xff]
    %v8140 = vld [vmem:[%s7953 + $0x5d0] sm:$0xff]
    %v8141 = vld [vmem:[%s7953 + $0x5d8] sm:$0xff]
    %v8142 = vld [vmem:[%s7953 + $0x5e0] sm:$0xff]
    %v8143 = vld [vmem:[%s7953 + $0x5e8] sm:$0xff]
    %v8144 = vld [vmem:[%s7953 + $0x5f0] sm:$0xff]
    %v8145 = vld [vmem:[%s7953 + $0x5f8] sm:$0xff]
    %v8146 = vld [vmem:[%s7953 + $0x600] sm:$0xff]
    %v8147 = vld [vmem:[%s7953 + $0x608] sm:$0xff]
    %v8148 = vld [vmem:[%s7953 + $0x610] sm:$0xff]
    %v8149 = vld [vmem:[%s7953 + $0x618] sm:$0xff]
    %v8150 = vld [vmem:[%s7953 + $0x620] sm:$0xff]
    %v8151 = vld [vmem:[%s7953 + $0x628] sm:$0xff]
    %v8152 = vld [vmem:[%s7953 + $0x630] sm:$0xff]
    %v8153 = vld [vmem:[%s7953 + $0x638] sm:$0xff]
    %v8154 = vld [vmem:[%s7953 + $0x640] sm:$0xff]
    %v8155 = vld [vmem:[%s7953 + $0x648] sm:$0xff]
    %v8156 = vld [vmem:[%s7953 + $0x650] sm:$0xff]
    %v8157 = vld [vmem:[%s7953 + $0x658] sm:$0xff]
    %v8158 = vld [vmem:[%s7953 + $0x660] sm:$0xff]
    %v8159 = vld [vmem:[%s7953 + $0x668] sm:$0xff]
    %v8160 = vld [vmem:[%s7953 + $0x670] sm:$0xff]
    %v8161 = vld [vmem:[%s7953 + $0x678] sm:$0xff]
    %v8162 = vld [vmem:[%s7953 + $0x680] sm:$0xff]
    %v8163 = vld [vmem:[%s7953 + $0x688] sm:$0xff]
    %v8164 = vld [vmem:[%s7953 + $0x690] sm:$0xff]
    %v8165 = vld [vmem:[%s7953 + $0x698] sm:$0xff]
    %v8166 = vld [vmem:[%s7953 + $0x6a0] sm:$0xff]
    %v8167 = vld [vmem:[%s7953 + $0x6a8] sm:$0xff]
    %v8168 = vld [vmem:[%s7953 + $0x6b0] sm:$0xff]
    %v8169 = vld [vmem:[%s7953 + $0x6b8] sm:$0xff]
    %v8170 = vld [vmem:[%s7953 + $0x6c0] sm:$0xff]
    %v8171 = vld [vmem:[%s7953 + $0x6c8] sm:$0xff]
    %v8172 = vld [vmem:[%s7953 + $0x6d0] sm:$0xff]
    %v8173 = vld [vmem:[%s7953 + $0x6d8] sm:$0xff]
    %v8174 = vld [vmem:[%s7953 + $0x6e0] sm:$0xff]
    %v8175 = vld [vmem:[%s7953 + $0x6e8] sm:$0xff]
    %v8176 = vld [vmem:[%s7953 + $0x6f0] sm:$0xff]
    %v8177 = vld [vmem:[%s7953 + $0x6f8] sm:$0xff]
    %v8178 = vld [vmem:[%s7953 + $0x700] sm:$0xff]
    %v8179 = vld [vmem:[%s7953 + $0x708] sm:$0xff]
    %v8180 = vld [vmem:[%s7953 + $0x710] sm:$0xff]
    %v8181 = vld [vmem:[%s7953 + $0x718] sm:$0xff]
    %v8182 = vld [vmem:[%s7953 + $0x720] sm:$0xff]
    %v8183 = vld [vmem:[%s7953 + $0x728] sm:$0xff]
    %v8184 = vld [vmem:[%s7953 + $0x730] sm:$0xff]
    %v8185 = vld [vmem:[%s7953 + $0x738] sm:$0xff]
    %v8186 = vld [vmem:[%s7953 + $0x740] sm:$0xff]
    %v8187 = vld [vmem:[%s7953 + $0x748] sm:$0xff]
    %v8188 = vld [vmem:[%s7953 + $0x750] sm:$0xff]
    %v8189 = vld [vmem:[%s7953 + $0x758] sm:$0xff]
    %v8190 = vld [vmem:[%s7953 + $0x760] sm:$0xff]
    %v8191 = vld [vmem:[%s7953 + $0x768] sm:$0xff]
    %v8192 = vld [vmem:[%s7953 + $0x770] sm:$0xff]
    %v8193 = vld [vmem:[%s7953 + $0x778] sm:$0xff]
    %v8194 = vld [vmem:[%s7953 + $0x780] sm:$0xff]
    %v8195 = vld [vmem:[%s7953 + $0x788] sm:$0xff]
    %v8196 = vld [vmem:[%s7953 + $0x790] sm:$0xff]
    %v8197 = vld [vmem:[%s7953 + $0x798] sm:$0xff]
    %v8198 = vld [vmem:[%s7953 + $0x7a0] sm:$0xff]
    %v8199 = vld [vmem:[%s7953 + $0x7a8] sm:$0xff]
    %v8200 = vld [vmem:[%s7953 + $0x7b0] sm:$0xff]
    %v8201 = vld [vmem:[%s7953 + $0x7b8] sm:$0xff]
    %v8202 = vld [vmem:[%s7953 + $0x7c0] sm:$0xff]
    %v8203 = vld [vmem:[%s7953 + $0x7c8] sm:$0xff]
    %v8204 = vld [vmem:[%s7953 + $0x7d0] sm:$0xff]
    %v8205 = vld [vmem:[%s7953 + $0x7d8] sm:$0xff]
    %v8206 = vld [vmem:[%s7953 + $0x7e0] sm:$0xff]
    %v8207 = vld [vmem:[%s7953 + $0x7e8] sm:$0xff]
    %v8208 = vld [vmem:[%s7953 + $0x7f0] sm:$0xff]
    %v8209 = vld [vmem:[%s7953 + $0x7f8] sm:$0xff]
    %v8210 = vpack.c.bf16 %v7910, %v7899
    %v8211 = vpack.c.bf16 %v7912, %v7902
    %v8212 = vpack.c.bf16 %v7914, %v7905
    %v8213 = vpack.c.bf16 %v7916, %v7908
    %v8214 = vpack.c.bf16 %v7930, %v7919
    %v8215 = vpack.c.bf16 %v7932, %v7922
    %v8216 = vpack.c.bf16 %v7934, %v7925
    %v8217 = vpack.c.bf16 %v7936, %v7928
    %v8474 = vunpack.c.l.b16 %v7954
    %v8475 = vunpack.c.h.b16 %v7954
    %v8476 = vunpack.c.l.b16 %v7955
    %v8477 = vunpack.c.h.b16 %v7955
    %v8478 = vunpack.c.l.b16 %v7956
    %v8479 = vunpack.c.h.b16 %v7956
    %v8480 = vunpack.c.l.b16 %v7957
    %v8481 = vunpack.c.h.b16 %v7957
    %v8482 = vunpack.c.l.b16 %v7958
    %v8483 = vunpack.c.h.b16 %v7958
    %v8484 = vunpack.c.l.b16 %v7959
    %v8485 = vunpack.c.h.b16 %v7959
    %v8486 = vunpack.c.l.b16 %v7960
    %v8487 = vunpack.c.h.b16 %v7960
    %v8488 = vunpack.c.l.b16 %v7961
    %v8489 = vunpack.c.h.b16 %v7961
    %v8490 = vunpack.c.l.b16 %v7962
    %v8491 = vunpack.c.h.b16 %v7962
    %v8492 = vunpack.c.l.b16 %v7963
    %v8493 = vunpack.c.h.b16 %v7963
    %v8494 = vunpack.c.l.b16 %v7964
    %v8495 = vunpack.c.h.b16 %v7964
    %v8496 = vunpack.c.l.b16 %v7965
    %v8497 = vunpack.c.h.b16 %v7965
    %v8498 = vunpack.c.l.b16 %v7966
    %v8499 = vunpack.c.h.b16 %v7966
    %v8500 = vunpack.c.l.b16 %v7967
    %v8501 = vunpack.c.h.b16 %v7967
    %v8502 = vunpack.c.l.b16 %v7968
    %v8503 = vunpack.c.h.b16 %v7968
    %v8504 = vunpack.c.l.b16 %v7969
    %v8505 = vunpack.c.h.b16 %v7969
    %v8506 = vunpack.c.l.b16 %v7970
    %v8507 = vunpack.c.h.b16 %v7970
    %v8508 = vunpack.c.l.b16 %v7971
    %v8509 = vunpack.c.h.b16 %v7971
    %v8510 = vunpack.c.l.b16 %v7972
    %v8511 = vunpack.c.h.b16 %v7972
    %v8512 = vunpack.c.l.b16 %v7973
    %v8513 = vunpack.c.h.b16 %v7973
    %v8514 = vunpack.c.l.b16 %v7974
    %v8515 = vunpack.c.h.b16 %v7974
    %v8516 = vunpack.c.l.b16 %v7975
    %v8517 = vunpack.c.h.b16 %v7975
    %v8518 = vunpack.c.l.b16 %v7976
    %v8519 = vunpack.c.h.b16 %v7976
    %v8520 = vunpack.c.l.b16 %v7977
    %v8521 = vunpack.c.h.b16 %v7977
    %v8522 = vunpack.c.l.b16 %v7978
    %v8523 = vunpack.c.h.b16 %v7978
    %v8524 = vunpack.c.l.b16 %v7979
    %v8525 = vunpack.c.h.b16 %v7979
    %v8526 = vunpack.c.l.b16 %v7980
    %v8527 = vunpack.c.h.b16 %v7980
    %v8528 = vunpack.c.l.b16 %v7981
    %v8529 = vunpack.c.h.b16 %v7981
    %v8530 = vunpack.c.l.b16 %v7982
    %v8531 = vunpack.c.h.b16 %v7982
    %v8532 = vunpack.c.l.b16 %v7983
    %v8533 = vunpack.c.h.b16 %v7983
    %v8534 = vunpack.c.l.b16 %v7984
    %v8535 = vunpack.c.h.b16 %v7984
    %v8536 = vunpack.c.l.b16 %v7985
    %v8537 = vunpack.c.h.b16 %v7985
    %v8538 = vunpack.c.l.b16 %v7986
    %v8539 = vunpack.c.h.b16 %v7986
    %v8540 = vunpack.c.l.b16 %v7987
    %v8541 = vunpack.c.h.b16 %v7987
    %v8542 = vunpack.c.l.b16 %v7988
    %v8543 = vunpack.c.h.b16 %v7988
    %v8544 = vunpack.c.l.b16 %v7989
    %v8545 = vunpack.c.h.b16 %v7989
    %v8546 = vunpack.c.l.b16 %v7990
    %v8547 = vunpack.c.h.b16 %v7990
    %v8548 = vunpack.c.l.b16 %v7991
    %v8549 = vunpack.c.h.b16 %v7991
    %v8550 = vunpack.c.l.b16 %v7992
    %v8551 = vunpack.c.h.b16 %v7992
    %v8552 = vunpack.c.l.b16 %v7993
    %v8553 = vunpack.c.h.b16 %v7993
    %v8554 = vunpack.c.l.b16 %v7994
    %v8555 = vunpack.c.h.b16 %v7994
    %v8556 = vunpack.c.l.b16 %v7995
    %v8557 = vunpack.c.h.b16 %v7995
    %v8558 = vunpack.c.l.b16 %v7996
    %v8559 = vunpack.c.h.b16 %v7996
    %v8560 = vunpack.c.l.b16 %v7997
    %v8561 = vunpack.c.h.b16 %v7997
    %v8562 = vunpack.c.l.b16 %v7998
    %v8563 = vunpack.c.h.b16 %v7998
    %v8564 = vunpack.c.l.b16 %v7999
    %v8565 = vunpack.c.h.b16 %v7999
    %v8566 = vunpack.c.l.b16 %v8000
    %v8567 = vunpack.c.h.b16 %v8000
    %v8568 = vunpack.c.l.b16 %v8001
    %v8569 = vunpack.c.h.b16 %v8001
    %v8570 = vunpack.c.l.b16 %v8002
    %v8571 = vunpack.c.h.b16 %v8002
    %v8572 = vunpack.c.l.b16 %v8003
    %v8573 = vunpack.c.h.b16 %v8003
    %v8574 = vunpack.c.l.b16 %v8004
    %v8575 = vunpack.c.h.b16 %v8004
    %v8576 = vunpack.c.l.b16 %v8005
    %v8577 = vunpack.c.h.b16 %v8005
    %v8578 = vunpack.c.l.b16 %v8006
    %v8579 = vunpack.c.h.b16 %v8006
    %v8580 = vunpack.c.l.b16 %v8007
    %v8581 = vunpack.c.h.b16 %v8007
    %v8582 = vunpack.c.l.b16 %v8008
    %v8583 = vunpack.c.h.b16 %v8008
    %v8584 = vunpack.c.l.b16 %v8009
    %v8585 = vunpack.c.h.b16 %v8009
    %v8586 = vunpack.c.l.b16 %v8010
    %v8587 = vunpack.c.h.b16 %v8010
    %v8588 = vunpack.c.l.b16 %v8011
    %v8589 = vunpack.c.h.b16 %v8011
    %v8590 = vunpack.c.l.b16 %v8012
    %v8591 = vunpack.c.h.b16 %v8012
    %v8592 = vunpack.c.l.b16 %v8013
    %v8593 = vunpack.c.h.b16 %v8013
    %v8594 = vunpack.c.l.b16 %v8014
    %v8595 = vunpack.c.h.b16 %v8014
    %v8596 = vunpack.c.l.b16 %v8015
    %v8597 = vunpack.c.h.b16 %v8015
    %v8598 = vunpack.c.l.b16 %v8016
    %v8599 = vunpack.c.h.b16 %v8016
    %v8600 = vunpack.c.l.b16 %v8017
    %v8601 = vunpack.c.h.b16 %v8017
    %v8602 = vunpack.c.l.b16 %v8018
    %v8603 = vunpack.c.h.b16 %v8018
    %v8604 = vunpack.c.l.b16 %v8019
    %v8605 = vunpack.c.h.b16 %v8019
    %v8606 = vunpack.c.l.b16 %v8020
    %v8607 = vunpack.c.h.b16 %v8020
    %v8608 = vunpack.c.l.b16 %v8021
    %v8609 = vunpack.c.h.b16 %v8021
    %v8610 = vunpack.c.l.b16 %v8022
    %v8611 = vunpack.c.h.b16 %v8022
    %v8612 = vunpack.c.l.b16 %v8023
    %v8613 = vunpack.c.h.b16 %v8023
    %v8614 = vunpack.c.l.b16 %v8024
    %v8615 = vunpack.c.h.b16 %v8024
    %v8616 = vunpack.c.l.b16 %v8025
    %v8617 = vunpack.c.h.b16 %v8025
    %v8618 = vunpack.c.l.b16 %v8026
    %v8619 = vunpack.c.h.b16 %v8026
    %v8620 = vunpack.c.l.b16 %v8027
    %v8621 = vunpack.c.h.b16 %v8027
    %v8622 = vunpack.c.l.b16 %v8028
    %v8623 = vunpack.c.h.b16 %v8028
    %v8624 = vunpack.c.l.b16 %v8029
    %v8625 = vunpack.c.h.b16 %v8029
    %v8626 = vunpack.c.l.b16 %v8030
    %v8627 = vunpack.c.h.b16 %v8030
    %v8628 = vunpack.c.l.b16 %v8031
    %v8629 = vunpack.c.h.b16 %v8031
    %v8630 = vunpack.c.l.b16 %v8032
    %v8631 = vunpack.c.h.b16 %v8032
    %v8632 = vunpack.c.l.b16 %v8033
    %v8633 = vunpack.c.h.b16 %v8033
    %v8634 = vunpack.c.l.b16 %v8034
    %v8635 = vunpack.c.h.b16 %v8034
    %v8636 = vunpack.c.l.b16 %v8035
    %v8637 = vunpack.c.h.b16 %v8035
    %v8638 = vunpack.c.l.b16 %v8036
    %v8639 = vunpack.c.h.b16 %v8036
    %v8640 = vunpack.c.l.b16 %v8037
    %v8641 = vunpack.c.h.b16 %v8037
    %v8642 = vunpack.c.l.b16 %v8038
    %v8643 = vunpack.c.h.b16 %v8038
    %v8644 = vunpack.c.l.b16 %v8039
    %v8645 = vunpack.c.h.b16 %v8039
    %v8646 = vunpack.c.l.b16 %v8040
    %v8647 = vunpack.c.h.b16 %v8040
    %v8648 = vunpack.c.l.b16 %v8041
    %v8649 = vunpack.c.h.b16 %v8041
    %v8650 = vunpack.c.l.b16 %v8042
    %v8651 = vunpack.c.h.b16 %v8042
    %v8652 = vunpack.c.l.b16 %v8043
    %v8653 = vunpack.c.h.b16 %v8043
    %v8654 = vunpack.c.l.b16 %v8044
    %v8655 = vunpack.c.h.b16 %v8044
    %v8656 = vunpack.c.l.b16 %v8045
    %v8657 = vunpack.c.h.b16 %v8045
    %v8658 = vunpack.c.l.b16 %v8046
    %v8659 = vunpack.c.h.b16 %v8046
    %v8660 = vunpack.c.l.b16 %v8047
    %v8661 = vunpack.c.h.b16 %v8047
    %v8662 = vunpack.c.l.b16 %v8048
    %v8663 = vunpack.c.h.b16 %v8048
    %v8664 = vunpack.c.l.b16 %v8049
    %v8665 = vunpack.c.h.b16 %v8049
    %v8666 = vunpack.c.l.b16 %v8050
    %v8667 = vunpack.c.h.b16 %v8050
    %v8668 = vunpack.c.l.b16 %v8051
    %v8669 = vunpack.c.h.b16 %v8051
    %v8670 = vunpack.c.l.b16 %v8052
    %v8671 = vunpack.c.h.b16 %v8052
    %v8672 = vunpack.c.l.b16 %v8053
    %v8673 = vunpack.c.h.b16 %v8053
    %v8674 = vunpack.c.l.b16 %v8054
    %v8675 = vunpack.c.h.b16 %v8054
    %v8676 = vunpack.c.l.b16 %v8055
    %v8677 = vunpack.c.h.b16 %v8055
    %v8678 = vunpack.c.l.b16 %v8056
    %v8679 = vunpack.c.h.b16 %v8056
    %v8680 = vunpack.c.l.b16 %v8057
    %v8681 = vunpack.c.h.b16 %v8057
    %v8682 = vunpack.c.l.b16 %v8058
    %v8683 = vunpack.c.h.b16 %v8058
    %v8684 = vunpack.c.l.b16 %v8059
    %v8685 = vunpack.c.h.b16 %v8059
    %v8686 = vunpack.c.l.b16 %v8060
    %v8687 = vunpack.c.h.b16 %v8060
    %v8688 = vunpack.c.l.b16 %v8061
    %v8689 = vunpack.c.h.b16 %v8061
    %v8690 = vunpack.c.l.b16 %v8062
    %v8691 = vunpack.c.h.b16 %v8062
    %v8692 = vunpack.c.l.b16 %v8063
    %v8693 = vunpack.c.h.b16 %v8063
    %v8694 = vunpack.c.l.b16 %v8064
    %v8695 = vunpack.c.h.b16 %v8064
    %v8696 = vunpack.c.l.b16 %v8065
    %v8697 = vunpack.c.h.b16 %v8065
    %v8698 = vunpack.c.l.b16 %v8066
    %v8699 = vunpack.c.h.b16 %v8066
    %v8700 = vunpack.c.l.b16 %v8067
    %v8701 = vunpack.c.h.b16 %v8067
    %v8702 = vunpack.c.l.b16 %v8068
    %v8703 = vunpack.c.h.b16 %v8068
    %v8704 = vunpack.c.l.b16 %v8069
    %v8705 = vunpack.c.h.b16 %v8069
    %v8706 = vunpack.c.l.b16 %v8070
    %v8707 = vunpack.c.h.b16 %v8070
    %v8708 = vunpack.c.l.b16 %v8071
    %v8709 = vunpack.c.h.b16 %v8071
    %v8710 = vunpack.c.l.b16 %v8072
    %v8711 = vunpack.c.h.b16 %v8072
    %v8712 = vunpack.c.l.b16 %v8073
    %v8713 = vunpack.c.h.b16 %v8073
    %v8714 = vunpack.c.l.b16 %v8074
    %v8715 = vunpack.c.h.b16 %v8074
    %v8716 = vunpack.c.l.b16 %v8075
    %v8717 = vunpack.c.h.b16 %v8075
    %v8718 = vunpack.c.l.b16 %v8076
    %v8719 = vunpack.c.h.b16 %v8076
    %v8720 = vunpack.c.l.b16 %v8077
    %v8721 = vunpack.c.h.b16 %v8077
    %v8722 = vunpack.c.l.b16 %v8078
    %v8723 = vunpack.c.h.b16 %v8078
    %v8724 = vunpack.c.l.b16 %v8079
    %v8725 = vunpack.c.h.b16 %v8079
    %v8726 = vunpack.c.l.b16 %v8080
    %v8727 = vunpack.c.h.b16 %v8080
    %v8728 = vunpack.c.l.b16 %v8081
    %v8729 = vunpack.c.h.b16 %v8081
    %v8730 = vunpack.c.l.b16 %v8082
    %v8731 = vunpack.c.h.b16 %v8082
    %v8732 = vunpack.c.l.b16 %v8083
    %v8733 = vunpack.c.h.b16 %v8083
    %v8734 = vunpack.c.l.b16 %v8084
    %v8735 = vunpack.c.h.b16 %v8084
    %v8736 = vunpack.c.l.b16 %v8085
    %v8737 = vunpack.c.h.b16 %v8085
    %v8738 = vunpack.c.l.b16 %v8086
    %v8739 = vunpack.c.h.b16 %v8086
    %v8740 = vunpack.c.l.b16 %v8087
    %v8741 = vunpack.c.h.b16 %v8087
    %v8742 = vunpack.c.l.b16 %v8088
    %v8743 = vunpack.c.h.b16 %v8088
    %v8744 = vunpack.c.l.b16 %v8089
    %v8745 = vunpack.c.h.b16 %v8089
    %v8746 = vunpack.c.l.b16 %v8090
    %v8747 = vunpack.c.h.b16 %v8090
    %v8748 = vunpack.c.l.b16 %v8091
    %v8749 = vunpack.c.h.b16 %v8091
    %v8750 = vunpack.c.l.b16 %v8092
    %v8751 = vunpack.c.h.b16 %v8092
    %v8752 = vunpack.c.l.b16 %v8093
    %v8753 = vunpack.c.h.b16 %v8093
    %v8754 = vunpack.c.l.b16 %v8094
    %v8755 = vunpack.c.h.b16 %v8094
    %v8756 = vunpack.c.l.b16 %v8095
    %v8757 = vunpack.c.h.b16 %v8095
    %v8758 = vunpack.c.l.b16 %v8096
    %v8759 = vunpack.c.h.b16 %v8096
    %v8760 = vunpack.c.l.b16 %v8097
    %v8761 = vunpack.c.h.b16 %v8097
    %v8762 = vunpack.c.l.b16 %v8098
    %v8763 = vunpack.c.h.b16 %v8098
    %v8764 = vunpack.c.l.b16 %v8099
    %v8765 = vunpack.c.h.b16 %v8099
    %v8766 = vunpack.c.l.b16 %v8100
    %v8767 = vunpack.c.h.b16 %v8100
    %v8768 = vunpack.c.l.b16 %v8101
    %v8769 = vunpack.c.h.b16 %v8101
    %v8770 = vunpack.c.l.b16 %v8102
    %v8771 = vunpack.c.h.b16 %v8102
    %v8772 = vunpack.c.l.b16 %v8103
    %v8773 = vunpack.c.h.b16 %v8103
    %v8774 = vunpack.c.l.b16 %v8104
    %v8775 = vunpack.c.h.b16 %v8104
    %v8776 = vunpack.c.l.b16 %v8105
    %v8777 = vunpack.c.h.b16 %v8105
    %v8778 = vunpack.c.l.b16 %v8106
    %v8779 = vunpack.c.h.b16 %v8106
    %v8780 = vunpack.c.l.b16 %v8107
    %v8781 = vunpack.c.h.b16 %v8107
    %v8782 = vunpack.c.l.b16 %v8108
    %v8783 = vunpack.c.h.b16 %v8108
    %v8784 = vunpack.c.l.b16 %v8109
    %v8785 = vunpack.c.h.b16 %v8109
    %v8786 = vunpack.c.l.b16 %v8110
    %v8787 = vunpack.c.h.b16 %v8110
    %v8788 = vunpack.c.l.b16 %v8111
    %v8789 = vunpack.c.h.b16 %v8111
    %v8790 = vunpack.c.l.b16 %v8112
    %v8791 = vunpack.c.h.b16 %v8112
    %v8792 = vunpack.c.l.b16 %v8113
    %v8793 = vunpack.c.h.b16 %v8113
    %v8794 = vunpack.c.l.b16 %v8114
    %v8795 = vunpack.c.h.b16 %v8114
    %v8796 = vunpack.c.l.b16 %v8115
    %v8797 = vunpack.c.h.b16 %v8115
    %v8798 = vunpack.c.l.b16 %v8116
    %v8799 = vunpack.c.h.b16 %v8116
    %v8800 = vunpack.c.l.b16 %v8117
    %v8801 = vunpack.c.h.b16 %v8117
    %v8802 = vunpack.c.l.b16 %v8118
    %v8803 = vunpack.c.h.b16 %v8118
    %v8804 = vunpack.c.l.b16 %v8119
    %v8805 = vunpack.c.h.b16 %v8119
    %v8806 = vunpack.c.l.b16 %v8120
    %v8807 = vunpack.c.h.b16 %v8120
    %v8808 = vunpack.c.l.b16 %v8121
    %v8809 = vunpack.c.h.b16 %v8121
    %v8810 = vunpack.c.l.b16 %v8122
    %v8811 = vunpack.c.h.b16 %v8122
    %v8812 = vunpack.c.l.b16 %v8123
    %v8813 = vunpack.c.h.b16 %v8123
    %v8814 = vunpack.c.l.b16 %v8124
    %v8815 = vunpack.c.h.b16 %v8124
    %v8816 = vunpack.c.l.b16 %v8125
    %v8817 = vunpack.c.h.b16 %v8125
    %v8818 = vunpack.c.l.b16 %v8126
    %v8819 = vunpack.c.h.b16 %v8126
    %v8820 = vunpack.c.l.b16 %v8127
    %v8821 = vunpack.c.h.b16 %v8127
    %v8822 = vunpack.c.l.b16 %v8128
    %v8823 = vunpack.c.h.b16 %v8128
    %v8824 = vunpack.c.l.b16 %v8129
    %v8825 = vunpack.c.h.b16 %v8129
    %v8826 = vunpack.c.l.b16 %v8130
    %v8827 = vunpack.c.h.b16 %v8130
    %v8828 = vunpack.c.l.b16 %v8131
    %v8829 = vunpack.c.h.b16 %v8131
    %v8830 = vunpack.c.l.b16 %v8132
    %v8831 = vunpack.c.h.b16 %v8132
    %v8832 = vunpack.c.l.b16 %v8133
    %v8833 = vunpack.c.h.b16 %v8133
    %v8834 = vunpack.c.l.b16 %v8134
    %v8835 = vunpack.c.h.b16 %v8134
    %v8836 = vunpack.c.l.b16 %v8135
    %v8837 = vunpack.c.h.b16 %v8135
    %v8838 = vunpack.c.l.b16 %v8136
    %v8839 = vunpack.c.h.b16 %v8136
    %v8840 = vunpack.c.l.b16 %v8137
    %v8841 = vunpack.c.h.b16 %v8137
    %v8842 = vunpack.c.l.b16 %v8138
    %v8843 = vunpack.c.h.b16 %v8138
    %v8844 = vunpack.c.l.b16 %v8139
    %v8845 = vunpack.c.h.b16 %v8139
    %v8846 = vunpack.c.l.b16 %v8140
    %v8847 = vunpack.c.h.b16 %v8140
    %v8848 = vunpack.c.l.b16 %v8141
    %v8849 = vunpack.c.h.b16 %v8141
    %v8850 = vunpack.c.l.b16 %v8142
    %v8851 = vunpack.c.h.b16 %v8142
    %v8852 = vunpack.c.l.b16 %v8143
    %v8853 = vunpack.c.h.b16 %v8143
    %v8854 = vunpack.c.l.b16 %v8144
    %v8855 = vunpack.c.h.b16 %v8144
    %v8856 = vunpack.c.l.b16 %v8145
    %v8857 = vunpack.c.h.b16 %v8145
    %v8858 = vunpack.c.l.b16 %v8146
    %v8859 = vunpack.c.h.b16 %v8146
    %v8860 = vunpack.c.l.b16 %v8147
    %v8861 = vunpack.c.h.b16 %v8147
    %v8862 = vunpack.c.l.b16 %v8148
    %v8863 = vunpack.c.h.b16 %v8148
    %v8864 = vunpack.c.l.b16 %v8149
    %v8865 = vunpack.c.h.b16 %v8149
    %v8866 = vunpack.c.l.b16 %v8150
    %v8867 = vunpack.c.h.b16 %v8150
    %v8868 = vunpack.c.l.b16 %v8151
    %v8869 = vunpack.c.h.b16 %v8151
    %v8870 = vunpack.c.l.b16 %v8152
    %v8871 = vunpack.c.h.b16 %v8152
    %v8872 = vunpack.c.l.b16 %v8153
    %v8873 = vunpack.c.h.b16 %v8153
    %v8874 = vunpack.c.l.b16 %v8154
    %v8875 = vunpack.c.h.b16 %v8154
    %v8876 = vunpack.c.l.b16 %v8155
    %v8877 = vunpack.c.h.b16 %v8155
    %v8878 = vunpack.c.l.b16 %v8156
    %v8879 = vunpack.c.h.b16 %v8156
    %v8880 = vunpack.c.l.b16 %v8157
    %v8881 = vunpack.c.h.b16 %v8157
    %v8882 = vunpack.c.l.b16 %v8158
    %v8883 = vunpack.c.h.b16 %v8158
    %v8884 = vunpack.c.l.b16 %v8159
    %v8885 = vunpack.c.h.b16 %v8159
    %v8886 = vunpack.c.l.b16 %v8160
    %v8887 = vunpack.c.h.b16 %v8160
    %v8888 = vunpack.c.l.b16 %v8161
    %v8889 = vunpack.c.h.b16 %v8161
    %v8890 = vunpack.c.l.b16 %v8162
    %v8891 = vunpack.c.h.b16 %v8162
    %v8892 = vunpack.c.l.b16 %v8163
    %v8893 = vunpack.c.h.b16 %v8163
    %v8894 = vunpack.c.l.b16 %v8164
    %v8895 = vunpack.c.h.b16 %v8164
    %v8896 = vunpack.c.l.b16 %v8165
    %v8897 = vunpack.c.h.b16 %v8165
    %v8898 = vunpack.c.l.b16 %v8166
    %v8899 = vunpack.c.h.b16 %v8166
    %v8900 = vunpack.c.l.b16 %v8167
    %v8901 = vunpack.c.h.b16 %v8167
    %v8902 = vunpack.c.l.b16 %v8168
    %v8903 = vunpack.c.h.b16 %v8168
    %v8904 = vunpack.c.l.b16 %v8169
    %v8905 = vunpack.c.h.b16 %v8169
    %v8906 = vunpack.c.l.b16 %v8170
    %v8907 = vunpack.c.h.b16 %v8170
    %v8908 = vunpack.c.l.b16 %v8171
    %v8909 = vunpack.c.h.b16 %v8171
    %v8910 = vunpack.c.l.b16 %v8172
    %v8911 = vunpack.c.h.b16 %v8172
    %v8912 = vunpack.c.l.b16 %v8173
    %v8913 = vunpack.c.h.b16 %v8173
    %v8914 = vunpack.c.l.b16 %v8174
    %v8915 = vunpack.c.h.b16 %v8174
    %v8916 = vunpack.c.l.b16 %v8175
    %v8917 = vunpack.c.h.b16 %v8175
    %v8918 = vunpack.c.l.b16 %v8176
    %v8919 = vunpack.c.h.b16 %v8176
    %v8920 = vunpack.c.l.b16 %v8177
    %v8921 = vunpack.c.h.b16 %v8177
    %v8922 = vunpack.c.l.b16 %v8178
    %v8923 = vunpack.c.h.b16 %v8178
    %v8924 = vunpack.c.l.b16 %v8179
    %v8925 = vunpack.c.h.b16 %v8179
    %v8926 = vunpack.c.l.b16 %v8180
    %v8927 = vunpack.c.h.b16 %v8180
    %v8928 = vunpack.c.l.b16 %v8181
    %v8929 = vunpack.c.h.b16 %v8181
    %v8930 = vunpack.c.l.b16 %v8182
    %v8931 = vunpack.c.h.b16 %v8182
    %v8932 = vunpack.c.l.b16 %v8183
    %v8933 = vunpack.c.h.b16 %v8183
    %v8934 = vunpack.c.l.b16 %v8184
    %v8935 = vunpack.c.h.b16 %v8184
    %v8936 = vunpack.c.l.b16 %v8185
    %v8937 = vunpack.c.h.b16 %v8185
    %v8938 = vunpack.c.l.b16 %v8186
    %v8939 = vunpack.c.h.b16 %v8186
    %v8940 = vunpack.c.l.b16 %v8187
    %v8941 = vunpack.c.h.b16 %v8187
    %v8942 = vunpack.c.l.b16 %v8188
    %v8943 = vunpack.c.h.b16 %v8188
    %v8944 = vunpack.c.l.b16 %v8189
    %v8945 = vunpack.c.h.b16 %v8189
    %v8946 = vunpack.c.l.b16 %v8190
    %v8947 = vunpack.c.h.b16 %v8190
    %v8948 = vunpack.c.l.b16 %v8191
    %v8949 = vunpack.c.h.b16 %v8191
    %v8950 = vunpack.c.l.b16 %v8192
    %v8951 = vunpack.c.h.b16 %v8192
    %v8952 = vunpack.c.l.b16 %v8193
    %v8953 = vunpack.c.h.b16 %v8193
    %v8954 = vunpack.c.l.b16 %v8194
    %v8955 = vunpack.c.h.b16 %v8194
    %v8956 = vunpack.c.l.b16 %v8195
    %v8957 = vunpack.c.h.b16 %v8195
    %v8958 = vunpack.c.l.b16 %v8196
    %v8959 = vunpack.c.h.b16 %v8196
    %v8960 = vunpack.c.l.b16 %v8197
    %v8961 = vunpack.c.h.b16 %v8197
    %v8962 = vunpack.c.l.b16 %v8198
    %v8963 = vunpack.c.h.b16 %v8198
    %v8964 = vunpack.c.l.b16 %v8199
    %v8965 = vunpack.c.h.b16 %v8199
    %v8966 = vunpack.c.l.b16 %v8200
    %v8967 = vunpack.c.h.b16 %v8200
    %v8968 = vunpack.c.l.b16 %v8201
    %v8969 = vunpack.c.h.b16 %v8201
    %v8970 = vunpack.c.l.b16 %v8202
    %v8971 = vunpack.c.h.b16 %v8202
    %v8972 = vunpack.c.l.b16 %v8203
    %v8973 = vunpack.c.h.b16 %v8203
    %v8974 = vunpack.c.l.b16 %v8204
    %v8975 = vunpack.c.h.b16 %v8204
    %v8976 = vunpack.c.l.b16 %v8205
    %v8977 = vunpack.c.h.b16 %v8205
    %v8978 = vunpack.c.l.b16 %v8206
    %v8979 = vunpack.c.h.b16 %v8206
    %v8980 = vunpack.c.l.b16 %v8207
    %v8981 = vunpack.c.h.b16 %v8207
    %v8982 = vunpack.c.l.b16 %v8208
    %v8983 = vunpack.c.h.b16 %v8208
    %v8984 = vunpack.c.l.b16 %v8209
    %v8985 = vunpack.c.h.b16 %v8209
    %v8986 = vpack.c.b16 %v8482, %v8474
    %v8987 = vpack.c.b16 %v8483, %v8475
    %v8988 = vpack.c.b16 %v8484, %v8476
    %v8989 = vpack.c.b16 %v8485, %v8477
    %v8990 = vpack.c.b16 %v8486, %v8478
    %v8991 = vpack.c.b16 %v8487, %v8479
    %v8992 = vpack.c.b16 %v8488, %v8480
    %v8993 = vpack.c.b16 %v8489, %v8481
    %v8994 = vpack.c.b16 %v8498, %v8490
    %v8995 = vpack.c.b16 %v8499, %v8491
    %v8996 = vpack.c.b16 %v8500, %v8492
    %v8997 = vpack.c.b16 %v8501, %v8493
    %v8998 = vpack.c.b16 %v8502, %v8494
    %v8999 = vpack.c.b16 %v8503, %v8495
    %v9000 = vpack.c.b16 %v8504, %v8496
    %v9001 = vpack.c.b16 %v8505, %v8497
    %v9002 = vpack.c.b16 %v8514, %v8506
    %v9003 = vpack.c.b16 %v8515, %v8507
    %v9004 = vpack.c.b16 %v8516, %v8508
    %v9005 = vpack.c.b16 %v8517, %v8509
    %v9006 = vpack.c.b16 %v8518, %v8510
    %v9007 = vpack.c.b16 %v8519, %v8511
    %v9008 = vpack.c.b16 %v8520, %v8512
    %v9009 = vpack.c.b16 %v8521, %v8513
    %v9010 = vpack.c.b16 %v8530, %v8522
    %v9011 = vpack.c.b16 %v8531, %v8523
    %v9012 = vpack.c.b16 %v8532, %v8524
    %v9013 = vpack.c.b16 %v8533, %v8525
    %v9014 = vpack.c.b16 %v8534, %v8526
    %v9015 = vpack.c.b16 %v8535, %v8527
    %v9016 = vpack.c.b16 %v8536, %v8528
    %v9017 = vpack.c.b16 %v8537, %v8529
    %v9018 = vpack.c.b16 %v8546, %v8538
    %v9019 = vpack.c.b16 %v8547, %v8539
    %v9020 = vpack.c.b16 %v8548, %v8540
    %v9021 = vpack.c.b16 %v8549, %v8541
    %v9022 = vpack.c.b16 %v8550, %v8542
    %v9023 = vpack.c.b16 %v8551, %v8543
    %v9024 = vpack.c.b16 %v8552, %v8544
    %v9025 = vpack.c.b16 %v8553, %v8545
    %v9026 = vpack.c.b16 %v8562, %v8554
    %v9027 = vpack.c.b16 %v8563, %v8555
    %v9028 = vpack.c.b16 %v8564, %v8556
    %v9029 = vpack.c.b16 %v8565, %v8557
    %v9030 = vpack.c.b16 %v8566, %v8558
    %v9031 = vpack.c.b16 %v8567, %v8559
    %v9032 = vpack.c.b16 %v8568, %v8560
    %v9033 = vpack.c.b16 %v8569, %v8561
    %v9034 = vpack.c.b16 %v8578, %v8570
    %v9035 = vpack.c.b16 %v8579, %v8571
    %v9036 = vpack.c.b16 %v8580, %v8572
    %v9037 = vpack.c.b16 %v8581, %v8573
    %v9038 = vpack.c.b16 %v8582, %v8574
    %v9039 = vpack.c.b16 %v8583, %v8575
    %v9040 = vpack.c.b16 %v8584, %v8576
    %v9041 = vpack.c.b16 %v8585, %v8577
    %v9042 = vpack.c.b16 %v8594, %v8586
    %v9043 = vpack.c.b16 %v8595, %v8587
    %v9044 = vpack.c.b16 %v8596, %v8588
    %v9045 = vpack.c.b16 %v8597, %v8589
    %v9046 = vpack.c.b16 %v8598, %v8590
    %v9047 = vpack.c.b16 %v8599, %v8591
    %v9048 = vpack.c.b16 %v8600, %v8592
    %v9049 = vpack.c.b16 %v8601, %v8593
    %v9050 = vpack.c.b16 %v8610, %v8602
    %v9051 = vpack.c.b16 %v8611, %v8603
    %v9052 = vpack.c.b16 %v8612, %v8604
    %v9053 = vpack.c.b16 %v8613, %v8605
    %v9054 = vpack.c.b16 %v8614, %v8606
    %v9055 = vpack.c.b16 %v8615, %v8607
    %v9056 = vpack.c.b16 %v8616, %v8608
    %v9057 = vpack.c.b16 %v8617, %v8609
    %v9058 = vpack.c.b16 %v8626, %v8618
    %v9059 = vpack.c.b16 %v8627, %v8619
    %v9060 = vpack.c.b16 %v8628, %v8620
    %v9061 = vpack.c.b16 %v8629, %v8621
    %v9062 = vpack.c.b16 %v8630, %v8622
    %v9063 = vpack.c.b16 %v8631, %v8623
    %v9064 = vpack.c.b16 %v8632, %v8624
    %v9065 = vpack.c.b16 %v8633, %v8625
    %v9066 = vpack.c.b16 %v8642, %v8634
    %v9067 = vpack.c.b16 %v8643, %v8635
    %v9068 = vpack.c.b16 %v8644, %v8636
    %v9069 = vpack.c.b16 %v8645, %v8637
    %v9070 = vpack.c.b16 %v8646, %v8638
    %v9071 = vpack.c.b16 %v8647, %v8639
    %v9072 = vpack.c.b16 %v8648, %v8640
    %v9073 = vpack.c.b16 %v8649, %v8641
    %v9074 = vpack.c.b16 %v8658, %v8650
    %v9075 = vpack.c.b16 %v8659, %v8651
    %v9076 = vpack.c.b16 %v8660, %v8652
    %v9077 = vpack.c.b16 %v8661, %v8653
    %v9078 = vpack.c.b16 %v8662, %v8654
    %v9079 = vpack.c.b16 %v8663, %v8655
    %v9080 = vpack.c.b16 %v8664, %v8656
    %v9081 = vpack.c.b16 %v8665, %v8657
    %v9082 = vpack.c.b16 %v8674, %v8666
    %v9083 = vpack.c.b16 %v8675, %v8667
    %v9084 = vpack.c.b16 %v8676, %v8668
    %v9085 = vpack.c.b16 %v8677, %v8669
    %v9086 = vpack.c.b16 %v8678, %v8670
    %v9087 = vpack.c.b16 %v8679, %v8671
    %v9088 = vpack.c.b16 %v8680, %v8672
    %v9089 = vpack.c.b16 %v8681, %v8673
    %v9090 = vpack.c.b16 %v8690, %v8682
    %v9091 = vpack.c.b16 %v8691, %v8683
    %v9092 = vpack.c.b16 %v8692, %v8684
    %v9093 = vpack.c.b16 %v8693, %v8685
    %v9094 = vpack.c.b16 %v8694, %v8686
    %v9095 = vpack.c.b16 %v8695, %v8687
    %v9096 = vpack.c.b16 %v8696, %v8688
    %v9097 = vpack.c.b16 %v8697, %v8689
    %v9098 = vpack.c.b16 %v8706, %v8698
    %v9099 = vpack.c.b16 %v8707, %v8699
    %v9100 = vpack.c.b16 %v8708, %v8700
    %v9101 = vpack.c.b16 %v8709, %v8701
    %v9102 = vpack.c.b16 %v8710, %v8702
    %v9103 = vpack.c.b16 %v8711, %v8703
    %v9104 = vpack.c.b16 %v8712, %v8704
    %v9105 = vpack.c.b16 %v8713, %v8705
    %v9106 = vpack.c.b16 %v8722, %v8714
    %v9107 = vpack.c.b16 %v8723, %v8715
    %v9108 = vpack.c.b16 %v8724, %v8716
    %v9109 = vpack.c.b16 %v8725, %v8717
    %v9110 = vpack.c.b16 %v8726, %v8718
    %v9111 = vpack.c.b16 %v8727, %v8719
    %v9112 = vpack.c.b16 %v8728, %v8720
    %v9113 = vpack.c.b16 %v8729, %v8721
    %v9114 = vpack.c.b16 %v8738, %v8730
    %v9115 = vpack.c.b16 %v8739, %v8731
    %v9116 = vpack.c.b16 %v8740, %v8732
    %v9117 = vpack.c.b16 %v8741, %v8733
    %v9118 = vpack.c.b16 %v8742, %v8734
    %v9119 = vpack.c.b16 %v8743, %v8735
    %v9120 = vpack.c.b16 %v8744, %v8736
    %v9121 = vpack.c.b16 %v8745, %v8737
    %v9122 = vpack.c.b16 %v8754, %v8746
    %v9123 = vpack.c.b16 %v8755, %v8747
    %v9124 = vpack.c.b16 %v8756, %v8748
    %v9125 = vpack.c.b16 %v8757, %v8749
    %v9126 = vpack.c.b16 %v8758, %v8750
    %v9127 = vpack.c.b16 %v8759, %v8751
    %v9128 = vpack.c.b16 %v8760, %v8752
    %v9129 = vpack.c.b16 %v8761, %v8753
    %v9130 = vpack.c.b16 %v8770, %v8762
    %v9131 = vpack.c.b16 %v8771, %v8763
    %v9132 = vpack.c.b16 %v8772, %v8764
    %v9133 = vpack.c.b16 %v8773, %v8765
    %v9134 = vpack.c.b16 %v8774, %v8766
    %v9135 = vpack.c.b16 %v8775, %v8767
    %v9136 = vpack.c.b16 %v8776, %v8768
    %v9137 = vpack.c.b16 %v8777, %v8769
    %v9138 = vpack.c.b16 %v8786, %v8778
    %v9139 = vpack.c.b16 %v8787, %v8779
    %v9140 = vpack.c.b16 %v8788, %v8780
    %v9141 = vpack.c.b16 %v8789, %v8781
    %v9142 = vpack.c.b16 %v8790, %v8782
    %v9143 = vpack.c.b16 %v8791, %v8783
    %v9144 = vpack.c.b16 %v8792, %v8784
    %v9145 = vpack.c.b16 %v8793, %v8785
    %v9146 = vpack.c.b16 %v8802, %v8794
    %v9147 = vpack.c.b16 %v8803, %v8795
    %v9148 = vpack.c.b16 %v8804, %v8796
    %v9149 = vpack.c.b16 %v8805, %v8797
    %v9150 = vpack.c.b16 %v8806, %v8798
    %v9151 = vpack.c.b16 %v8807, %v8799
    %v9152 = vpack.c.b16 %v8808, %v8800
    %v9153 = vpack.c.b16 %v8809, %v8801
    %v9154 = vpack.c.b16 %v8818, %v8810
    %v9155 = vpack.c.b16 %v8819, %v8811
    %v9156 = vpack.c.b16 %v8820, %v8812
    %v9157 = vpack.c.b16 %v8821, %v8813
    %v9158 = vpack.c.b16 %v8822, %v8814
    %v9159 = vpack.c.b16 %v8823, %v8815
    %v9160 = vpack.c.b16 %v8824, %v8816
    %v9161 = vpack.c.b16 %v8825, %v8817
    %v9162 = vpack.c.b16 %v8834, %v8826
    %v9163 = vpack.c.b16 %v8835, %v8827
    %v9164 = vpack.c.b16 %v8836, %v8828
    %v9165 = vpack.c.b16 %v8837, %v8829
    %v9166 = vpack.c.b16 %v8838, %v8830
    %v9167 = vpack.c.b16 %v8839, %v8831
    %v9168 = vpack.c.b16 %v8840, %v8832
    %v9169 = vpack.c.b16 %v8841, %v8833
    %v9170 = vpack.c.b16 %v8850, %v8842
    %v9171 = vpack.c.b16 %v8851, %v8843
    %v9172 = vpack.c.b16 %v8852, %v8844
    %v9173 = vpack.c.b16 %v8853, %v8845
    %v9174 = vpack.c.b16 %v8854, %v8846
    %v9175 = vpack.c.b16 %v8855, %v8847
    %v9176 = vpack.c.b16 %v8856, %v8848
    %v9177 = vpack.c.b16 %v8857, %v8849
    %v9178 = vpack.c.b16 %v8866, %v8858
    %v9179 = vpack.c.b16 %v8867, %v8859
    %v9180 = vpack.c.b16 %v8868, %v8860
    %v9181 = vpack.c.b16 %v8869, %v8861
    %v9182 = vpack.c.b16 %v8870, %v8862
    %v9183 = vpack.c.b16 %v8871, %v8863
    %v9184 = vpack.c.b16 %v8872, %v8864
    %v9185 = vpack.c.b16 %v8873, %v8865
    %v9186 = vpack.c.b16 %v8882, %v8874
    %v9187 = vpack.c.b16 %v8883, %v8875
    %v9188 = vpack.c.b16 %v8884, %v8876
    %v9189 = vpack.c.b16 %v8885, %v8877
    %v9190 = vpack.c.b16 %v8886, %v8878
    %v9191 = vpack.c.b16 %v8887, %v8879
    %v9192 = vpack.c.b16 %v8888, %v8880
    %v9193 = vpack.c.b16 %v8889, %v8881
    %v9194 = vpack.c.b16 %v8898, %v8890
    %v9195 = vpack.c.b16 %v8899, %v8891
    %v9196 = vpack.c.b16 %v8900, %v8892
    %v9197 = vpack.c.b16 %v8901, %v8893
    %v9198 = vpack.c.b16 %v8902, %v8894
    %v9199 = vpack.c.b16 %v8903, %v8895
    %v9200 = vpack.c.b16 %v8904, %v8896
    %v9201 = vpack.c.b16 %v8905, %v8897
    %v9202 = vpack.c.b16 %v8914, %v8906
    %v9203 = vpack.c.b16 %v8915, %v8907
    %v9204 = vpack.c.b16 %v8916, %v8908
    %v9205 = vpack.c.b16 %v8917, %v8909
    %v9206 = vpack.c.b16 %v8918, %v8910
    %v9207 = vpack.c.b16 %v8919, %v8911
    %v9208 = vpack.c.b16 %v8920, %v8912
    %v9209 = vpack.c.b16 %v8921, %v8913
    %v9210 = vpack.c.b16 %v8930, %v8922
    %v9211 = vpack.c.b16 %v8931, %v8923
    %v9212 = vpack.c.b16 %v8932, %v8924
    %v9213 = vpack.c.b16 %v8933, %v8925
    %v9214 = vpack.c.b16 %v8934, %v8926
    %v9215 = vpack.c.b16 %v8935, %v8927
    %v9216 = vpack.c.b16 %v8936, %v8928
    %v9217 = vpack.c.b16 %v8937, %v8929
    %v9218 = vpack.c.b16 %v8946, %v8938
    %v9219 = vpack.c.b16 %v8947, %v8939
    %v9220 = vpack.c.b16 %v8948, %v8940
    %v9221 = vpack.c.b16 %v8949, %v8941
    %v9222 = vpack.c.b16 %v8950, %v8942
    %v9223 = vpack.c.b16 %v8951, %v8943
    %v9224 = vpack.c.b16 %v8952, %v8944
    %v9225 = vpack.c.b16 %v8953, %v8945
    %v9226 = vpack.c.b16 %v8962, %v8954
    %v9227 = vpack.c.b16 %v8963, %v8955
    %v9228 = vpack.c.b16 %v8964, %v8956
    %v9229 = vpack.c.b16 %v8965, %v8957
    %v9230 = vpack.c.b16 %v8966, %v8958
    %v9231 = vpack.c.b16 %v8967, %v8959
    %v9232 = vpack.c.b16 %v8968, %v8960
    %v9233 = vpack.c.b16 %v8969, %v8961
    %v9234 = vpack.c.b16 %v8978, %v8970
    %v9235 = vpack.c.b16 %v8979, %v8971
    %v9236 = vpack.c.b16 %v8980, %v8972
    %v9237 = vpack.c.b16 %v8981, %v8973
    %v9238 = vpack.c.b16 %v8982, %v8974
    %v9239 = vpack.c.b16 %v8983, %v8975
    %v9240 = vpack.c.b16 %v8984, %v8976
    %v9241 = vpack.c.b16 %v8985, %v8977
    %9498 = vmatprep.subr.bf16.mxu0 %v9043
    %9499 = vmatpush1.bf16.msra.mxu0 %v9042
    %9500 = vmatprep.subr.bf16.mxu0 %v9035
    %9501 = vmatpush1.bf16.msra.mxu0 %v9034
    %9502 = vmatprep.subr.bf16.mxu0 %v9027
    %9503 = vmatpush1.bf16.msra.mxu0 %v9026
    %9504 = vmatprep.subr.bf16.mxu0 %v9019
    %9505 = vmatpush1.bf16.msra.mxu0 %v9018
    %9506 = vmatprep.subr.bf16.mxu0 %v9011
    %9507 = vmatpush1.bf16.msra.mxu0 %v9010
    %9508 = vmatprep.subr.bf16.mxu0 %v9003
    %9509 = vmatpush1.bf16.msra.mxu0 %v9002
    %9510 = vmatprep.subr.bf16.mxu0 %v8995
    %9511 = vmatpush1.bf16.msra.mxu0 %v8994
    %9512 = vmatprep.subr.bf16.mxu0 %v8987
    %9513 = vmatpush1.bf16.msra.mxu0 %v8986
    %9514 = vmatprep.subr.bf16.mxu0 %v9107
    %9515 = vmatpush2.bf16.msra.mxu0 %v9106
    %9516 = vmatprep.subr.bf16.mxu0 %v9099
    %9517 = vmatpush2.bf16.msra.mxu0 %v9098
    %9518 = vmatprep.subr.bf16.mxu0 %v9091
    %9519 = vmatpush2.bf16.msra.mxu0 %v9090
    %9520 = vmatprep.subr.bf16.mxu0 %v9083
    %9521 = vmatpush2.bf16.msra.mxu0 %v9082
    %9522 = vmatprep.subr.bf16.mxu0 %v9075
    %9523 = vmatpush2.bf16.msra.mxu0 %v9074
    %9524 = vmatprep.subr.bf16.mxu0 %v9067
    %9525 = vmatpush2.bf16.msra.mxu0 %v9066
    %9526 = vmatprep.subr.bf16.mxu0 %v9059
    %9527 = vmatpush2.bf16.msra.mxu0 %v9058
    %9528 = vmatprep.subr.bf16.mxu0 %v9051
    %9529 = vmatpush2.bf16.msra.mxu0 %v9050
    %9530 = vmatprep.mubr.bf16.mxu0 %v8211
    %9531 = vmatmul.mubr.bf16.gmra.mxu0 %v8210
    %v9532 = vpop.f32.mrf.mxu0
    %v9533 = vadd.f32 0.0, %v9532
    %v9534 = vpop.f32.mrf.mxu0
    %v9535 = vadd.f32 0.0, %v9534
    %v9536 = vpop.f32.mrf.mxu0
    %v9537 = vadd.f32 0.0, %v9536
    %v9538 = vpop.f32.mrf.mxu0
    %v9539 = vadd.f32 0.0, %v9538
    %9540 = vmatprep.mubr.bf16.mxu0 %v8215
    %9541 = vmatmul.mubr.bf16.gmra.mxu0 %v8214
    %v9542 = vpop.f32.mrf.mxu0
    %v9543 = vadd.f32 0.0, %v9542
    %v9544 = vpop.f32.mrf.mxu0
    %v9545 = vadd.f32 0.0, %v9544
    %v9546 = vpop.f32.mrf.mxu0
    %v9547 = vadd.f32 0.0, %v9546
    %v9548 = vpop.f32.mrf.mxu0
    %v9549 = vadd.f32 0.0, %v9548
    %9550 = vdwg.mxu0
    %9551 = vmatprep.subr.bf16.mxu0 %v9171
    %9552 = vmatpush1.bf16.msra.mxu0 %v9170
    %9553 = vmatprep.subr.bf16.mxu0 %v9163
    %9554 = vmatpush1.bf16.msra.mxu0 %v9162
    %9555 = vmatprep.subr.bf16.mxu0 %v9155
    %9556 = vmatpush1.bf16.msra.mxu0 %v9154
    %9557 = vmatprep.subr.bf16.mxu0 %v9147
    %9558 = vmatpush1.bf16.msra.mxu0 %v9146
    %9559 = vmatprep.subr.bf16.mxu0 %v9139
    %9560 = vmatpush1.bf16.msra.mxu0 %v9138
    %9561 = vmatprep.subr.bf16.mxu0 %v9131
    %9562 = vmatpush1.bf16.msra.mxu0 %v9130
    %9563 = vmatprep.subr.bf16.mxu0 %v9123
    %9564 = vmatpush1.bf16.msra.mxu0 %v9122
    %9565 = vmatprep.subr.bf16.mxu0 %v9115
    %9566 = vmatpush1.bf16.msra.mxu0 %v9114
    %9567 = vmatprep.subr.bf16.mxu0 %v9235
    %9568 = vmatpush2.bf16.msra.mxu0 %v9234
    %9569 = vmatprep.subr.bf16.mxu0 %v9227
    %9570 = vmatpush2.bf16.msra.mxu0 %v9226
    %9571 = vmatprep.subr.bf16.mxu0 %v9219
    %9572 = vmatpush2.bf16.msra.mxu0 %v9218
    %9573 = vmatprep.subr.bf16.mxu0 %v9211
    %9574 = vmatpush2.bf16.msra.mxu0 %v9210
    %9575 = vmatprep.subr.bf16.mxu0 %v9203
    %9576 = vmatpush2.bf16.msra.mxu0 %v9202
    %9577 = vmatprep.subr.bf16.mxu0 %v9195
    %9578 = vmatpush2.bf16.msra.mxu0 %v9194
    %9579 = vmatprep.subr.bf16.mxu0 %v9187
    %9580 = vmatpush2.bf16.msra.mxu0 %v9186
    %9581 = vmatprep.subr.bf16.mxu0 %v9179
    %9582 = vmatpush2.bf16.msra.mxu0 %v9178
    %9583 = vmatprep.mubr.bf16.mxu0 %v8213
    %9584 = vmatmul.mubr.bf16.gmra.mxu0 %v8212
    %v9585 = vpop.f32.mrf.mxu0
    %v9586 = vadd.f32 %v9533, %v9585
    %v9587 = vpop.f32.mrf.mxu0
    %v9588 = vadd.f32 %v9535, %v9587
    %v9589 = vpop.f32.mrf.mxu0
    %v9590 = vadd.f32 %v9537, %v9589
    %v9591 = vpop.f32.mrf.mxu0
    %v9592 = vadd.f32 %v9539, %v9591
    %9593 = vmatprep.mubr.bf16.mxu0 %v8217
    %9594 = vmatmul.mubr.bf16.gmra.mxu0 %v8216
    %v9595 = vpop.f32.mrf.mxu0
    %v9596 = vadd.f32 %v9543, %v9595
    %v9597 = vpop.f32.mrf.mxu0
    %v9598 = vadd.f32 %v9545, %v9597
    %v9599 = vpop.f32.mrf.mxu0
    %v9600 = vadd.f32 %v9547, %v9599
    %v9601 = vpop.f32.mrf.mxu0
    %v9602 = vadd.f32 %v9549, %v9601
    %9603 = vdwg.mxu0
    %9604 = vmatprep.subr.bf16.mxu0 %v9045
    %9605 = vmatpush1.bf16.msra.mxu0 %v9044
    %9606 = vmatprep.subr.bf16.mxu0 %v9037
    %9607 = vmatpush1.bf16.msra.mxu0 %v9036
    %9608 = vmatprep.subr.bf16.mxu0 %v9029
    %9609 = vmatpush1.bf16.msra.mxu0 %v9028
    %9610 = vmatprep.subr.bf16.mxu0 %v9021
    %9611 = vmatpush1.bf16.msra.mxu0 %v9020
    %9612 = vmatprep.subr.bf16.mxu0 %v9013
    %9613 = vmatpush1.bf16.msra.mxu0 %v9012
    %9614 = vmatprep.subr.bf16.mxu0 %v9005
    %9615 = vmatpush1.bf16.msra.mxu0 %v9004
    %9616 = vmatprep.subr.bf16.mxu0 %v8997
    %9617 = vmatpush1.bf16.msra.mxu0 %v8996
    %9618 = vmatprep.subr.bf16.mxu0 %v8989
    %9619 = vmatpush1.bf16.msra.mxu0 %v8988
    %9620 = vmatprep.subr.bf16.mxu0 %v9109
    %9621 = vmatpush2.bf16.msra.mxu0 %v9108
    %9622 = vmatprep.subr.bf16.mxu0 %v9101
    %9623 = vmatpush2.bf16.msra.mxu0 %v9100
    %9624 = vmatprep.subr.bf16.mxu0 %v9093
    %9625 = vmatpush2.bf16.msra.mxu0 %v9092
    %9626 = vmatprep.subr.bf16.mxu0 %v9085
    %9627 = vmatpush2.bf16.msra.mxu0 %v9084
    %9628 = vmatprep.subr.bf16.mxu0 %v9077
    %9629 = vmatpush2.bf16.msra.mxu0 %v9076
    %9630 = vmatprep.subr.bf16.mxu0 %v9069
    %9631 = vmatpush2.bf16.msra.mxu0 %v9068
    %9632 = vmatprep.subr.bf16.mxu0 %v9061
    %9633 = vmatpush2.bf16.msra.mxu0 %v9060
    %9634 = vmatprep.subr.bf16.mxu0 %v9053
    %9635 = vmatpush2.bf16.msra.mxu0 %v9052
    %9636 = vmatprep.mubr.bf16.mxu0 %v8211
    %9637 = vmatmul.mubr.bf16.gmra.mxu0 %v8210
    %v9638 = vpop.f32.mrf.mxu0
    %v9639 = vadd.f32 0.0, %v9638
    %v9640 = vpop.f32.mrf.mxu0
    %v9641 = vadd.f32 0.0, %v9640
    %v9642 = vpop.f32.mrf.mxu0
    %v9643 = vadd.f32 0.0, %v9642
    %v9644 = vpop.f32.mrf.mxu0
    %v9645 = vadd.f32 0.0, %v9644
    %9646 = vmatprep.mubr.bf16.mxu0 %v8215
    %9647 = vmatmul.mubr.bf16.gmra.mxu0 %v8214
    %v9648 = vpop.f32.mrf.mxu0
    %v9649 = vadd.f32 0.0, %v9648
    %v9650 = vpop.f32.mrf.mxu0
    %v9651 = vadd.f32 0.0, %v9650
    %v9652 = vpop.f32.mrf.mxu0
    %v9653 = vadd.f32 0.0, %v9652
    %v9654 = vpop.f32.mrf.mxu0
    %v9655 = vadd.f32 0.0, %v9654
    %9656 = vdwg.mxu0
    %9657 = vmatprep.subr.bf16.mxu0 %v9173
    %9658 = vmatpush1.bf16.msra.mxu0 %v9172
    %9659 = vmatprep.subr.bf16.mxu0 %v9165
    %9660 = vmatpush1.bf16.msra.mxu0 %v9164
    %9661 = vmatprep.subr.bf16.mxu0 %v9157
    %9662 = vmatpush1.bf16.msra.mxu0 %v9156
    %9663 = vmatprep.subr.bf16.mxu0 %v9149
    %9664 = vmatpush1.bf16.msra.mxu0 %v9148
    %9665 = vmatprep.subr.bf16.mxu0 %v9141
    %9666 = vmatpush1.bf16.msra.mxu0 %v9140
    %9667 = vmatprep.subr.bf16.mxu0 %v9133
    %9668 = vmatpush1.bf16.msra.mxu0 %v9132
    %9669 = vmatprep.subr.bf16.mxu0 %v9125
    %9670 = vmatpush1.bf16.msra.mxu0 %v9124
    %9671 = vmatprep.subr.bf16.mxu0 %v9117
    %9672 = vmatpush1.bf16.msra.mxu0 %v9116
    %9673 = vmatprep.subr.bf16.mxu0 %v9237
    %9674 = vmatpush2.bf16.msra.mxu0 %v9236
    %9675 = vmatprep.subr.bf16.mxu0 %v9229
    %9676 = vmatpush2.bf16.msra.mxu0 %v9228
    %9677 = vmatprep.subr.bf16.mxu0 %v9221
    %9678 = vmatpush2.bf16.msra.mxu0 %v9220
    %9679 = vmatprep.subr.bf16.mxu0 %v9213
    %9680 = vmatpush2.bf16.msra.mxu0 %v9212
    %9681 = vmatprep.subr.bf16.mxu0 %v9205
    %9682 = vmatpush2.bf16.msra.mxu0 %v9204
    %9683 = vmatprep.subr.bf16.mxu0 %v9197
    %9684 = vmatpush2.bf16.msra.mxu0 %v9196
    %9685 = vmatprep.subr.bf16.mxu0 %v9189
    %9686 = vmatpush2.bf16.msra.mxu0 %v9188
    %9687 = vmatprep.subr.bf16.mxu0 %v9181
    %9688 = vmatpush2.bf16.msra.mxu0 %v9180
    %9689 = vmatprep.mubr.bf16.mxu0 %v8213
    %9690 = vmatmul.mubr.bf16.gmra.mxu0 %v8212
    %v9691 = vpop.f32.mrf.mxu0
    %v9692 = vadd.f32 %v9639, %v9691
    %v9693 = vpop.f32.mrf.mxu0
    %v9694 = vadd.f32 %v9641, %v9693
    %v9695 = vpop.f32.mrf.mxu0
    %v9696 = vadd.f32 %v9643, %v9695
    %v9697 = vpop.f32.mrf.mxu0
    %v9698 = vadd.f32 %v9645, %v9697
    %9699 = vmatprep.mubr.bf16.mxu0 %v8217
    %9700 = vmatmul.mubr.bf16.gmra.mxu0 %v8216
    %v9701 = vpop.f32.mrf.mxu0
    %v9702 = vadd.f32 %v9649, %v9701
    %v9703 = vpop.f32.mrf.mxu0
    %v9704 = vadd.f32 %v9651, %v9703
    %v9705 = vpop.f32.mrf.mxu0
    %v9706 = vadd.f32 %v9653, %v9705
    %v9707 = vpop.f32.mrf.mxu0
    %v9708 = vadd.f32 %v9655, %v9707
    %9709 = vdwg.mxu0
    %9710 = vmatprep.subr.bf16.mxu0 %v9047
    %9711 = vmatpush1.bf16.msra.mxu0 %v9046
    %9712 = vmatprep.subr.bf16.mxu0 %v9039
    %9713 = vmatpush1.bf16.msra.mxu0 %v9038
    %9714 = vmatprep.subr.bf16.mxu0 %v9031
    %9715 = vmatpush1.bf16.msra.mxu0 %v9030
    %9716 = vmatprep.subr.bf16.mxu0 %v9023
    %9717 = vmatpush1.bf16.msra.mxu0 %v9022
    %9718 = vmatprep.subr.bf16.mxu0 %v9015
    %9719 = vmatpush1.bf16.msra.mxu0 %v9014
    %9720 = vmatprep.subr.bf16.mxu0 %v9007
    %9721 = vmatpush1.bf16.msra.mxu0 %v9006
    %9722 = vmatprep.subr.bf16.mxu0 %v8999
    %9723 = vmatpush1.bf16.msra.mxu0 %v8998
    %9724 = vmatprep.subr.bf16.mxu0 %v8991
    %9725 = vmatpush1.bf16.msra.mxu0 %v8990
    %9726 = vmatprep.subr.bf16.mxu0 %v9111
    %9727 = vmatpush2.bf16.msra.mxu0 %v9110
    %9728 = vmatprep.subr.bf16.mxu0 %v9103
    %9729 = vmatpush2.bf16.msra.mxu0 %v9102
    %9730 = vmatprep.subr.bf16.mxu0 %v9095
    %9731 = vmatpush2.bf16.msra.mxu0 %v9094
    %9732 = vmatprep.subr.bf16.mxu0 %v9087
    %9733 = vmatpush2.bf16.msra.mxu0 %v9086
    %9734 = vmatprep.subr.bf16.mxu0 %v9079
    %9735 = vmatpush2.bf16.msra.mxu0 %v9078
    %9736 = vmatprep.subr.bf16.mxu0 %v9071
    %9737 = vmatpush2.bf16.msra.mxu0 %v9070
    %9738 = vmatprep.subr.bf16.mxu0 %v9063
    %9739 = vmatpush2.bf16.msra.mxu0 %v9062
    %9740 = vmatprep.subr.bf16.mxu0 %v9055
    %9741 = vmatpush2.bf16.msra.mxu0 %v9054
    %9742 = vmatprep.mubr.bf16.mxu0 %v8211
    %9743 = vmatmul.mubr.bf16.gmra.mxu0 %v8210
    %v9744 = vpop.f32.mrf.mxu0
    %v9745 = vadd.f32 0.0, %v9744
    %v9746 = vpop.f32.mrf.mxu0
    %v9747 = vadd.f32 0.0, %v9746
    %v9748 = vpop.f32.mrf.mxu0
    %v9749 = vadd.f32 0.0, %v9748
    %v9750 = vpop.f32.mrf.mxu0
    %v9751 = vadd.f32 0.0, %v9750
    %9752 = vmatprep.mubr.bf16.mxu0 %v8215
    %9753 = vmatmul.mubr.bf16.gmra.mxu0 %v8214
    %v9754 = vpop.f32.mrf.mxu0
    %v9755 = vadd.f32 0.0, %v9754
    %v9756 = vpop.f32.mrf.mxu0
    %v9757 = vadd.f32 0.0, %v9756
    %v9758 = vpop.f32.mrf.mxu0
    %v9759 = vadd.f32 0.0, %v9758
    %v9760 = vpop.f32.mrf.mxu0
    %v9761 = vadd.f32 0.0, %v9760
    %9762 = vdwg.mxu0
    %9763 = vmatprep.subr.bf16.mxu0 %v9175
    %9764 = vmatpush1.bf16.msra.mxu0 %v9174
    %9765 = vmatprep.subr.bf16.mxu0 %v9167
    %9766 = vmatpush1.bf16.msra.mxu0 %v9166
    %9767 = vmatprep.subr.bf16.mxu0 %v9159
    %9768 = vmatpush1.bf16.msra.mxu0 %v9158
    %9769 = vmatprep.subr.bf16.mxu0 %v9151
    %9770 = vmatpush1.bf16.msra.mxu0 %v9150
    %9771 = vmatprep.subr.bf16.mxu0 %v9143
    %9772 = vmatpush1.bf16.msra.mxu0 %v9142
    %9773 = vmatprep.subr.bf16.mxu0 %v9135
    %9774 = vmatpush1.bf16.msra.mxu0 %v9134
    %9775 = vmatprep.subr.bf16.mxu0 %v9127
    %9776 = vmatpush1.bf16.msra.mxu0 %v9126
    %9777 = vmatprep.subr.bf16.mxu0 %v9119
    %9778 = vmatpush1.bf16.msra.mxu0 %v9118
    %9779 = vmatprep.subr.bf16.mxu0 %v9239
    %9780 = vmatpush2.bf16.msra.mxu0 %v9238
    %9781 = vmatprep.subr.bf16.mxu0 %v9231
    %9782 = vmatpush2.bf16.msra.mxu0 %v9230
    %9783 = vmatprep.subr.bf16.mxu0 %v9223
    %9784 = vmatpush2.bf16.msra.mxu0 %v9222
    %9785 = vmatprep.subr.bf16.mxu0 %v9215
    %9786 = vmatpush2.bf16.msra.mxu0 %v9214
    %9787 = vmatprep.subr.bf16.mxu0 %v9207
    %9788 = vmatpush2.bf16.msra.mxu0 %v9206
    %9789 = vmatprep.subr.bf16.mxu0 %v9199
    %9790 = vmatpush2.bf16.msra.mxu0 %v9198
    %9791 = vmatprep.subr.bf16.mxu0 %v9191
    %9792 = vmatpush2.bf16.msra.mxu0 %v9190
    %9793 = vmatprep.subr.bf16.mxu0 %v9183
    %9794 = vmatpush2.bf16.msra.mxu0 %v9182
    %9795 = vmatprep.mubr.bf16.mxu0 %v8213
    %9796 = vmatmul.mubr.bf16.gmra.mxu0 %v8212
    %v9797 = vpop.f32.mrf.mxu0
    %v9798 = vadd.f32 %v9745, %v9797
    %v9799 = vpop.f32.mrf.mxu0
    %v9800 = vadd.f32 %v9747, %v9799
    %v9801 = vpop.f32.mrf.mxu0
    %v9802 = vadd.f32 %v9749, %v9801
    %v9803 = vpop.f32.mrf.mxu0
    %v9804 = vadd.f32 %v9751, %v9803
    %9805 = vmatprep.mubr.bf16.mxu0 %v8217
    %9806 = vmatmul.mubr.bf16.gmra.mxu0 %v8216
    %v9807 = vpop.f32.mrf.mxu0
    %v9808 = vadd.f32 %v9755, %v9807
    %v9809 = vpop.f32.mrf.mxu0
    %v9810 = vadd.f32 %v9757, %v9809
    %v9811 = vpop.f32.mrf.mxu0
    %v9812 = vadd.f32 %v9759, %v9811
    %v9813 = vpop.f32.mrf.mxu0
    %v9814 = vadd.f32 %v9761, %v9813
    %9815 = vdwg.mxu0
    %9816 = vmatprep.subr.bf16.mxu0 %v9049
    %9817 = vmatpush1.bf16.msra.mxu0 %v9048
    %9818 = vmatprep.subr.bf16.mxu0 %v9041
    %9819 = vmatpush1.bf16.msra.mxu0 %v9040
    %9820 = vmatprep.subr.bf16.mxu0 %v9033
    %9821 = vmatpush1.bf16.msra.mxu0 %v9032
    %9822 = vmatprep.subr.bf16.mxu0 %v9025
    %9823 = vmatpush1.bf16.msra.mxu0 %v9024
    %9824 = vmatprep.subr.bf16.mxu0 %v9017
    %9825 = vmatpush1.bf16.msra.mxu0 %v9016
    %9826 = vmatprep.subr.bf16.mxu0 %v9009
    %9827 = vmatpush1.bf16.msra.mxu0 %v9008
    %9828 = vmatprep.subr.bf16.mxu0 %v9001
    %9829 = vmatpush1.bf16.msra.mxu0 %v9000
    %9830 = vmatprep.subr.bf16.mxu0 %v8993
    %9831 = vmatpush1.bf16.msra.mxu0 %v8992
    %9832 = vmatprep.subr.bf16.mxu0 %v9113
    %9833 = vmatpush2.bf16.msra.mxu0 %v9112
    %9834 = vmatprep.subr.bf16.mxu0 %v9105
    %9835 = vmatpush2.bf16.msra.mxu0 %v9104
    %9836 = vmatprep.subr.bf16.mxu0 %v9097
    %9837 = vmatpush2.bf16.msra.mxu0 %v9096
    %9838 = vmatprep.subr.bf16.mxu0 %v9089
    %9839 = vmatpush2.bf16.msra.mxu0 %v9088
    %9840 = vmatprep.subr.bf16.mxu0 %v9081
    %9841 = vmatpush2.bf16.msra.mxu0 %v9080
    %9842 = vmatprep.subr.bf16.mxu0 %v9073
    %9843 = vmatpush2.bf16.msra.mxu0 %v9072
    %9844 = vmatprep.subr.bf16.mxu0 %v9065
    %9845 = vmatpush2.bf16.msra.mxu0 %v9064
    %9846 = vmatprep.subr.bf16.mxu0 %v9057
    %9847 = vmatpush2.bf16.msra.mxu0 %v9056
    %9848 = vmatprep.mubr.bf16.mxu0 %v8211
    %9849 = vmatmul.mubr.bf16.gmra.mxu0 %v8210
    %v9850 = vpop.f32.mrf.mxu0
    %v9851 = vadd.f32 0.0, %v9850
    %v9852 = vpop.f32.mrf.mxu0
    %v9853 = vadd.f32 0.0, %v9852
    %v9854 = vpop.f32.mrf.mxu0
    %v9855 = vadd.f32 0.0, %v9854
    %v9856 = vpop.f32.mrf.mxu0
    %v9857 = vadd.f32 0.0, %v9856
    %9858 = vmatprep.mubr.bf16.mxu0 %v8215
    %9859 = vmatmul.mubr.bf16.gmra.mxu0 %v8214
    %v9860 = vpop.f32.mrf.mxu0
    %v9861 = vadd.f32 0.0, %v9860
    %v9862 = vpop.f32.mrf.mxu0
    %v9863 = vadd.f32 0.0, %v9862
    %v9864 = vpop.f32.mrf.mxu0
    %v9865 = vadd.f32 0.0, %v9864
    %v9866 = vpop.f32.mrf.mxu0
    %v9867 = vadd.f32 0.0, %v9866
    %9868 = vdwg.mxu0
    %9869 = vmatprep.subr.bf16.mxu0 %v9177
    %9870 = vmatpush1.bf16.msra.mxu0 %v9176
    %9871 = vmatprep.subr.bf16.mxu0 %v9169
    %9872 = vmatpush1.bf16.msra.mxu0 %v9168
    %9873 = vmatprep.subr.bf16.mxu0 %v9161
    %9874 = vmatpush1.bf16.msra.mxu0 %v9160
    %9875 = vmatprep.subr.bf16.mxu0 %v9153
    %9876 = vmatpush1.bf16.msra.mxu0 %v9152
    %9877 = vmatprep.subr.bf16.mxu0 %v9145
    %9878 = vmatpush1.bf16.msra.mxu0 %v9144
    %9879 = vmatprep.subr.bf16.mxu0 %v9137
    %9880 = vmatpush1.bf16.msra.mxu0 %v9136
    %9881 = vmatprep.subr.bf16.mxu0 %v9129
    %9882 = vmatpush1.bf16.msra.mxu0 %v9128
    %9883 = vmatprep.subr.bf16.mxu0 %v9121
    %9884 = vmatpush1.bf16.msra.mxu0 %v9120
    %9885 = vmatprep.subr.bf16.mxu0 %v9241
    %9886 = vmatpush2.bf16.msra.mxu0 %v9240
    %9887 = vmatprep.subr.bf16.mxu0 %v9233
    %9888 = vmatpush2.bf16.msra.mxu0 %v9232
    %9889 = vmatprep.subr.bf16.mxu0 %v9225
    %9890 = vmatpush2.bf16.msra.mxu0 %v9224
    %9891 = vmatprep.subr.bf16.mxu0 %v9217
    %9892 = vmatpush2.bf16.msra.mxu0 %v9216
    %9893 = vmatprep.subr.bf16.mxu0 %v9209
    %9894 = vmatpush2.bf16.msra.mxu0 %v9208
    %9895 = vmatprep.subr.bf16.mxu0 %v9201
    %9896 = vmatpush2.bf16.msra.mxu0 %v9200
    %9897 = vmatprep.subr.bf16.mxu0 %v9193
    %9898 = vmatpush2.bf16.msra.mxu0 %v9192
    %9899 = vmatprep.subr.bf16.mxu0 %v9185
    %9900 = vmatpush2.bf16.msra.mxu0 %v9184
    %9901 = vmatprep.mubr.bf16.mxu0 %v8213
    %9902 = vmatmul.mubr.bf16.gmra.mxu0 %v8212
    %v9903 = vpop.f32.mrf.mxu0
    %v9904 = vadd.f32 %v9851, %v9903
    %v9905 = vpop.f32.mrf.mxu0
    %v9906 = vadd.f32 %v9853, %v9905
    %v9907 = vpop.f32.mrf.mxu0
    %v9908 = vadd.f32 %v9855, %v9907
    %v9909 = vpop.f32.mrf.mxu0
    %v9910 = vadd.f32 %v9857, %v9909
    %9911 = vmatprep.mubr.bf16.mxu0 %v8217
    %9912 = vmatmul.mubr.bf16.gmra.mxu0 %v8216
    %v9913 = vpop.f32.mrf.mxu0
    %v9914 = vadd.f32 %v9861, %v9913
    %v9915 = vpop.f32.mrf.mxu0
    %v9916 = vadd.f32 %v9863, %v9915
    %v9917 = vpop.f32.mrf.mxu0
    %v9918 = vadd.f32 %v9865, %v9917
    %v9919 = vpop.f32.mrf.mxu0
    %v9920 = vadd.f32 %v9867, %v9919
    %9921 = vdwg.mxu0
    %v9922 = vadd.f32 %v7528, %v9586
    %v9923 = vadd.f32 %v7530, %v9588
    %v9924 = vadd.f32 %v7634, %v9692
    %v9925 = vadd.f32 %v7636, %v9694
    %v9926 = vadd.f32 %v7740, %v9798
    %v9927 = vadd.f32 %v7742, %v9800
    %v9928 = vadd.f32 %v7846, %v9904
    %v9929 = vadd.f32 %v7848, %v9906
    %v9930 = vadd.f32 %v7532, %v9590
    %v9931 = vadd.f32 %v7534, %v9592
    %v9932 = vadd.f32 %v7638, %v9696
    %v9933 = vadd.f32 %v7640, %v9698
    %v9934 = vadd.f32 %v7744, %v9802
    %v9935 = vadd.f32 %v7746, %v9804
    %v9936 = vadd.f32 %v7850, %v9908
    %v9937 = vadd.f32 %v7852, %v9910
    %v9938 = vadd.f32 %v7538, %v9596
    %v9939 = vadd.f32 %v7540, %v9598
    %v9940 = vadd.f32 %v7644, %v9702
    %v9941 = vadd.f32 %v7646, %v9704
    %v9942 = vadd.f32 %v7750, %v9808
    %v9943 = vadd.f32 %v7752, %v9810
    %v9944 = vadd.f32 %v7856, %v9914
    %v9945 = vadd.f32 %v7858, %v9916
    %v9946 = vadd.f32 %v7542, %v9600
    %v9947 = vadd.f32 %v7544, %v9602
    %v9948 = vadd.f32 %v7648, %v9706
    %v9949 = vadd.f32 %v7650, %v9708
    %v9950 = vadd.f32 %v7754, %v9812
    %v9951 = vadd.f32 %v7756, %v9814
    %v9952 = vadd.f32 %v7860, %v9918
    %v9953 = vadd.f32 %v7862, %v9920
    %v9954 = vld [vmem:[%s4] sm:$0xff]
    %v9956 = vlaneseq
    %v9957 = vshrl.u32 %v9956, 7
    %v9958 = vsub.s32 0, %v9957
    %v9959 = vrot.slane %v9954, %v9958
    %v9960 = vlaneseq
    %v9961 = vshrl.u32 %v9960, 7
    %v9962 = vsub.s32 1, %v9961
    %v9963 = vrot.slane %v9954, %v9962
    %v9964 = vlaneseq
    %v9965 = vshrl.u32 %v9964, 7
    %v9966 = vsub.s32 2, %v9965
    %v9967 = vrot.slane %v9954, %v9966
    %v9968 = vlaneseq
    %v9969 = vshrl.u32 %v9968, 7
    %v9970 = vsub.s32 3, %v9969
    %v9971 = vrot.slane %v9954, %v9970
    %v9972 = vlaneseq
    %v9973 = vshrl.u32 %v9972, 7
    %v9974 = vsub.s32 4, %v9973
    %v9975 = vrot.slane %v9954, %v9974
    %v9976 = vlaneseq
    %v9977 = vshrl.u32 %v9976, 7
    %v9978 = vsub.s32 5, %v9977
    %v9979 = vrot.slane %v9954, %v9978
    %v9980 = vlaneseq
    %v9981 = vshrl.u32 %v9980, 7
    %v9982 = vsub.s32 6, %v9981
    %v9983 = vrot.slane %v9954, %v9982
    %v9984 = vlaneseq
    %v9985 = vshrl.u32 %v9984, 7
    %v9986 = vsub.s32 7, %v9985
    %v9987 = vrot.slane %v9954, %v9986
    %v9996 = vadd.f32 %v9922, %v9959
    %v9997 = vadd.f32 %v9923, %v9963
    %v9998 = vadd.f32 %v9924, %v9967
    %v9999 = vadd.f32 %v9925, %v9971
    %v10000 = vadd.f32 %v9926, %v9975
    %v10001 = vadd.f32 %v9927, %v9979
    %v10002 = vadd.f32 %v9928, %v9983
    %v10003 = vadd.f32 %v9929, %v9987
    %v10004 = vadd.f32 %v9930, %v9959
    %v10005 = vadd.f32 %v9931, %v9963
    %v10006 = vadd.f32 %v9932, %v9967
    %v10007 = vadd.f32 %v9933, %v9971
    %v10008 = vadd.f32 %v9934, %v9975
    %v10009 = vadd.f32 %v9935, %v9979
    %v10010 = vadd.f32 %v9936, %v9983
    %v10011 = vadd.f32 %v9937, %v9987
    %v10012 = vadd.f32 %v9938, %v9959
    %v10013 = vadd.f32 %v9939, %v9963
    %v10014 = vadd.f32 %v9940, %v9967
    %v10015 = vadd.f32 %v9941, %v9971
    %v10016 = vadd.f32 %v9942, %v9975
    %v10017 = vadd.f32 %v9943, %v9979
    %v10018 = vadd.f32 %v9944, %v9983
    %v10019 = vadd.f32 %v9945, %v9987
    %v10020 = vadd.f32 %v9946, %v9959
    %v10021 = vadd.f32 %v9947, %v9963
    %v10022 = vadd.f32 %v9948, %v9967
    %v10023 = vadd.f32 %v9949, %v9971
    %v10024 = vadd.f32 %v9950, %v9975
    %v10025 = vadd.f32 %v9951, %v9979
    %v10026 = vadd.f32 %v9952, %v9983
    %v10027 = vadd.f32 %v9953, %v9987
    %v10028 = vmax.f32 %v9996, 0.0
    %v10029 = vmax.f32 %v9997, 0.0
    %v10030 = vmax.f32 %v9998, 0.0
    %v10031 = vmax.f32 %v9999, 0.0
    %v10032 = vmax.f32 %v10000, 0.0
    %v10033 = vmax.f32 %v10001, 0.0
    %v10034 = vmax.f32 %v10002, 0.0
    %v10035 = vmax.f32 %v10003, 0.0
    %v10036 = vmax.f32 %v10004, 0.0
    %v10037 = vmax.f32 %v10005, 0.0
    %v10038 = vmax.f32 %v10006, 0.0
    %v10039 = vmax.f32 %v10007, 0.0
    %v10040 = vmax.f32 %v10008, 0.0
    %v10041 = vmax.f32 %v10009, 0.0
    %v10042 = vmax.f32 %v10010, 0.0
    %v10043 = vmax.f32 %v10011, 0.0
    %v10044 = vmax.f32 %v10012, 0.0
    %v10045 = vmax.f32 %v10013, 0.0
    %v10046 = vmax.f32 %v10014, 0.0
    %v10047 = vmax.f32 %v10015, 0.0
    %v10048 = vmax.f32 %v10016, 0.0
    %v10049 = vmax.f32 %v10017, 0.0
    %v10050 = vmax.f32 %v10018, 0.0
    %v10051 = vmax.f32 %v10019, 0.0
    %v10052 = vmax.f32 %v10020, 0.0
    %v10053 = vmax.f32 %v10021, 0.0
    %v10054 = vmax.f32 %v10022, 0.0
    %v10055 = vmax.f32 %v10023, 0.0
    %v10056 = vmax.f32 %v10024, 0.0
    %v10057 = vmax.f32 %v10025, 0.0
    %v10058 = vmax.f32 %v10026, 0.0
    %v10059 = vmax.f32 %v10027, 0.0
    %v10092 = vcombine.low %v10028, %v10029
    %v10093 = vcombine.high %v10028, %v10029
    %v10094 = vcombine.low %v10030, %v10031
    %v10095 = vcombine.high %v10030, %v10031
    %v10097 = vunpack.c.l.s4 1983009808
    %v10098 = vunpack.c.0.s8 %v10097
    %v10099 = vlaneseq
    %v10100 = vshrl.u32 %v10099, 7
    %v10101 = vsub.s32 %v10098, %v10100
    %v10102 = vrot.slane %v10092, %v10101
    %v10104 = vunpack.c.l.s4 1983009808
    %v10105 = vunpack.c.0.s8 %v10104
    %v10106 = vlaneseq
    %v10107 = vshrl.u32 %v10106, 7
    %v10108 = vsub.s32 %v10105, %v10107
    %v10109 = vrot.slane %v10093, %v10108
    %v10111 = vunpack.c.l.s4 1983009808
    %v10112 = vunpack.c.0.s8 %v10111
    %v10113 = vlaneseq
    %v10114 = vshrl.u32 %v10113, 7
    %v10115 = vsub.s32 %v10112, %v10114
    %v10116 = vrot.slane %v10094, %v10115
    %v10118 = vunpack.c.l.s4 1983009808
    %v10119 = vunpack.c.0.s8 %v10118
    %v10120 = vlaneseq
    %v10121 = vshrl.u32 %v10120, 7
    %v10122 = vsub.s32 %v10119, %v10121
    %v10123 = vrot.slane %v10095, %v10122
    %v10124 = vcombine.low %v10102, %v10116
    %v10125 = vcombine.high %v10102, %v10116
    %v10126 = vcombine.low %v10109, %v10123
    %v10127 = vcombine.high %v10109, %v10123
    %v10128 = vcombine.low %v10032, %v10033
    %v10129 = vcombine.high %v10032, %v10033
    %v10130 = vcombine.low %v10034, %v10035
    %v10131 = vcombine.high %v10034, %v10035
    %v10133 = vunpack.c.l.s4 1983009808
    %v10134 = vunpack.c.0.s8 %v10133
    %v10135 = vlaneseq
    %v10136 = vshrl.u32 %v10135, 7
    %v10137 = vsub.s32 %v10134, %v10136
    %v10138 = vrot.slane %v10128, %v10137
    %v10140 = vunpack.c.l.s4 1983009808
    %v10141 = vunpack.c.0.s8 %v10140
    %v10142 = vlaneseq
    %v10143 = vshrl.u32 %v10142, 7
    %v10144 = vsub.s32 %v10141, %v10143
    %v10145 = vrot.slane %v10129, %v10144
    %v10147 = vunpack.c.l.s4 1983009808
    %v10148 = vunpack.c.0.s8 %v10147
    %v10149 = vlaneseq
    %v10150 = vshrl.u32 %v10149, 7
    %v10151 = vsub.s32 %v10148, %v10150
    %v10152 = vrot.slane %v10130, %v10151
    %v10154 = vunpack.c.l.s4 1983009808
    %v10155 = vunpack.c.0.s8 %v10154
    %v10156 = vlaneseq
    %v10157 = vshrl.u32 %v10156, 7
    %v10158 = vsub.s32 %v10155, %v10157
    %v10159 = vrot.slane %v10131, %v10158
    %v10160 = vcombine.low %v10138, %v10152
    %v10161 = vcombine.high %v10138, %v10152
    %v10162 = vcombine.low %v10145, %v10159
    %v10163 = vcombine.high %v10145, %v10159
    %v10164 = vcombine.low %v10036, %v10037
    %v10165 = vcombine.high %v10036, %v10037
    %v10166 = vcombine.low %v10038, %v10039
    %v10167 = vcombine.high %v10038, %v10039
    %v10169 = vunpack.c.l.s4 1983009808
    %v10170 = vunpack.c.0.s8 %v10169
    %v10171 = vlaneseq
    %v10172 = vshrl.u32 %v10171, 7
    %v10173 = vsub.s32 %v10170, %v10172
    %v10174 = vrot.slane %v10164, %v10173
    %v10176 = vunpack.c.l.s4 1983009808
    %v10177 = vunpack.c.0.s8 %v10176
    %v10178 = vlaneseq
    %v10179 = vshrl.u32 %v10178, 7
    %v10180 = vsub.s32 %v10177, %v10179
    %v10181 = vrot.slane %v10165, %v10180
    %v10183 = vunpack.c.l.s4 1983009808
    %v10184 = vunpack.c.0.s8 %v10183
    %v10185 = vlaneseq
    %v10186 = vshrl.u32 %v10185, 7
    %v10187 = vsub.s32 %v10184, %v10186
    %v10188 = vrot.slane %v10166, %v10187
    %v10190 = vunpack.c.l.s4 1983009808
    %v10191 = vunpack.c.0.s8 %v10190
    %v10192 = vlaneseq
    %v10193 = vshrl.u32 %v10192, 7
    %v10194 = vsub.s32 %v10191, %v10193
    %v10195 = vrot.slane %v10167, %v10194
    %v10196 = vcombine.low %v10174, %v10188
    %v10197 = vcombine.high %v10174, %v10188
    %v10198 = vcombine.low %v10181, %v10195
    %v10199 = vcombine.high %v10181, %v10195
    %v10200 = vcombine.low %v10040, %v10041
    %v10201 = vcombine.high %v10040, %v10041
    %v10202 = vcombine.low %v10042, %v10043
    %v10203 = vcombine.high %v10042, %v10043
    %v10205 = vunpack.c.l.s4 1983009808
    %v10206 = vunpack.c.0.s8 %v10205
    %v10207 = vlaneseq
    %v10208 = vshrl.u32 %v10207, 7
    %v10209 = vsub.s32 %v10206, %v10208
    %v10210 = vrot.slane %v10200, %v10209
    %v10212 = vunpack.c.l.s4 1983009808
    %v10213 = vunpack.c.0.s8 %v10212
    %v10214 = vlaneseq
    %v10215 = vshrl.u32 %v10214, 7
    %v10216 = vsub.s32 %v10213, %v10215
    %v10217 = vrot.slane %v10201, %v10216
    %v10219 = vunpack.c.l.s4 1983009808
    %v10220 = vunpack.c.0.s8 %v10219
    %v10221 = vlaneseq
    %v10222 = vshrl.u32 %v10221, 7
    %v10223 = vsub.s32 %v10220, %v10222
    %v10224 = vrot.slane %v10202, %v10223
    %v10226 = vunpack.c.l.s4 1983009808
    %v10227 = vunpack.c.0.s8 %v10226
    %v10228 = vlaneseq
    %v10229 = vshrl.u32 %v10228, 7
    %v10230 = vsub.s32 %v10227, %v10229
    %v10231 = vrot.slane %v10203, %v10230
    %v10232 = vcombine.low %v10210, %v10224
    %v10233 = vcombine.high %v10210, %v10224
    %v10234 = vcombine.low %v10217, %v10231
    %v10235 = vcombine.high %v10217, %v10231
    %v10236 = vcombine.low %v10044, %v10045
    %v10237 = vcombine.high %v10044, %v10045
    %v10238 = vcombine.low %v10046, %v10047
    %v10239 = vcombine.high %v10046, %v10047
    %v10241 = vunpack.c.l.s4 1983009808
    %v10242 = vunpack.c.0.s8 %v10241
    %v10243 = vlaneseq
    %v10244 = vshrl.u32 %v10243, 7
    %v10245 = vsub.s32 %v10242, %v10244
    %v10246 = vrot.slane %v10236, %v10245
    %v10248 = vunpack.c.l.s4 1983009808
    %v10249 = vunpack.c.0.s8 %v10248
    %v10250 = vlaneseq
    %v10251 = vshrl.u32 %v10250, 7
    %v10252 = vsub.s32 %v10249, %v10251
    %v10253 = vrot.slane %v10237, %v10252
    %v10255 = vunpack.c.l.s4 1983009808
    %v10256 = vunpack.c.0.s8 %v10255
    %v10257 = vlaneseq
    %v10258 = vshrl.u32 %v10257, 7
    %v10259 = vsub.s32 %v10256, %v10258
    %v10260 = vrot.slane %v10238, %v10259
    %v10262 = vunpack.c.l.s4 1983009808
    %v10263 = vunpack.c.0.s8 %v10262
    %v10264 = vlaneseq
    %v10265 = vshrl.u32 %v10264, 7
    %v10266 = vsub.s32 %v10263, %v10265
    %v10267 = vrot.slane %v10239, %v10266
    %v10268 = vcombine.low %v10246, %v10260
    %v10269 = vcombine.high %v10246, %v10260
    %v10270 = vcombine.low %v10253, %v10267
    %v10271 = vcombine.high %v10253, %v10267
    %v10272 = vcombine.low %v10048, %v10049
    %v10273 = vcombine.high %v10048, %v10049
    %v10274 = vcombine.low %v10050, %v10051
    %v10275 = vcombine.high %v10050, %v10051
    %v10277 = vunpack.c.l.s4 1983009808
    %v10278 = vunpack.c.0.s8 %v10277
    %v10279 = vlaneseq
    %v10280 = vshrl.u32 %v10279, 7
    %v10281 = vsub.s32 %v10278, %v10280
    %v10282 = vrot.slane %v10272, %v10281
    %v10284 = vunpack.c.l.s4 1983009808
    %v10285 = vunpack.c.0.s8 %v10284
    %v10286 = vlaneseq
    %v10287 = vshrl.u32 %v10286, 7
    %v10288 = vsub.s32 %v10285, %v10287
    %v10289 = vrot.slane %v10273, %v10288
    %v10291 = vunpack.c.l.s4 1983009808
    %v10292 = vunpack.c.0.s8 %v10291
    %v10293 = vlaneseq
    %v10294 = vshrl.u32 %v10293, 7
    %v10295 = vsub.s32 %v10292, %v10294
    %v10296 = vrot.slane %v10274, %v10295
    %v10298 = vunpack.c.l.s4 1983009808
    %v10299 = vunpack.c.0.s8 %v10298
    %v10300 = vlaneseq
    %v10301 = vshrl.u32 %v10300, 7
    %v10302 = vsub.s32 %v10299, %v10301
    %v10303 = vrot.slane %v10275, %v10302
    %v10304 = vcombine.low %v10282, %v10296
    %v10305 = vcombine.high %v10282, %v10296
    %v10306 = vcombine.low %v10289, %v10303
    %v10307 = vcombine.high %v10289, %v10303
    %v10308 = vcombine.low %v10052, %v10053
    %v10309 = vcombine.high %v10052, %v10053
    %v10310 = vcombine.low %v10054, %v10055
    %v10311 = vcombine.high %v10054, %v10055
    %v10313 = vunpack.c.l.s4 1983009808
    %v10314 = vunpack.c.0.s8 %v10313
    %v10315 = vlaneseq
    %v10316 = vshrl.u32 %v10315, 7
    %v10317 = vsub.s32 %v10314, %v10316
    %v10318 = vrot.slane %v10308, %v10317
    %v10320 = vunpack.c.l.s4 1983009808
    %v10321 = vunpack.c.0.s8 %v10320
    %v10322 = vlaneseq
    %v10323 = vshrl.u32 %v10322, 7
    %v10324 = vsub.s32 %v10321, %v10323
    %v10325 = vrot.slane %v10309, %v10324
    %v10327 = vunpack.c.l.s4 1983009808
    %v10328 = vunpack.c.0.s8 %v10327
    %v10329 = vlaneseq
    %v10330 = vshrl.u32 %v10329, 7
    %v10331 = vsub.s32 %v10328, %v10330
    %v10332 = vrot.slane %v10310, %v10331
    %v10334 = vunpack.c.l.s4 1983009808
    %v10335 = vunpack.c.0.s8 %v10334
    %v10336 = vlaneseq
    %v10337 = vshrl.u32 %v10336, 7
    %v10338 = vsub.s32 %v10335, %v10337
    %v10339 = vrot.slane %v10311, %v10338
    %v10340 = vcombine.low %v10318, %v10332
    %v10341 = vcombine.high %v10318, %v10332
    %v10342 = vcombine.low %v10325, %v10339
    %v10343 = vcombine.high %v10325, %v10339
    %v10344 = vcombine.low %v10056, %v10057
    %v10345 = vcombine.high %v10056, %v10057
    %v10346 = vcombine.low %v10058, %v10059
    %v10347 = vcombine.high %v10058, %v10059
    %v10349 = vunpack.c.l.s4 1983009808
    %v10350 = vunpack.c.0.s8 %v10349
    %v10351 = vlaneseq
    %v10352 = vshrl.u32 %v10351, 7
    %v10353 = vsub.s32 %v10350, %v10352
    %v10354 = vrot.slane %v10344, %v10353
    %v10356 = vunpack.c.l.s4 1983009808
    %v10357 = vunpack.c.0.s8 %v10356
    %v10358 = vlaneseq
    %v10359 = vshrl.u32 %v10358, 7
    %v10360 = vsub.s32 %v10357, %v10359
    %v10361 = vrot.slane %v10345, %v10360
    %v10363 = vunpack.c.l.s4 1983009808
    %v10364 = vunpack.c.0.s8 %v10363
    %v10365 = vlaneseq
    %v10366 = vshrl.u32 %v10365, 7
    %v10367 = vsub.s32 %v10364, %v10366
    %v10368 = vrot.slane %v10346, %v10367
    %v10370 = vunpack.c.l.s4 1983009808
    %v10371 = vunpack.c.0.s8 %v10370
    %v10372 = vlaneseq
    %v10373 = vshrl.u32 %v10372, 7
    %v10374 = vsub.s32 %v10371, %v10373
    %v10375 = vrot.slane %v10347, %v10374
    %v10376 = vcombine.low %v10354, %v10368
    %v10377 = vcombine.high %v10354, %v10368
    %v10378 = vcombine.low %v10361, %v10375
    %v10379 = vcombine.high %v10361, %v10375
    %v10412 = vrot.slane %v10124, 7
    %v10413 = vrot.slane %v10412, 2
    %v10414 = vrot.slane %v10160, 7
    %v10415 = vrot.slane %v10414, 2
    %v10416 = vrot.slane %v10125, 7
    %v10417 = vrot.slane %v10416, 2
    %v10418 = vrot.slane %v10161, 7
    %v10419 = vrot.slane %v10418, 2
    %v10420 = vrot.slane %v10126, 7
    %v10421 = vrot.slane %v10420, 2
    %v10422 = vrot.slane %v10162, 7
    %v10423 = vrot.slane %v10422, 2
    %v10424 = vrot.slane %v10127, 7
    %v10425 = vrot.slane %v10424, 2
    %v10426 = vrot.slane %v10163, 7
    %v10427 = vrot.slane %v10426, 2
    %v10428 = vrot.slane %v10196, 7
    %v10429 = vrot.slane %v10428, 2
    %v10430 = vrot.slane %v10232, 7
    %v10431 = vrot.slane %v10430, 2
    %v10432 = vrot.slane %v10197, 7
    %v10433 = vrot.slane %v10432, 2
    %v10434 = vrot.slane %v10233, 7
    %v10435 = vrot.slane %v10434, 2
    %v10436 = vrot.slane %v10198, 7
    %v10437 = vrot.slane %v10436, 2
    %v10438 = vrot.slane %v10234, 7
    %v10439 = vrot.slane %v10438, 2
    %v10440 = vrot.slane %v10199, 7
    %v10441 = vrot.slane %v10440, 2
    %v10442 = vrot.slane %v10235, 7
    %v10443 = vrot.slane %v10442, 2
    %v10444 = vrot.slane %v10268, 7
    %v10445 = vrot.slane %v10444, 2
    %v10446 = vrot.slane %v10304, 7
    %v10447 = vrot.slane %v10446, 2
    %v10448 = vrot.slane %v10269, 7
    %v10449 = vrot.slane %v10448, 2
    %v10450 = vrot.slane %v10305, 7
    %v10451 = vrot.slane %v10450, 2
    %v10452 = vrot.slane %v10270, 7
    %v10453 = vrot.slane %v10452, 2
    %v10454 = vrot.slane %v10306, 7
    %v10455 = vrot.slane %v10454, 2
    %v10456 = vrot.slane %v10271, 7
    %v10457 = vrot.slane %v10456, 2
    %v10458 = vrot.slane %v10307, 7
    %v10459 = vrot.slane %v10458, 2
    %v10460 = vrot.slane %v10340, 7
    %v10461 = vrot.slane %v10460, 2
    %v10462 = vrot.slane %v10376, 7
    %v10463 = vrot.slane %v10462, 2
    %v10464 = vrot.slane %v10341, 7
    %v10465 = vrot.slane %v10464, 2
    %v10466 = vrot.slane %v10377, 7
    %v10467 = vrot.slane %v10466, 2
    %v10468 = vrot.slane %v10342, 7
    %v10469 = vrot.slane %v10468, 2
    %v10470 = vrot.slane %v10378, 7
    %v10471 = vrot.slane %v10470, 2
    %v10472 = vrot.slane %v10343, 7
    %v10473 = vrot.slane %v10472, 2
    %v10474 = vrot.slane %v10379, 7
    %v10475 = vrot.slane %v10474, 2
    %v10508 = vmax.f32 %v10124, %v10413
    %v10509 = vmax.f32 %v10160, %v10415
    %v10510 = vmax.f32 %v10125, %v10417
    %v10511 = vmax.f32 %v10161, %v10419
    %v10512 = vmax.f32 %v10126, %v10421
    %v10513 = vmax.f32 %v10162, %v10423
    %v10514 = vmax.f32 %v10127, %v10425
    %v10515 = vmax.f32 %v10163, %v10427
    %v10516 = vmax.f32 %v10196, %v10429
    %v10517 = vmax.f32 %v10232, %v10431
    %v10518 = vmax.f32 %v10197, %v10433
    %v10519 = vmax.f32 %v10233, %v10435
    %v10520 = vmax.f32 %v10198, %v10437
    %v10521 = vmax.f32 %v10234, %v10439
    %v10522 = vmax.f32 %v10199, %v10441
    %v10523 = vmax.f32 %v10235, %v10443
    %v10524 = vmax.f32 %v10268, %v10445
    %v10525 = vmax.f32 %v10304, %v10447
    %v10526 = vmax.f32 %v10269, %v10449
    %v10527 = vmax.f32 %v10305, %v10451
    %v10528 = vmax.f32 %v10270, %v10453
    %v10529 = vmax.f32 %v10306, %v10455
    %v10530 = vmax.f32 %v10271, %v10457
    %v10531 = vmax.f32 %v10307, %v10459
    %v10532 = vmax.f32 %v10340, %v10461
    %v10533 = vmax.f32 %v10376, %v10463
    %v10534 = vmax.f32 %v10341, %v10465
    %v10535 = vmax.f32 %v10377, %v10467
    %v10536 = vmax.f32 %v10342, %v10469
    %v10537 = vmax.f32 %v10378, %v10471
    %v10538 = vmax.f32 %v10343, %v10473
    %v10539 = vmax.f32 %v10379, %v10475
    %v10540 = vmax.f32 %v10508, %v10509
    %v10541 = vmax.f32 %v10510, %v10511
    %v10542 = vmax.f32 %v10512, %v10513
    %v10543 = vmax.f32 %v10514, %v10515
    %v10544 = vmax.f32 %v10516, %v10517
    %v10545 = vmax.f32 %v10518, %v10519
    %v10546 = vmax.f32 %v10520, %v10521
    %v10547 = vmax.f32 %v10522, %v10523
    %v10548 = vmax.f32 %v10524, %v10525
    %v10549 = vmax.f32 %v10526, %v10527
    %v10550 = vmax.f32 %v10528, %v10529
    %v10551 = vmax.f32 %v10530, %v10531
    %v10552 = vmax.f32 %v10532, %v10533
    %v10553 = vmax.f32 %v10534, %v10535
    %v10554 = vmax.f32 %v10536, %v10537
    %v10555 = vmax.f32 %v10538, %v10539
    %v10558 = vsel %vm3659, %v10540, %v10540
    %v10559 = vsel %vm3663, %v10540, %v10558
    %v10560 = vrot.slane %v10548, 7
    %v10561 = vsel %vm3685, %v10560, %v10559
    %v10562 = vsel %vm3657, %v10560, %v10561
    %v10563 = vsel %vm3661, %v10560, %v10562
    %v10564 = vsel %vm3665, %v10560, %v10563
    %10566 = vst [vmem:[#allocation4] sm:$0xff] %v10564
    %v10569 = vsel %vm3659, %v10541, %v10541
    %v10570 = vsel %vm3663, %v10541, %v10569
    %v10571 = vrot.slane %v10549, 7
    %v10572 = vsel %vm3685, %v10571, %v10570
    %v10573 = vsel %vm3657, %v10571, %v10572
    %v10574 = vsel %vm3661, %v10571, %v10573
    %v10575 = vsel %vm3665, %v10571, %v10574
    %10577 = vst [vmem:[#allocation4 + $0x8] sm:$0xff] %v10575
    %v10580 = vsel %vm3659, %v10542, %v10542
    %v10581 = vsel %vm3663, %v10542, %v10580
    %v10582 = vrot.slane %v10550, 7
    %v10583 = vsel %vm3685, %v10582, %v10581
    %v10584 = vsel %vm3657, %v10582, %v10583
    %v10585 = vsel %vm3661, %v10582, %v10584
    %v10586 = vsel %vm3665, %v10582, %v10585
    %10588 = vst [vmem:[#allocation4 + $0x10] sm:$0xff] %v10586
    %v10591 = vsel %vm3659, %v10543, %v10543
    %v10592 = vsel %vm3663, %v10543, %v10591
    %v10593 = vrot.slane %v10551, 7
    %v10594 = vsel %vm3685, %v10593, %v10592
    %v10595 = vsel %vm3657, %v10593, %v10594
    %v10596 = vsel %vm3661, %v10593, %v10595
    %v10597 = vsel %vm3665, %v10593, %v10596
    %10599 = vst [vmem:[#allocation4 + $0x18] sm:$0xff] %v10597
    %v10602 = vsel %vm3659, %v10544, %v10544
    %v10603 = vsel %vm3663, %v10544, %v10602
    %v10604 = vrot.slane %v10552, 7
    %v10605 = vsel %vm3685, %v10604, %v10603
    %v10606 = vsel %vm3657, %v10604, %v10605
    %v10607 = vsel %vm3661, %v10604, %v10606
    %v10608 = vsel %vm3665, %v10604, %v10607
    %10610 = vst [vmem:[#allocation4 + $0x20] sm:$0xff] %v10608
    %v10613 = vsel %vm3659, %v10545, %v10545
    %v10614 = vsel %vm3663, %v10545, %v10613
    %v10615 = vrot.slane %v10553, 7
    %v10616 = vsel %vm3685, %v10615, %v10614
    %v10617 = vsel %vm3657, %v10615, %v10616
    %v10618 = vsel %vm3661, %v10615, %v10617
    %v10619 = vsel %vm3665, %v10615, %v10618
    %10621 = vst [vmem:[#allocation4 + $0x28] sm:$0xff] %v10619
    %v10624 = vsel %vm3659, %v10546, %v10546
    %v10625 = vsel %vm3663, %v10546, %v10624
    %v10626 = vrot.slane %v10554, 7
    %v10627 = vsel %vm3685, %v10626, %v10625
    %v10628 = vsel %vm3657, %v10626, %v10627
    %v10629 = vsel %vm3661, %v10626, %v10628
    %v10630 = vsel %vm3665, %v10626, %v10629
    %10632 = vst [vmem:[#allocation4 + $0x30] sm:$0xff] %v10630
    %v10635 = vsel %vm3659, %v10547, %v10547
    %v10636 = vsel %vm3663, %v10547, %v10635
    %v10637 = vrot.slane %v10555, 7
    %v10638 = vsel %vm3685, %v10637, %v10636
    %v10639 = vsel %vm3657, %v10637, %v10638
    %v10640 = vsel %vm3661, %v10637, %v10639
    %v10641 = vsel %vm3665, %v10637, %v10640
    %10643 = vst [vmem:[#allocation4 + $0x38] sm:$0xff] %v10641
    %v10644 = vld [vmem:[#allocation4] sm:$0xff]
    %v10645 = vld [vmem:[#allocation4 + $0x8] sm:$0xff]
    %v10646 = vld [vmem:[#allocation4 + $0x10] sm:$0xff]
    %v10647 = vld [vmem:[#allocation4 + $0x18] sm:$0xff]
    %v10648 = vld [vmem:[#allocation4 + $0x20] sm:$0xff]
    %v10649 = vld [vmem:[#allocation4 + $0x28] sm:$0xff]
    %v10650 = vld [vmem:[#allocation4 + $0x30] sm:$0xff]
    %v10651 = vld [vmem:[#allocation4 + $0x38] sm:$0xff]
    %v10652 = vld [vmem:[%s5] sm:$0xf]
    %v10653 = vld [vmem:[%s5 + $0x4] sm:$0xf]
    %v10654 = vld [vmem:[%s5 + $0x8] sm:$0xf]
    %v10655 = vld [vmem:[%s5 + $0xc] sm:$0xf]
    %v10656 = vld [vmem:[%s5 + $0x10] sm:$0xf]
    %v10657 = vld [vmem:[%s5 + $0x14] sm:$0xf]
    %v10658 = vld [vmem:[%s5 + $0x18] sm:$0xf]
    %v10659 = vld [vmem:[%s5 + $0x1c] sm:$0xf]
    %v10660 = vld [vmem:[%s5 + $0x20] sm:$0xf]
    %v10661 = vld [vmem:[%s5 + $0x24] sm:$0xf]
    %v10662 = vld [vmem:[%s5 + $0x28] sm:$0xf]
    %v10663 = vld [vmem:[%s5 + $0x2c] sm:$0xf]
    %v10664 = vld [vmem:[%s5 + $0x30] sm:$0xf]
    %v10665 = vld [vmem:[%s5 + $0x34] sm:$0xf]
    %v10666 = vld [vmem:[%s5 + $0x38] sm:$0xf]
    %v10667 = vld [vmem:[%s5 + $0x3c] sm:$0xf]
    %v10668 = vld [vmem:[%s5 + $0x40] sm:$0xf]
    %v10669 = vld [vmem:[%s5 + $0x44] sm:$0xf]
    %v10670 = vld [vmem:[%s5 + $0x48] sm:$0xf]
    %v10671 = vld [vmem:[%s5 + $0x4c] sm:$0xf]
    %v10672 = vld [vmem:[%s5 + $0x50] sm:$0xf]
    %v10673 = vld [vmem:[%s5 + $0x54] sm:$0xf]
    %v10674 = vld [vmem:[%s5 + $0x58] sm:$0xf]
    %v10675 = vld [vmem:[%s5 + $0x5c] sm:$0xf]
    %v10676 = vld [vmem:[%s5 + $0x60] sm:$0xf]
    %v10677 = vld [vmem:[%s5 + $0x64] sm:$0xf]
    %v10678 = vld [vmem:[%s5 + $0x68] sm:$0xf]
    %v10679 = vld [vmem:[%s5 + $0x6c] sm:$0xf]
    %v10680 = vld [vmem:[%s5 + $0x70] sm:$0xf]
    %v10681 = vld [vmem:[%s5 + $0x74] sm:$0xf]
    %v10682 = vld [vmem:[%s5 + $0x78] sm:$0xf]
    %v10683 = vld [vmem:[%s5 + $0x7c] sm:$0xf]
    %v10684 = vld [vmem:[%s5 + $0x80] sm:$0xf]
    %v10685 = vld [vmem:[%s5 + $0x84] sm:$0xf]
    %v10686 = vld [vmem:[%s5 + $0x88] sm:$0xf]
    %v10687 = vld [vmem:[%s5 + $0x8c] sm:$0xf]
    %v10688 = vld [vmem:[%s5 + $0x90] sm:$0xf]
    %v10689 = vld [vmem:[%s5 + $0x94] sm:$0xf]
    %v10690 = vld [vmem:[%s5 + $0x98] sm:$0xf]
    %v10691 = vld [vmem:[%s5 + $0x9c] sm:$0xf]
    %v10692 = vld [vmem:[%s5 + $0xa0] sm:$0xf]
    %v10693 = vld [vmem:[%s5 + $0xa4] sm:$0xf]
    %v10694 = vld [vmem:[%s5 + $0xa8] sm:$0xf]
    %v10695 = vld [vmem:[%s5 + $0xac] sm:$0xf]
    %v10696 = vld [vmem:[%s5 + $0xb0] sm:$0xf]
    %v10697 = vld [vmem:[%s5 + $0xb4] sm:$0xf]
    %v10698 = vld [vmem:[%s5 + $0xb8] sm:$0xf]
    %v10699 = vld [vmem:[%s5 + $0xbc] sm:$0xf]
    %v10700 = vld [vmem:[%s5 + $0xc0] sm:$0xf]
    %v10701 = vld [vmem:[%s5 + $0xc4] sm:$0xf]
    %v10702 = vld [vmem:[%s5 + $0xc8] sm:$0xf]
    %v10703 = vld [vmem:[%s5 + $0xcc] sm:$0xf]
    %v10704 = vld [vmem:[%s5 + $0xd0] sm:$0xf]
    %v10705 = vld [vmem:[%s5 + $0xd4] sm:$0xf]
    %v10706 = vld [vmem:[%s5 + $0xd8] sm:$0xf]
    %v10707 = vld [vmem:[%s5 + $0xdc] sm:$0xf]
    %v10708 = vld [vmem:[%s5 + $0xe0] sm:$0xf]
    %v10709 = vld [vmem:[%s5 + $0xe4] sm:$0xf]
    %v10710 = vld [vmem:[%s5 + $0xe8] sm:$0xf]
    %v10711 = vld [vmem:[%s5 + $0xec] sm:$0xf]
    %v10712 = vld [vmem:[%s5 + $0xf0] sm:$0xf]
    %v10713 = vld [vmem:[%s5 + $0xf4] sm:$0xf]
    %v10714 = vld [vmem:[%s5 + $0xf8] sm:$0xf]
    %v10715 = vld [vmem:[%s5 + $0xfc] sm:$0xf]
    %v10716 = vld [vmem:[%s5 + $0x100] sm:$0xf]
    %v10717 = vld [vmem:[%s5 + $0x104] sm:$0xf]
    %v10718 = vld [vmem:[%s5 + $0x108] sm:$0xf]
    %v10719 = vld [vmem:[%s5 + $0x10c] sm:$0xf]
    %v10720 = vld [vmem:[%s5 + $0x110] sm:$0xf]
    %v10721 = vld [vmem:[%s5 + $0x114] sm:$0xf]
    %v10722 = vld [vmem:[%s5 + $0x118] sm:$0xf]
    %v10723 = vld [vmem:[%s5 + $0x11c] sm:$0xf]
    %v10724 = vld [vmem:[%s5 + $0x120] sm:$0xf]
    %v10725 = vld [vmem:[%s5 + $0x124] sm:$0xf]
    %v10726 = vld [vmem:[%s5 + $0x128] sm:$0xf]
    %v10727 = vld [vmem:[%s5 + $0x12c] sm:$0xf]
    %v10728 = vld [vmem:[%s5 + $0x130] sm:$0xf]
    %v10729 = vld [vmem:[%s5 + $0x134] sm:$0xf]
    %v10730 = vld [vmem:[%s5 + $0x138] sm:$0xf]
    %v10731 = vld [vmem:[%s5 + $0x13c] sm:$0xf]
    %v10732 = vld [vmem:[%s5 + $0x140] sm:$0xf]
    %v10733 = vld [vmem:[%s5 + $0x144] sm:$0xf]
    %v10734 = vld [vmem:[%s5 + $0x148] sm:$0xf]
    %v10735 = vld [vmem:[%s5 + $0x14c] sm:$0xf]
    %v10736 = vld [vmem:[%s5 + $0x150] sm:$0xf]
    %v10737 = vld [vmem:[%s5 + $0x154] sm:$0xf]
    %v10738 = vld [vmem:[%s5 + $0x158] sm:$0xf]
    %v10739 = vld [vmem:[%s5 + $0x15c] sm:$0xf]
    %v10740 = vld [vmem:[%s5 + $0x160] sm:$0xf]
    %v10741 = vld [vmem:[%s5 + $0x164] sm:$0xf]
    %v10742 = vld [vmem:[%s5 + $0x168] sm:$0xf]
    %v10743 = vld [vmem:[%s5 + $0x16c] sm:$0xf]
    %v10744 = vld [vmem:[%s5 + $0x170] sm:$0xf]
    %v10745 = vld [vmem:[%s5 + $0x174] sm:$0xf]
    %v10746 = vld [vmem:[%s5 + $0x178] sm:$0xf]
    %v10747 = vld [vmem:[%s5 + $0x17c] sm:$0xf]
    %v10748 = vld [vmem:[%s5 + $0x180] sm:$0xf]
    %v10749 = vld [vmem:[%s5 + $0x184] sm:$0xf]
    %v10750 = vld [vmem:[%s5 + $0x188] sm:$0xf]
    %v10751 = vld [vmem:[%s5 + $0x18c] sm:$0xf]
    %v10752 = vld [vmem:[%s5 + $0x190] sm:$0xf]
    %v10753 = vld [vmem:[%s5 + $0x194] sm:$0xf]
    %v10754 = vld [vmem:[%s5 + $0x198] sm:$0xf]
    %v10755 = vld [vmem:[%s5 + $0x19c] sm:$0xf]
    %v10756 = vld [vmem:[%s5 + $0x1a0] sm:$0xf]
    %v10757 = vld [vmem:[%s5 + $0x1a4] sm:$0xf]
    %v10758 = vld [vmem:[%s5 + $0x1a8] sm:$0xf]
    %v10759 = vld [vmem:[%s5 + $0x1ac] sm:$0xf]
    %v10760 = vld [vmem:[%s5 + $0x1b0] sm:$0xf]
    %v10761 = vld [vmem:[%s5 + $0x1b4] sm:$0xf]
    %v10762 = vld [vmem:[%s5 + $0x1b8] sm:$0xf]
    %v10763 = vld [vmem:[%s5 + $0x1bc] sm:$0xf]
    %v10764 = vld [vmem:[%s5 + $0x1c0] sm:$0xf]
    %v10765 = vld [vmem:[%s5 + $0x1c4] sm:$0xf]
    %v10766 = vld [vmem:[%s5 + $0x1c8] sm:$0xf]
    %v10767 = vld [vmem:[%s5 + $0x1cc] sm:$0xf]
    %v10768 = vld [vmem:[%s5 + $0x1d0] sm:$0xf]
    %v10769 = vld [vmem:[%s5 + $0x1d4] sm:$0xf]
    %v10770 = vld [vmem:[%s5 + $0x1d8] sm:$0xf]
    %v10771 = vld [vmem:[%s5 + $0x1dc] sm:$0xf]
    %v10772 = vld [vmem:[%s5 + $0x1e0] sm:$0xf]
    %v10773 = vld [vmem:[%s5 + $0x1e4] sm:$0xf]
    %v10774 = vld [vmem:[%s5 + $0x1e8] sm:$0xf]
    %v10775 = vld [vmem:[%s5 + $0x1ec] sm:$0xf]
    %v10776 = vld [vmem:[%s5 + $0x1f0] sm:$0xf]
    %v10777 = vld [vmem:[%s5 + $0x1f4] sm:$0xf]
    %v10778 = vld [vmem:[%s5 + $0x1f8] sm:$0xf]
    %v10779 = vld [vmem:[%s5 + $0x1fc] sm:$0xf]
    %v10780 = vld [vmem:[%s5 + $0x200] sm:$0xf]
    %v10781 = vld [vmem:[%s5 + $0x204] sm:$0xf]
    %v10782 = vld [vmem:[%s5 + $0x208] sm:$0xf]
    %v10783 = vld [vmem:[%s5 + $0x20c] sm:$0xf]
    %v10784 = vld [vmem:[%s5 + $0x210] sm:$0xf]
    %v10785 = vld [vmem:[%s5 + $0x214] sm:$0xf]
    %v10786 = vld [vmem:[%s5 + $0x218] sm:$0xf]
    %v10787 = vld [vmem:[%s5 + $0x21c] sm:$0xf]
    %v10788 = vld [vmem:[%s5 + $0x220] sm:$0xf]
    %v10789 = vld [vmem:[%s5 + $0x224] sm:$0xf]
    %v10790 = vld [vmem:[%s5 + $0x228] sm:$0xf]
    %v10791 = vld [vmem:[%s5 + $0x22c] sm:$0xf]
    %v10792 = vld [vmem:[%s5 + $0x230] sm:$0xf]
    %v10793 = vld [vmem:[%s5 + $0x234] sm:$0xf]
    %v10794 = vld [vmem:[%s5 + $0x238] sm:$0xf]
    %v10795 = vld [vmem:[%s5 + $0x23c] sm:$0xf]
    %v10796 = vld [vmem:[%s5 + $0x240] sm:$0xf]
    %v10797 = vld [vmem:[%s5 + $0x244] sm:$0xf]
    %v10798 = vld [vmem:[%s5 + $0x248] sm:$0xf]
    %v10799 = vld [vmem:[%s5 + $0x24c] sm:$0xf]
    %v10800 = vld [vmem:[%s5 + $0x250] sm:$0xf]
    %v10801 = vld [vmem:[%s5 + $0x254] sm:$0xf]
    %v10802 = vld [vmem:[%s5 + $0x258] sm:$0xf]
    %v10803 = vld [vmem:[%s5 + $0x25c] sm:$0xf]
    %v10804 = vld [vmem:[%s5 + $0x260] sm:$0xf]
    %v10805 = vld [vmem:[%s5 + $0x264] sm:$0xf]
    %v10806 = vld [vmem:[%s5 + $0x268] sm:$0xf]
    %v10807 = vld [vmem:[%s5 + $0x26c] sm:$0xf]
    %v10808 = vld [vmem:[%s5 + $0x270] sm:$0xf]
    %v10809 = vld [vmem:[%s5 + $0x274] sm:$0xf]
    %v10810 = vld [vmem:[%s5 + $0x278] sm:$0xf]
    %v10811 = vld [vmem:[%s5 + $0x27c] sm:$0xf]
    %v10812 = vld [vmem:[%s5 + $0x280] sm:$0xf]
    %v10813 = vld [vmem:[%s5 + $0x284] sm:$0xf]
    %v10814 = vld [vmem:[%s5 + $0x288] sm:$0xf]
    %v10815 = vld [vmem:[%s5 + $0x28c] sm:$0xf]
    %v10816 = vld [vmem:[%s5 + $0x290] sm:$0xf]
    %v10817 = vld [vmem:[%s5 + $0x294] sm:$0xf]
    %v10818 = vld [vmem:[%s5 + $0x298] sm:$0xf]
    %v10819 = vld [vmem:[%s5 + $0x29c] sm:$0xf]
    %v10820 = vld [vmem:[%s5 + $0x2a0] sm:$0xf]
    %v10821 = vld [vmem:[%s5 + $0x2a4] sm:$0xf]
    %v10822 = vld [vmem:[%s5 + $0x2a8] sm:$0xf]
    %v10823 = vld [vmem:[%s5 + $0x2ac] sm:$0xf]
    %v10824 = vld [vmem:[%s5 + $0x2b0] sm:$0xf]
    %v10825 = vld [vmem:[%s5 + $0x2b4] sm:$0xf]
    %v10826 = vld [vmem:[%s5 + $0x2b8] sm:$0xf]
    %v10827 = vld [vmem:[%s5 + $0x2bc] sm:$0xf]
    %v10828 = vld [vmem:[%s5 + $0x2c0] sm:$0xf]
    %v10829 = vld [vmem:[%s5 + $0x2c4] sm:$0xf]
    %v10830 = vld [vmem:[%s5 + $0x2c8] sm:$0xf]
    %v10831 = vld [vmem:[%s5 + $0x2cc] sm:$0xf]
    %v10832 = vld [vmem:[%s5 + $0x2d0] sm:$0xf]
    %v10833 = vld [vmem:[%s5 + $0x2d4] sm:$0xf]
    %v10834 = vld [vmem:[%s5 + $0x2d8] sm:$0xf]
    %v10835 = vld [vmem:[%s5 + $0x2dc] sm:$0xf]
    %v10836 = vld [vmem:[%s5 + $0x2e0] sm:$0xf]
    %v10837 = vld [vmem:[%s5 + $0x2e4] sm:$0xf]
    %v10838 = vld [vmem:[%s5 + $0x2e8] sm:$0xf]
    %v10839 = vld [vmem:[%s5 + $0x2ec] sm:$0xf]
    %v10840 = vld [vmem:[%s5 + $0x2f0] sm:$0xf]
    %v10841 = vld [vmem:[%s5 + $0x2f4] sm:$0xf]
    %v10842 = vld [vmem:[%s5 + $0x2f8] sm:$0xf]
    %v10843 = vld [vmem:[%s5 + $0x2fc] sm:$0xf]
    %v10844 = vld [vmem:[%s5 + $0x300] sm:$0xf]
    %v10845 = vld [vmem:[%s5 + $0x304] sm:$0xf]
    %v10846 = vld [vmem:[%s5 + $0x308] sm:$0xf]
    %v10847 = vld [vmem:[%s5 + $0x30c] sm:$0xf]
    %v10848 = vld [vmem:[%s5 + $0x310] sm:$0xf]
    %v10849 = vld [vmem:[%s5 + $0x314] sm:$0xf]
    %v10850 = vld [vmem:[%s5 + $0x318] sm:$0xf]
    %v10851 = vld [vmem:[%s5 + $0x31c] sm:$0xf]
    %v10852 = vld [vmem:[%s5 + $0x320] sm:$0xf]
    %v10853 = vld [vmem:[%s5 + $0x324] sm:$0xf]
    %v10854 = vld [vmem:[%s5 + $0x328] sm:$0xf]
    %v10855 = vld [vmem:[%s5 + $0x32c] sm:$0xf]
    %v10856 = vld [vmem:[%s5 + $0x330] sm:$0xf]
    %v10857 = vld [vmem:[%s5 + $0x334] sm:$0xf]
    %v10858 = vld [vmem:[%s5 + $0x338] sm:$0xf]
    %v10859 = vld [vmem:[%s5 + $0x33c] sm:$0xf]
    %v10860 = vld [vmem:[%s5 + $0x340] sm:$0xf]
    %v10861 = vld [vmem:[%s5 + $0x344] sm:$0xf]
    %v10862 = vld [vmem:[%s5 + $0x348] sm:$0xf]
    %v10863 = vld [vmem:[%s5 + $0x34c] sm:$0xf]
    %v10864 = vld [vmem:[%s5 + $0x350] sm:$0xf]
    %v10865 = vld [vmem:[%s5 + $0x354] sm:$0xf]
    %v10866 = vld [vmem:[%s5 + $0x358] sm:$0xf]
    %v10867 = vld [vmem:[%s5 + $0x35c] sm:$0xf]
    %v10868 = vld [vmem:[%s5 + $0x360] sm:$0xf]
    %v10869 = vld [vmem:[%s5 + $0x364] sm:$0xf]
    %v10870 = vld [vmem:[%s5 + $0x368] sm:$0xf]
    %v10871 = vld [vmem:[%s5 + $0x36c] sm:$0xf]
    %v10872 = vld [vmem:[%s5 + $0x370] sm:$0xf]
    %v10873 = vld [vmem:[%s5 + $0x374] sm:$0xf]
    %v10874 = vld [vmem:[%s5 + $0x378] sm:$0xf]
    %v10875 = vld [vmem:[%s5 + $0x37c] sm:$0xf]
    %v10876 = vld [vmem:[%s5 + $0x380] sm:$0xf]
    %v10877 = vld [vmem:[%s5 + $0x384] sm:$0xf]
    %v10878 = vld [vmem:[%s5 + $0x388] sm:$0xf]
    %v10879 = vld [vmem:[%s5 + $0x38c] sm:$0xf]
    %v10880 = vld [vmem:[%s5 + $0x390] sm:$0xf]
    %v10881 = vld [vmem:[%s5 + $0x394] sm:$0xf]
    %v10882 = vld [vmem:[%s5 + $0x398] sm:$0xf]
    %v10883 = vld [vmem:[%s5 + $0x39c] sm:$0xf]
    %v10884 = vld [vmem:[%s5 + $0x3a0] sm:$0xf]
    %v10885 = vld [vmem:[%s5 + $0x3a4] sm:$0xf]
    %v10886 = vld [vmem:[%s5 + $0x3a8] sm:$0xf]
    %v10887 = vld [vmem:[%s5 + $0x3ac] sm:$0xf]
    %v10888 = vld [vmem:[%s5 + $0x3b0] sm:$0xf]
    %v10889 = vld [vmem:[%s5 + $0x3b4] sm:$0xf]
    %v10890 = vld [vmem:[%s5 + $0x3b8] sm:$0xf]
    %v10891 = vld [vmem:[%s5 + $0x3bc] sm:$0xf]
    %v10892 = vld [vmem:[%s5 + $0x3c0] sm:$0xf]
    %v10893 = vld [vmem:[%s5 + $0x3c4] sm:$0xf]
    %v10894 = vld [vmem:[%s5 + $0x3c8] sm:$0xf]
    %v10895 = vld [vmem:[%s5 + $0x3cc] sm:$0xf]
    %v10896 = vld [vmem:[%s5 + $0x3d0] sm:$0xf]
    %v10897 = vld [vmem:[%s5 + $0x3d4] sm:$0xf]
    %v10898 = vld [vmem:[%s5 + $0x3d8] sm:$0xf]
    %v10899 = vld [vmem:[%s5 + $0x3dc] sm:$0xf]
    %v10900 = vld [vmem:[%s5 + $0x3e0] sm:$0xf]
    %v10901 = vld [vmem:[%s5 + $0x3e4] sm:$0xf]
    %v10902 = vld [vmem:[%s5 + $0x3e8] sm:$0xf]
    %v10903 = vld [vmem:[%s5 + $0x3ec] sm:$0xf]
    %v10904 = vld [vmem:[%s5 + $0x3f0] sm:$0xf]
    %v10905 = vld [vmem:[%s5 + $0x3f4] sm:$0xf]
    %v10906 = vld [vmem:[%s5 + $0x3f8] sm:$0xf]
    %v10907 = vld [vmem:[%s5 + $0x3fc] sm:$0xf]
    %v10908 = vld [vmem:[%s5 + $0x400] sm:$0xf]
    %v10909 = vld [vmem:[%s5 + $0x404] sm:$0xf]
    %v10910 = vld [vmem:[%s5 + $0x408] sm:$0xf]
    %v10911 = vld [vmem:[%s5 + $0x40c] sm:$0xf]
    %v10912 = vld [vmem:[%s5 + $0x410] sm:$0xf]
    %v10913 = vld [vmem:[%s5 + $0x414] sm:$0xf]
    %v10914 = vld [vmem:[%s5 + $0x418] sm:$0xf]
    %v10915 = vld [vmem:[%s5 + $0x41c] sm:$0xf]
    %v10916 = vld [vmem:[%s5 + $0x420] sm:$0xf]
    %v10917 = vld [vmem:[%s5 + $0x424] sm:$0xf]
    %v10918 = vld [vmem:[%s5 + $0x428] sm:$0xf]
    %v10919 = vld [vmem:[%s5 + $0x42c] sm:$0xf]
    %v10920 = vld [vmem:[%s5 + $0x430] sm:$0xf]
    %v10921 = vld [vmem:[%s5 + $0x434] sm:$0xf]
    %v10922 = vld [vmem:[%s5 + $0x438] sm:$0xf]
    %v10923 = vld [vmem:[%s5 + $0x43c] sm:$0xf]
    %v10924 = vld [vmem:[%s5 + $0x440] sm:$0xf]
    %v10925 = vld [vmem:[%s5 + $0x444] sm:$0xf]
    %v10926 = vld [vmem:[%s5 + $0x448] sm:$0xf]
    %v10927 = vld [vmem:[%s5 + $0x44c] sm:$0xf]
    %v10928 = vld [vmem:[%s5 + $0x450] sm:$0xf]
    %v10929 = vld [vmem:[%s5 + $0x454] sm:$0xf]
    %v10930 = vld [vmem:[%s5 + $0x458] sm:$0xf]
    %v10931 = vld [vmem:[%s5 + $0x45c] sm:$0xf]
    %v10932 = vld [vmem:[%s5 + $0x460] sm:$0xf]
    %v10933 = vld [vmem:[%s5 + $0x464] sm:$0xf]
    %v10934 = vld [vmem:[%s5 + $0x468] sm:$0xf]
    %v10935 = vld [vmem:[%s5 + $0x46c] sm:$0xf]
    %v10936 = vld [vmem:[%s5 + $0x470] sm:$0xf]
    %v10937 = vld [vmem:[%s5 + $0x474] sm:$0xf]
    %v10938 = vld [vmem:[%s5 + $0x478] sm:$0xf]
    %v10939 = vld [vmem:[%s5 + $0x47c] sm:$0xf]
    %v10940 = vld [vmem:[%s5 + $0x480] sm:$0xf]
    %v10941 = vld [vmem:[%s5 + $0x484] sm:$0xf]
    %v10942 = vld [vmem:[%s5 + $0x488] sm:$0xf]
    %v10943 = vld [vmem:[%s5 + $0x48c] sm:$0xf]
    %v10944 = vld [vmem:[%s5 + $0x490] sm:$0xf]
    %v10945 = vld [vmem:[%s5 + $0x494] sm:$0xf]
    %v10946 = vld [vmem:[%s5 + $0x498] sm:$0xf]
    %v10947 = vld [vmem:[%s5 + $0x49c] sm:$0xf]
    %v10948 = vld [vmem:[%s5 + $0x4a0] sm:$0xf]
    %v10949 = vld [vmem:[%s5 + $0x4a4] sm:$0xf]
    %v10950 = vld [vmem:[%s5 + $0x4a8] sm:$0xf]
    %v10951 = vld [vmem:[%s5 + $0x4ac] sm:$0xf]
    %v10952 = vld [vmem:[%s5 + $0x4b0] sm:$0xf]
    %v10953 = vld [vmem:[%s5 + $0x4b4] sm:$0xf]
    %v10954 = vld [vmem:[%s5 + $0x4b8] sm:$0xf]
    %v10955 = vld [vmem:[%s5 + $0x4bc] sm:$0xf]
    %v10956 = vld [vmem:[%s5 + $0x4c0] sm:$0xf]
    %v10957 = vld [vmem:[%s5 + $0x4c4] sm:$0xf]
    %v10958 = vld [vmem:[%s5 + $0x4c8] sm:$0xf]
    %v10959 = vld [vmem:[%s5 + $0x4cc] sm:$0xf]
    %v10960 = vld [vmem:[%s5 + $0x4d0] sm:$0xf]
    %v10961 = vld [vmem:[%s5 + $0x4d4] sm:$0xf]
    %v10962 = vld [vmem:[%s5 + $0x4d8] sm:$0xf]
    %v10963 = vld [vmem:[%s5 + $0x4dc] sm:$0xf]
    %v10964 = vld [vmem:[%s5 + $0x4e0] sm:$0xf]
    %v10965 = vld [vmem:[%s5 + $0x4e4] sm:$0xf]
    %v10966 = vld [vmem:[%s5 + $0x4e8] sm:$0xf]
    %v10967 = vld [vmem:[%s5 + $0x4ec] sm:$0xf]
    %v10968 = vld [vmem:[%s5 + $0x4f0] sm:$0xf]
    %v10969 = vld [vmem:[%s5 + $0x4f4] sm:$0xf]
    %v10970 = vld [vmem:[%s5 + $0x4f8] sm:$0xf]
    %v10971 = vld [vmem:[%s5 + $0x4fc] sm:$0xf]
    %v10972 = vld [vmem:[%s5 + $0x500] sm:$0xf]
    %v10973 = vld [vmem:[%s5 + $0x504] sm:$0xf]
    %v10974 = vld [vmem:[%s5 + $0x508] sm:$0xf]
    %v10975 = vld [vmem:[%s5 + $0x50c] sm:$0xf]
    %v10976 = vld [vmem:[%s5 + $0x510] sm:$0xf]
    %v10977 = vld [vmem:[%s5 + $0x514] sm:$0xf]
    %v10978 = vld [vmem:[%s5 + $0x518] sm:$0xf]
    %v10979 = vld [vmem:[%s5 + $0x51c] sm:$0xf]
    %v10980 = vld [vmem:[%s5 + $0x520] sm:$0xf]
    %v10981 = vld [vmem:[%s5 + $0x524] sm:$0xf]
    %v10982 = vld [vmem:[%s5 + $0x528] sm:$0xf]
    %v10983 = vld [vmem:[%s5 + $0x52c] sm:$0xf]
    %v10984 = vld [vmem:[%s5 + $0x530] sm:$0xf]
    %v10985 = vld [vmem:[%s5 + $0x534] sm:$0xf]
    %v10986 = vld [vmem:[%s5 + $0x538] sm:$0xf]
    %v10987 = vld [vmem:[%s5 + $0x53c] sm:$0xf]
    %v10988 = vld [vmem:[%s5 + $0x540] sm:$0xf]
    %v10989 = vld [vmem:[%s5 + $0x544] sm:$0xf]
    %v10990 = vld [vmem:[%s5 + $0x548] sm:$0xf]
    %v10991 = vld [vmem:[%s5 + $0x54c] sm:$0xf]
    %v10992 = vld [vmem:[%s5 + $0x550] sm:$0xf]
    %v10993 = vld [vmem:[%s5 + $0x554] sm:$0xf]
    %v10994 = vld [vmem:[%s5 + $0x558] sm:$0xf]
    %v10995 = vld [vmem:[%s5 + $0x55c] sm:$0xf]
    %v10996 = vld [vmem:[%s5 + $0x560] sm:$0xf]
    %v10997 = vld [vmem:[%s5 + $0x564] sm:$0xf]
    %v10998 = vld [vmem:[%s5 + $0x568] sm:$0xf]
    %v10999 = vld [vmem:[%s5 + $0x56c] sm:$0xf]
    %v11000 = vld [vmem:[%s5 + $0x570] sm:$0xf]
    %v11001 = vld [vmem:[%s5 + $0x574] sm:$0xf]
    %v11002 = vld [vmem:[%s5 + $0x578] sm:$0xf]
    %v11003 = vld [vmem:[%s5 + $0x57c] sm:$0xf]
    %v11004 = vld [vmem:[%s5 + $0x580] sm:$0xf]
    %v11005 = vld [vmem:[%s5 + $0x584] sm:$0xf]
    %v11006 = vld [vmem:[%s5 + $0x588] sm:$0xf]
    %v11007 = vld [vmem:[%s5 + $0x58c] sm:$0xf]
    %v11008 = vld [vmem:[%s5 + $0x590] sm:$0xf]
    %v11009 = vld [vmem:[%s5 + $0x594] sm:$0xf]
    %v11010 = vld [vmem:[%s5 + $0x598] sm:$0xf]
    %v11011 = vld [vmem:[%s5 + $0x59c] sm:$0xf]
    %v11012 = vld [vmem:[%s5 + $0x5a0] sm:$0xf]
    %v11013 = vld [vmem:[%s5 + $0x5a4] sm:$0xf]
    %v11014 = vld [vmem:[%s5 + $0x5a8] sm:$0xf]
    %v11015 = vld [vmem:[%s5 + $0x5ac] sm:$0xf]
    %v11016 = vld [vmem:[%s5 + $0x5b0] sm:$0xf]
    %v11017 = vld [vmem:[%s5 + $0x5b4] sm:$0xf]
    %v11018 = vld [vmem:[%s5 + $0x5b8] sm:$0xf]
    %v11019 = vld [vmem:[%s5 + $0x5bc] sm:$0xf]
    %v11020 = vld [vmem:[%s5 + $0x5c0] sm:$0xf]
    %v11021 = vld [vmem:[%s5 + $0x5c4] sm:$0xf]
    %v11022 = vld [vmem:[%s5 + $0x5c8] sm:$0xf]
    %v11023 = vld [vmem:[%s5 + $0x5cc] sm:$0xf]
    %v11024 = vld [vmem:[%s5 + $0x5d0] sm:$0xf]
    %v11025 = vld [vmem:[%s5 + $0x5d4] sm:$0xf]
    %v11026 = vld [vmem:[%s5 + $0x5d8] sm:$0xf]
    %v11027 = vld [vmem:[%s5 + $0x5dc] sm:$0xf]
    %v11028 = vld [vmem:[%s5 + $0x5e0] sm:$0xf]
    %v11029 = vld [vmem:[%s5 + $0x5e4] sm:$0xf]
    %v11030 = vld [vmem:[%s5 + $0x5e8] sm:$0xf]
    %v11031 = vld [vmem:[%s5 + $0x5ec] sm:$0xf]
    %v11032 = vld [vmem:[%s5 + $0x5f0] sm:$0xf]
    %v11033 = vld [vmem:[%s5 + $0x5f4] sm:$0xf]
    %v11034 = vld [vmem:[%s5 + $0x5f8] sm:$0xf]
    %v11035 = vld [vmem:[%s5 + $0x5fc] sm:$0xf]
    %v11036 = vld [vmem:[%s5 + $0x600] sm:$0xf]
    %v11037 = vld [vmem:[%s5 + $0x604] sm:$0xf]
    %v11038 = vld [vmem:[%s5 + $0x608] sm:$0xf]
    %v11039 = vld [vmem:[%s5 + $0x60c] sm:$0xf]
    %v11040 = vld [vmem:[%s5 + $0x610] sm:$0xf]
    %v11041 = vld [vmem:[%s5 + $0x614] sm:$0xf]
    %v11042 = vld [vmem:[%s5 + $0x618] sm:$0xf]
    %v11043 = vld [vmem:[%s5 + $0x61c] sm:$0xf]
    %v11044 = vld [vmem:[%s5 + $0x620] sm:$0xf]
    %v11045 = vld [vmem:[%s5 + $0x624] sm:$0xf]
    %v11046 = vld [vmem:[%s5 + $0x628] sm:$0xf]
    %v11047 = vld [vmem:[%s5 + $0x62c] sm:$0xf]
    %v11048 = vld [vmem:[%s5 + $0x630] sm:$0xf]
    %v11049 = vld [vmem:[%s5 + $0x634] sm:$0xf]
    %v11050 = vld [vmem:[%s5 + $0x638] sm:$0xf]
    %v11051 = vld [vmem:[%s5 + $0x63c] sm:$0xf]
    %v11052 = vld [vmem:[%s5 + $0x640] sm:$0xf]
    %v11053 = vld [vmem:[%s5 + $0x644] sm:$0xf]
    %v11054 = vld [vmem:[%s5 + $0x648] sm:$0xf]
    %v11055 = vld [vmem:[%s5 + $0x64c] sm:$0xf]
    %v11056 = vld [vmem:[%s5 + $0x650] sm:$0xf]
    %v11057 = vld [vmem:[%s5 + $0x654] sm:$0xf]
    %v11058 = vld [vmem:[%s5 + $0x658] sm:$0xf]
    %v11059 = vld [vmem:[%s5 + $0x65c] sm:$0xf]
    %v11060 = vld [vmem:[%s5 + $0x660] sm:$0xf]
    %v11061 = vld [vmem:[%s5 + $0x664] sm:$0xf]
    %v11062 = vld [vmem:[%s5 + $0x668] sm:$0xf]
    %v11063 = vld [vmem:[%s5 + $0x66c] sm:$0xf]
    %v11064 = vld [vmem:[%s5 + $0x670] sm:$0xf]
    %v11065 = vld [vmem:[%s5 + $0x674] sm:$0xf]
    %v11066 = vld [vmem:[%s5 + $0x678] sm:$0xf]
    %v11067 = vld [vmem:[%s5 + $0x67c] sm:$0xf]
    %v11068 = vld [vmem:[%s5 + $0x680] sm:$0xf]
    %v11069 = vld [vmem:[%s5 + $0x684] sm:$0xf]
    %v11070 = vld [vmem:[%s5 + $0x688] sm:$0xf]
    %v11071 = vld [vmem:[%s5 + $0x68c] sm:$0xf]
    %v11072 = vld [vmem:[%s5 + $0x690] sm:$0xf]
    %v11073 = vld [vmem:[%s5 + $0x694] sm:$0xf]
    %v11074 = vld [vmem:[%s5 + $0x698] sm:$0xf]
    %v11075 = vld [vmem:[%s5 + $0x69c] sm:$0xf]
    %v11076 = vld [vmem:[%s5 + $0x6a0] sm:$0xf]
    %v11077 = vld [vmem:[%s5 + $0x6a4] sm:$0xf]
    %v11078 = vld [vmem:[%s5 + $0x6a8] sm:$0xf]
    %v11079 = vld [vmem:[%s5 + $0x6ac] sm:$0xf]
    %v11080 = vld [vmem:[%s5 + $0x6b0] sm:$0xf]
    %v11081 = vld [vmem:[%s5 + $0x6b4] sm:$0xf]
    %v11082 = vld [vmem:[%s5 + $0x6b8] sm:$0xf]
    %v11083 = vld [vmem:[%s5 + $0x6bc] sm:$0xf]
    %v11084 = vld [vmem:[%s5 + $0x6c0] sm:$0xf]
    %v11085 = vld [vmem:[%s5 + $0x6c4] sm:$0xf]
    %v11086 = vld [vmem:[%s5 + $0x6c8] sm:$0xf]
    %v11087 = vld [vmem:[%s5 + $0x6cc] sm:$0xf]
    %v11088 = vld [vmem:[%s5 + $0x6d0] sm:$0xf]
    %v11089 = vld [vmem:[%s5 + $0x6d4] sm:$0xf]
    %v11090 = vld [vmem:[%s5 + $0x6d8] sm:$0xf]
    %v11091 = vld [vmem:[%s5 + $0x6dc] sm:$0xf]
    %v11092 = vld [vmem:[%s5 + $0x6e0] sm:$0xf]
    %v11093 = vld [vmem:[%s5 + $0x6e4] sm:$0xf]
    %v11094 = vld [vmem:[%s5 + $0x6e8] sm:$0xf]
    %v11095 = vld [vmem:[%s5 + $0x6ec] sm:$0xf]
    %v11096 = vld [vmem:[%s5 + $0x6f0] sm:$0xf]
    %v11097 = vld [vmem:[%s5 + $0x6f4] sm:$0xf]
    %v11098 = vld [vmem:[%s5 + $0x6f8] sm:$0xf]
    %v11099 = vld [vmem:[%s5 + $0x6fc] sm:$0xf]
    %v11100 = vld [vmem:[%s5 + $0x700] sm:$0xf]
    %v11101 = vld [vmem:[%s5 + $0x704] sm:$0xf]
    %v11102 = vld [vmem:[%s5 + $0x708] sm:$0xf]
    %v11103 = vld [vmem:[%s5 + $0x70c] sm:$0xf]
    %v11104 = vld [vmem:[%s5 + $0x710] sm:$0xf]
    %v11105 = vld [vmem:[%s5 + $0x714] sm:$0xf]
    %v11106 = vld [vmem:[%s5 + $0x718] sm:$0xf]
    %v11107 = vld [vmem:[%s5 + $0x71c] sm:$0xf]
    %v11108 = vld [vmem:[%s5 + $0x720] sm:$0xf]
    %v11109 = vld [vmem:[%s5 + $0x724] sm:$0xf]
    %v11110 = vld [vmem:[%s5 + $0x728] sm:$0xf]
    %v11111 = vld [vmem:[%s5 + $0x72c] sm:$0xf]
    %v11112 = vld [vmem:[%s5 + $0x730] sm:$0xf]
    %v11113 = vld [vmem:[%s5 + $0x734] sm:$0xf]
    %v11114 = vld [vmem:[%s5 + $0x738] sm:$0xf]
    %v11115 = vld [vmem:[%s5 + $0x73c] sm:$0xf]
    %v11116 = vld [vmem:[%s5 + $0x740] sm:$0xf]
    %v11117 = vld [vmem:[%s5 + $0x744] sm:$0xf]
    %v11118 = vld [vmem:[%s5 + $0x748] sm:$0xf]
    %v11119 = vld [vmem:[%s5 + $0x74c] sm:$0xf]
    %v11120 = vld [vmem:[%s5 + $0x750] sm:$0xf]
    %v11121 = vld [vmem:[%s5 + $0x754] sm:$0xf]
    %v11122 = vld [vmem:[%s5 + $0x758] sm:$0xf]
    %v11123 = vld [vmem:[%s5 + $0x75c] sm:$0xf]
    %v11124 = vld [vmem:[%s5 + $0x760] sm:$0xf]
    %v11125 = vld [vmem:[%s5 + $0x764] sm:$0xf]
    %v11126 = vld [vmem:[%s5 + $0x768] sm:$0xf]
    %v11127 = vld [vmem:[%s5 + $0x76c] sm:$0xf]
    %v11128 = vld [vmem:[%s5 + $0x770] sm:$0xf]
    %v11129 = vld [vmem:[%s5 + $0x774] sm:$0xf]
    %v11130 = vld [vmem:[%s5 + $0x778] sm:$0xf]
    %v11131 = vld [vmem:[%s5 + $0x77c] sm:$0xf]
    %v11132 = vld [vmem:[%s5 + $0x780] sm:$0xf]
    %v11133 = vld [vmem:[%s5 + $0x784] sm:$0xf]
    %v11134 = vld [vmem:[%s5 + $0x788] sm:$0xf]
    %v11135 = vld [vmem:[%s5 + $0x78c] sm:$0xf]
    %v11136 = vld [vmem:[%s5 + $0x790] sm:$0xf]
    %v11137 = vld [vmem:[%s5 + $0x794] sm:$0xf]
    %v11138 = vld [vmem:[%s5 + $0x798] sm:$0xf]
    %v11139 = vld [vmem:[%s5 + $0x79c] sm:$0xf]
    %v11140 = vld [vmem:[%s5 + $0x7a0] sm:$0xf]
    %v11141 = vld [vmem:[%s5 + $0x7a4] sm:$0xf]
    %v11142 = vld [vmem:[%s5 + $0x7a8] sm:$0xf]
    %v11143 = vld [vmem:[%s5 + $0x7ac] sm:$0xf]
    %v11144 = vld [vmem:[%s5 + $0x7b0] sm:$0xf]
    %v11145 = vld [vmem:[%s5 + $0x7b4] sm:$0xf]
    %v11146 = vld [vmem:[%s5 + $0x7b8] sm:$0xf]
    %v11147 = vld [vmem:[%s5 + $0x7bc] sm:$0xf]
    %v11148 = vld [vmem:[%s5 + $0x7c0] sm:$0xf]
    %v11149 = vld [vmem:[%s5 + $0x7c4] sm:$0xf]
    %v11150 = vld [vmem:[%s5 + $0x7c8] sm:$0xf]
    %v11151 = vld [vmem:[%s5 + $0x7cc] sm:$0xf]
    %v11152 = vld [vmem:[%s5 + $0x7d0] sm:$0xf]
    %v11153 = vld [vmem:[%s5 + $0x7d4] sm:$0xf]
    %v11154 = vld [vmem:[%s5 + $0x7d8] sm:$0xf]
    %v11155 = vld [vmem:[%s5 + $0x7dc] sm:$0xf]
    %v11156 = vld [vmem:[%s5 + $0x7e0] sm:$0xf]
    %v11157 = vld [vmem:[%s5 + $0x7e4] sm:$0xf]
    %v11158 = vld [vmem:[%s5 + $0x7e8] sm:$0xf]
    %v11159 = vld [vmem:[%s5 + $0x7ec] sm:$0xf]
    %v11160 = vld [vmem:[%s5 + $0x7f0] sm:$0xf]
    %v11161 = vld [vmem:[%s5 + $0x7f4] sm:$0xf]
    %v11162 = vld [vmem:[%s5 + $0x7f8] sm:$0xf]
    %v11163 = vld [vmem:[%s5 + $0x7fc] sm:$0xf]
    %v11172 = vcombine.high %v10644, %v10644
    %v11174 = vunpack.c.l.s4 1983009808
    %v11175 = vunpack.c.0.s8 %v11174
    %v11176 = vlaneseq
    %v11177 = vshrl.u32 %v11176, 7
    %v11178 = vsub.s32 %v11175, %v11177
    %v11179 = vrot.slane %v10644, %v11178
    %v11181 = vunpack.c.l.s4 1983009808
    %v11182 = vunpack.c.0.s8 %v11181
    %v11183 = vlaneseq
    %v11184 = vshrl.u32 %v11183, 7
    %v11185 = vsub.s32 %v11182, %v11184
    %v11186 = vrot.slane %v11172, %v11185
    %v11187 = vcombine.high %v11179, %v11179
    %v11188 = vcombine.high %v11186, %v11186
    %v11189 = vcombine.high %v10645, %v10645
    %v11191 = vunpack.c.l.s4 1983009808
    %v11192 = vunpack.c.0.s8 %v11191
    %v11193 = vlaneseq
    %v11194 = vshrl.u32 %v11193, 7
    %v11195 = vsub.s32 %v11192, %v11194
    %v11196 = vrot.slane %v10645, %v11195
    %v11198 = vunpack.c.l.s4 1983009808
    %v11199 = vunpack.c.0.s8 %v11198
    %v11200 = vlaneseq
    %v11201 = vshrl.u32 %v11200, 7
    %v11202 = vsub.s32 %v11199, %v11201
    %v11203 = vrot.slane %v11189, %v11202
    %v11204 = vcombine.high %v11196, %v11196
    %v11205 = vcombine.high %v11203, %v11203
    %v11206 = vcombine.high %v10646, %v10646
    %v11208 = vunpack.c.l.s4 1983009808
    %v11209 = vunpack.c.0.s8 %v11208
    %v11210 = vlaneseq
    %v11211 = vshrl.u32 %v11210, 7
    %v11212 = vsub.s32 %v11209, %v11211
    %v11213 = vrot.slane %v10646, %v11212
    %v11215 = vunpack.c.l.s4 1983009808
    %v11216 = vunpack.c.0.s8 %v11215
    %v11217 = vlaneseq
    %v11218 = vshrl.u32 %v11217, 7
    %v11219 = vsub.s32 %v11216, %v11218
    %v11220 = vrot.slane %v11206, %v11219
    %v11221 = vcombine.high %v11213, %v11213
    %v11222 = vcombine.high %v11220, %v11220
    %v11223 = vcombine.high %v10647, %v10647
    %v11225 = vunpack.c.l.s4 1983009808
    %v11226 = vunpack.c.0.s8 %v11225
    %v11227 = vlaneseq
    %v11228 = vshrl.u32 %v11227, 7
    %v11229 = vsub.s32 %v11226, %v11228
    %v11230 = vrot.slane %v10647, %v11229
    %v11232 = vunpack.c.l.s4 1983009808
    %v11233 = vunpack.c.0.s8 %v11232
    %v11234 = vlaneseq
    %v11235 = vshrl.u32 %v11234, 7
    %v11236 = vsub.s32 %v11233, %v11235
    %v11237 = vrot.slane %v11223, %v11236
    %v11238 = vcombine.high %v11230, %v11230
    %v11239 = vcombine.high %v11237, %v11237
    %v11240 = vcombine.high %v10648, %v10648
    %v11242 = vunpack.c.l.s4 1983009808
    %v11243 = vunpack.c.0.s8 %v11242
    %v11244 = vlaneseq
    %v11245 = vshrl.u32 %v11244, 7
    %v11246 = vsub.s32 %v11243, %v11245
    %v11247 = vrot.slane %v10648, %v11246
    %v11249 = vunpack.c.l.s4 1983009808
    %v11250 = vunpack.c.0.s8 %v11249
    %v11251 = vlaneseq
    %v11252 = vshrl.u32 %v11251, 7
    %v11253 = vsub.s32 %v11250, %v11252
    %v11254 = vrot.slane %v11240, %v11253
    %v11255 = vcombine.high %v11247, %v11247
    %v11256 = vcombine.high %v11254, %v11254
    %v11257 = vcombine.high %v10649, %v10649
    %v11259 = vunpack.c.l.s4 1983009808
    %v11260 = vunpack.c.0.s8 %v11259
    %v11261 = vlaneseq
    %v11262 = vshrl.u32 %v11261, 7
    %v11263 = vsub.s32 %v11260, %v11262
    %v11264 = vrot.slane %v10649, %v11263
    %v11266 = vunpack.c.l.s4 1983009808
    %v11267 = vunpack.c.0.s8 %v11266
    %v11268 = vlaneseq
    %v11269 = vshrl.u32 %v11268, 7
    %v11270 = vsub.s32 %v11267, %v11269
    %v11271 = vrot.slane %v11257, %v11270
    %v11272 = vcombine.high %v11264, %v11264
    %v11273 = vcombine.high %v11271, %v11271
    %v11274 = vcombine.high %v10650, %v10650
    %v11276 = vunpack.c.l.s4 1983009808
    %v11277 = vunpack.c.0.s8 %v11276
    %v11278 = vlaneseq
    %v11279 = vshrl.u32 %v11278, 7
    %v11280 = vsub.s32 %v11277, %v11279
    %v11281 = vrot.slane %v10650, %v11280
    %v11283 = vunpack.c.l.s4 1983009808
    %v11284 = vunpack.c.0.s8 %v11283
    %v11285 = vlaneseq
    %v11286 = vshrl.u32 %v11285, 7
    %v11287 = vsub.s32 %v11284, %v11286
    %v11288 = vrot.slane %v11274, %v11287
    %v11289 = vcombine.high %v11281, %v11281
    %v11290 = vcombine.high %v11288, %v11288
    %v11291 = vcombine.high %v10651, %v10651
    %v11293 = vunpack.c.l.s4 1983009808
    %v11294 = vunpack.c.0.s8 %v11293
    %v11295 = vlaneseq
    %v11296 = vshrl.u32 %v11295, 7
    %v11297 = vsub.s32 %v11294, %v11296
    %v11298 = vrot.slane %v10651, %v11297
    %v11300 = vunpack.c.l.s4 1983009808
    %v11301 = vunpack.c.0.s8 %v11300
    %v11302 = vlaneseq
    %v11303 = vshrl.u32 %v11302, 7
    %v11304 = vsub.s32 %v11301, %v11303
    %v11305 = vrot.slane %v11291, %v11304
    %v11306 = vcombine.high %v11298, %v11298
    %v11307 = vcombine.high %v11305, %v11305
    %v11340 = vpack.c.bf16 %v11179, %v11179
    %v11341 = vpack.c.bf16 %v11187, %v11187
    %v11342 = vpack.c.bf16 %v11186, %v11186
    %v11343 = vpack.c.bf16 %v11188, %v11188
    %v11344 = vpack.c.bf16 %v11196, %v11196
    %v11345 = vpack.c.bf16 %v11204, %v11204
    %v11346 = vpack.c.bf16 %v11203, %v11203
    %v11347 = vpack.c.bf16 %v11205, %v11205
    %v11348 = vpack.c.bf16 %v11213, %v11213
    %v11349 = vpack.c.bf16 %v11221, %v11221
    %v11350 = vpack.c.bf16 %v11220, %v11220
    %v11351 = vpack.c.bf16 %v11222, %v11222
    %v11352 = vpack.c.bf16 %v11230, %v11230
    %v11353 = vpack.c.bf16 %v11238, %v11238
    %v11354 = vpack.c.bf16 %v11237, %v11237
    %v11355 = vpack.c.bf16 %v11239, %v11239
    %v11356 = vpack.c.bf16 %v11247, %v11247
    %v11357 = vpack.c.bf16 %v11255, %v11255
    %v11358 = vpack.c.bf16 %v11254, %v11254
    %v11359 = vpack.c.bf16 %v11256, %v11256
    %v11360 = vpack.c.bf16 %v11264, %v11264
    %v11361 = vpack.c.bf16 %v11272, %v11272
    %v11362 = vpack.c.bf16 %v11271, %v11271
    %v11363 = vpack.c.bf16 %v11273, %v11273
    %v11364 = vpack.c.bf16 %v11281, %v11281
    %v11365 = vpack.c.bf16 %v11289, %v11289
    %v11366 = vpack.c.bf16 %v11288, %v11288
    %v11367 = vpack.c.bf16 %v11290, %v11290
    %v11368 = vpack.c.bf16 %v11298, %v11298
    %v11369 = vpack.c.bf16 %v11306, %v11306
    %v11370 = vpack.c.bf16 %v11305, %v11305
    %v11371 = vpack.c.bf16 %v11307, %v11307
    %v11372 = vld [vmem:[%s6] sm:$0x1]
    %v11374 = vlaneseq
    %v11375 = vshrl.u32 %v11374, 7
    %v11376 = vsub.s32 0, %v11375
    %v11377 = vrot.slane %v11372, %v11376
    %v11891 = vunpack.c.l.b16 %v10652
    %v11892 = vunpack.c.l.b16 %v10653
    %v11893 = vunpack.c.l.b16 %v10654
    %v11894 = vunpack.c.l.b16 %v10655
    %v11895 = vunpack.c.l.b16 %v10656
    %v11896 = vunpack.c.l.b16 %v10657
    %v11897 = vunpack.c.l.b16 %v10658
    %v11898 = vunpack.c.l.b16 %v10659
    %v11899 = vunpack.c.l.b16 %v10660
    %v11900 = vunpack.c.l.b16 %v10661
    %v11901 = vunpack.c.l.b16 %v10662
    %v11902 = vunpack.c.l.b16 %v10663
    %v11903 = vunpack.c.l.b16 %v10664
    %v11904 = vunpack.c.l.b16 %v10665
    %v11905 = vunpack.c.l.b16 %v10666
    %v11906 = vunpack.c.l.b16 %v10667
    %v11907 = vunpack.c.l.b16 %v10668
    %v11908 = vunpack.c.l.b16 %v10669
    %v11909 = vunpack.c.l.b16 %v10670
    %v11910 = vunpack.c.l.b16 %v10671
    %v11911 = vunpack.c.l.b16 %v10672
    %v11912 = vunpack.c.l.b16 %v10673
    %v11913 = vunpack.c.l.b16 %v10674
    %v11914 = vunpack.c.l.b16 %v10675
    %v11915 = vunpack.c.l.b16 %v10676
    %v11916 = vunpack.c.l.b16 %v10677
    %v11917 = vunpack.c.l.b16 %v10678
    %v11918 = vunpack.c.l.b16 %v10679
    %v11919 = vunpack.c.l.b16 %v10680
    %v11920 = vunpack.c.l.b16 %v10681
    %v11921 = vunpack.c.l.b16 %v10682
    %v11922 = vunpack.c.l.b16 %v10683
    %v11923 = vunpack.c.l.b16 %v10684
    %v11924 = vunpack.c.l.b16 %v10685
    %v11925 = vunpack.c.l.b16 %v10686
    %v11926 = vunpack.c.l.b16 %v10687
    %v11927 = vunpack.c.l.b16 %v10688
    %v11928 = vunpack.c.l.b16 %v10689
    %v11929 = vunpack.c.l.b16 %v10690
    %v11930 = vunpack.c.l.b16 %v10691
    %v11931 = vunpack.c.l.b16 %v10692
    %v11932 = vunpack.c.l.b16 %v10693
    %v11933 = vunpack.c.l.b16 %v10694
    %v11934 = vunpack.c.l.b16 %v10695
    %v11935 = vunpack.c.l.b16 %v10696
    %v11936 = vunpack.c.l.b16 %v10697
    %v11937 = vunpack.c.l.b16 %v10698
    %v11938 = vunpack.c.l.b16 %v10699
    %v11939 = vunpack.c.l.b16 %v10700
    %v11940 = vunpack.c.l.b16 %v10701
    %v11941 = vunpack.c.l.b16 %v10702
    %v11942 = vunpack.c.l.b16 %v10703
    %v11943 = vunpack.c.l.b16 %v10704
    %v11944 = vunpack.c.l.b16 %v10705
    %v11945 = vunpack.c.l.b16 %v10706
    %v11946 = vunpack.c.l.b16 %v10707
    %v11947 = vunpack.c.l.b16 %v10708
    %v11948 = vunpack.c.l.b16 %v10709
    %v11949 = vunpack.c.l.b16 %v10710
    %v11950 = vunpack.c.l.b16 %v10711
    %v11951 = vunpack.c.l.b16 %v10712
    %v11952 = vunpack.c.l.b16 %v10713
    %v11953 = vunpack.c.l.b16 %v10714
    %v11954 = vunpack.c.l.b16 %v10715
    %v11955 = vunpack.c.l.b16 %v10716
    %v11956 = vunpack.c.l.b16 %v10717
    %v11957 = vunpack.c.l.b16 %v10718
    %v11958 = vunpack.c.l.b16 %v10719
    %v11959 = vunpack.c.l.b16 %v10720
    %v11960 = vunpack.c.l.b16 %v10721
    %v11961 = vunpack.c.l.b16 %v10722
    %v11962 = vunpack.c.l.b16 %v10723
    %v11963 = vunpack.c.l.b16 %v10724
    %v11964 = vunpack.c.l.b16 %v10725
    %v11965 = vunpack.c.l.b16 %v10726
    %v11966 = vunpack.c.l.b16 %v10727
    %v11967 = vunpack.c.l.b16 %v10728
    %v11968 = vunpack.c.l.b16 %v10729
    %v11969 = vunpack.c.l.b16 %v10730
    %v11970 = vunpack.c.l.b16 %v10731
    %v11971 = vunpack.c.l.b16 %v10732
    %v11972 = vunpack.c.l.b16 %v10733
    %v11973 = vunpack.c.l.b16 %v10734
    %v11974 = vunpack.c.l.b16 %v10735
    %v11975 = vunpack.c.l.b16 %v10736
    %v11976 = vunpack.c.l.b16 %v10737
    %v11977 = vunpack.c.l.b16 %v10738
    %v11978 = vunpack.c.l.b16 %v10739
    %v11979 = vunpack.c.l.b16 %v10740
    %v11980 = vunpack.c.l.b16 %v10741
    %v11981 = vunpack.c.l.b16 %v10742
    %v11982 = vunpack.c.l.b16 %v10743
    %v11983 = vunpack.c.l.b16 %v10744
    %v11984 = vunpack.c.l.b16 %v10745
    %v11985 = vunpack.c.l.b16 %v10746
    %v11986 = vunpack.c.l.b16 %v10747
    %v11987 = vunpack.c.l.b16 %v10748
    %v11988 = vunpack.c.l.b16 %v10749
    %v11989 = vunpack.c.l.b16 %v10750
    %v11990 = vunpack.c.l.b16 %v10751
    %v11991 = vunpack.c.l.b16 %v10752
    %v11992 = vunpack.c.l.b16 %v10753
    %v11993 = vunpack.c.l.b16 %v10754
    %v11994 = vunpack.c.l.b16 %v10755
    %v11995 = vunpack.c.l.b16 %v10756
    %v11996 = vunpack.c.l.b16 %v10757
    %v11997 = vunpack.c.l.b16 %v10758
    %v11998 = vunpack.c.l.b16 %v10759
    %v11999 = vunpack.c.l.b16 %v10760
    %v12000 = vunpack.c.l.b16 %v10761
    %v12001 = vunpack.c.l.b16 %v10762
    %v12002 = vunpack.c.l.b16 %v10763
    %v12003 = vunpack.c.l.b16 %v10764
    %v12004 = vunpack.c.l.b16 %v10765
    %v12005 = vunpack.c.l.b16 %v10766
    %v12006 = vunpack.c.l.b16 %v10767
    %v12007 = vunpack.c.l.b16 %v10768
    %v12008 = vunpack.c.l.b16 %v10769
    %v12009 = vunpack.c.l.b16 %v10770
    %v12010 = vunpack.c.l.b16 %v10771
    %v12011 = vunpack.c.l.b16 %v10772
    %v12012 = vunpack.c.l.b16 %v10773
    %v12013 = vunpack.c.l.b16 %v10774
    %v12014 = vunpack.c.l.b16 %v10775
    %v12015 = vunpack.c.l.b16 %v10776
    %v12016 = vunpack.c.l.b16 %v10777
    %v12017 = vunpack.c.l.b16 %v10778
    %v12018 = vunpack.c.l.b16 %v10779
    %v12019 = vunpack.c.l.b16 %v10780
    %v12020 = vunpack.c.l.b16 %v10781
    %v12021 = vunpack.c.l.b16 %v10782
    %v12022 = vunpack.c.l.b16 %v10783
    %v12023 = vunpack.c.l.b16 %v10784
    %v12024 = vunpack.c.l.b16 %v10785
    %v12025 = vunpack.c.l.b16 %v10786
    %v12026 = vunpack.c.l.b16 %v10787
    %v12027 = vunpack.c.l.b16 %v10788
    %v12028 = vunpack.c.l.b16 %v10789
    %v12029 = vunpack.c.l.b16 %v10790
    %v12030 = vunpack.c.l.b16 %v10791
    %v12031 = vunpack.c.l.b16 %v10792
    %v12032 = vunpack.c.l.b16 %v10793
    %v12033 = vunpack.c.l.b16 %v10794
    %v12034 = vunpack.c.l.b16 %v10795
    %v12035 = vunpack.c.l.b16 %v10796
    %v12036 = vunpack.c.l.b16 %v10797
    %v12037 = vunpack.c.l.b16 %v10798
    %v12038 = vunpack.c.l.b16 %v10799
    %v12039 = vunpack.c.l.b16 %v10800
    %v12040 = vunpack.c.l.b16 %v10801
    %v12041 = vunpack.c.l.b16 %v10802
    %v12042 = vunpack.c.l.b16 %v10803
    %v12043 = vunpack.c.l.b16 %v10804
    %v12044 = vunpack.c.l.b16 %v10805
    %v12045 = vunpack.c.l.b16 %v10806
    %v12046 = vunpack.c.l.b16 %v10807
    %v12047 = vunpack.c.l.b16 %v10808
    %v12048 = vunpack.c.l.b16 %v10809
    %v12049 = vunpack.c.l.b16 %v10810
    %v12050 = vunpack.c.l.b16 %v10811
    %v12051 = vunpack.c.l.b16 %v10812
    %v12052 = vunpack.c.l.b16 %v10813
    %v12053 = vunpack.c.l.b16 %v10814
    %v12054 = vunpack.c.l.b16 %v10815
    %v12055 = vunpack.c.l.b16 %v10816
    %v12056 = vunpack.c.l.b16 %v10817
    %v12057 = vunpack.c.l.b16 %v10818
    %v12058 = vunpack.c.l.b16 %v10819
    %v12059 = vunpack.c.l.b16 %v10820
    %v12060 = vunpack.c.l.b16 %v10821
    %v12061 = vunpack.c.l.b16 %v10822
    %v12062 = vunpack.c.l.b16 %v10823
    %v12063 = vunpack.c.l.b16 %v10824
    %v12064 = vunpack.c.l.b16 %v10825
    %v12065 = vunpack.c.l.b16 %v10826
    %v12066 = vunpack.c.l.b16 %v10827
    %v12067 = vunpack.c.l.b16 %v10828
    %v12068 = vunpack.c.l.b16 %v10829
    %v12069 = vunpack.c.l.b16 %v10830
    %v12070 = vunpack.c.l.b16 %v10831
    %v12071 = vunpack.c.l.b16 %v10832
    %v12072 = vunpack.c.l.b16 %v10833
    %v12073 = vunpack.c.l.b16 %v10834
    %v12074 = vunpack.c.l.b16 %v10835
    %v12075 = vunpack.c.l.b16 %v10836
    %v12076 = vunpack.c.l.b16 %v10837
    %v12077 = vunpack.c.l.b16 %v10838
    %v12078 = vunpack.c.l.b16 %v10839
    %v12079 = vunpack.c.l.b16 %v10840
    %v12080 = vunpack.c.l.b16 %v10841
    %v12081 = vunpack.c.l.b16 %v10842
    %v12082 = vunpack.c.l.b16 %v10843
    %v12083 = vunpack.c.l.b16 %v10844
    %v12084 = vunpack.c.l.b16 %v10845
    %v12085 = vunpack.c.l.b16 %v10846
    %v12086 = vunpack.c.l.b16 %v10847
    %v12087 = vunpack.c.l.b16 %v10848
    %v12088 = vunpack.c.l.b16 %v10849
    %v12089 = vunpack.c.l.b16 %v10850
    %v12090 = vunpack.c.l.b16 %v10851
    %v12091 = vunpack.c.l.b16 %v10852
    %v12092 = vunpack.c.l.b16 %v10853
    %v12093 = vunpack.c.l.b16 %v10854
    %v12094 = vunpack.c.l.b16 %v10855
    %v12095 = vunpack.c.l.b16 %v10856
    %v12096 = vunpack.c.l.b16 %v10857
    %v12097 = vunpack.c.l.b16 %v10858
    %v12098 = vunpack.c.l.b16 %v10859
    %v12099 = vunpack.c.l.b16 %v10860
    %v12100 = vunpack.c.l.b16 %v10861
    %v12101 = vunpack.c.l.b16 %v10862
    %v12102 = vunpack.c.l.b16 %v10863
    %v12103 = vunpack.c.l.b16 %v10864
    %v12104 = vunpack.c.l.b16 %v10865
    %v12105 = vunpack.c.l.b16 %v10866
    %v12106 = vunpack.c.l.b16 %v10867
    %v12107 = vunpack.c.l.b16 %v10868
    %v12108 = vunpack.c.l.b16 %v10869
    %v12109 = vunpack.c.l.b16 %v10870
    %v12110 = vunpack.c.l.b16 %v10871
    %v12111 = vunpack.c.l.b16 %v10872
    %v12112 = vunpack.c.l.b16 %v10873
    %v12113 = vunpack.c.l.b16 %v10874
    %v12114 = vunpack.c.l.b16 %v10875
    %v12115 = vunpack.c.l.b16 %v10876
    %v12116 = vunpack.c.l.b16 %v10877
    %v12117 = vunpack.c.l.b16 %v10878
    %v12118 = vunpack.c.l.b16 %v10879
    %v12119 = vunpack.c.l.b16 %v10880
    %v12120 = vunpack.c.l.b16 %v10881
    %v12121 = vunpack.c.l.b16 %v10882
    %v12122 = vunpack.c.l.b16 %v10883
    %v12123 = vunpack.c.l.b16 %v10884
    %v12124 = vunpack.c.l.b16 %v10885
    %v12125 = vunpack.c.l.b16 %v10886
    %v12126 = vunpack.c.l.b16 %v10887
    %v12127 = vunpack.c.l.b16 %v10888
    %v12128 = vunpack.c.l.b16 %v10889
    %v12129 = vunpack.c.l.b16 %v10890
    %v12130 = vunpack.c.l.b16 %v10891
    %v12131 = vunpack.c.l.b16 %v10892
    %v12132 = vunpack.c.l.b16 %v10893
    %v12133 = vunpack.c.l.b16 %v10894
    %v12134 = vunpack.c.l.b16 %v10895
    %v12135 = vunpack.c.l.b16 %v10896
    %v12136 = vunpack.c.l.b16 %v10897
    %v12137 = vunpack.c.l.b16 %v10898
    %v12138 = vunpack.c.l.b16 %v10899
    %v12139 = vunpack.c.l.b16 %v10900
    %v12140 = vunpack.c.l.b16 %v10901
    %v12141 = vunpack.c.l.b16 %v10902
    %v12142 = vunpack.c.l.b16 %v10903
    %v12143 = vunpack.c.l.b16 %v10904
    %v12144 = vunpack.c.l.b16 %v10905
    %v12145 = vunpack.c.l.b16 %v10906
    %v12146 = vunpack.c.l.b16 %v10907
    %v12147 = vunpack.c.l.b16 %v10908
    %v12148 = vunpack.c.l.b16 %v10909
    %v12149 = vunpack.c.l.b16 %v10910
    %v12150 = vunpack.c.l.b16 %v10911
    %v12151 = vunpack.c.l.b16 %v10912
    %v12152 = vunpack.c.l.b16 %v10913
    %v12153 = vunpack.c.l.b16 %v10914
    %v12154 = vunpack.c.l.b16 %v10915
    %v12155 = vunpack.c.l.b16 %v10916
    %v12156 = vunpack.c.l.b16 %v10917
    %v12157 = vunpack.c.l.b16 %v10918
    %v12158 = vunpack.c.l.b16 %v10919
    %v12159 = vunpack.c.l.b16 %v10920
    %v12160 = vunpack.c.l.b16 %v10921
    %v12161 = vunpack.c.l.b16 %v10922
    %v12162 = vunpack.c.l.b16 %v10923
    %v12163 = vunpack.c.l.b16 %v10924
    %v12164 = vunpack.c.l.b16 %v10925
    %v12165 = vunpack.c.l.b16 %v10926
    %v12166 = vunpack.c.l.b16 %v10927
    %v12167 = vunpack.c.l.b16 %v10928
    %v12168 = vunpack.c.l.b16 %v10929
    %v12169 = vunpack.c.l.b16 %v10930
    %v12170 = vunpack.c.l.b16 %v10931
    %v12171 = vunpack.c.l.b16 %v10932
    %v12172 = vunpack.c.l.b16 %v10933
    %v12173 = vunpack.c.l.b16 %v10934
    %v12174 = vunpack.c.l.b16 %v10935
    %v12175 = vunpack.c.l.b16 %v10936
    %v12176 = vunpack.c.l.b16 %v10937
    %v12177 = vunpack.c.l.b16 %v10938
    %v12178 = vunpack.c.l.b16 %v10939
    %v12179 = vunpack.c.l.b16 %v10940
    %v12180 = vunpack.c.l.b16 %v10941
    %v12181 = vunpack.c.l.b16 %v10942
    %v12182 = vunpack.c.l.b16 %v10943
    %v12183 = vunpack.c.l.b16 %v10944
    %v12184 = vunpack.c.l.b16 %v10945
    %v12185 = vunpack.c.l.b16 %v10946
    %v12186 = vunpack.c.l.b16 %v10947
    %v12187 = vunpack.c.l.b16 %v10948
    %v12188 = vunpack.c.l.b16 %v10949
    %v12189 = vunpack.c.l.b16 %v10950
    %v12190 = vunpack.c.l.b16 %v10951
    %v12191 = vunpack.c.l.b16 %v10952
    %v12192 = vunpack.c.l.b16 %v10953
    %v12193 = vunpack.c.l.b16 %v10954
    %v12194 = vunpack.c.l.b16 %v10955
    %v12195 = vunpack.c.l.b16 %v10956
    %v12196 = vunpack.c.l.b16 %v10957
    %v12197 = vunpack.c.l.b16 %v10958
    %v12198 = vunpack.c.l.b16 %v10959
    %v12199 = vunpack.c.l.b16 %v10960
    %v12200 = vunpack.c.l.b16 %v10961
    %v12201 = vunpack.c.l.b16 %v10962
    %v12202 = vunpack.c.l.b16 %v10963
    %v12203 = vunpack.c.l.b16 %v10964
    %v12204 = vunpack.c.l.b16 %v10965
    %v12205 = vunpack.c.l.b16 %v10966
    %v12206 = vunpack.c.l.b16 %v10967
    %v12207 = vunpack.c.l.b16 %v10968
    %v12208 = vunpack.c.l.b16 %v10969
    %v12209 = vunpack.c.l.b16 %v10970
    %v12210 = vunpack.c.l.b16 %v10971
    %v12211 = vunpack.c.l.b16 %v10972
    %v12212 = vunpack.c.l.b16 %v10973
    %v12213 = vunpack.c.l.b16 %v10974
    %v12214 = vunpack.c.l.b16 %v10975
    %v12215 = vunpack.c.l.b16 %v10976
    %v12216 = vunpack.c.l.b16 %v10977
    %v12217 = vunpack.c.l.b16 %v10978
    %v12218 = vunpack.c.l.b16 %v10979
    %v12219 = vunpack.c.l.b16 %v10980
    %v12220 = vunpack.c.l.b16 %v10981
    %v12221 = vunpack.c.l.b16 %v10982
    %v12222 = vunpack.c.l.b16 %v10983
    %v12223 = vunpack.c.l.b16 %v10984
    %v12224 = vunpack.c.l.b16 %v10985
    %v12225 = vunpack.c.l.b16 %v10986
    %v12226 = vunpack.c.l.b16 %v10987
    %v12227 = vunpack.c.l.b16 %v10988
    %v12228 = vunpack.c.l.b16 %v10989
    %v12229 = vunpack.c.l.b16 %v10990
    %v12230 = vunpack.c.l.b16 %v10991
    %v12231 = vunpack.c.l.b16 %v10992
    %v12232 = vunpack.c.l.b16 %v10993
    %v12233 = vunpack.c.l.b16 %v10994
    %v12234 = vunpack.c.l.b16 %v10995
    %v12235 = vunpack.c.l.b16 %v10996
    %v12236 = vunpack.c.l.b16 %v10997
    %v12237 = vunpack.c.l.b16 %v10998
    %v12238 = vunpack.c.l.b16 %v10999
    %v12239 = vunpack.c.l.b16 %v11000
    %v12240 = vunpack.c.l.b16 %v11001
    %v12241 = vunpack.c.l.b16 %v11002
    %v12242 = vunpack.c.l.b16 %v11003
    %v12243 = vunpack.c.l.b16 %v11004
    %v12244 = vunpack.c.l.b16 %v11005
    %v12245 = vunpack.c.l.b16 %v11006
    %v12246 = vunpack.c.l.b16 %v11007
    %v12247 = vunpack.c.l.b16 %v11008
    %v12248 = vunpack.c.l.b16 %v11009
    %v12249 = vunpack.c.l.b16 %v11010
    %v12250 = vunpack.c.l.b16 %v11011
    %v12251 = vunpack.c.l.b16 %v11012
    %v12252 = vunpack.c.l.b16 %v11013
    %v12253 = vunpack.c.l.b16 %v11014
    %v12254 = vunpack.c.l.b16 %v11015
    %v12255 = vunpack.c.l.b16 %v11016
    %v12256 = vunpack.c.l.b16 %v11017
    %v12257 = vunpack.c.l.b16 %v11018
    %v12258 = vunpack.c.l.b16 %v11019
    %v12259 = vunpack.c.l.b16 %v11020
    %v12260 = vunpack.c.l.b16 %v11021
    %v12261 = vunpack.c.l.b16 %v11022
    %v12262 = vunpack.c.l.b16 %v11023
    %v12263 = vunpack.c.l.b16 %v11024
    %v12264 = vunpack.c.l.b16 %v11025
    %v12265 = vunpack.c.l.b16 %v11026
    %v12266 = vunpack.c.l.b16 %v11027
    %v12267 = vunpack.c.l.b16 %v11028
    %v12268 = vunpack.c.l.b16 %v11029
    %v12269 = vunpack.c.l.b16 %v11030
    %v12270 = vunpack.c.l.b16 %v11031
    %v12271 = vunpack.c.l.b16 %v11032
    %v12272 = vunpack.c.l.b16 %v11033
    %v12273 = vunpack.c.l.b16 %v11034
    %v12274 = vunpack.c.l.b16 %v11035
    %v12275 = vunpack.c.l.b16 %v11036
    %v12276 = vunpack.c.l.b16 %v11037
    %v12277 = vunpack.c.l.b16 %v11038
    %v12278 = vunpack.c.l.b16 %v11039
    %v12279 = vunpack.c.l.b16 %v11040
    %v12280 = vunpack.c.l.b16 %v11041
    %v12281 = vunpack.c.l.b16 %v11042
    %v12282 = vunpack.c.l.b16 %v11043
    %v12283 = vunpack.c.l.b16 %v11044
    %v12284 = vunpack.c.l.b16 %v11045
    %v12285 = vunpack.c.l.b16 %v11046
    %v12286 = vunpack.c.l.b16 %v11047
    %v12287 = vunpack.c.l.b16 %v11048
    %v12288 = vunpack.c.l.b16 %v11049
    %v12289 = vunpack.c.l.b16 %v11050
    %v12290 = vunpack.c.l.b16 %v11051
    %v12291 = vunpack.c.l.b16 %v11052
    %v12292 = vunpack.c.l.b16 %v11053
    %v12293 = vunpack.c.l.b16 %v11054
    %v12294 = vunpack.c.l.b16 %v11055
    %v12295 = vunpack.c.l.b16 %v11056
    %v12296 = vunpack.c.l.b16 %v11057
    %v12297 = vunpack.c.l.b16 %v11058
    %v12298 = vunpack.c.l.b16 %v11059
    %v12299 = vunpack.c.l.b16 %v11060
    %v12300 = vunpack.c.l.b16 %v11061
    %v12301 = vunpack.c.l.b16 %v11062
    %v12302 = vunpack.c.l.b16 %v11063
    %v12303 = vunpack.c.l.b16 %v11064
    %v12304 = vunpack.c.l.b16 %v11065
    %v12305 = vunpack.c.l.b16 %v11066
    %v12306 = vunpack.c.l.b16 %v11067
    %v12307 = vunpack.c.l.b16 %v11068
    %v12308 = vunpack.c.l.b16 %v11069
    %v12309 = vunpack.c.l.b16 %v11070
    %v12310 = vunpack.c.l.b16 %v11071
    %v12311 = vunpack.c.l.b16 %v11072
    %v12312 = vunpack.c.l.b16 %v11073
    %v12313 = vunpack.c.l.b16 %v11074
    %v12314 = vunpack.c.l.b16 %v11075
    %v12315 = vunpack.c.l.b16 %v11076
    %v12316 = vunpack.c.l.b16 %v11077
    %v12317 = vunpack.c.l.b16 %v11078
    %v12318 = vunpack.c.l.b16 %v11079
    %v12319 = vunpack.c.l.b16 %v11080
    %v12320 = vunpack.c.l.b16 %v11081
    %v12321 = vunpack.c.l.b16 %v11082
    %v12322 = vunpack.c.l.b16 %v11083
    %v12323 = vunpack.c.l.b16 %v11084
    %v12324 = vunpack.c.l.b16 %v11085
    %v12325 = vunpack.c.l.b16 %v11086
    %v12326 = vunpack.c.l.b16 %v11087
    %v12327 = vunpack.c.l.b16 %v11088
    %v12328 = vunpack.c.l.b16 %v11089
    %v12329 = vunpack.c.l.b16 %v11090
    %v12330 = vunpack.c.l.b16 %v11091
    %v12331 = vunpack.c.l.b16 %v11092
    %v12332 = vunpack.c.l.b16 %v11093
    %v12333 = vunpack.c.l.b16 %v11094
    %v12334 = vunpack.c.l.b16 %v11095
    %v12335 = vunpack.c.l.b16 %v11096
    %v12336 = vunpack.c.l.b16 %v11097
    %v12337 = vunpack.c.l.b16 %v11098
    %v12338 = vunpack.c.l.b16 %v11099
    %v12339 = vunpack.c.l.b16 %v11100
    %v12340 = vunpack.c.l.b16 %v11101
    %v12341 = vunpack.c.l.b16 %v11102
    %v12342 = vunpack.c.l.b16 %v11103
    %v12343 = vunpack.c.l.b16 %v11104
    %v12344 = vunpack.c.l.b16 %v11105
    %v12345 = vunpack.c.l.b16 %v11106
    %v12346 = vunpack.c.l.b16 %v11107
    %v12347 = vunpack.c.l.b16 %v11108
    %v12348 = vunpack.c.l.b16 %v11109
    %v12349 = vunpack.c.l.b16 %v11110
    %v12350 = vunpack.c.l.b16 %v11111
    %v12351 = vunpack.c.l.b16 %v11112
    %v12352 = vunpack.c.l.b16 %v11113
    %v12353 = vunpack.c.l.b16 %v11114
    %v12354 = vunpack.c.l.b16 %v11115
    %v12355 = vunpack.c.l.b16 %v11116
    %v12356 = vunpack.c.l.b16 %v11117
    %v12357 = vunpack.c.l.b16 %v11118
    %v12358 = vunpack.c.l.b16 %v11119
    %v12359 = vunpack.c.l.b16 %v11120
    %v12360 = vunpack.c.l.b16 %v11121
    %v12361 = vunpack.c.l.b16 %v11122
    %v12362 = vunpack.c.l.b16 %v11123
    %v12363 = vunpack.c.l.b16 %v11124
    %v12364 = vunpack.c.l.b16 %v11125
    %v12365 = vunpack.c.l.b16 %v11126
    %v12366 = vunpack.c.l.b16 %v11127
    %v12367 = vunpack.c.l.b16 %v11128
    %v12368 = vunpack.c.l.b16 %v11129
    %v12369 = vunpack.c.l.b16 %v11130
    %v12370 = vunpack.c.l.b16 %v11131
    %v12371 = vunpack.c.l.b16 %v11132
    %v12372 = vunpack.c.l.b16 %v11133
    %v12373 = vunpack.c.l.b16 %v11134
    %v12374 = vunpack.c.l.b16 %v11135
    %v12375 = vunpack.c.l.b16 %v11136
    %v12376 = vunpack.c.l.b16 %v11137
    %v12377 = vunpack.c.l.b16 %v11138
    %v12378 = vunpack.c.l.b16 %v11139
    %v12379 = vunpack.c.l.b16 %v11140
    %v12380 = vunpack.c.l.b16 %v11141
    %v12381 = vunpack.c.l.b16 %v11142
    %v12382 = vunpack.c.l.b16 %v11143
    %v12383 = vunpack.c.l.b16 %v11144
    %v12384 = vunpack.c.l.b16 %v11145
    %v12385 = vunpack.c.l.b16 %v11146
    %v12386 = vunpack.c.l.b16 %v11147
    %v12387 = vunpack.c.l.b16 %v11148
    %v12388 = vunpack.c.l.b16 %v11149
    %v12389 = vunpack.c.l.b16 %v11150
    %v12390 = vunpack.c.l.b16 %v11151
    %v12391 = vunpack.c.l.b16 %v11152
    %v12392 = vunpack.c.l.b16 %v11153
    %v12393 = vunpack.c.l.b16 %v11154
    %v12394 = vunpack.c.l.b16 %v11155
    %v12395 = vunpack.c.l.b16 %v11156
    %v12396 = vunpack.c.l.b16 %v11157
    %v12397 = vunpack.c.l.b16 %v11158
    %v12398 = vunpack.c.l.b16 %v11159
    %v12399 = vunpack.c.l.b16 %v11160
    %v12400 = vunpack.c.l.b16 %v11161
    %v12401 = vunpack.c.l.b16 %v11162
    %v12402 = vunpack.c.l.b16 %v11163
    %v12403 = vpack.c.b16 %v11892, %v11891
    %v12404 = vpack.c.b16 %v11894, %v11893
    %v12405 = vpack.c.b16 %v11896, %v11895
    %v12406 = vpack.c.b16 %v11898, %v11897
    %v12407 = vpack.c.b16 %v11900, %v11899
    %v12408 = vpack.c.b16 %v11902, %v11901
    %v12409 = vpack.c.b16 %v11904, %v11903
    %v12410 = vpack.c.b16 %v11906, %v11905
    %v12411 = vpack.c.b16 %v11908, %v11907
    %v12412 = vpack.c.b16 %v11910, %v11909
    %v12413 = vpack.c.b16 %v11912, %v11911
    %v12414 = vpack.c.b16 %v11914, %v11913
    %v12415 = vpack.c.b16 %v11916, %v11915
    %v12416 = vpack.c.b16 %v11918, %v11917
    %v12417 = vpack.c.b16 %v11920, %v11919
    %v12418 = vpack.c.b16 %v11922, %v11921
    %v12419 = vpack.c.b16 %v11924, %v11923
    %v12420 = vpack.c.b16 %v11926, %v11925
    %v12421 = vpack.c.b16 %v11928, %v11927
    %v12422 = vpack.c.b16 %v11930, %v11929
    %v12423 = vpack.c.b16 %v11932, %v11931
    %v12424 = vpack.c.b16 %v11934, %v11933
    %v12425 = vpack.c.b16 %v11936, %v11935
    %v12426 = vpack.c.b16 %v11938, %v11937
    %v12427 = vpack.c.b16 %v11940, %v11939
    %v12428 = vpack.c.b16 %v11942, %v11941
    %v12429 = vpack.c.b16 %v11944, %v11943
    %v12430 = vpack.c.b16 %v11946, %v11945
    %v12431 = vpack.c.b16 %v11948, %v11947
    %v12432 = vpack.c.b16 %v11950, %v11949
    %v12433 = vpack.c.b16 %v11952, %v11951
    %v12434 = vpack.c.b16 %v11954, %v11953
    %v12435 = vpack.c.b16 %v11956, %v11955
    %v12436 = vpack.c.b16 %v11958, %v11957
    %v12437 = vpack.c.b16 %v11960, %v11959
    %v12438 = vpack.c.b16 %v11962, %v11961
    %v12439 = vpack.c.b16 %v11964, %v11963
    %v12440 = vpack.c.b16 %v11966, %v11965
    %v12441 = vpack.c.b16 %v11968, %v11967
    %v12442 = vpack.c.b16 %v11970, %v11969
    %v12443 = vpack.c.b16 %v11972, %v11971
    %v12444 = vpack.c.b16 %v11974, %v11973
    %v12445 = vpack.c.b16 %v11976, %v11975
    %v12446 = vpack.c.b16 %v11978, %v11977
    %v12447 = vpack.c.b16 %v11980, %v11979
    %v12448 = vpack.c.b16 %v11982, %v11981
    %v12449 = vpack.c.b16 %v11984, %v11983
    %v12450 = vpack.c.b16 %v11986, %v11985
    %v12451 = vpack.c.b16 %v11988, %v11987
    %v12452 = vpack.c.b16 %v11990, %v11989
    %v12453 = vpack.c.b16 %v11992, %v11991
    %v12454 = vpack.c.b16 %v11994, %v11993
    %v12455 = vpack.c.b16 %v11996, %v11995
    %v12456 = vpack.c.b16 %v11998, %v11997
    %v12457 = vpack.c.b16 %v12000, %v11999
    %v12458 = vpack.c.b16 %v12002, %v12001
    %v12459 = vpack.c.b16 %v12004, %v12003
    %v12460 = vpack.c.b16 %v12006, %v12005
    %v12461 = vpack.c.b16 %v12008, %v12007
    %v12462 = vpack.c.b16 %v12010, %v12009
    %v12463 = vpack.c.b16 %v12012, %v12011
    %v12464 = vpack.c.b16 %v12014, %v12013
    %v12465 = vpack.c.b16 %v12016, %v12015
    %v12466 = vpack.c.b16 %v12018, %v12017
    %v12467 = vpack.c.b16 %v12020, %v12019
    %v12468 = vpack.c.b16 %v12022, %v12021
    %v12469 = vpack.c.b16 %v12024, %v12023
    %v12470 = vpack.c.b16 %v12026, %v12025
    %v12471 = vpack.c.b16 %v12028, %v12027
    %v12472 = vpack.c.b16 %v12030, %v12029
    %v12473 = vpack.c.b16 %v12032, %v12031
    %v12474 = vpack.c.b16 %v12034, %v12033
    %v12475 = vpack.c.b16 %v12036, %v12035
    %v12476 = vpack.c.b16 %v12038, %v12037
    %v12477 = vpack.c.b16 %v12040, %v12039
    %v12478 = vpack.c.b16 %v12042, %v12041
    %v12479 = vpack.c.b16 %v12044, %v12043
    %v12480 = vpack.c.b16 %v12046, %v12045
    %v12481 = vpack.c.b16 %v12048, %v12047
    %v12482 = vpack.c.b16 %v12050, %v12049
    %v12483 = vpack.c.b16 %v12052, %v12051
    %v12484 = vpack.c.b16 %v12054, %v12053
    %v12485 = vpack.c.b16 %v12056, %v12055
    %v12486 = vpack.c.b16 %v12058, %v12057
    %v12487 = vpack.c.b16 %v12060, %v12059
    %v12488 = vpack.c.b16 %v12062, %v12061
    %v12489 = vpack.c.b16 %v12064, %v12063
    %v12490 = vpack.c.b16 %v12066, %v12065
    %v12491 = vpack.c.b16 %v12068, %v12067
    %v12492 = vpack.c.b16 %v12070, %v12069
    %v12493 = vpack.c.b16 %v12072, %v12071
    %v12494 = vpack.c.b16 %v12074, %v12073
    %v12495 = vpack.c.b16 %v12076, %v12075
    %v12496 = vpack.c.b16 %v12078, %v12077
    %v12497 = vpack.c.b16 %v12080, %v12079
    %v12498 = vpack.c.b16 %v12082, %v12081
    %v12499 = vpack.c.b16 %v12084, %v12083
    %v12500 = vpack.c.b16 %v12086, %v12085
    %v12501 = vpack.c.b16 %v12088, %v12087
    %v12502 = vpack.c.b16 %v12090, %v12089
    %v12503 = vpack.c.b16 %v12092, %v12091
    %v12504 = vpack.c.b16 %v12094, %v12093
    %v12505 = vpack.c.b16 %v12096, %v12095
    %v12506 = vpack.c.b16 %v12098, %v12097
    %v12507 = vpack.c.b16 %v12100, %v12099
    %v12508 = vpack.c.b16 %v12102, %v12101
    %v12509 = vpack.c.b16 %v12104, %v12103
    %v12510 = vpack.c.b16 %v12106, %v12105
    %v12511 = vpack.c.b16 %v12108, %v12107
    %v12512 = vpack.c.b16 %v12110, %v12109
    %v12513 = vpack.c.b16 %v12112, %v12111
    %v12514 = vpack.c.b16 %v12114, %v12113
    %v12515 = vpack.c.b16 %v12116, %v12115
    %v12516 = vpack.c.b16 %v12118, %v12117
    %v12517 = vpack.c.b16 %v12120, %v12119
    %v12518 = vpack.c.b16 %v12122, %v12121
    %v12519 = vpack.c.b16 %v12124, %v12123
    %v12520 = vpack.c.b16 %v12126, %v12125
    %v12521 = vpack.c.b16 %v12128, %v12127
    %v12522 = vpack.c.b16 %v12130, %v12129
    %v12523 = vpack.c.b16 %v12132, %v12131
    %v12524 = vpack.c.b16 %v12134, %v12133
    %v12525 = vpack.c.b16 %v12136, %v12135
    %v12526 = vpack.c.b16 %v12138, %v12137
    %v12527 = vpack.c.b16 %v12140, %v12139
    %v12528 = vpack.c.b16 %v12142, %v12141
    %v12529 = vpack.c.b16 %v12144, %v12143
    %v12530 = vpack.c.b16 %v12146, %v12145
    %v12531 = vpack.c.b16 %v12148, %v12147
    %v12532 = vpack.c.b16 %v12150, %v12149
    %v12533 = vpack.c.b16 %v12152, %v12151
    %v12534 = vpack.c.b16 %v12154, %v12153
    %v12535 = vpack.c.b16 %v12156, %v12155
    %v12536 = vpack.c.b16 %v12158, %v12157
    %v12537 = vpack.c.b16 %v12160, %v12159
    %v12538 = vpack.c.b16 %v12162, %v12161
    %v12539 = vpack.c.b16 %v12164, %v12163
    %v12540 = vpack.c.b16 %v12166, %v12165
    %v12541 = vpack.c.b16 %v12168, %v12167
    %v12542 = vpack.c.b16 %v12170, %v12169
    %v12543 = vpack.c.b16 %v12172, %v12171
    %v12544 = vpack.c.b16 %v12174, %v12173
    %v12545 = vpack.c.b16 %v12176, %v12175
    %v12546 = vpack.c.b16 %v12178, %v12177
    %v12547 = vpack.c.b16 %v12180, %v12179
    %v12548 = vpack.c.b16 %v12182, %v12181
    %v12549 = vpack.c.b16 %v12184, %v12183
    %v12550 = vpack.c.b16 %v12186, %v12185
    %v12551 = vpack.c.b16 %v12188, %v12187
    %v12552 = vpack.c.b16 %v12190, %v12189
    %v12553 = vpack.c.b16 %v12192, %v12191
    %v12554 = vpack.c.b16 %v12194, %v12193
    %v12555 = vpack.c.b16 %v12196, %v12195
    %v12556 = vpack.c.b16 %v12198, %v12197
    %v12557 = vpack.c.b16 %v12200, %v12199
    %v12558 = vpack.c.b16 %v12202, %v12201
    %v12559 = vpack.c.b16 %v12204, %v12203
    %v12560 = vpack.c.b16 %v12206, %v12205
    %v12561 = vpack.c.b16 %v12208, %v12207
    %v12562 = vpack.c.b16 %v12210, %v12209
    %v12563 = vpack.c.b16 %v12212, %v12211
    %v12564 = vpack.c.b16 %v12214, %v12213
    %v12565 = vpack.c.b16 %v12216, %v12215
    %v12566 = vpack.c.b16 %v12218, %v12217
    %v12567 = vpack.c.b16 %v12220, %v12219
    %v12568 = vpack.c.b16 %v12222, %v12221
    %v12569 = vpack.c.b16 %v12224, %v12223
    %v12570 = vpack.c.b16 %v12226, %v12225
    %v12571 = vpack.c.b16 %v12228, %v12227
    %v12572 = vpack.c.b16 %v12230, %v12229
    %v12573 = vpack.c.b16 %v12232, %v12231
    %v12574 = vpack.c.b16 %v12234, %v12233
    %v12575 = vpack.c.b16 %v12236, %v12235
    %v12576 = vpack.c.b16 %v12238, %v12237
    %v12577 = vpack.c.b16 %v12240, %v12239
    %v12578 = vpack.c.b16 %v12242, %v12241
    %v12579 = vpack.c.b16 %v12244, %v12243
    %v12580 = vpack.c.b16 %v12246, %v12245
    %v12581 = vpack.c.b16 %v12248, %v12247
    %v12582 = vpack.c.b16 %v12250, %v12249
    %v12583 = vpack.c.b16 %v12252, %v12251
    %v12584 = vpack.c.b16 %v12254, %v12253
    %v12585 = vpack.c.b16 %v12256, %v12255
    %v12586 = vpack.c.b16 %v12258, %v12257
    %v12587 = vpack.c.b16 %v12260, %v12259
    %v12588 = vpack.c.b16 %v12262, %v12261
    %v12589 = vpack.c.b16 %v12264, %v12263
    %v12590 = vpack.c.b16 %v12266, %v12265
    %v12591 = vpack.c.b16 %v12268, %v12267
    %v12592 = vpack.c.b16 %v12270, %v12269
    %v12593 = vpack.c.b16 %v12272, %v12271
    %v12594 = vpack.c.b16 %v12274, %v12273
    %v12595 = vpack.c.b16 %v12276, %v12275
    %v12596 = vpack.c.b16 %v12278, %v12277
    %v12597 = vpack.c.b16 %v12280, %v12279
    %v12598 = vpack.c.b16 %v12282, %v12281
    %v12599 = vpack.c.b16 %v12284, %v12283
    %v12600 = vpack.c.b16 %v12286, %v12285
    %v12601 = vpack.c.b16 %v12288, %v12287
    %v12602 = vpack.c.b16 %v12290, %v12289
    %v12603 = vpack.c.b16 %v12292, %v12291
    %v12604 = vpack.c.b16 %v12294, %v12293
    %v12605 = vpack.c.b16 %v12296, %v12295
    %v12606 = vpack.c.b16 %v12298, %v12297
    %v12607 = vpack.c.b16 %v12300, %v12299
    %v12608 = vpack.c.b16 %v12302, %v12301
    %v12609 = vpack.c.b16 %v12304, %v12303
    %v12610 = vpack.c.b16 %v12306, %v12305
    %v12611 = vpack.c.b16 %v12308, %v12307
    %v12612 = vpack.c.b16 %v12310, %v12309
    %v12613 = vpack.c.b16 %v12312, %v12311
    %v12614 = vpack.c.b16 %v12314, %v12313
    %v12615 = vpack.c.b16 %v12316, %v12315
    %v12616 = vpack.c.b16 %v12318, %v12317
    %v12617 = vpack.c.b16 %v12320, %v12319
    %v12618 = vpack.c.b16 %v12322, %v12321
    %v12619 = vpack.c.b16 %v12324, %v12323
    %v12620 = vpack.c.b16 %v12326, %v12325
    %v12621 = vpack.c.b16 %v12328, %v12327
    %v12622 = vpack.c.b16 %v12330, %v12329
    %v12623 = vpack.c.b16 %v12332, %v12331
    %v12624 = vpack.c.b16 %v12334, %v12333
    %v12625 = vpack.c.b16 %v12336, %v12335
    %v12626 = vpack.c.b16 %v12338, %v12337
    %v12627 = vpack.c.b16 %v12340, %v12339
    %v12628 = vpack.c.b16 %v12342, %v12341
    %v12629 = vpack.c.b16 %v12344, %v12343
    %v12630 = vpack.c.b16 %v12346, %v12345
    %v12631 = vpack.c.b16 %v12348, %v12347
    %v12632 = vpack.c.b16 %v12350, %v12349
    %v12633 = vpack.c.b16 %v12352, %v12351
    %v12634 = vpack.c.b16 %v12354, %v12353
    %v12635 = vpack.c.b16 %v12356, %v12355
    %v12636 = vpack.c.b16 %v12358, %v12357
    %v12637 = vpack.c.b16 %v12360, %v12359
    %v12638 = vpack.c.b16 %v12362, %v12361
    %v12639 = vpack.c.b16 %v12364, %v12363
    %v12640 = vpack.c.b16 %v12366, %v12365
    %v12641 = vpack.c.b16 %v12368, %v12367
    %v12642 = vpack.c.b16 %v12370, %v12369
    %v12643 = vpack.c.b16 %v12372, %v12371
    %v12644 = vpack.c.b16 %v12374, %v12373
    %v12645 = vpack.c.b16 %v12376, %v12375
    %v12646 = vpack.c.b16 %v12378, %v12377
    %v12647 = vpack.c.b16 %v12380, %v12379
    %v12648 = vpack.c.b16 %v12382, %v12381
    %v12649 = vpack.c.b16 %v12384, %v12383
    %v12650 = vpack.c.b16 %v12386, %v12385
    %v12651 = vpack.c.b16 %v12388, %v12387
    %v12652 = vpack.c.b16 %v12390, %v12389
    %v12653 = vpack.c.b16 %v12392, %v12391
    %v12654 = vpack.c.b16 %v12394, %v12393
    %v12655 = vpack.c.b16 %v12396, %v12395
    %v12656 = vpack.c.b16 %v12398, %v12397
    %v12657 = vpack.c.b16 %v12400, %v12399
    %v12658 = vpack.c.b16 %v12402, %v12401
    %12915 = vmatprep.subr.bf16.mxu0 0
    %12916 = vmatpush1.bf16.msra.mxu0 %v12410
    %12917 = vmatprep.subr.bf16.mxu0 0
    %12918 = vmatpush1.bf16.msra.mxu0 %v12409
    %12919 = vmatprep.subr.bf16.mxu0 0
    %12920 = vmatpush1.bf16.msra.mxu0 %v12408
    %12921 = vmatprep.subr.bf16.mxu0 0
    %12922 = vmatpush1.bf16.msra.mxu0 %v12407
    %12923 = vmatprep.subr.bf16.mxu0 0
    %12924 = vmatpush1.bf16.msra.mxu0 %v12406
    %12925 = vmatprep.subr.bf16.mxu0 0
    %12926 = vmatpush1.bf16.msra.mxu0 %v12405
    %12927 = vmatprep.subr.bf16.mxu0 0
    %12928 = vmatpush1.bf16.msra.mxu0 %v12404
    %12929 = vmatprep.subr.bf16.mxu0 0
    %12930 = vmatpush1.bf16.msra.mxu0 %v12403
    %12931 = vmatprep.subr.bf16.mxu0 0
    %12932 = vmatpush2.bf16.msra.mxu0 %v12418
    %12933 = vmatprep.subr.bf16.mxu0 0
    %12934 = vmatpush2.bf16.msra.mxu0 %v12417
    %12935 = vmatprep.subr.bf16.mxu0 0
    %12936 = vmatpush2.bf16.msra.mxu0 %v12416
    %12937 = vmatprep.subr.bf16.mxu0 0
    %12938 = vmatpush2.bf16.msra.mxu0 %v12415
    %12939 = vmatprep.subr.bf16.mxu0 0
    %12940 = vmatpush2.bf16.msra.mxu0 %v12414
    %12941 = vmatprep.subr.bf16.mxu0 0
    %12942 = vmatpush2.bf16.msra.mxu0 %v12413
    %12943 = vmatprep.subr.bf16.mxu0 0
    %12944 = vmatpush2.bf16.msra.mxu0 %v12412
    %12945 = vmatprep.subr.bf16.mxu0 0
    %12946 = vmatpush2.bf16.msra.mxu0 %v12411
    %12947 = vmatprep.mubr.bf16.mxu0 %v11341
    %12948 = vmatmul.mubr.bf16.gmra.mxu0 %v11340
    %v12949 = vpop.f32.mrf.mxu0
    %v12950 = vadd.f32 %v11377, %v12949
    %v12951 = vpop.f32.mrf.mxu0
    %v12952 = vpop.f32.mrf.mxu0
    %v12953 = vpop.f32.mrf.mxu0
    %12954 = vdwg.mxu0
    %12955 = vmatprep.subr.bf16.mxu0 0
    %12956 = vmatpush1.bf16.msra.mxu0 %v12426
    %12957 = vmatprep.subr.bf16.mxu0 0
    %12958 = vmatpush1.bf16.msra.mxu0 %v12425
    %12959 = vmatprep.subr.bf16.mxu0 0
    %12960 = vmatpush1.bf16.msra.mxu0 %v12424
    %12961 = vmatprep.subr.bf16.mxu0 0
    %12962 = vmatpush1.bf16.msra.mxu0 %v12423
    %12963 = vmatprep.subr.bf16.mxu0 0
    %12964 = vmatpush1.bf16.msra.mxu0 %v12422
    %12965 = vmatprep.subr.bf16.mxu0 0
    %12966 = vmatpush1.bf16.msra.mxu0 %v12421
    %12967 = vmatprep.subr.bf16.mxu0 0
    %12968 = vmatpush1.bf16.msra.mxu0 %v12420
    %12969 = vmatprep.subr.bf16.mxu0 0
    %12970 = vmatpush1.bf16.msra.mxu0 %v12419
    %12971 = vmatprep.subr.bf16.mxu0 0
    %12972 = vmatpush2.bf16.msra.mxu0 %v12434
    %12973 = vmatprep.subr.bf16.mxu0 0
    %12974 = vmatpush2.bf16.msra.mxu0 %v12433
    %12975 = vmatprep.subr.bf16.mxu0 0
    %12976 = vmatpush2.bf16.msra.mxu0 %v12432
    %12977 = vmatprep.subr.bf16.mxu0 0
    %12978 = vmatpush2.bf16.msra.mxu0 %v12431
    %12979 = vmatprep.subr.bf16.mxu0 0
    %12980 = vmatpush2.bf16.msra.mxu0 %v12430
    %12981 = vmatprep.subr.bf16.mxu0 0
    %12982 = vmatpush2.bf16.msra.mxu0 %v12429
    %12983 = vmatprep.subr.bf16.mxu0 0
    %12984 = vmatpush2.bf16.msra.mxu0 %v12428
    %12985 = vmatprep.subr.bf16.mxu0 0
    %12986 = vmatpush2.bf16.msra.mxu0 %v12427
    %12987 = vmatprep.mubr.bf16.mxu0 %v11343
    %12988 = vmatmul.mubr.bf16.gmra.mxu0 %v11342
    %v12989 = vpop.f32.mrf.mxu0
    %v12990 = vadd.f32 %v12950, %v12989
    %v12991 = vpop.f32.mrf.mxu0
    %v12992 = vpop.f32.mrf.mxu0
    %v12993 = vpop.f32.mrf.mxu0
    %12994 = vdwg.mxu0
    %12995 = vmatprep.subr.bf16.mxu0 0
    %12996 = vmatpush1.bf16.msra.mxu0 %v12442
    %12997 = vmatprep.subr.bf16.mxu0 0
    %12998 = vmatpush1.bf16.msra.mxu0 %v12441
    %12999 = vmatprep.subr.bf16.mxu0 0
    %13000 = vmatpush1.bf16.msra.mxu0 %v12440
    %13001 = vmatprep.subr.bf16.mxu0 0
    %13002 = vmatpush1.bf16.msra.mxu0 %v12439
    %13003 = vmatprep.subr.bf16.mxu0 0
    %13004 = vmatpush1.bf16.msra.mxu0 %v12438
    %13005 = vmatprep.subr.bf16.mxu0 0
    %13006 = vmatpush1.bf16.msra.mxu0 %v12437
    %13007 = vmatprep.subr.bf16.mxu0 0
    %13008 = vmatpush1.bf16.msra.mxu0 %v12436
    %13009 = vmatprep.subr.bf16.mxu0 0
    %13010 = vmatpush1.bf16.msra.mxu0 %v12435
    %13011 = vmatprep.subr.bf16.mxu0 0
    %13012 = vmatpush2.bf16.msra.mxu0 %v12450
    %13013 = vmatprep.subr.bf16.mxu0 0
    %13014 = vmatpush2.bf16.msra.mxu0 %v12449
    %13015 = vmatprep.subr.bf16.mxu0 0
    %13016 = vmatpush2.bf16.msra.mxu0 %v12448
    %13017 = vmatprep.subr.bf16.mxu0 0
    %13018 = vmatpush2.bf16.msra.mxu0 %v12447
    %13019 = vmatprep.subr.bf16.mxu0 0
    %13020 = vmatpush2.bf16.msra.mxu0 %v12446
    %13021 = vmatprep.subr.bf16.mxu0 0
    %13022 = vmatpush2.bf16.msra.mxu0 %v12445
    %13023 = vmatprep.subr.bf16.mxu0 0
    %13024 = vmatpush2.bf16.msra.mxu0 %v12444
    %13025 = vmatprep.subr.bf16.mxu0 0
    %13026 = vmatpush2.bf16.msra.mxu0 %v12443
    %13027 = vmatprep.mubr.bf16.mxu0 %v11345
    %13028 = vmatmul.mubr.bf16.gmra.mxu0 %v11344
    %v13029 = vpop.f32.mrf.mxu0
    %v13030 = vadd.f32 %v12990, %v13029
    %v13031 = vpop.f32.mrf.mxu0
    %v13032 = vpop.f32.mrf.mxu0
    %v13033 = vpop.f32.mrf.mxu0
    %13034 = vdwg.mxu0
    %13035 = vmatprep.subr.bf16.mxu0 0
    %13036 = vmatpush1.bf16.msra.mxu0 %v12458
    %13037 = vmatprep.subr.bf16.mxu0 0
    %13038 = vmatpush1.bf16.msra.mxu0 %v12457
    %13039 = vmatprep.subr.bf16.mxu0 0
    %13040 = vmatpush1.bf16.msra.mxu0 %v12456
    %13041 = vmatprep.subr.bf16.mxu0 0
    %13042 = vmatpush1.bf16.msra.mxu0 %v12455
    %13043 = vmatprep.subr.bf16.mxu0 0
    %13044 = vmatpush1.bf16.msra.mxu0 %v12454
    %13045 = vmatprep.subr.bf16.mxu0 0
    %13046 = vmatpush1.bf16.msra.mxu0 %v12453
    %13047 = vmatprep.subr.bf16.mxu0 0
    %13048 = vmatpush1.bf16.msra.mxu0 %v12452
    %13049 = vmatprep.subr.bf16.mxu0 0
    %13050 = vmatpush1.bf16.msra.mxu0 %v12451
    %13051 = vmatprep.subr.bf16.mxu0 0
    %13052 = vmatpush2.bf16.msra.mxu0 %v12466
    %13053 = vmatprep.subr.bf16.mxu0 0
    %13054 = vmatpush2.bf16.msra.mxu0 %v12465
    %13055 = vmatprep.subr.bf16.mxu0 0
    %13056 = vmatpush2.bf16.msra.mxu0 %v12464
    %13057 = vmatprep.subr.bf16.mxu0 0
    %13058 = vmatpush2.bf16.msra.mxu0 %v12463
    %13059 = vmatprep.subr.bf16.mxu0 0
    %13060 = vmatpush2.bf16.msra.mxu0 %v12462
    %13061 = vmatprep.subr.bf16.mxu0 0
    %13062 = vmatpush2.bf16.msra.mxu0 %v12461
    %13063 = vmatprep.subr.bf16.mxu0 0
    %13064 = vmatpush2.bf16.msra.mxu0 %v12460
    %13065 = vmatprep.subr.bf16.mxu0 0
    %13066 = vmatpush2.bf16.msra.mxu0 %v12459
    %13067 = vmatprep.mubr.bf16.mxu0 %v11347
    %13068 = vmatmul.mubr.bf16.gmra.mxu0 %v11346
    %v13069 = vpop.f32.mrf.mxu0
    %v13070 = vadd.f32 %v13030, %v13069
    %v13071 = vpop.f32.mrf.mxu0
    %v13072 = vpop.f32.mrf.mxu0
    %v13073 = vpop.f32.mrf.mxu0
    %13074 = vdwg.mxu0
    %13075 = vmatprep.subr.bf16.mxu0 0
    %13076 = vmatpush1.bf16.msra.mxu0 %v12474
    %13077 = vmatprep.subr.bf16.mxu0 0
    %13078 = vmatpush1.bf16.msra.mxu0 %v12473
    %13079 = vmatprep.subr.bf16.mxu0 0
    %13080 = vmatpush1.bf16.msra.mxu0 %v12472
    %13081 = vmatprep.subr.bf16.mxu0 0
    %13082 = vmatpush1.bf16.msra.mxu0 %v12471
    %13083 = vmatprep.subr.bf16.mxu0 0
    %13084 = vmatpush1.bf16.msra.mxu0 %v12470
    %13085 = vmatprep.subr.bf16.mxu0 0
    %13086 = vmatpush1.bf16.msra.mxu0 %v12469
    %13087 = vmatprep.subr.bf16.mxu0 0
    %13088 = vmatpush1.bf16.msra.mxu0 %v12468
    %13089 = vmatprep.subr.bf16.mxu0 0
    %13090 = vmatpush1.bf16.msra.mxu0 %v12467
    %13091 = vmatprep.subr.bf16.mxu0 0
    %13092 = vmatpush2.bf16.msra.mxu0 %v12482
    %13093 = vmatprep.subr.bf16.mxu0 0
    %13094 = vmatpush2.bf16.msra.mxu0 %v12481
    %13095 = vmatprep.subr.bf16.mxu0 0
    %13096 = vmatpush2.bf16.msra.mxu0 %v12480
    %13097 = vmatprep.subr.bf16.mxu0 0
    %13098 = vmatpush2.bf16.msra.mxu0 %v12479
    %13099 = vmatprep.subr.bf16.mxu0 0
    %13100 = vmatpush2.bf16.msra.mxu0 %v12478
    %13101 = vmatprep.subr.bf16.mxu0 0
    %13102 = vmatpush2.bf16.msra.mxu0 %v12477
    %13103 = vmatprep.subr.bf16.mxu0 0
    %13104 = vmatpush2.bf16.msra.mxu0 %v12476
    %13105 = vmatprep.subr.bf16.mxu0 0
    %13106 = vmatpush2.bf16.msra.mxu0 %v12475
    %13107 = vmatprep.mubr.bf16.mxu0 %v11349
    %13108 = vmatmul.mubr.bf16.gmra.mxu0 %v11348
    %v13109 = vpop.f32.mrf.mxu0
    %v13110 = vadd.f32 %v13070, %v13109
    %v13111 = vpop.f32.mrf.mxu0
    %v13112 = vpop.f32.mrf.mxu0
    %v13113 = vpop.f32.mrf.mxu0
    %13114 = vdwg.mxu0
    %13115 = vmatprep.subr.bf16.mxu0 0
    %13116 = vmatpush1.bf16.msra.mxu0 %v12490
    %13117 = vmatprep.subr.bf16.mxu0 0
    %13118 = vmatpush1.bf16.msra.mxu0 %v12489
    %13119 = vmatprep.subr.bf16.mxu0 0
    %13120 = vmatpush1.bf16.msra.mxu0 %v12488
    %13121 = vmatprep.subr.bf16.mxu0 0
    %13122 = vmatpush1.bf16.msra.mxu0 %v12487
    %13123 = vmatprep.subr.bf16.mxu0 0
    %13124 = vmatpush1.bf16.msra.mxu0 %v12486
    %13125 = vmatprep.subr.bf16.mxu0 0
    %13126 = vmatpush1.bf16.msra.mxu0 %v12485
    %13127 = vmatprep.subr.bf16.mxu0 0
    %13128 = vmatpush1.bf16.msra.mxu0 %v12484
    %13129 = vmatprep.subr.bf16.mxu0 0
    %13130 = vmatpush1.bf16.msra.mxu0 %v12483
    %13131 = vmatprep.subr.bf16.mxu0 0
    %13132 = vmatpush2.bf16.msra.mxu0 %v12498
    %13133 = vmatprep.subr.bf16.mxu0 0
    %13134 = vmatpush2.bf16.msra.mxu0 %v12497
    %13135 = vmatprep.subr.bf16.mxu0 0
    %13136 = vmatpush2.bf16.msra.mxu0 %v12496
    %13137 = vmatprep.subr.bf16.mxu0 0
    %13138 = vmatpush2.bf16.msra.mxu0 %v12495
    %13139 = vmatprep.subr.bf16.mxu0 0
    %13140 = vmatpush2.bf16.msra.mxu0 %v12494
    %13141 = vmatprep.subr.bf16.mxu0 0
    %13142 = vmatpush2.bf16.msra.mxu0 %v12493
    %13143 = vmatprep.subr.bf16.mxu0 0
    %13144 = vmatpush2.bf16.msra.mxu0 %v12492
    %13145 = vmatprep.subr.bf16.mxu0 0
    %13146 = vmatpush2.bf16.msra.mxu0 %v12491
    %13147 = vmatprep.mubr.bf16.mxu0 %v11351
    %13148 = vmatmul.mubr.bf16.gmra.mxu0 %v11350
    %v13149 = vpop.f32.mrf.mxu0
    %v13150 = vadd.f32 %v13110, %v13149
    %v13151 = vpop.f32.mrf.mxu0
    %v13152 = vpop.f32.mrf.mxu0
    %v13153 = vpop.f32.mrf.mxu0
    %13154 = vdwg.mxu0
    %13155 = vmatprep.subr.bf16.mxu0 0
    %13156 = vmatpush1.bf16.msra.mxu0 %v12506
    %13157 = vmatprep.subr.bf16.mxu0 0
    %13158 = vmatpush1.bf16.msra.mxu0 %v12505
    %13159 = vmatprep.subr.bf16.mxu0 0
    %13160 = vmatpush1.bf16.msra.mxu0 %v12504
    %13161 = vmatprep.subr.bf16.mxu0 0
    %13162 = vmatpush1.bf16.msra.mxu0 %v12503
    %13163 = vmatprep.subr.bf16.mxu0 0
    %13164 = vmatpush1.bf16.msra.mxu0 %v12502
    %13165 = vmatprep.subr.bf16.mxu0 0
    %13166 = vmatpush1.bf16.msra.mxu0 %v12501
    %13167 = vmatprep.subr.bf16.mxu0 0
    %13168 = vmatpush1.bf16.msra.mxu0 %v12500
    %13169 = vmatprep.subr.bf16.mxu0 0
    %13170 = vmatpush1.bf16.msra.mxu0 %v12499
    %13171 = vmatprep.subr.bf16.mxu0 0
    %13172 = vmatpush2.bf16.msra.mxu0 %v12514
    %13173 = vmatprep.subr.bf16.mxu0 0
    %13174 = vmatpush2.bf16.msra.mxu0 %v12513
    %13175 = vmatprep.subr.bf16.mxu0 0
    %13176 = vmatpush2.bf16.msra.mxu0 %v12512
    %13177 = vmatprep.subr.bf16.mxu0 0
    %13178 = vmatpush2.bf16.msra.mxu0 %v12511
    %13179 = vmatprep.subr.bf16.mxu0 0
    %13180 = vmatpush2.bf16.msra.mxu0 %v12510
    %13181 = vmatprep.subr.bf16.mxu0 0
    %13182 = vmatpush2.bf16.msra.mxu0 %v12509
    %13183 = vmatprep.subr.bf16.mxu0 0
    %13184 = vmatpush2.bf16.msra.mxu0 %v12508
    %13185 = vmatprep.subr.bf16.mxu0 0
    %13186 = vmatpush2.bf16.msra.mxu0 %v12507
    %13187 = vmatprep.mubr.bf16.mxu0 %v11353
    %13188 = vmatmul.mubr.bf16.gmra.mxu0 %v11352
    %v13189 = vpop.f32.mrf.mxu0
    %v13190 = vadd.f32 %v13150, %v13189
    %v13191 = vpop.f32.mrf.mxu0
    %v13192 = vpop.f32.mrf.mxu0
    %v13193 = vpop.f32.mrf.mxu0
    %13194 = vdwg.mxu0
    %13195 = vmatprep.subr.bf16.mxu0 0
    %13196 = vmatpush1.bf16.msra.mxu0 %v12522
    %13197 = vmatprep.subr.bf16.mxu0 0
    %13198 = vmatpush1.bf16.msra.mxu0 %v12521
    %13199 = vmatprep.subr.bf16.mxu0 0
    %13200 = vmatpush1.bf16.msra.mxu0 %v12520
    %13201 = vmatprep.subr.bf16.mxu0 0
    %13202 = vmatpush1.bf16.msra.mxu0 %v12519
    %13203 = vmatprep.subr.bf16.mxu0 0
    %13204 = vmatpush1.bf16.msra.mxu0 %v12518
    %13205 = vmatprep.subr.bf16.mxu0 0
    %13206 = vmatpush1.bf16.msra.mxu0 %v12517
    %13207 = vmatprep.subr.bf16.mxu0 0
    %13208 = vmatpush1.bf16.msra.mxu0 %v12516
    %13209 = vmatprep.subr.bf16.mxu0 0
    %13210 = vmatpush1.bf16.msra.mxu0 %v12515
    %13211 = vmatprep.subr.bf16.mxu0 0
    %13212 = vmatpush2.bf16.msra.mxu0 %v12530
    %13213 = vmatprep.subr.bf16.mxu0 0
    %13214 = vmatpush2.bf16.msra.mxu0 %v12529
    %13215 = vmatprep.subr.bf16.mxu0 0
    %13216 = vmatpush2.bf16.msra.mxu0 %v12528
    %13217 = vmatprep.subr.bf16.mxu0 0
    %13218 = vmatpush2.bf16.msra.mxu0 %v12527
    %13219 = vmatprep.subr.bf16.mxu0 0
    %13220 = vmatpush2.bf16.msra.mxu0 %v12526
    %13221 = vmatprep.subr.bf16.mxu0 0
    %13222 = vmatpush2.bf16.msra.mxu0 %v12525
    %13223 = vmatprep.subr.bf16.mxu0 0
    %13224 = vmatpush2.bf16.msra.mxu0 %v12524
    %13225 = vmatprep.subr.bf16.mxu0 0
    %13226 = vmatpush2.bf16.msra.mxu0 %v12523
    %13227 = vmatprep.mubr.bf16.mxu0 %v11355
    %13228 = vmatmul.mubr.bf16.gmra.mxu0 %v11354
    %v13229 = vpop.f32.mrf.mxu0
    %v13230 = vadd.f32 %v13190, %v13229
    %v13231 = vpop.f32.mrf.mxu0
    %v13232 = vpop.f32.mrf.mxu0
    %v13233 = vpop.f32.mrf.mxu0
    %13234 = vdwg.mxu0
    %13235 = vmatprep.subr.bf16.mxu0 0
    %13236 = vmatpush1.bf16.msra.mxu0 %v12538
    %13237 = vmatprep.subr.bf16.mxu0 0
    %13238 = vmatpush1.bf16.msra.mxu0 %v12537
    %13239 = vmatprep.subr.bf16.mxu0 0
    %13240 = vmatpush1.bf16.msra.mxu0 %v12536
    %13241 = vmatprep.subr.bf16.mxu0 0
    %13242 = vmatpush1.bf16.msra.mxu0 %v12535
    %13243 = vmatprep.subr.bf16.mxu0 0
    %13244 = vmatpush1.bf16.msra.mxu0 %v12534
    %13245 = vmatprep.subr.bf16.mxu0 0
    %13246 = vmatpush1.bf16.msra.mxu0 %v12533
    %13247 = vmatprep.subr.bf16.mxu0 0
    %13248 = vmatpush1.bf16.msra.mxu0 %v12532
    %13249 = vmatprep.subr.bf16.mxu0 0
    %13250 = vmatpush1.bf16.msra.mxu0 %v12531
    %13251 = vmatprep.subr.bf16.mxu0 0
    %13252 = vmatpush2.bf16.msra.mxu0 %v12546
    %13253 = vmatprep.subr.bf16.mxu0 0
    %13254 = vmatpush2.bf16.msra.mxu0 %v12545
    %13255 = vmatprep.subr.bf16.mxu0 0
    %13256 = vmatpush2.bf16.msra.mxu0 %v12544
    %13257 = vmatprep.subr.bf16.mxu0 0
    %13258 = vmatpush2.bf16.msra.mxu0 %v12543
    %13259 = vmatprep.subr.bf16.mxu0 0
    %13260 = vmatpush2.bf16.msra.mxu0 %v12542
    %13261 = vmatprep.subr.bf16.mxu0 0
    %13262 = vmatpush2.bf16.msra.mxu0 %v12541
    %13263 = vmatprep.subr.bf16.mxu0 0
    %13264 = vmatpush2.bf16.msra.mxu0 %v12540
    %13265 = vmatprep.subr.bf16.mxu0 0
    %13266 = vmatpush2.bf16.msra.mxu0 %v12539
    %13267 = vmatprep.mubr.bf16.mxu0 %v11357
    %13268 = vmatmul.mubr.bf16.gmra.mxu0 %v11356
    %v13269 = vpop.f32.mrf.mxu0
    %v13270 = vadd.f32 %v13230, %v13269
    %v13271 = vpop.f32.mrf.mxu0
    %v13272 = vpop.f32.mrf.mxu0
    %v13273 = vpop.f32.mrf.mxu0
    %13274 = vdwg.mxu0
    %13275 = vmatprep.subr.bf16.mxu0 0
    %13276 = vmatpush1.bf16.msra.mxu0 %v12554
    %13277 = vmatprep.subr.bf16.mxu0 0
    %13278 = vmatpush1.bf16.msra.mxu0 %v12553
    %13279 = vmatprep.subr.bf16.mxu0 0
    %13280 = vmatpush1.bf16.msra.mxu0 %v12552
    %13281 = vmatprep.subr.bf16.mxu0 0
    %13282 = vmatpush1.bf16.msra.mxu0 %v12551
    %13283 = vmatprep.subr.bf16.mxu0 0
    %13284 = vmatpush1.bf16.msra.mxu0 %v12550
    %13285 = vmatprep.subr.bf16.mxu0 0
    %13286 = vmatpush1.bf16.msra.mxu0 %v12549
    %13287 = vmatprep.subr.bf16.mxu0 0
    %13288 = vmatpush1.bf16.msra.mxu0 %v12548
    %13289 = vmatprep.subr.bf16.mxu0 0
    %13290 = vmatpush1.bf16.msra.mxu0 %v12547
    %13291 = vmatprep.subr.bf16.mxu0 0
    %13292 = vmatpush2.bf16.msra.mxu0 %v12562
    %13293 = vmatprep.subr.bf16.mxu0 0
    %13294 = vmatpush2.bf16.msra.mxu0 %v12561
    %13295 = vmatprep.subr.bf16.mxu0 0
    %13296 = vmatpush2.bf16.msra.mxu0 %v12560
    %13297 = vmatprep.subr.bf16.mxu0 0
    %13298 = vmatpush2.bf16.msra.mxu0 %v12559
    %13299 = vmatprep.subr.bf16.mxu0 0
    %13300 = vmatpush2.bf16.msra.mxu0 %v12558
    %13301 = vmatprep.subr.bf16.mxu0 0
    %13302 = vmatpush2.bf16.msra.mxu0 %v12557
    %13303 = vmatprep.subr.bf16.mxu0 0
    %13304 = vmatpush2.bf16.msra.mxu0 %v12556
    %13305 = vmatprep.subr.bf16.mxu0 0
    %13306 = vmatpush2.bf16.msra.mxu0 %v12555
    %13307 = vmatprep.mubr.bf16.mxu0 %v11359
    %13308 = vmatmul.mubr.bf16.gmra.mxu0 %v11358
    %v13309 = vpop.f32.mrf.mxu0
    %v13310 = vadd.f32 %v13270, %v13309
    %v13311 = vpop.f32.mrf.mxu0
    %v13312 = vpop.f32.mrf.mxu0
    %v13313 = vpop.f32.mrf.mxu0
    %13314 = vdwg.mxu0
    %13315 = vmatprep.subr.bf16.mxu0 0
    %13316 = vmatpush1.bf16.msra.mxu0 %v12570
    %13317 = vmatprep.subr.bf16.mxu0 0
    %13318 = vmatpush1.bf16.msra.mxu0 %v12569
    %13319 = vmatprep.subr.bf16.mxu0 0
    %13320 = vmatpush1.bf16.msra.mxu0 %v12568
    %13321 = vmatprep.subr.bf16.mxu0 0
    %13322 = vmatpush1.bf16.msra.mxu0 %v12567
    %13323 = vmatprep.subr.bf16.mxu0 0
    %13324 = vmatpush1.bf16.msra.mxu0 %v12566
    %13325 = vmatprep.subr.bf16.mxu0 0
    %13326 = vmatpush1.bf16.msra.mxu0 %v12565
    %13327 = vmatprep.subr.bf16.mxu0 0
    %13328 = vmatpush1.bf16.msra.mxu0 %v12564
    %13329 = vmatprep.subr.bf16.mxu0 0
    %13330 = vmatpush1.bf16.msra.mxu0 %v12563
    %13331 = vmatprep.subr.bf16.mxu0 0
    %13332 = vmatpush2.bf16.msra.mxu0 %v12578
    %13333 = vmatprep.subr.bf16.mxu0 0
    %13334 = vmatpush2.bf16.msra.mxu0 %v12577
    %13335 = vmatprep.subr.bf16.mxu0 0
    %13336 = vmatpush2.bf16.msra.mxu0 %v12576
    %13337 = vmatprep.subr.bf16.mxu0 0
    %13338 = vmatpush2.bf16.msra.mxu0 %v12575
    %13339 = vmatprep.subr.bf16.mxu0 0
    %13340 = vmatpush2.bf16.msra.mxu0 %v12574
    %13341 = vmatprep.subr.bf16.mxu0 0
    %13342 = vmatpush2.bf16.msra.mxu0 %v12573
    %13343 = vmatprep.subr.bf16.mxu0 0
    %13344 = vmatpush2.bf16.msra.mxu0 %v12572
    %13345 = vmatprep.subr.bf16.mxu0 0
    %13346 = vmatpush2.bf16.msra.mxu0 %v12571
    %13347 = vmatprep.mubr.bf16.mxu0 %v11361
    %13348 = vmatmul.mubr.bf16.gmra.mxu0 %v11360
    %v13349 = vpop.f32.mrf.mxu0
    %v13350 = vadd.f32 %v13310, %v13349
    %v13351 = vpop.f32.mrf.mxu0
    %v13352 = vpop.f32.mrf.mxu0
    %v13353 = vpop.f32.mrf.mxu0
    %13354 = vdwg.mxu0
    %13355 = vmatprep.subr.bf16.mxu0 0
    %13356 = vmatpush1.bf16.msra.mxu0 %v12586
    %13357 = vmatprep.subr.bf16.mxu0 0
    %13358 = vmatpush1.bf16.msra.mxu0 %v12585
    %13359 = vmatprep.subr.bf16.mxu0 0
    %13360 = vmatpush1.bf16.msra.mxu0 %v12584
    %13361 = vmatprep.subr.bf16.mxu0 0
    %13362 = vmatpush1.bf16.msra.mxu0 %v12583
    %13363 = vmatprep.subr.bf16.mxu0 0
    %13364 = vmatpush1.bf16.msra.mxu0 %v12582
    %13365 = vmatprep.subr.bf16.mxu0 0
    %13366 = vmatpush1.bf16.msra.mxu0 %v12581
    %13367 = vmatprep.subr.bf16.mxu0 0
    %13368 = vmatpush1.bf16.msra.mxu0 %v12580
    %13369 = vmatprep.subr.bf16.mxu0 0
    %13370 = vmatpush1.bf16.msra.mxu0 %v12579
    %13371 = vmatprep.subr.bf16.mxu0 0
    %13372 = vmatpush2.bf16.msra.mxu0 %v12594
    %13373 = vmatprep.subr.bf16.mxu0 0
    %13374 = vmatpush2.bf16.msra.mxu0 %v12593
    %13375 = vmatprep.subr.bf16.mxu0 0
    %13376 = vmatpush2.bf16.msra.mxu0 %v12592
    %13377 = vmatprep.subr.bf16.mxu0 0
    %13378 = vmatpush2.bf16.msra.mxu0 %v12591
    %13379 = vmatprep.subr.bf16.mxu0 0
    %13380 = vmatpush2.bf16.msra.mxu0 %v12590
    %13381 = vmatprep.subr.bf16.mxu0 0
    %13382 = vmatpush2.bf16.msra.mxu0 %v12589
    %13383 = vmatprep.subr.bf16.mxu0 0
    %13384 = vmatpush2.bf16.msra.mxu0 %v12588
    %13385 = vmatprep.subr.bf16.mxu0 0
    %13386 = vmatpush2.bf16.msra.mxu0 %v12587
    %13387 = vmatprep.mubr.bf16.mxu0 %v11363
    %13388 = vmatmul.mubr.bf16.gmra.mxu0 %v11362
    %v13389 = vpop.f32.mrf.mxu0
    %v13390 = vadd.f32 %v13350, %v13389
    %v13391 = vpop.f32.mrf.mxu0
    %v13392 = vpop.f32.mrf.mxu0
    %v13393 = vpop.f32.mrf.mxu0
    %13394 = vdwg.mxu0
    %13395 = vmatprep.subr.bf16.mxu0 0
    %13396 = vmatpush1.bf16.msra.mxu0 %v12602
    %13397 = vmatprep.subr.bf16.mxu0 0
    %13398 = vmatpush1.bf16.msra.mxu0 %v12601
    %13399 = vmatprep.subr.bf16.mxu0 0
    %13400 = vmatpush1.bf16.msra.mxu0 %v12600
    %13401 = vmatprep.subr.bf16.mxu0 0
    %13402 = vmatpush1.bf16.msra.mxu0 %v12599
    %13403 = vmatprep.subr.bf16.mxu0 0
    %13404 = vmatpush1.bf16.msra.mxu0 %v12598
    %13405 = vmatprep.subr.bf16.mxu0 0
    %13406 = vmatpush1.bf16.msra.mxu0 %v12597
    %13407 = vmatprep.subr.bf16.mxu0 0
    %13408 = vmatpush1.bf16.msra.mxu0 %v12596
    %13409 = vmatprep.subr.bf16.mxu0 0
    %13410 = vmatpush1.bf16.msra.mxu0 %v12595
    %13411 = vmatprep.subr.bf16.mxu0 0
    %13412 = vmatpush2.bf16.msra.mxu0 %v12610
    %13413 = vmatprep.subr.bf16.mxu0 0
    %13414 = vmatpush2.bf16.msra.mxu0 %v12609
    %13415 = vmatprep.subr.bf16.mxu0 0
    %13416 = vmatpush2.bf16.msra.mxu0 %v12608
    %13417 = vmatprep.subr.bf16.mxu0 0
    %13418 = vmatpush2.bf16.msra.mxu0 %v12607
    %13419 = vmatprep.subr.bf16.mxu0 0
    %13420 = vmatpush2.bf16.msra.mxu0 %v12606
    %13421 = vmatprep.subr.bf16.mxu0 0
    %13422 = vmatpush2.bf16.msra.mxu0 %v12605
    %13423 = vmatprep.subr.bf16.mxu0 0
    %13424 = vmatpush2.bf16.msra.mxu0 %v12604
    %13425 = vmatprep.subr.bf16.mxu0 0
    %13426 = vmatpush2.bf16.msra.mxu0 %v12603
    %13427 = vmatprep.mubr.bf16.mxu0 %v11365
    %13428 = vmatmul.mubr.bf16.gmra.mxu0 %v11364
    %v13429 = vpop.f32.mrf.mxu0
    %v13430 = vadd.f32 %v13390, %v13429
    %v13431 = vpop.f32.mrf.mxu0
    %v13432 = vpop.f32.mrf.mxu0
    %v13433 = vpop.f32.mrf.mxu0
    %13434 = vdwg.mxu0
    %13435 = vmatprep.subr.bf16.mxu0 0
    %13436 = vmatpush1.bf16.msra.mxu0 %v12618
    %13437 = vmatprep.subr.bf16.mxu0 0
    %13438 = vmatpush1.bf16.msra.mxu0 %v12617
    %13439 = vmatprep.subr.bf16.mxu0 0
    %13440 = vmatpush1.bf16.msra.mxu0 %v12616
    %13441 = vmatprep.subr.bf16.mxu0 0
    %13442 = vmatpush1.bf16.msra.mxu0 %v12615
    %13443 = vmatprep.subr.bf16.mxu0 0
    %13444 = vmatpush1.bf16.msra.mxu0 %v12614
    %13445 = vmatprep.subr.bf16.mxu0 0
    %13446 = vmatpush1.bf16.msra.mxu0 %v12613
    %13447 = vmatprep.subr.bf16.mxu0 0
    %13448 = vmatpush1.bf16.msra.mxu0 %v12612
    %13449 = vmatprep.subr.bf16.mxu0 0
    %13450 = vmatpush1.bf16.msra.mxu0 %v12611
    %13451 = vmatprep.subr.bf16.mxu0 0
    %13452 = vmatpush2.bf16.msra.mxu0 %v12626
    %13453 = vmatprep.subr.bf16.mxu0 0
    %13454 = vmatpush2.bf16.msra.mxu0 %v12625
    %13455 = vmatprep.subr.bf16.mxu0 0
    %13456 = vmatpush2.bf16.msra.mxu0 %v12624
    %13457 = vmatprep.subr.bf16.mxu0 0
    %13458 = vmatpush2.bf16.msra.mxu0 %v12623
    %13459 = vmatprep.subr.bf16.mxu0 0
    %13460 = vmatpush2.bf16.msra.mxu0 %v12622
    %13461 = vmatprep.subr.bf16.mxu0 0
    %13462 = vmatpush2.bf16.msra.mxu0 %v12621
    %13463 = vmatprep.subr.bf16.mxu0 0
    %13464 = vmatpush2.bf16.msra.mxu0 %v12620
    %13465 = vmatprep.subr.bf16.mxu0 0
    %13466 = vmatpush2.bf16.msra.mxu0 %v12619
    %13467 = vmatprep.mubr.bf16.mxu0 %v11367
    %13468 = vmatmul.mubr.bf16.gmra.mxu0 %v11366
    %v13469 = vpop.f32.mrf.mxu0
    %v13470 = vadd.f32 %v13430, %v13469
    %v13471 = vpop.f32.mrf.mxu0
    %v13472 = vpop.f32.mrf.mxu0
    %v13473 = vpop.f32.mrf.mxu0
    %13474 = vdwg.mxu0
    %13475 = vmatprep.subr.bf16.mxu0 0
    %13476 = vmatpush1.bf16.msra.mxu0 %v12634
    %13477 = vmatprep.subr.bf16.mxu0 0
    %13478 = vmatpush1.bf16.msra.mxu0 %v12633
    %13479 = vmatprep.subr.bf16.mxu0 0
    %13480 = vmatpush1.bf16.msra.mxu0 %v12632
    %13481 = vmatprep.subr.bf16.mxu0 0
    %13482 = vmatpush1.bf16.msra.mxu0 %v12631
    %13483 = vmatprep.subr.bf16.mxu0 0
    %13484 = vmatpush1.bf16.msra.mxu0 %v12630
    %13485 = vmatprep.subr.bf16.mxu0 0
    %13486 = vmatpush1.bf16.msra.mxu0 %v12629
    %13487 = vmatprep.subr.bf16.mxu0 0
    %13488 = vmatpush1.bf16.msra.mxu0 %v12628
    %13489 = vmatprep.subr.bf16.mxu0 0
    %13490 = vmatpush1.bf16.msra.mxu0 %v12627
    %13491 = vmatprep.subr.bf16.mxu0 0
    %13492 = vmatpush2.bf16.msra.mxu0 %v12642
    %13493 = vmatprep.subr.bf16.mxu0 0
    %13494 = vmatpush2.bf16.msra.mxu0 %v12641
    %13495 = vmatprep.subr.bf16.mxu0 0
    %13496 = vmatpush2.bf16.msra.mxu0 %v12640
    %13497 = vmatprep.subr.bf16.mxu0 0
    %13498 = vmatpush2.bf16.msra.mxu0 %v12639
    %13499 = vmatprep.subr.bf16.mxu0 0
    %13500 = vmatpush2.bf16.msra.mxu0 %v12638
    %13501 = vmatprep.subr.bf16.mxu0 0
    %13502 = vmatpush2.bf16.msra.mxu0 %v12637
    %13503 = vmatprep.subr.bf16.mxu0 0
    %13504 = vmatpush2.bf16.msra.mxu0 %v12636
    %13505 = vmatprep.subr.bf16.mxu0 0
    %13506 = vmatpush2.bf16.msra.mxu0 %v12635
    %13507 = vmatprep.mubr.bf16.mxu0 %v11369
    %13508 = vmatmul.mubr.bf16.gmra.mxu0 %v11368
    %v13509 = vpop.f32.mrf.mxu0
    %v13510 = vadd.f32 %v13470, %v13509
    %v13511 = vpop.f32.mrf.mxu0
    %v13512 = vpop.f32.mrf.mxu0
    %v13513 = vpop.f32.mrf.mxu0
    %13514 = vdwg.mxu0
    %13515 = vmatprep.subr.bf16.mxu0 0
    %13516 = vmatpush1.bf16.msra.mxu0 %v12650
    %13517 = vmatprep.subr.bf16.mxu0 0
    %13518 = vmatpush1.bf16.msra.mxu0 %v12649
    %13519 = vmatprep.subr.bf16.mxu0 0
    %13520 = vmatpush1.bf16.msra.mxu0 %v12648
    %13521 = vmatprep.subr.bf16.mxu0 0
    %13522 = vmatpush1.bf16.msra.mxu0 %v12647
    %13523 = vmatprep.subr.bf16.mxu0 0
    %13524 = vmatpush1.bf16.msra.mxu0 %v12646
    %13525 = vmatprep.subr.bf16.mxu0 0
    %13526 = vmatpush1.bf16.msra.mxu0 %v12645
    %13527 = vmatprep.subr.bf16.mxu0 0
    %13528 = vmatpush1.bf16.msra.mxu0 %v12644
    %13529 = vmatprep.subr.bf16.mxu0 0
    %13530 = vmatpush1.bf16.msra.mxu0 %v12643
    %13531 = vmatprep.subr.bf16.mxu0 0
    %13532 = vmatpush2.bf16.msra.mxu0 %v12658
    %13533 = vmatprep.subr.bf16.mxu0 0
    %13534 = vmatpush2.bf16.msra.mxu0 %v12657
    %13535 = vmatprep.subr.bf16.mxu0 0
    %13536 = vmatpush2.bf16.msra.mxu0 %v12656
    %13537 = vmatprep.subr.bf16.mxu0 0
    %13538 = vmatpush2.bf16.msra.mxu0 %v12655
    %13539 = vmatprep.subr.bf16.mxu0 0
    %13540 = vmatpush2.bf16.msra.mxu0 %v12654
    %13541 = vmatprep.subr.bf16.mxu0 0
    %13542 = vmatpush2.bf16.msra.mxu0 %v12653
    %13543 = vmatprep.subr.bf16.mxu0 0
    %13544 = vmatpush2.bf16.msra.mxu0 %v12652
    %13545 = vmatprep.subr.bf16.mxu0 0
    %13546 = vmatpush2.bf16.msra.mxu0 %v12651
    %13547 = vmatprep.mubr.bf16.mxu0 %v11371
    %13548 = vmatmul.mubr.bf16.gmra.mxu0 %v11370
    %v13549 = vpop.f32.mrf.mxu0
    %v13550 = vadd.f32 %v13510, %v13549
    %v13551 = vpop.f32.mrf.mxu0
    %v13552 = vpop.f32.mrf.mxu0
    %v13553 = vpop.f32.mrf.mxu0
    %13554 = vdwg.mxu0
    %v13555 = vmax.f32 %v13550, 0.0
    %v13556 = vld [vmem:[%s7] sm:$0xf]
    %v13557 = vld [vmem:[%s7 + $0x4] sm:$0xf]
    %v13558 = vld [vmem:[%s7 + $0x8] sm:$0xf]
    %v13559 = vld [vmem:[%s7 + $0xc] sm:$0xf]
    %v13560 = vld [vmem:[%s7 + $0x10] sm:$0xf]
    %v13561 = vld [vmem:[%s7 + $0x14] sm:$0xf]
    %v13562 = vld [vmem:[%s7 + $0x18] sm:$0xf]
    %v13563 = vld [vmem:[%s7 + $0x1c] sm:$0xf]
    %v13564 = vld [vmem:[%s7 + $0x20] sm:$0xf]
    %v13565 = vld [vmem:[%s7 + $0x24] sm:$0xf]
    %v13566 = vld [vmem:[%s7 + $0x28] sm:$0xf]
    %v13567 = vld [vmem:[%s7 + $0x2c] sm:$0xf]
    %v13568 = vld [vmem:[%s7 + $0x30] sm:$0xf]
    %v13569 = vld [vmem:[%s7 + $0x34] sm:$0xf]
    %v13570 = vld [vmem:[%s7 + $0x38] sm:$0xf]
    %v13571 = vld [vmem:[%s7 + $0x3c] sm:$0xf]
    %v13572 = vpack.c.bf16 %v13555, %v13555
    %v13573 = vld [vmem:[%s8] sm:$0x1]
    %v13575 = vlaneseq
    %v13576 = vshrl.u32 %v13575, 7
    %v13577 = vsub.s32 0, %v13576
    %v13578 = vrot.slane %v13573, %v13577
    %v13596 = vunpack.c.l.b16 %v13556
    %v13597 = vunpack.c.l.b16 %v13557
    %v13598 = vunpack.c.l.b16 %v13558
    %v13599 = vunpack.c.l.b16 %v13559
    %v13600 = vunpack.c.l.b16 %v13560
    %v13601 = vunpack.c.l.b16 %v13561
    %v13602 = vunpack.c.l.b16 %v13562
    %v13603 = vunpack.c.l.b16 %v13563
    %v13604 = vunpack.c.l.b16 %v13564
    %v13605 = vunpack.c.l.b16 %v13565
    %v13606 = vunpack.c.l.b16 %v13566
    %v13607 = vunpack.c.l.b16 %v13567
    %v13608 = vunpack.c.l.b16 %v13568
    %v13609 = vunpack.c.l.b16 %v13569
    %v13610 = vunpack.c.l.b16 %v13570
    %v13611 = vunpack.c.l.b16 %v13571
    %v13612 = vpack.c.b16 %v13597, %v13596
    %v13613 = vpack.c.b16 %v13599, %v13598
    %v13614 = vpack.c.b16 %v13601, %v13600
    %v13615 = vpack.c.b16 %v13603, %v13602
    %v13616 = vpack.c.b16 %v13605, %v13604
    %v13617 = vpack.c.b16 %v13607, %v13606
    %v13618 = vpack.c.b16 %v13609, %v13608
    %v13619 = vpack.c.b16 %v13611, %v13610
    %13628 = vmatprep.subr.bf16.mxu0 0
    %13629 = vmatpush1.bf16.msra.mxu0 %v13619
    %13630 = vmatprep.subr.bf16.mxu0 0
    %13631 = vmatpush1.bf16.msra.mxu0 %v13618
    %13632 = vmatprep.subr.bf16.mxu0 0
    %13633 = vmatpush1.bf16.msra.mxu0 %v13617
    %13634 = vmatprep.subr.bf16.mxu0 0
    %13635 = vmatpush1.bf16.msra.mxu0 %v13616
    %13636 = vmatprep.subr.bf16.mxu0 0
    %13637 = vmatpush1.bf16.msra.mxu0 %v13615
    %13638 = vmatprep.subr.bf16.mxu0 0
    %13639 = vmatpush1.bf16.msra.mxu0 %v13614
    %13640 = vmatprep.subr.bf16.mxu0 0
    %13641 = vmatpush1.bf16.msra.mxu0 %v13613
    %13642 = vmatprep.subr.bf16.mxu0 0
    %13643 = vmatpush1.bf16.msra.mxu0 %v13612
    %13644 = vmatprep.subr.bf16.mxu0 0
    %13645 = vmatpush2.bf16.msra.mxu0 0
    %13646 = vmatprep.subr.bf16.mxu0 0
    %13647 = vmatpush2.bf16.msra.mxu0 0
    %13648 = vmatprep.subr.bf16.mxu0 0
    %13649 = vmatpush2.bf16.msra.mxu0 0
    %13650 = vmatprep.subr.bf16.mxu0 0
    %13651 = vmatpush2.bf16.msra.mxu0 0
    %13652 = vmatprep.subr.bf16.mxu0 0
    %13653 = vmatpush2.bf16.msra.mxu0 0
    %13654 = vmatprep.subr.bf16.mxu0 0
    %13655 = vmatpush2.bf16.msra.mxu0 0
    %13656 = vmatprep.subr.bf16.mxu0 0
    %13657 = vmatpush2.bf16.msra.mxu0 0
    %13658 = vmatprep.subr.bf16.mxu0 0
    %13659 = vmatpush2.bf16.msra.mxu0 0
    %13660 = vmatprep.mubr.bf16.mxu0 0
    %13661 = vmatmul.mubr.bf16.gmra.mxu0 %v13572
    %v13662 = vpop.f32.mrf.mxu0
    %v13663 = vadd.f32 %v13578, %v13662
    %v13664 = vpop.f32.mrf.mxu0
    %v13665 = vpop.f32.mrf.mxu0
    %v13666 = vpop.f32.mrf.mxu0
    %13667 = vdwg.mxu0
    %13668 = vst [vmem:[#allocation5] sm:$0x3] %v13663
    // Predicated region
    $region38: #{simple_cnn_forward.1} parent=1 // pred_check
      _
    $region39: #{simple_cnn_forward.1} parent=1 // pred_check_branch
      %13670 = sbr.rel (0) target = $region41
    $region40: #{simple_cnn_forward.1} parent=1 // pred_region
      %s13672 = ssub.s32 32, 32
      %13673 = vsyncadd [#allocation6], %s13672
      %s13675 = sshll.u32 [#allocation5], 4
      %s13676 = int_to_ptr.vmem [resolvable:$true] %s13675
      %13678 = dma.vmem_to_hbm [thread:$0]  %s13676, 32, %s9, [#allocation6]
    $region41: #{simple_cnn_forward.1} parent=1 // pred_fallthru
      _
    // Predicated region
    $region42: #{simple_cnn_forward.1} parent=1 // pred_check
      _
    $region43: #{simple_cnn_forward.1} parent=1 // pred_check_branch
      %13680 = sbr.rel (0) target = $region45
    $region44: #{simple_cnn_forward.1} parent=1 // pred_region
      %13681 = dma.done [#allocation6], 32
    $region45: #{simple_cnn_forward.1} parent=1 // pred_fallthru
      _
    %13682 = vsyncpa [#allocation6], 1

</llo_original>
